<compile_context>
chip_gen: v6e
topology: v6e:2x2x1
jax: 0.10.0
libtpu: 0.0.40
codegen_flags: <defaults>
</compile_context>

<pallas_src>
import functools

import jax
import jax.numpy as jnp
import numpy as np
from jax import lax
from jax.experimental import pallas as pl
from jax.experimental.pallas import tpu as pltpu

_HIGHEST = jax.lax.Precision.HIGHEST
_VMEM_LIMIT = 32 * 1024 * 1024  # safe on v5e/v6e/v7x; tiles below sized well under this


def _ru(n, m):
    return ((n + m - 1) // m) * m


# ------------------------- kernels -------------------------

def _stats_kernel(grp_ref, x_ref, sums_ref, sumsq_ref, *, n_buckets):
    """Accumulate per-bucket sum(x) and sum(x*x) across node tiles (one read of x).

    The one-hot selector is built in-registers from int32 bucket ids (no [S,N]
    matrix in HBM) and drives two MXU matmuls into resident [Sp, Dp] outputs.
    """
    @pl.when(pl.program_id(0) == 0)
    def _init():
        sums_ref[...] = jnp.zeros_like(sums_ref)
        sumsq_ref[...] = jnp.zeros_like(sumsq_ref)

    tm = x_ref.shape[0]
    grp = grp_ref[...]                                             # [1, TM] int32
    oh = (lax.broadcasted_iota(jnp.int32, (n_buckets, tm), 0)
          == grp).astype(jnp.float32)                              # [Sp, TM]
    xv = x_ref[...]
    sums_ref[...] += jnp.dot(oh, xv,
                             preferred_element_type=jnp.float32,
                             precision=_HIGHEST)
    sumsq_ref[...] += jnp.dot(oh, xv * xv,
                              preferred_element_type=jnp.float32,
                              precision=_HIGHEST)


def _affine_kernel(grp_col_ref, alpha_col_ref, x_ref, beta_ref, o_ref, *, n_buckets):
    """o = alpha_u * x + beta_u.

    beta_u ( = (1-alpha_group)*group_mean, zero for test nodes) is gathered per
    node from a resident [Sp, Dp] table with a single one-hot MXU matmul;
    alpha_u is a per-node scalar column broadcast on the VPU.
    """
    tm = x_ref.shape[0]
    ohg = (lax.broadcasted_iota(jnp.int32, (tm, n_buckets), 1)
           == grp_col_ref[...]).astype(jnp.float32)                # [TM, Sp]
    beta_u = jnp.dot(ohg, beta_ref[...],
                     preferred_element_type=jnp.float32, precision=_HIGHEST)
    o_ref[...] = alpha_col_ref[...] * x_ref[...] + beta_u


# ------------------------- pallas_call wrappers -------------------------

def _bucket_stats(xp, grp_row, Sp, TM):
    Np, Dp = xp.shape
    Nt = Np // TM
    return pl.pallas_call(
        functools.partial(_stats_kernel, n_buckets=Sp),
        out_shape=(jax.ShapeDtypeStruct((Sp, Dp), jnp.float32),
                   jax.ShapeDtypeStruct((Sp, Dp), jnp.float32)),
        grid=(Nt,),
        in_specs=[pl.BlockSpec((1, TM), lambda i: (0, i)),
                  pl.BlockSpec((TM, Dp), lambda i: (i, 0))],
        out_specs=(pl.BlockSpec((Sp, Dp), lambda i: (0, 0)),
                   pl.BlockSpec((Sp, Dp), lambda i: (0, 0))),
        compiler_params=pltpu.CompilerParams(
            dimension_semantics=("arbitrary",),
            vmem_limit_bytes=_VMEM_LIMIT),
        cost_estimate=pl.CostEstimate(
            flops=4 * Sp * Np * Dp + Np * Dp, transcendentals=0,
            bytes_accessed=Np * Dp * 4 + Np * 4 + 2 * Sp * Dp * 4),
    )(grp_row, xp)


def _affine_blend(xp, grp_col, alpha_col, beta_table, TM):
    Np, Dp = xp.shape
    Sp = beta_table.shape[0]
    Nt = Np // TM
    return pl.pallas_call(
        functools.partial(_affine_kernel, n_buckets=Sp),
        out_shape=jax.ShapeDtypeStruct((Np, Dp), jnp.float32),
        grid=(Nt,),
        in_specs=[pl.BlockSpec((TM, 1), lambda i: (i, 0)),
                  pl.BlockSpec((TM, 1), lambda i: (i, 0)),
                  pl.BlockSpec((TM, Dp), lambda i: (i, 0)),
                  pl.BlockSpec((Sp, Dp), lambda i: (0, 0))],
        out_specs=pl.BlockSpec((TM, Dp), lambda i: (i, 0)),
        compiler_params=pltpu.CompilerParams(
            dimension_semantics=("parallel",),
            vmem_limit_bytes=_VMEM_LIMIT),
        cost_estimate=pl.CostEstimate(
            flops=2 * Np * Sp * Dp + 3 * Np * Dp, transcendentals=0,
            bytes_accessed=2 * Np * Dp * 4 + 2 * Np * 4 + Sp * Dp * 4),
    )(grp_col, alpha_col, xp, beta_table)


# ------------------------- JJ_Norm forward -------------------------

@functools.partial(jax.jit, static_argnums=(3, 4, 5))
def jj_norm_forward(x, labels, times, num_time, num_label, split):
    N, D = x.shape
    T, L = num_time, num_label
    TL = T * L
    S = TL + 1                       # buckets: T*L train groups + 1 test bucket
    Sp = _ru(S, 128)                 # 128-lane aligned -> clean MXU K-dim / gather
    Dp = _ru(D, 128)
    TM = 512 if Dp <= 2048 else 256  # node tile; keeps per-step VMEM well under limit
    Np = _ru(N, TM)

    labels = labels.astype(jnp.int32)
    times = times.astype(jnp.int32)
    train_mask = times < split

    # per-node bucket ids (test nodes -> bucket TL / time-bucket T)
    grp = jnp.where(train_mask, times * L + labels, TL).astype(jnp.int32)   # [N]
    tb = jnp.where(train_mask, times, T).astype(jnp.int32)                  # [N]

    # pad x ONCE; pad bucket ids with out-of-range values so padded rows match nothing
    xp = jnp.pad(x.astype(jnp.float32), ((0, Np - N), (0, Dp - D)))
    grp_pad = jnp.pad(grp, (0, Np - N), constant_values=Sp)
    grp_row = grp_pad.reshape(1, Np)
    grp_col = grp_pad.reshape(Np, 1)

    # tiny counts (O(N) int32 scatter in glue)
    cnt = jnp.zeros((S,), jnp.float32).at[grp].add(1.0)
    train_cnt = cnt[:TL]                                  # [TL]
    test_cnt = cnt[TL]
    time_cnt = train_cnt.reshape(T, L).sum(axis=1)        # [T]

    # ---- kernel 1: per-bucket sum(x) and sum(x*x) in ONE pass over x ----
    sums, sumsq = _bucket_stats(xp, grp_row, Sp, TM)                        # [Sp, Dp] x2

    mean_rows = sums[:TL] / jnp.maximum(1.0, train_cnt)[:, None]            # [TL, Dp]
    test_mean = sums[TL] / jnp.maximum(1.0, test_cnt)                       # [Dp]
    time_sum = sums[:TL].reshape(T, L, Dp).sum(axis=1)                      # raw sums
    train_time_mean = time_sum / jnp.maximum(1.0, time_cnt)[:, None]        # [T, Dp]

    # residual sums of squares per bucket: sum((x-c)^2) = sum(x^2) - cnt*c^2
    centers_S = jnp.concatenate([mean_rows, test_mean[None]], axis=0)       # [S, Dp]
    res_feat = jnp.maximum(0.0, sumsq[:S] - cnt[:, None] * centers_S * centers_S)
    rsq_raw = res_feat[:TL].reshape(T, L, Dp).sum(axis=(1, 2))              # [T]
    test_var = jnp.sum(res_feat[TL]) / jnp.maximum(1.0, test_cnt - 1.0)

    # tiny O(T*L*D) stats in glue
    diff = mean_rows.reshape(T, L, Dp) - train_time_mean[:, None, :]
    msq_raw = jnp.sum(train_cnt.reshape(T, L) * jnp.sum(diff * diff, axis=-1), axis=-1)
    denom = jnp.maximum(1.0, time_cnt - 1.0)
    msq = msq_raw / denom
    rsq = rsq_raw / denom

    alpha_sq = (test_var - msq) / jnp.maximum(1e-6, rsq)
    alpha_t = jnp.where(alpha_sq > 0, jnp.sqrt(jnp.maximum(alpha_sq, 0.0)), 0.0)  # [T]

    # per-node alpha column (test nodes & padded rows -> 1 = exact pass-through)
    alpha_full = jnp.concatenate([alpha_t, jnp.ones((1,), jnp.float32)])    # [T+1]
    alpha_node = alpha_full[tb]                                             # [N]
    alpha_col = jnp.pad(alpha_node, (0, Np - N),
                        constant_values=1.0).reshape(Np, 1)

    # beta table: rows 0..TL-1 = (1-alpha_group)*group_mean, other rows zero
    one_minus_a = (1.0 - jnp.repeat(alpha_t, L))[:, None]                   # [TL, 1]
    beta_table = jnp.zeros((Sp, Dp), jnp.float32).at[:TL].set(one_minus_a * mean_rows)

    # ---- kernel 2: affine blend (single MXU gather per tile) ----
    out = _affine_blend(xp, grp_col, alpha_col, beta_table, TM)             # [Np, Dp]
    return out[:N, :D].astype(x.dtype)


# ------------------------- reference (loop-for-loop port of the torch code) ---

def reference_forward(x, labels, times, num_time, num_label, split):
    x = np.asarray(x, dtype=np.float64)
    labels = np.asarray(labels)
    times = np.asarray(times)
    N, D = x.shape
    clone_x = x.copy()
    train_idx = np.nonzero(times < split)[0]
    test_idx = np.nonzero(times >= split)[0]
    train_mean = np.zeros((num_time, num_label, D))
    train_cnt = np.zeros((num_time, num_label))
    train_time_mean = np.zeros((num_time, D))
    train_time_cnt = np.zeros(num_time)
    test_cnt = 0.0
    test_mean = np.zeros(D)
    for u in test_idx:
        test_cnt += 1
        test_mean += x[u]
    for u in train_idx:
        t = times[u]
        train_time_cnt[t] += 1
        train_cnt[t, labels[u]] += 1
        train_mean[t, labels[u]] += x[u]
    for t in range(num_time):
        for l in range(num_label):
            train_time_mean[t] += train_mean[t, l]
            train_mean[t, l] = train_mean[t, l] / max(1, train_cnt[t, l])
        train_time_mean[t] /= max(1, train_time_cnt[t])
    test_mean /= max(1, test_cnt)
    test_var = 0.0
    rsq = np.zeros(num_time)
    msq = np.zeros(num_time)
    for u in test_idx:
        test_var += np.sum((x[u] - test_mean) ** 2)
    for u in train_idx:
        t = times[u]
        msq[t] += np.sum((train_mean[t, labels[u]] - train_time_mean[t]) ** 2)
        rsq[t] += np.sum((x[u] - train_mean[t, labels[u]]) ** 2)
    test_var /= max(1, test_cnt - 1)
    for t in range(split):
        msq[t] /= max(1, train_time_cnt[t] - 1)
        rsq[t] /= max(1, train_time_cnt[t] - 1)
    alpha = np.ones(split)
    for t in range(split):
        a2 = (test_var - msq[t]) / max(1e-6, rsq[t])
        alpha[t] = np.sqrt(a2) if a2 > 0 else 0.0
    for u in train_idx:
        t = times[u]
        clone_x[u] = alpha[t] * x[u] + (1 - alpha[t]) * train_mean[t, labels[u]]
    return clone_x


# ------------------------- main -------------------------

if __name__ == "__main__":
    key = jax.random.PRNGKey(0)
    kx, kt, kl = jax.random.split(key, 3)
    N, D = 128, 32
    num_time, num_label, split = 4, 3, 2

    # deterministic "module parameters" (labels/times) and input x
    times = jax.random.randint(kt, (N,), 0, num_time, dtype=jnp.int32)
    labels = jax.random.randint(kl, (N,), 0, num_label, dtype=jnp.int32)
    x = jax.random.normal(kx, (N, D), dtype=jnp.float32)

    out = jj_norm_forward(x, labels, times, num_time, num_label, split)
    out = jax.block_until_ready(out)

    ref = reference_forward(np.array(x), np.array(labels), np.array(times),
                            num_time, num_label, split)
    err = np.max(np.abs(np.array(out) - ref))
    assert np.allclose(np.array(out), ref, rtol=1e-3, atol=1e-3), \
        f"max abs err = {err}"
    print("KERNEL_OK")
</pallas_src>

<mosaic_0001>
module attributes {stable_mosaic.version = 11 : i64} {
  func.func private @main(%arg0: i32) attributes {dimension_semantics = [#tpu.dimension_semantics<core_parallel>], iteration_bounds = array<i64: 2>, tpu.core_type = #tpu.core_type<sc_scalar_subcore>, window_params = []} {
    return
  }
}

module attributes {stable_mosaic.version = 11 : i64} {
  func.func private @main(%arg0: i32) attributes {dimension_semantics = [#tpu.dimension_semantics<core_parallel>], iteration_bounds = array<i64: 2>, tpu.core_type = #tpu.core_type<sc_scalar_subcore>, window_params = []} {
    return
  }
}

module attributes {stable_mosaic.version = 11 : i64} {
  func.func @_stats_kernel(%arg0: i32, %arg1: memref<1x512xi32, #tpu.memory_space<vmem>>, %arg2: memref<512x128xf32, #tpu.memory_space<vmem>>, %arg3: memref<128x128xf32, #tpu.memory_space<vmem>>, %arg4: memref<128x128xf32, #tpu.memory_space<vmem>>) attributes {dimension_semantics = [#tpu.dimension_semantics<arbitrary>], iteration_bounds = array<i64: 1>, scalar_prefetch = 0 : i64, scratch_operands = 0 : i64, tpu.core_type = #tpu.core_type<tc>, window_params = [{transform_indices = @transform_0, window_bounds = array<i64: 1, 512>}, {transform_indices = @transform_1, window_bounds = array<i64: 512, 128>}, {pipeline_mode = #tpu.pipeline_mode<synchronous>, transform_indices = @transform_2, window_bounds = array<i64: 128, 128>}, {pipeline_mode = #tpu.pipeline_mode<synchronous>, transform_indices = @transform_3, window_bounds = array<i64: 128, 128>}]} {
    %c0_i32 = arith.constant 0 : i32
    %0 = arith.cmpi eq, %arg0, %c0_i32 : i32
    %1 = arith.extui %0 : i1 to i32
    %c0_i32_0 = arith.constant 0 : i32
    %2 = arith.cmpi ne, %1, %c0_i32_0 : i32
    scf.if %2 {
      %cst_13 = arith.constant 0.000000e+00 : f32
      %19 = vector.broadcast %cst_13 : f32 to vector<128x128xf32>
      %c0_14 = arith.constant 0 : index
      %c0_15 = arith.constant 0 : index
      %20 = vector.load %arg3[%c0_14, %c0_15] : memref<128x128xf32, #tpu.memory_space<vmem>>, vector<128x128xf32>
      tpu.vector_store %arg3[%c0_14, %c0_15], %19 {strides = array<i32>} : memref<128x128xf32, #tpu.memory_space<vmem>>, vector<128x128xf32>,
      %cst_16 = arith.constant 0.000000e+00 : f32
      %21 = vector.broadcast %cst_16 : f32 to vector<128x128xf32>
      %c0_17 = arith.constant 0 : index
      %c0_18 = arith.constant 0 : index
      %22 = vector.load %arg4[%c0_17, %c0_18] : memref<128x128xf32, #tpu.memory_space<vmem>>, vector<128x128xf32>
      tpu.vector_store %arg4[%c0_17, %c0_18], %21 {strides = array<i32>} : memref<128x128xf32, #tpu.memory_space<vmem>>, vector<128x128xf32>,
    } else {
    }
    %c0 = arith.constant 0 : index
    %c0_1 = arith.constant 0 : index
    %3 = vector.load %arg1[%c0, %c0_1] : memref<1x512xi32, #tpu.memory_space<vmem>>, vector<1x512xi32>
    %4 = tpu.iota {dimensions = array<i32: 0>} : vector<128x512xi32>
    %5 = vector.broadcast %3 : vector<1x512xi32> to vector<128x512xi32>
    %6 = arith.cmpi eq, %4, %5 : vector<128x512xi32>
    %7 = arith.extui %6 : vector<128x512xi1> to vector<128x512xi32>
    %8 = arith.sitofp %7 : vector<128x512xi32> to vector<128x512xf32>
    %c0_2 = arith.constant 0 : index
    %c0_3 = arith.constant 0 : index
    %9 = vector.load %arg2[%c0_2, %c0_3] : memref<512x128xf32, #tpu.memory_space<vmem>>, vector<512x128xf32>
    %c0_4 = arith.constant 0 : index
    %c0_5 = arith.constant 0 : index
    %10 = vector.load %arg3[%c0_4, %c0_5] : memref<128x128xf32, #tpu.memory_space<vmem>>, vector<128x128xf32>
    %cst = arith.constant dense<0.000000e+00> : vector<128x128xf32>
    %11 = tpu.matmul %8, %9, %cst {dimension_numbers = #tpu.dot_dimension_numbers<[1], [0], [0], [1], [0, 0, 1, 1], [], []>, precision = #tpu.contract_precision<fp32>} : vector<128x512xf32>, vector<512x128xf32>, vector<128x128xf32> -> vector<128x128xf32>
    %12 = arith.addf %10, %11 : vector<128x128xf32>
    %c0_6 = arith.constant 0 : index
    %c0_7 = arith.constant 0 : index
    %13 = vector.load %arg3[%c0_6, %c0_7] : memref<128x128xf32, #tpu.memory_space<vmem>>, vector<128x128xf32>
    tpu.vector_store %arg3[%c0_6, %c0_7], %12 {strides = array<i32>} : memref<128x128xf32, #tpu.memory_space<vmem>>, vector<128x128xf32>,
    %c0_8 = arith.constant 0 : index
    %c0_9 = arith.constant 0 : index
    %14 = vector.load %arg4[%c0_8, %c0_9] : memref<128x128xf32, #tpu.memory_space<vmem>>, vector<128x128xf32>
    %15 = arith.mulf %9, %9 : vector<512x128xf32>
    %cst_10 = arith.constant dense<0.000000e+00> : vector<128x128xf32>
    %16 = tpu.matmul %8, %15, %cst_10 {dimension_numbers = #tpu.dot_dimension_numbers<[1], [0], [0], [1], [0, 0, 1, 1], [], []>, precision = #tpu.contract_precision<fp32>} : vector<128x512xf32>, vector<512x128xf32>, vector<128x128xf32> -> vector<128x128xf32>
    %17 = arith.addf %14, %16 : vector<128x128xf32>
    %c0_11 = arith.constant 0 : index
    %c0_12 = arith.constant 0 : index
    %18 = vector.load %arg4[%c0_11, %c0_12] : memref<128x128xf32, #tpu.memory_space<vmem>>, vector<128x128xf32>
    tpu.vector_store %arg4[%c0_11, %c0_12], %17 {strides = array<i32>} : memref<128x128xf32, #tpu.memory_space<vmem>>, vector<128x128xf32>,
    return
  }
  func.func @transform_0(%arg0: i32) -> (i32, i32) {
    %c0_i32 = arith.constant 0 : i32
    %c0_i32_0 = arith.constant 0 : i32
    return %c0_i32, %arg0 : i32, i32
  }
  func.func @transform_1(%arg0: i32) -> (i32, i32) {
    %c0_i32 = arith.constant 0 : i32
    %c0_i32_0 = arith.constant 0 : i32
    return %arg0, %c0_i32 : i32, i32
  }
  func.func @transform_2(%arg0: i32) -> (i32, i32) {
    %c0_i32 = arith.constant 0 : i32
    %c0_i32_0 = arith.constant 0 : i32
    %c0_i32_1 = arith.constant 0 : i32
    return %c0_i32, %c0_i32_0 : i32, i32
  }
  func.func @transform_3(%arg0: i32) -> (i32, i32) {
    %c0_i32 = arith.constant 0 : i32
    %c0_i32_0 = arith.constant 0 : i32
    %c0_i32_1 = arith.constant 0 : i32
    return %c0_i32, %c0_i32_0 : i32, i32
  }
}

module attributes {stable_mosaic.version = 11 : i64} {
  func.func @_affine_kernel(%arg0: i32, %arg1: memref<512x1xi32, #tpu.memory_space<vmem>>, %arg2: memref<512x1xf32, #tpu.memory_space<vmem>>, %arg3: memref<512x128xf32, #tpu.memory_space<vmem>>, %arg4: memref<128x128xf32, #tpu.memory_space<vmem>>, %arg5: memref<512x128xf32, #tpu.memory_space<vmem>>) attributes {dimension_semantics = [#tpu.dimension_semantics<parallel>], iteration_bounds = array<i64: 1>, scalar_prefetch = 0 : i64, scratch_operands = 0 : i64, tpu.core_type = #tpu.core_type<tc>, window_params = [{transform_indices = @transform_0, window_bounds = array<i64: 512, 1>}, {transform_indices = @transform_1, window_bounds = array<i64: 512, 1>}, {transform_indices = @transform_2, window_bounds = array<i64: 512, 128>}, {pipeline_mode = #tpu.pipeline_mode<synchronous>, transform_indices = @transform_3, window_bounds = array<i64: 128, 128>}, {transform_indices = @transform_4, window_bounds = array<i64: 512, 128>}]} {
    %0 = tpu.iota {dimensions = array<i32: 1>} : vector<512x128xi32>
    %c0 = arith.constant 0 : index
    %c0_0 = arith.constant 0 : index
    %1 = vector.load %arg1[%c0, %c0_0] : memref<512x1xi32, #tpu.memory_space<vmem>>, vector<512x1xi32>
    %2 = vector.broadcast %1 : vector<512x1xi32> to vector<512x128xi32>
    %3 = arith.cmpi eq, %0, %2 : vector<512x128xi32>
    %4 = arith.extui %3 : vector<512x128xi1> to vector<512x128xi32>
    %5 = arith.sitofp %4 : vector<512x128xi32> to vector<512x128xf32>
    %c0_1 = arith.constant 0 : index
    %c0_2 = arith.constant 0 : index
    %6 = vector.load %arg4[%c0_1, %c0_2] : memref<128x128xf32, #tpu.memory_space<vmem>>, vector<128x128xf32>
    %cst = arith.constant dense<0.000000e+00> : vector<512x128xf32>
    %7 = tpu.matmul %5, %6, %cst {dimension_numbers = #tpu.dot_dimension_numbers<[1], [0], [0], [1], [0, 0, 1, 1], [], []>, precision = #tpu.contract_precision<fp32>} : vector<512x128xf32>, vector<128x128xf32>, vector<512x128xf32> -> vector<512x128xf32>
    %c0_3 = arith.constant 0 : index
    %c0_4 = arith.constant 0 : index
    %8 = vector.load %arg2[%c0_3, %c0_4] : memref<512x1xf32, #tpu.memory_space<vmem>>, vector<512x1xf32>
    %c0_5 = arith.constant 0 : index
    %c0_6 = arith.constant 0 : index
    %9 = vector.load %arg3[%c0_5, %c0_6] : memref<512x128xf32, #tpu.memory_space<vmem>>, vector<512x128xf32>
    %10 = vector.broadcast %8 : vector<512x1xf32> to vector<512x128xf32>
    %11 = arith.mulf %10, %9 : vector<512x128xf32>
    %12 = arith.addf %11, %7 : vector<512x128xf32>
    %c0_7 = arith.constant 0 : index
    %c0_8 = arith.constant 0 : index
    %13 = vector.load %arg5[%c0_7, %c0_8] : memref<512x128xf32, #tpu.memory_space<vmem>>, vector<512x128xf32>
    tpu.vector_store %arg5[%c0_7, %c0_8], %12 {strides = array<i32>} : memref<512x128xf32, #tpu.memory_space<vmem>>, vector<512x128xf32>,
    return
  }
  func.func @transform_0(%arg0: i32) -> (i32, i32) {
    %c0_i32 = arith.constant 0 : i32
    %c0_i32_0 = arith.constant 0 : i32
    return %arg0, %c0_i32 : i32, i32
  }
  func.func @transform_1(%arg0: i32) -> (i32, i32) {
    %c0_i32 = arith.constant 0 : i32
    %c0_i32_0 = arith.constant 0 : i32
    return %arg0, %c0_i32 : i32, i32
  }
  func.func @transform_2(%arg0: i32) -> (i32, i32) {
    %c0_i32 = arith.constant 0 : i32
    %c0_i32_0 = arith.constant 0 : i32
    return %arg0, %c0_i32 : i32, i32
  }
  func.func @transform_3(%arg0: i32) -> (i32, i32) {
    %c0_i32 = arith.constant 0 : i32
    %c0_i32_0 = arith.constant 0 : i32
    %c0_i32_1 = arith.constant 0 : i32
    return %c0_i32, %c0_i32_0 : i32, i32
  }
  func.func @transform_4(%arg0: i32) -> (i32, i32) {
    %c0_i32 = arith.constant 0 : i32
    %c0_i32_0 = arith.constant 0 : i32
    return %arg0, %c0_i32 : i32, i32
  }
}

</mosaic_0001>

<llo_original>
// kernel: jj_norm_forward.2
$region0: #{jj_norm_forward.2}
  #allocation0 [shape = 'u32[]', space=smem, size = 0x4, offset = 0x4, fixed_abs, tag = 'smem constant byte address 0x4 - core index']
  #allocation1 [shape = 'u32[144,128]{1,0:T(1,128)}', space=vmem, size = 0x12000, scoped, tag = 'internal scratch']
  %s0 = inlined_call_operand.vmem [shape: s32[1,512], index: 0, kind: input, shape index: {}]
  %s1 = inlined_call_operand.vmem [shape: f32[512,128], index: 1, kind: input, shape index: {}]
  %s2 = inlined_call_operand.vmem [shape: f32[128,128], index: 2, kind: output, shape index: {0}]
  %s3 = inlined_call_operand.vmem [shape: f32[128,128], index: 3, kind: output, shape index: {1}]
  %4 = xla_tuple %s2, %s3
  %s5 = sld [smem:[#allocation0]]
  $region30: #{jj_norm_forward.2} parent=0
    _
  %s7 = ssub.s32 1, %s5
  %s8 = scalar_select 0, %s7, %s5
  // Predicated region
  $region2: #{jj_norm_forward.2} parent=0 // pred_check
    _
  $region3: #{jj_norm_forward.2} parent=0 // pred_check_branch
    %10 = sbr.rel (0) target = $region5
  $region4: #{jj_norm_forward.2} parent=0 // pred_region
    _
  $region5: #{jj_norm_forward.2} parent=0 // pred_fallthru
    _
  // Predicated region
  $region6: #{jj_norm_forward.2} parent=0 // pred_check
    _
  $region7: #{jj_norm_forward.2} parent=0 // pred_check_branch
    %12 = sbr.rel (0) target = $region9
  $region8: #{jj_norm_forward.2} parent=0 // pred_region
    _
  $region9: #{jj_norm_forward.2} parent=0 // pred_fallthru
    _
  %p13 = scmp.eq.s32.totalorder 0, 0
  // Predicated region
  $region10: #{jj_norm_forward.2} parent=0 // pred_check
    %p14 = pneg %p13
  $region11: #{jj_norm_forward.2} parent=0 // pred_check_branch
    %16 = sbr.rel (%p14) target = $region13
  $region12: #{jj_norm_forward.2} parent=0 // pred_region
    %17 = vst [vmem:[%s2] sm:$0xff] 0.0
    %18 = vst [vmem:[%s2 + $0x8] sm:$0xff] 0.0
    %19 = vst [vmem:[%s2 + $0x10] sm:$0xff] 0.0
    %20 = vst [vmem:[%s2 + $0x18] sm:$0xff] 0.0
    %21 = vst [vmem:[%s2 + $0x20] sm:$0xff] 0.0
    %22 = vst [vmem:[%s2 + $0x28] sm:$0xff] 0.0
    %23 = vst [vmem:[%s2 + $0x30] sm:$0xff] 0.0
    %24 = vst [vmem:[%s2 + $0x38] sm:$0xff] 0.0
    %25 = vst [vmem:[%s2 + $0x40] sm:$0xff] 0.0
    %26 = vst [vmem:[%s2 + $0x48] sm:$0xff] 0.0
    %27 = vst [vmem:[%s2 + $0x50] sm:$0xff] 0.0
    %28 = vst [vmem:[%s2 + $0x58] sm:$0xff] 0.0
    %29 = vst [vmem:[%s2 + $0x60] sm:$0xff] 0.0
    %30 = vst [vmem:[%s2 + $0x68] sm:$0xff] 0.0
    %31 = vst [vmem:[%s2 + $0x70] sm:$0xff] 0.0
    %32 = vst [vmem:[%s2 + $0x78] sm:$0xff] 0.0
    %33 = vst [vmem:[%s3] sm:$0xff] 0.0
    %34 = vst [vmem:[%s3 + $0x8] sm:$0xff] 0.0
    %35 = vst [vmem:[%s3 + $0x10] sm:$0xff] 0.0
    %36 = vst [vmem:[%s3 + $0x18] sm:$0xff] 0.0
    %37 = vst [vmem:[%s3 + $0x20] sm:$0xff] 0.0
    %38 = vst [vmem:[%s3 + $0x28] sm:$0xff] 0.0
    %39 = vst [vmem:[%s3 + $0x30] sm:$0xff] 0.0
    %40 = vst [vmem:[%s3 + $0x38] sm:$0xff] 0.0
    %41 = vst [vmem:[%s3 + $0x40] sm:$0xff] 0.0
    %42 = vst [vmem:[%s3 + $0x48] sm:$0xff] 0.0
    %43 = vst [vmem:[%s3 + $0x50] sm:$0xff] 0.0
    %44 = vst [vmem:[%s3 + $0x58] sm:$0xff] 0.0
    %45 = vst [vmem:[%s3 + $0x60] sm:$0xff] 0.0
    %46 = vst [vmem:[%s3 + $0x68] sm:$0xff] 0.0
    %47 = vst [vmem:[%s3 + $0x70] sm:$0xff] 0.0
    %48 = vst [vmem:[%s3 + $0x78] sm:$0xff] 0.0
  $region13: #{jj_norm_forward.2} parent=0 // pred_fallthru
    _
  %v49 = vld [vmem:[%s0] sm:$0xf]
  %v50 = vlaneseq
  %v51 = vshrl.u32 %v50, 7
  %v52 = vadd.s32 %v51, 8
  %v53 = vadd.s32 %v51, 16
  %v54 = vadd.s32 %v51, 24
  %v55 = vadd.s32 %v51, 32
  %v56 = vadd.s32 %v51, 40
  %v57 = vadd.s32 %v51, 48
  %v58 = vadd.s32 %v51, 56
  %v59 = vadd.s32 %v51, 64
  %v60 = vadd.s32 %v51, 72
  %v61 = vadd.s32 %v51, 80
  %v62 = vadd.s32 %v51, 88
  %v63 = vadd.s32 %v51, 96
  %v64 = vadd.s32 %v51, 104
  %v65 = vadd.s32 %v51, 112
  %v66 = vadd.s32 %v51, 120
  %v67 = vlaneseq
  %v68 = vshrl.u32 %v67, 7
  %v69 = vsub.s32 0, %v68
  %v70 = vrot.slane %v49, %v69
  %v71 = vlaneseq
  %v72 = vshrl.u32 %v71, 7
  %v73 = vsub.s32 1, %v72
  %v74 = vrot.slane %v49, %v73
  %v75 = vlaneseq
  %v76 = vshrl.u32 %v75, 7
  %v77 = vsub.s32 2, %v76
  %v78 = vrot.slane %v49, %v77
  %v79 = vlaneseq
  %v80 = vshrl.u32 %v79, 7
  %v81 = vsub.s32 3, %v80
  %v82 = vrot.slane %v49, %v81
  %vm83 = vcmp.eq.s32.totalorder %v51, %v70
  %vm84 = vcmp.eq.s32.totalorder %v51, %v74
  %vm85 = vcmp.eq.s32.totalorder %v51, %v78
  %vm86 = vcmp.eq.s32.totalorder %v51, %v82
  %vm87 = vcmp.eq.s32.totalorder %v52, %v70
  %vm88 = vcmp.eq.s32.totalorder %v52, %v74
  %vm89 = vcmp.eq.s32.totalorder %v52, %v78
  %vm90 = vcmp.eq.s32.totalorder %v52, %v82
  %vm91 = vcmp.eq.s32.totalorder %v53, %v70
  %vm92 = vcmp.eq.s32.totalorder %v53, %v74
  %vm93 = vcmp.eq.s32.totalorder %v53, %v78
  %vm94 = vcmp.eq.s32.totalorder %v53, %v82
  %vm95 = vcmp.eq.s32.totalorder %v54, %v70
  %vm96 = vcmp.eq.s32.totalorder %v54, %v74
  %vm97 = vcmp.eq.s32.totalorder %v54, %v78
  %vm98 = vcmp.eq.s32.totalorder %v54, %v82
  %vm99 = vcmp.eq.s32.totalorder %v55, %v70
  %vm100 = vcmp.eq.s32.totalorder %v55, %v74
  %vm101 = vcmp.eq.s32.totalorder %v55, %v78
  %vm102 = vcmp.eq.s32.totalorder %v55, %v82
  %vm103 = vcmp.eq.s32.totalorder %v56, %v70
  %vm104 = vcmp.eq.s32.totalorder %v56, %v74
  %vm105 = vcmp.eq.s32.totalorder %v56, %v78
  %vm106 = vcmp.eq.s32.totalorder %v56, %v82
  %vm107 = vcmp.eq.s32.totalorder %v57, %v70
  %vm108 = vcmp.eq.s32.totalorder %v57, %v74
  %vm109 = vcmp.eq.s32.totalorder %v57, %v78
  %vm110 = vcmp.eq.s32.totalorder %v57, %v82
  %vm111 = vcmp.eq.s32.totalorder %v58, %v70
  %vm112 = vcmp.eq.s32.totalorder %v58, %v74
  %vm113 = vcmp.eq.s32.totalorder %v58, %v78
  %vm114 = vcmp.eq.s32.totalorder %v58, %v82
  %vm115 = vcmp.eq.s32.totalorder %v59, %v70
  %vm116 = vcmp.eq.s32.totalorder %v59, %v74
  %vm117 = vcmp.eq.s32.totalorder %v59, %v78
  %vm118 = vcmp.eq.s32.totalorder %v59, %v82
  %vm119 = vcmp.eq.s32.totalorder %v60, %v70
  %vm120 = vcmp.eq.s32.totalorder %v60, %v74
  %vm121 = vcmp.eq.s32.totalorder %v60, %v78
  %vm122 = vcmp.eq.s32.totalorder %v60, %v82
  %vm123 = vcmp.eq.s32.totalorder %v61, %v70
  %vm124 = vcmp.eq.s32.totalorder %v61, %v74
  %vm125 = vcmp.eq.s32.totalorder %v61, %v78
  %vm126 = vcmp.eq.s32.totalorder %v61, %v82
  %vm127 = vcmp.eq.s32.totalorder %v62, %v70
  %vm128 = vcmp.eq.s32.totalorder %v62, %v74
  %vm129 = vcmp.eq.s32.totalorder %v62, %v78
  %vm130 = vcmp.eq.s32.totalorder %v62, %v82
  %vm131 = vcmp.eq.s32.totalorder %v63, %v70
  %vm132 = vcmp.eq.s32.totalorder %v63, %v74
  %vm133 = vcmp.eq.s32.totalorder %v63, %v78
  %vm134 = vcmp.eq.s32.totalorder %v63, %v82
  %vm135 = vcmp.eq.s32.totalorder %v64, %v70
  %vm136 = vcmp.eq.s32.totalorder %v64, %v74
  %vm137 = vcmp.eq.s32.totalorder %v64, %v78
  %vm138 = vcmp.eq.s32.totalorder %v64, %v82
  %vm139 = vcmp.eq.s32.totalorder %v65, %v70
  %vm140 = vcmp.eq.s32.totalorder %v65, %v74
  %vm141 = vcmp.eq.s32.totalorder %v65, %v78
  %vm142 = vcmp.eq.s32.totalorder %v65, %v82
  %vm143 = vcmp.eq.s32.totalorder %v66, %v70
  %vm144 = vcmp.eq.s32.totalorder %v66, %v74
  %vm145 = vcmp.eq.s32.totalorder %v66, %v78
  %vm146 = vcmp.eq.s32.totalorder %v66, %v82
  %v147 = vsel %vm83, 1, 0
  %v148 = vsel %vm84, 1, 0
  %v149 = vsel %vm85, 1, 0
  %v150 = vsel %vm86, 1, 0
  %v151 = vsel %vm87, 1, 0
  %v152 = vsel %vm88, 1, 0
  %v153 = vsel %vm89, 1, 0
  %v154 = vsel %vm90, 1, 0
  %v155 = vsel %vm91, 1, 0
  %v156 = vsel %vm92, 1, 0
  %v157 = vsel %vm93, 1, 0
  %v158 = vsel %vm94, 1, 0
  %v159 = vsel %vm95, 1, 0
  %v160 = vsel %vm96, 1, 0
  %v161 = vsel %vm97, 1, 0
  %v162 = vsel %vm98, 1, 0
  %v163 = vsel %vm99, 1, 0
  %v164 = vsel %vm100, 1, 0
  %v165 = vsel %vm101, 1, 0
  %v166 = vsel %vm102, 1, 0
  %v167 = vsel %vm103, 1, 0
  %v168 = vsel %vm104, 1, 0
  %v169 = vsel %vm105, 1, 0
  %v170 = vsel %vm106, 1, 0
  %v171 = vsel %vm107, 1, 0
  %v172 = vsel %vm108, 1, 0
  %v173 = vsel %vm109, 1, 0
  %v174 = vsel %vm110, 1, 0
  %v175 = vsel %vm111, 1, 0
  %v176 = vsel %vm112, 1, 0
  %v177 = vsel %vm113, 1, 0
  %v178 = vsel %vm114, 1, 0
  %v179 = vsel %vm115, 1, 0
  %v180 = vsel %vm116, 1, 0
  %v181 = vsel %vm117, 1, 0
  %v182 = vsel %vm118, 1, 0
  %v183 = vsel %vm119, 1, 0
  %v184 = vsel %vm120, 1, 0
  %v185 = vsel %vm121, 1, 0
  %v186 = vsel %vm122, 1, 0
  %v187 = vsel %vm123, 1, 0
  %v188 = vsel %vm124, 1, 0
  %v189 = vsel %vm125, 1, 0
  %v190 = vsel %vm126, 1, 0
  %v191 = vsel %vm127, 1, 0
  %v192 = vsel %vm128, 1, 0
  %v193 = vsel %vm129, 1, 0
  %v194 = vsel %vm130, 1, 0
  %v195 = vsel %vm131, 1, 0
  %v196 = vsel %vm132, 1, 0
  %v197 = vsel %vm133, 1, 0
  %v198 = vsel %vm134, 1, 0
  %v199 = vsel %vm135, 1, 0
  %v200 = vsel %vm136, 1, 0
  %v201 = vsel %vm137, 1, 0
  %v202 = vsel %vm138, 1, 0
  %v203 = vsel %vm139, 1, 0
  %v204 = vsel %vm140, 1, 0
  %v205 = vsel %vm141, 1, 0
  %v206 = vsel %vm142, 1, 0
  %v207 = vsel %vm143, 1, 0
  %v208 = vsel %vm144, 1, 0
  %v209 = vsel %vm145, 1, 0
  %v210 = vsel %vm146, 1, 0
  %v211 = vcvt.s32.f32 %v147
  %v212 = vcvt.s32.f32 %v148
  %v213 = vcvt.s32.f32 %v149
  %v214 = vcvt.s32.f32 %v150
  %v215 = vcvt.s32.f32 %v151
  %v216 = vcvt.s32.f32 %v152
  %v217 = vcvt.s32.f32 %v153
  %v218 = vcvt.s32.f32 %v154
  %v219 = vcvt.s32.f32 %v155
  %v220 = vcvt.s32.f32 %v156
  %v221 = vcvt.s32.f32 %v157
  %v222 = vcvt.s32.f32 %v158
  %v223 = vcvt.s32.f32 %v159
  %v224 = vcvt.s32.f32 %v160
  %v225 = vcvt.s32.f32 %v161
  %v226 = vcvt.s32.f32 %v162
  %v227 = vcvt.s32.f32 %v163
  %v228 = vcvt.s32.f32 %v164
  %v229 = vcvt.s32.f32 %v165
  %v230 = vcvt.s32.f32 %v166
  %v231 = vcvt.s32.f32 %v167
  %v232 = vcvt.s32.f32 %v168
  %v233 = vcvt.s32.f32 %v169
  %v234 = vcvt.s32.f32 %v170
  %v235 = vcvt.s32.f32 %v171
  %v236 = vcvt.s32.f32 %v172
  %v237 = vcvt.s32.f32 %v173
  %v238 = vcvt.s32.f32 %v174
  %v239 = vcvt.s32.f32 %v175
  %v240 = vcvt.s32.f32 %v176
  %v241 = vcvt.s32.f32 %v177
  %v242 = vcvt.s32.f32 %v178
  %v243 = vcvt.s32.f32 %v179
  %v244 = vcvt.s32.f32 %v180
  %v245 = vcvt.s32.f32 %v181
  %v246 = vcvt.s32.f32 %v182
  %v247 = vcvt.s32.f32 %v183
  %v248 = vcvt.s32.f32 %v184
  %v249 = vcvt.s32.f32 %v185
  %v250 = vcvt.s32.f32 %v186
  %v251 = vcvt.s32.f32 %v187
  %v252 = vcvt.s32.f32 %v188
  %v253 = vcvt.s32.f32 %v189
  %v254 = vcvt.s32.f32 %v190
  %v255 = vcvt.s32.f32 %v191
  %v256 = vcvt.s32.f32 %v192
  %v257 = vcvt.s32.f32 %v193
  %v258 = vcvt.s32.f32 %v194
  %v259 = vcvt.s32.f32 %v195
  %v260 = vcvt.s32.f32 %v196
  %v261 = vcvt.s32.f32 %v197
  %v262 = vcvt.s32.f32 %v198
  %v263 = vcvt.s32.f32 %v199
  %v264 = vcvt.s32.f32 %v200
  %v265 = vcvt.s32.f32 %v201
  %v266 = vcvt.s32.f32 %v202
  %v267 = vcvt.s32.f32 %v203
  %v268 = vcvt.s32.f32 %v204
  %v269 = vcvt.s32.f32 %v205
  %v270 = vcvt.s32.f32 %v206
  %v271 = vcvt.s32.f32 %v207
  %v272 = vcvt.s32.f32 %v208
  %v273 = vcvt.s32.f32 %v209
  %v274 = vcvt.s32.f32 %v210
  %v275 = vld [vmem:[%s1] sm:$0xff]
  %v276 = vld [vmem:[%s1 + $0x8] sm:$0xff]
  %v277 = vld [vmem:[%s1 + $0x10] sm:$0xff]
  %v278 = vld [vmem:[%s1 + $0x18] sm:$0xff]
  %v279 = vld [vmem:[%s1 + $0x20] sm:$0xff]
  %v280 = vld [vmem:[%s1 + $0x28] sm:$0xff]
  %v281 = vld [vmem:[%s1 + $0x30] sm:$0xff]
  %v282 = vld [vmem:[%s1 + $0x38] sm:$0xff]
  %v283 = vld [vmem:[%s1 + $0x40] sm:$0xff]
  %v284 = vld [vmem:[%s1 + $0x48] sm:$0xff]
  %v285 = vld [vmem:[%s1 + $0x50] sm:$0xff]
  %v286 = vld [vmem:[%s1 + $0x58] sm:$0xff]
  %v287 = vld [vmem:[%s1 + $0x60] sm:$0xff]
  %v288 = vld [vmem:[%s1 + $0x68] sm:$0xff]
  %v289 = vld [vmem:[%s1 + $0x70] sm:$0xff]
  %v290 = vld [vmem:[%s1 + $0x78] sm:$0xff]
  %v291 = vld [vmem:[%s1 + $0x80] sm:$0xff]
  %v292 = vld [vmem:[%s1 + $0x88] sm:$0xff]
  %v293 = vld [vmem:[%s1 + $0x90] sm:$0xff]
  %v294 = vld [vmem:[%s1 + $0x98] sm:$0xff]
  %v295 = vld [vmem:[%s1 + $0xa0] sm:$0xff]
  %v296 = vld [vmem:[%s1 + $0xa8] sm:$0xff]
  %v297 = vld [vmem:[%s1 + $0xb0] sm:$0xff]
  %v298 = vld [vmem:[%s1 + $0xb8] sm:$0xff]
  %v299 = vld [vmem:[%s1 + $0xc0] sm:$0xff]
  %v300 = vld [vmem:[%s1 + $0xc8] sm:$0xff]
  %v301 = vld [vmem:[%s1 + $0xd0] sm:$0xff]
  %v302 = vld [vmem:[%s1 + $0xd8] sm:$0xff]
  %v303 = vld [vmem:[%s1 + $0xe0] sm:$0xff]
  %v304 = vld [vmem:[%s1 + $0xe8] sm:$0xff]
  %v305 = vld [vmem:[%s1 + $0xf0] sm:$0xff]
  %v306 = vld [vmem:[%s1 + $0xf8] sm:$0xff]
  %v307 = vld [vmem:[%s1 + $0x100] sm:$0xff]
  %v308 = vld [vmem:[%s1 + $0x108] sm:$0xff]
  %v309 = vld [vmem:[%s1 + $0x110] sm:$0xff]
  %v310 = vld [vmem:[%s1 + $0x118] sm:$0xff]
  %v311 = vld [vmem:[%s1 + $0x120] sm:$0xff]
  %v312 = vld [vmem:[%s1 + $0x128] sm:$0xff]
  %v313 = vld [vmem:[%s1 + $0x130] sm:$0xff]
  %v314 = vld [vmem:[%s1 + $0x138] sm:$0xff]
  %v315 = vld [vmem:[%s1 + $0x140] sm:$0xff]
  %v316 = vld [vmem:[%s1 + $0x148] sm:$0xff]
  %v317 = vld [vmem:[%s1 + $0x150] sm:$0xff]
  %v318 = vld [vmem:[%s1 + $0x158] sm:$0xff]
  %v319 = vld [vmem:[%s1 + $0x160] sm:$0xff]
  %v320 = vld [vmem:[%s1 + $0x168] sm:$0xff]
  %v321 = vld [vmem:[%s1 + $0x170] sm:$0xff]
  %v322 = vld [vmem:[%s1 + $0x178] sm:$0xff]
  %v323 = vld [vmem:[%s1 + $0x180] sm:$0xff]
  %v324 = vld [vmem:[%s1 + $0x188] sm:$0xff]
  %v325 = vld [vmem:[%s1 + $0x190] sm:$0xff]
  %v326 = vld [vmem:[%s1 + $0x198] sm:$0xff]
  %v327 = vld [vmem:[%s1 + $0x1a0] sm:$0xff]
  %v328 = vld [vmem:[%s1 + $0x1a8] sm:$0xff]
  %v329 = vld [vmem:[%s1 + $0x1b0] sm:$0xff]
  %v330 = vld [vmem:[%s1 + $0x1b8] sm:$0xff]
  %v331 = vld [vmem:[%s1 + $0x1c0] sm:$0xff]
  %v332 = vld [vmem:[%s1 + $0x1c8] sm:$0xff]
  %v333 = vld [vmem:[%s1 + $0x1d0] sm:$0xff]
  %v334 = vld [vmem:[%s1 + $0x1d8] sm:$0xff]
  %v335 = vld [vmem:[%s1 + $0x1e0] sm:$0xff]
  %v336 = vld [vmem:[%s1 + $0x1e8] sm:$0xff]
  %v337 = vld [vmem:[%s1 + $0x1f0] sm:$0xff]
  %v338 = vld [vmem:[%s1 + $0x1f8] sm:$0xff]
  %v339 = vld [vmem:[%s2] sm:$0xff]
  %v340 = vld [vmem:[%s2 + $0x8] sm:$0xff]
  %v341 = vld [vmem:[%s2 + $0x10] sm:$0xff]
  %v342 = vld [vmem:[%s2 + $0x18] sm:$0xff]
  %v343 = vld [vmem:[%s2 + $0x20] sm:$0xff]
  %v344 = vld [vmem:[%s2 + $0x28] sm:$0xff]
  %v345 = vld [vmem:[%s2 + $0x30] sm:$0xff]
  %v346 = vld [vmem:[%s2 + $0x38] sm:$0xff]
  %v347 = vld [vmem:[%s2 + $0x40] sm:$0xff]
  %v348 = vld [vmem:[%s2 + $0x48] sm:$0xff]
  %v349 = vld [vmem:[%s2 + $0x50] sm:$0xff]
  %v350 = vld [vmem:[%s2 + $0x58] sm:$0xff]
  %v351 = vld [vmem:[%s2 + $0x60] sm:$0xff]
  %v352 = vld [vmem:[%s2 + $0x68] sm:$0xff]
  %v353 = vld [vmem:[%s2 + $0x70] sm:$0xff]
  %v354 = vld [vmem:[%s2 + $0x78] sm:$0xff]
  %355 = vmatprep.subr.mxu0 0.0
  %v356 = vand.u32 %v290, 4294901760
  %357 = vmatpush1.msra.mxu0 %v356
  %358 = vmatprep.subr.mxu0 0.0
  %v359 = vand.u32 %v289, 4294901760
  %360 = vmatpush1.msra.mxu0 %v359
  %361 = vmatprep.subr.mxu0 0.0
  %v362 = vand.u32 %v288, 4294901760
  %363 = vmatpush1.msra.mxu0 %v362
  %364 = vmatprep.subr.mxu0 0.0
  %v365 = vand.u32 %v287, 4294901760
  %366 = vmatpush1.msra.mxu0 %v365
  %367 = vmatprep.subr.mxu0 0.0
  %v368 = vand.u32 %v286, 4294901760
  %369 = vmatpush1.msra.mxu0 %v368
  %370 = vmatprep.subr.mxu0 0.0
  %v371 = vand.u32 %v285, 4294901760
  %372 = vmatpush1.msra.mxu0 %v371
  %373 = vmatprep.subr.mxu0 0.0
  %v374 = vand.u32 %v284, 4294901760
  %375 = vmatpush1.msra.mxu0 %v374
  %376 = vmatprep.subr.mxu0 0.0
  %v377 = vand.u32 %v283, 4294901760
  %378 = vmatpush1.msra.mxu0 %v377
  %379 = vmatprep.subr.mxu0 0.0
  %v380 = vand.u32 %v282, 4294901760
  %381 = vmatpush1.msra.mxu0 %v380
  %382 = vmatprep.subr.mxu0 0.0
  %v383 = vand.u32 %v281, 4294901760
  %384 = vmatpush1.msra.mxu0 %v383
  %385 = vmatprep.subr.mxu0 0.0
  %v386 = vand.u32 %v280, 4294901760
  %387 = vmatpush1.msra.mxu0 %v386
  %388 = vmatprep.subr.mxu0 0.0
  %v389 = vand.u32 %v279, 4294901760
  %390 = vmatpush1.msra.mxu0 %v389
  %391 = vmatprep.subr.mxu0 0.0
  %v392 = vand.u32 %v278, 4294901760
  %393 = vmatpush1.msra.mxu0 %v392
  %394 = vmatprep.subr.mxu0 0.0
  %v395 = vand.u32 %v277, 4294901760
  %396 = vmatpush1.msra.mxu0 %v395
  %397 = vmatprep.subr.mxu0 0.0
  %v398 = vand.u32 %v276, 4294901760
  %399 = vmatpush1.msra.mxu0 %v398
  %400 = vmatprep.subr.mxu0 0.0
  %v401 = vand.u32 %v275, 4294901760
  %402 = vmatpush1.msra.mxu0 %v401
  %403 = vmatprep.subr.mxu0 0.0
  %v404 = vand.u32 %v306, 4294901760
  %405 = vmatpush2.msra.mxu0 %v404
  %406 = vmatprep.subr.mxu0 0.0
  %v407 = vand.u32 %v305, 4294901760
  %408 = vmatpush2.msra.mxu0 %v407
  %409 = vmatprep.subr.mxu0 0.0
  %v410 = vand.u32 %v304, 4294901760
  %411 = vmatpush2.msra.mxu0 %v410
  %412 = vmatprep.subr.mxu0 0.0
  %v413 = vand.u32 %v303, 4294901760
  %414 = vmatpush2.msra.mxu0 %v413
  %415 = vmatprep.subr.mxu0 0.0
  %v416 = vand.u32 %v302, 4294901760
  %417 = vmatpush2.msra.mxu0 %v416
  %418 = vmatprep.subr.mxu0 0.0
  %v419 = vand.u32 %v301, 4294901760
  %420 = vmatpush2.msra.mxu0 %v419
  %421 = vmatprep.subr.mxu0 0.0
  %v422 = vand.u32 %v300, 4294901760
  %423 = vmatpush2.msra.mxu0 %v422
  %424 = vmatprep.subr.mxu0 0.0
  %v425 = vand.u32 %v299, 4294901760
  %426 = vmatpush2.msra.mxu0 %v425
  %427 = vmatprep.subr.mxu0 0.0
  %v428 = vand.u32 %v298, 4294901760
  %429 = vmatpush2.msra.mxu0 %v428
  %430 = vmatprep.subr.mxu0 0.0
  %v431 = vand.u32 %v297, 4294901760
  %432 = vmatpush2.msra.mxu0 %v431
  %433 = vmatprep.subr.mxu0 0.0
  %v434 = vand.u32 %v296, 4294901760
  %435 = vmatpush2.msra.mxu0 %v434
  %436 = vmatprep.subr.mxu0 0.0
  %v437 = vand.u32 %v295, 4294901760
  %438 = vmatpush2.msra.mxu0 %v437
  %439 = vmatprep.subr.mxu0 0.0
  %v440 = vand.u32 %v294, 4294901760
  %441 = vmatpush2.msra.mxu0 %v440
  %442 = vmatprep.subr.mxu0 0.0
  %v443 = vand.u32 %v293, 4294901760
  %444 = vmatpush2.msra.mxu0 %v443
  %445 = vmatprep.subr.mxu0 0.0
  %v446 = vand.u32 %v292, 4294901760
  %447 = vmatpush2.msra.mxu0 %v446
  %448 = vmatprep.subr.mxu0 0.0
  %v449 = vand.u32 %v291, 4294901760
  %450 = vmatpush2.msra.mxu0 %v449
  %v451 = vand.u32 %v212, 4294901760
  %v452 = vsub.f32 %v212, %v451
  %v453 = vand.u32 %v452, 4294901760
  %v454 = vsub.f32 %v452, %v453
  %v455 = vand.u32 %v454, 4294901760
  %456 = vmatprep.mubr.f32.mxu0 %v455
  %v457 = vand.u32 %v211, 4294901760
  %v458 = vsub.f32 %v211, %v457
  %v459 = vand.u32 %v458, 4294901760
  %v460 = vsub.f32 %v458, %v459
  %v461 = vand.u32 %v460, 4294901760
  %462 = vmatmul.mubr.f32.gmra.mxu0 %v461
  %v463 = vpop.f32.mrf.mxu0
  %v464 = vadd.f32 0.0, %v463
  %v465 = vpop.f32.mrf.mxu0
  %v466 = vand.u32 %v216, 4294901760
  %v467 = vsub.f32 %v216, %v466
  %v468 = vand.u32 %v467, 4294901760
  %v469 = vsub.f32 %v467, %v468
  %v470 = vand.u32 %v469, 4294901760
  %471 = vmatprep.mubr.f32.mxu0 %v470
  %v472 = vand.u32 %v215, 4294901760
  %v473 = vsub.f32 %v215, %v472
  %v474 = vand.u32 %v473, 4294901760
  %v475 = vsub.f32 %v473, %v474
  %v476 = vand.u32 %v475, 4294901760
  %477 = vmatmul.mubr.f32.gmra.mxu0 %v476
  %v478 = vpop.f32.mrf.mxu0
  %v479 = vadd.f32 0.0, %v478
  %v480 = vpop.f32.mrf.mxu0
  %v481 = vand.u32 %v220, 4294901760
  %v482 = vsub.f32 %v220, %v481
  %v483 = vand.u32 %v482, 4294901760
  %v484 = vsub.f32 %v482, %v483
  %v485 = vand.u32 %v484, 4294901760
  %486 = vmatprep.mubr.f32.mxu0 %v485
  %v487 = vand.u32 %v219, 4294901760
  %v488 = vsub.f32 %v219, %v487
  %v489 = vand.u32 %v488, 4294901760
  %v490 = vsub.f32 %v488, %v489
  %v491 = vand.u32 %v490, 4294901760
  %492 = vmatmul.mubr.f32.gmra.mxu0 %v491
  %v493 = vpop.f32.mrf.mxu0
  %v494 = vadd.f32 0.0, %v493
  %v495 = vpop.f32.mrf.mxu0
  %v496 = vand.u32 %v224, 4294901760
  %v497 = vsub.f32 %v224, %v496
  %v498 = vand.u32 %v497, 4294901760
  %v499 = vsub.f32 %v497, %v498
  %v500 = vand.u32 %v499, 4294901760
  %501 = vmatprep.mubr.f32.mxu0 %v500
  %v502 = vand.u32 %v223, 4294901760
  %v503 = vsub.f32 %v223, %v502
  %v504 = vand.u32 %v503, 4294901760
  %v505 = vsub.f32 %v503, %v504
  %v506 = vand.u32 %v505, 4294901760
  %507 = vmatmul.mubr.f32.gmra.mxu0 %v506
  %v508 = vpop.f32.mrf.mxu0
  %v509 = vadd.f32 0.0, %v508
  %v510 = vpop.f32.mrf.mxu0
  %v511 = vand.u32 %v228, 4294901760
  %v512 = vsub.f32 %v228, %v511
  %v513 = vand.u32 %v512, 4294901760
  %v514 = vsub.f32 %v512, %v513
  %v515 = vand.u32 %v514, 4294901760
  %516 = vmatprep.mubr.f32.mxu0 %v515
  %v517 = vand.u32 %v227, 4294901760
  %v518 = vsub.f32 %v227, %v517
  %v519 = vand.u32 %v518, 4294901760
  %v520 = vsub.f32 %v518, %v519
  %v521 = vand.u32 %v520, 4294901760
  %522 = vmatmul.mubr.f32.gmra.mxu0 %v521
  %v523 = vpop.f32.mrf.mxu0
  %v524 = vadd.f32 0.0, %v523
  %v525 = vpop.f32.mrf.mxu0
  %v526 = vand.u32 %v232, 4294901760
  %v527 = vsub.f32 %v232, %v526
  %v528 = vand.u32 %v527, 4294901760
  %v529 = vsub.f32 %v527, %v528
  %v530 = vand.u32 %v529, 4294901760
  %531 = vmatprep.mubr.f32.mxu0 %v530
  %v532 = vand.u32 %v231, 4294901760
  %v533 = vsub.f32 %v231, %v532
  %v534 = vand.u32 %v533, 4294901760
  %v535 = vsub.f32 %v533, %v534
  %v536 = vand.u32 %v535, 4294901760
  %537 = vmatmul.mubr.f32.gmra.mxu0 %v536
  %v538 = vpop.f32.mrf.mxu0
  %v539 = vadd.f32 0.0, %v538
  %v540 = vpop.f32.mrf.mxu0
  %v541 = vand.u32 %v236, 4294901760
  %v542 = vsub.f32 %v236, %v541
  %v543 = vand.u32 %v542, 4294901760
  %v544 = vsub.f32 %v542, %v543
  %v545 = vand.u32 %v544, 4294901760
  %546 = vmatprep.mubr.f32.mxu0 %v545
  %v547 = vand.u32 %v235, 4294901760
  %v548 = vsub.f32 %v235, %v547
  %v549 = vand.u32 %v548, 4294901760
  %v550 = vsub.f32 %v548, %v549
  %v551 = vand.u32 %v550, 4294901760
  %552 = vmatmul.mubr.f32.gmra.mxu0 %v551
  %v553 = vpop.f32.mrf.mxu0
  %v554 = vadd.f32 0.0, %v553
  %v555 = vpop.f32.mrf.mxu0
  %v556 = vand.u32 %v240, 4294901760
  %v557 = vsub.f32 %v240, %v556
  %v558 = vand.u32 %v557, 4294901760
  %v559 = vsub.f32 %v557, %v558
  %v560 = vand.u32 %v559, 4294901760
  %561 = vmatprep.mubr.f32.mxu0 %v560
  %v562 = vand.u32 %v239, 4294901760
  %v563 = vsub.f32 %v239, %v562
  %v564 = vand.u32 %v563, 4294901760
  %v565 = vsub.f32 %v563, %v564
  %v566 = vand.u32 %v565, 4294901760
  %567 = vmatmul.mubr.f32.gmra.mxu0 %v566
  %v568 = vpop.f32.mrf.mxu0
  %v569 = vadd.f32 0.0, %v568
  %v570 = vpop.f32.mrf.mxu0
  %v571 = vand.u32 %v244, 4294901760
  %v572 = vsub.f32 %v244, %v571
  %v573 = vand.u32 %v572, 4294901760
  %v574 = vsub.f32 %v572, %v573
  %v575 = vand.u32 %v574, 4294901760
  %576 = vmatprep.mubr.f32.mxu0 %v575
  %v577 = vand.u32 %v243, 4294901760
  %v578 = vsub.f32 %v243, %v577
  %v579 = vand.u32 %v578, 4294901760
  %v580 = vsub.f32 %v578, %v579
  %v581 = vand.u32 %v580, 4294901760
  %582 = vmatmul.mubr.f32.gmra.mxu0 %v581
  %v583 = vpop.f32.mrf.mxu0
  %v584 = vadd.f32 0.0, %v583
  %v585 = vpop.f32.mrf.mxu0
  %v586 = vand.u32 %v248, 4294901760
  %v587 = vsub.f32 %v248, %v586
  %v588 = vand.u32 %v587, 4294901760
  %v589 = vsub.f32 %v587, %v588
  %v590 = vand.u32 %v589, 4294901760
  %591 = vmatprep.mubr.f32.mxu0 %v590
  %v592 = vand.u32 %v247, 4294901760
  %v593 = vsub.f32 %v247, %v592
  %v594 = vand.u32 %v593, 4294901760
  %v595 = vsub.f32 %v593, %v594
  %v596 = vand.u32 %v595, 4294901760
  %597 = vmatmul.mubr.f32.gmra.mxu0 %v596
  %v598 = vpop.f32.mrf.mxu0
  %v599 = vadd.f32 0.0, %v598
  %v600 = vpop.f32.mrf.mxu0
  %v601 = vand.u32 %v252, 4294901760
  %v602 = vsub.f32 %v252, %v601
  %v603 = vand.u32 %v602, 4294901760
  %v604 = vsub.f32 %v602, %v603
  %v605 = vand.u32 %v604, 4294901760
  %606 = vmatprep.mubr.f32.mxu0 %v605
  %v607 = vand.u32 %v251, 4294901760
  %v608 = vsub.f32 %v251, %v607
  %v609 = vand.u32 %v608, 4294901760
  %v610 = vsub.f32 %v608, %v609
  %v611 = vand.u32 %v610, 4294901760
  %612 = vmatmul.mubr.f32.gmra.mxu0 %v611
  %v613 = vpop.f32.mrf.mxu0
  %v614 = vadd.f32 0.0, %v613
  %v615 = vpop.f32.mrf.mxu0
  %v616 = vand.u32 %v256, 4294901760
  %v617 = vsub.f32 %v256, %v616
  %v618 = vand.u32 %v617, 4294901760
  %v619 = vsub.f32 %v617, %v618
  %v620 = vand.u32 %v619, 4294901760
  %621 = vmatprep.mubr.f32.mxu0 %v620
  %v622 = vand.u32 %v255, 4294901760
  %v623 = vsub.f32 %v255, %v622
  %v624 = vand.u32 %v623, 4294901760
  %v625 = vsub.f32 %v623, %v624
  %v626 = vand.u32 %v625, 4294901760
  %627 = vmatmul.mubr.f32.gmra.mxu0 %v626
  %v628 = vpop.f32.mrf.mxu0
  %v629 = vadd.f32 0.0, %v628
  %v630 = vpop.f32.mrf.mxu0
  %v631 = vand.u32 %v260, 4294901760
  %v632 = vsub.f32 %v260, %v631
  %v633 = vand.u32 %v632, 4294901760
  %v634 = vsub.f32 %v632, %v633
  %v635 = vand.u32 %v634, 4294901760
  %636 = vmatprep.mubr.f32.mxu0 %v635
  %v637 = vand.u32 %v259, 4294901760
  %v638 = vsub.f32 %v259, %v637
  %v639 = vand.u32 %v638, 4294901760
  %v640 = vsub.f32 %v638, %v639
  %v641 = vand.u32 %v640, 4294901760
  %642 = vmatmul.mubr.f32.gmra.mxu0 %v641
  %v643 = vpop.f32.mrf.mxu0
  %v644 = vadd.f32 0.0, %v643
  %v645 = vpop.f32.mrf.mxu0
  %v646 = vand.u32 %v264, 4294901760
  %v647 = vsub.f32 %v264, %v646
  %v648 = vand.u32 %v647, 4294901760
  %v649 = vsub.f32 %v647, %v648
  %v650 = vand.u32 %v649, 4294901760
  %651 = vmatprep.mubr.f32.mxu0 %v650
  %v652 = vand.u32 %v263, 4294901760
  %v653 = vsub.f32 %v263, %v652
  %v654 = vand.u32 %v653, 4294901760
  %v655 = vsub.f32 %v653, %v654
  %v656 = vand.u32 %v655, 4294901760
  %657 = vmatmul.mubr.f32.gmra.mxu0 %v656
  %v658 = vpop.f32.mrf.mxu0
  %v659 = vadd.f32 0.0, %v658
  %v660 = vpop.f32.mrf.mxu0
  %v661 = vand.u32 %v268, 4294901760
  %v662 = vsub.f32 %v268, %v661
  %v663 = vand.u32 %v662, 4294901760
  %v664 = vsub.f32 %v662, %v663
  %v665 = vand.u32 %v664, 4294901760
  %666 = vmatprep.mubr.f32.mxu0 %v665
  %v667 = vand.u32 %v267, 4294901760
  %v668 = vsub.f32 %v267, %v667
  %v669 = vand.u32 %v668, 4294901760
  %v670 = vsub.f32 %v668, %v669
  %v671 = vand.u32 %v670, 4294901760
  %672 = vmatmul.mubr.f32.gmra.mxu0 %v671
  %v673 = vpop.f32.mrf.mxu0
  %v674 = vadd.f32 0.0, %v673
  %v675 = vpop.f32.mrf.mxu0
  %v676 = vand.u32 %v272, 4294901760
  %v677 = vsub.f32 %v272, %v676
  %v678 = vand.u32 %v677, 4294901760
  %v679 = vsub.f32 %v677, %v678
  %v680 = vand.u32 %v679, 4294901760
  %681 = vmatprep.mubr.f32.mxu0 %v680
  %v682 = vand.u32 %v271, 4294901760
  %v683 = vsub.f32 %v271, %v682
  %v684 = vand.u32 %v683, 4294901760
  %v685 = vsub.f32 %v683, %v684
  %v686 = vand.u32 %v685, 4294901760
  %687 = vmatmul.mubr.f32.gmra.mxu0 %v686
  %v688 = vpop.f32.mrf.mxu0
  %v689 = vadd.f32 0.0, %v688
  %v690 = vpop.f32.mrf.mxu0
  %691 = vdwg.mxu0
  %692 = vmatprep.subr.mxu0 0.0
  %v693 = vand.u32 %v290, 4294901760
  %v694 = vsub.f32 %v290, %v693
  %v695 = vand.u32 %v694, 4294901760
  %v696 = vsub.f32 %v694, %v695
  %v697 = vand.u32 %v696, 4294901760
  %698 = vmatpush1.msra.mxu0 %v697
  %699 = vmatprep.subr.mxu0 0.0
  %v700 = vand.u32 %v289, 4294901760
  %v701 = vsub.f32 %v289, %v700
  %v702 = vand.u32 %v701, 4294901760
  %v703 = vsub.f32 %v701, %v702
  %v704 = vand.u32 %v703, 4294901760
  %705 = vmatpush1.msra.mxu0 %v704
  %706 = vmatprep.subr.mxu0 0.0
  %v707 = vand.u32 %v288, 4294901760
  %v708 = vsub.f32 %v288, %v707
  %v709 = vand.u32 %v708, 4294901760
  %v710 = vsub.f32 %v708, %v709
  %v711 = vand.u32 %v710, 4294901760
  %712 = vmatpush1.msra.mxu0 %v711
  %713 = vmatprep.subr.mxu0 0.0
  %v714 = vand.u32 %v287, 4294901760
  %v715 = vsub.f32 %v287, %v714
  %v716 = vand.u32 %v715, 4294901760
  %v717 = vsub.f32 %v715, %v716
  %v718 = vand.u32 %v717, 4294901760
  %719 = vmatpush1.msra.mxu0 %v718
  %720 = vmatprep.subr.mxu0 0.0
  %v721 = vand.u32 %v286, 4294901760
  %v722 = vsub.f32 %v286, %v721
  %v723 = vand.u32 %v722, 4294901760
  %v724 = vsub.f32 %v722, %v723
  %v725 = vand.u32 %v724, 4294901760
  %726 = vmatpush1.msra.mxu0 %v725
  %727 = vmatprep.subr.mxu0 0.0
  %v728 = vand.u32 %v285, 4294901760
  %v729 = vsub.f32 %v285, %v728
  %v730 = vand.u32 %v729, 4294901760
  %v731 = vsub.f32 %v729, %v730
  %v732 = vand.u32 %v731, 4294901760
  %733 = vmatpush1.msra.mxu0 %v732
  %734 = vmatprep.subr.mxu0 0.0
  %v735 = vand.u32 %v284, 4294901760
  %v736 = vsub.f32 %v284, %v735
  %v737 = vand.u32 %v736, 4294901760
  %v738 = vsub.f32 %v736, %v737
  %v739 = vand.u32 %v738, 4294901760
  %740 = vmatpush1.msra.mxu0 %v739
  %741 = vmatprep.subr.mxu0 0.0
  %v742 = vand.u32 %v283, 4294901760
  %v743 = vsub.f32 %v283, %v742
  %v744 = vand.u32 %v743, 4294901760
  %v745 = vsub.f32 %v743, %v744
  %v746 = vand.u32 %v745, 4294901760
  %747 = vmatpush1.msra.mxu0 %v746
  %748 = vmatprep.subr.mxu0 0.0
  %v749 = vand.u32 %v282, 4294901760
  %v750 = vsub.f32 %v282, %v749
  %v751 = vand.u32 %v750, 4294901760
  %v752 = vsub.f32 %v750, %v751
  %v753 = vand.u32 %v752, 4294901760
  %754 = vmatpush1.msra.mxu0 %v753
  %755 = vmatprep.subr.mxu0 0.0
  %v756 = vand.u32 %v281, 4294901760
  %v757 = vsub.f32 %v281, %v756
  %v758 = vand.u32 %v757, 4294901760
  %v759 = vsub.f32 %v757, %v758
  %v760 = vand.u32 %v759, 4294901760
  %761 = vmatpush1.msra.mxu0 %v760
  %762 = vmatprep.subr.mxu0 0.0
  %v763 = vand.u32 %v280, 4294901760
  %v764 = vsub.f32 %v280, %v763
  %v765 = vand.u32 %v764, 4294901760
  %v766 = vsub.f32 %v764, %v765
  %v767 = vand.u32 %v766, 4294901760
  %768 = vmatpush1.msra.mxu0 %v767
  %769 = vmatprep.subr.mxu0 0.0
  %v770 = vand.u32 %v279, 4294901760
  %v771 = vsub.f32 %v279, %v770
  %v772 = vand.u32 %v771, 4294901760
  %v773 = vsub.f32 %v771, %v772
  %v774 = vand.u32 %v773, 4294901760
  %775 = vmatpush1.msra.mxu0 %v774
  %776 = vmatprep.subr.mxu0 0.0
  %v777 = vand.u32 %v278, 4294901760
  %v778 = vsub.f32 %v278, %v777
  %v779 = vand.u32 %v778, 4294901760
  %v780 = vsub.f32 %v778, %v779
  %v781 = vand.u32 %v780, 4294901760
  %782 = vmatpush1.msra.mxu0 %v781
  %783 = vmatprep.subr.mxu0 0.0
  %v784 = vand.u32 %v277, 4294901760
  %v785 = vsub.f32 %v277, %v784
  %v786 = vand.u32 %v785, 4294901760
  %v787 = vsub.f32 %v785, %v786
  %v788 = vand.u32 %v787, 4294901760
  %789 = vmatpush1.msra.mxu0 %v788
  %790 = vmatprep.subr.mxu0 0.0
  %v791 = vand.u32 %v276, 4294901760
  %v792 = vsub.f32 %v276, %v791
  %v793 = vand.u32 %v792, 4294901760
  %v794 = vsub.f32 %v792, %v793
  %v795 = vand.u32 %v794, 4294901760
  %796 = vmatpush1.msra.mxu0 %v795
  %797 = vmatprep.subr.mxu0 0.0
  %v798 = vand.u32 %v275, 4294901760
  %v799 = vsub.f32 %v275, %v798
  %v800 = vand.u32 %v799, 4294901760
  %v801 = vsub.f32 %v799, %v800
  %v802 = vand.u32 %v801, 4294901760
  %803 = vmatpush1.msra.mxu0 %v802
  %804 = vmatprep.subr.mxu0 0.0
  %v805 = vand.u32 %v306, 4294901760
  %v806 = vsub.f32 %v306, %v805
  %v807 = vand.u32 %v806, 4294901760
  %v808 = vsub.f32 %v806, %v807
  %v809 = vand.u32 %v808, 4294901760
  %810 = vmatpush2.msra.mxu0 %v809
  %811 = vmatprep.subr.mxu0 0.0
  %v812 = vand.u32 %v305, 4294901760
  %v813 = vsub.f32 %v305, %v812
  %v814 = vand.u32 %v813, 4294901760
  %v815 = vsub.f32 %v813, %v814
  %v816 = vand.u32 %v815, 4294901760
  %817 = vmatpush2.msra.mxu0 %v816
  %818 = vmatprep.subr.mxu0 0.0
  %v819 = vand.u32 %v304, 4294901760
  %v820 = vsub.f32 %v304, %v819
  %v821 = vand.u32 %v820, 4294901760
  %v822 = vsub.f32 %v820, %v821
  %v823 = vand.u32 %v822, 4294901760
  %824 = vmatpush2.msra.mxu0 %v823
  %825 = vmatprep.subr.mxu0 0.0
  %v826 = vand.u32 %v303, 4294901760
  %v827 = vsub.f32 %v303, %v826
  %v828 = vand.u32 %v827, 4294901760
  %v829 = vsub.f32 %v827, %v828
  %v830 = vand.u32 %v829, 4294901760
  %831 = vmatpush2.msra.mxu0 %v830
  %832 = vmatprep.subr.mxu0 0.0
  %v833 = vand.u32 %v302, 4294901760
  %v834 = vsub.f32 %v302, %v833
  %v835 = vand.u32 %v834, 4294901760
  %v836 = vsub.f32 %v834, %v835
  %v837 = vand.u32 %v836, 4294901760
  %838 = vmatpush2.msra.mxu0 %v837
  %839 = vmatprep.subr.mxu0 0.0
  %v840 = vand.u32 %v301, 4294901760
  %v841 = vsub.f32 %v301, %v840
  %v842 = vand.u32 %v841, 4294901760
  %v843 = vsub.f32 %v841, %v842
  %v844 = vand.u32 %v843, 4294901760
  %845 = vmatpush2.msra.mxu0 %v844
  %846 = vmatprep.subr.mxu0 0.0
  %v847 = vand.u32 %v300, 4294901760
  %v848 = vsub.f32 %v300, %v847
  %v849 = vand.u32 %v848, 4294901760
  %v850 = vsub.f32 %v848, %v849
  %v851 = vand.u32 %v850, 4294901760
  %852 = vmatpush2.msra.mxu0 %v851
  %853 = vmatprep.subr.mxu0 0.0
  %v854 = vand.u32 %v299, 4294901760
  %v855 = vsub.f32 %v299, %v854
  %v856 = vand.u32 %v855, 4294901760
  %v857 = vsub.f32 %v855, %v856
  %v858 = vand.u32 %v857, 4294901760
  %859 = vmatpush2.msra.mxu0 %v858
  %860 = vmatprep.subr.mxu0 0.0
  %v861 = vand.u32 %v298, 4294901760
  %v862 = vsub.f32 %v298, %v861
  %v863 = vand.u32 %v862, 4294901760
  %v864 = vsub.f32 %v862, %v863
  %v865 = vand.u32 %v864, 4294901760
  %866 = vmatpush2.msra.mxu0 %v865
  %867 = vmatprep.subr.mxu0 0.0
  %v868 = vand.u32 %v297, 4294901760
  %v869 = vsub.f32 %v297, %v868
  %v870 = vand.u32 %v869, 4294901760
  %v871 = vsub.f32 %v869, %v870
  %v872 = vand.u32 %v871, 4294901760
  %873 = vmatpush2.msra.mxu0 %v872
  %874 = vmatprep.subr.mxu0 0.0
  %v875 = vand.u32 %v296, 4294901760
  %v876 = vsub.f32 %v296, %v875
  %v877 = vand.u32 %v876, 4294901760
  %v878 = vsub.f32 %v876, %v877
  %v879 = vand.u32 %v878, 4294901760
  %880 = vmatpush2.msra.mxu0 %v879
  %881 = vmatprep.subr.mxu0 0.0
  %v882 = vand.u32 %v295, 4294901760
  %v883 = vsub.f32 %v295, %v882
  %v884 = vand.u32 %v883, 4294901760
  %v885 = vsub.f32 %v883, %v884
  %v886 = vand.u32 %v885, 4294901760
  %887 = vmatpush2.msra.mxu0 %v886
  %888 = vmatprep.subr.mxu0 0.0
  %v889 = vand.u32 %v294, 4294901760
  %v890 = vsub.f32 %v294, %v889
  %v891 = vand.u32 %v890, 4294901760
  %v892 = vsub.f32 %v890, %v891
  %v893 = vand.u32 %v892, 4294901760
  %894 = vmatpush2.msra.mxu0 %v893
  %895 = vmatprep.subr.mxu0 0.0
  %v896 = vand.u32 %v293, 4294901760
  %v897 = vsub.f32 %v293, %v896
  %v898 = vand.u32 %v897, 4294901760
  %v899 = vsub.f32 %v897, %v898
  %v900 = vand.u32 %v899, 4294901760
  %901 = vmatpush2.msra.mxu0 %v900
  %902 = vmatprep.subr.mxu0 0.0
  %v903 = vand.u32 %v292, 4294901760
  %v904 = vsub.f32 %v292, %v903
  %v905 = vand.u32 %v904, 4294901760
  %v906 = vsub.f32 %v904, %v905
  %v907 = vand.u32 %v906, 4294901760
  %908 = vmatpush2.msra.mxu0 %v907
  %909 = vmatprep.subr.mxu0 0.0
  %v910 = vand.u32 %v291, 4294901760
  %v911 = vsub.f32 %v291, %v910
  %v912 = vand.u32 %v911, 4294901760
  %v913 = vsub.f32 %v911, %v912
  %v914 = vand.u32 %v913, 4294901760
  %915 = vmatpush2.msra.mxu0 %v914
  %v916 = vand.u32 %v212, 4294901760
  %917 = vmatprep.mubr.f32.mxu0 %v916
  %v918 = vand.u32 %v211, 4294901760
  %919 = vmatmul.mubr.f32.gmra.mxu0 %v918
  %v920 = vpop.f32.mrf.mxu0
  %v921 = vadd.f32 %v464, %v920
  %v922 = vpop.f32.mrf.mxu0
  %v923 = vand.u32 %v216, 4294901760
  %924 = vmatprep.mubr.f32.mxu0 %v923
  %v925 = vand.u32 %v215, 4294901760
  %926 = vmatmul.mubr.f32.gmra.mxu0 %v925
  %v927 = vpop.f32.mrf.mxu0
  %v928 = vadd.f32 %v479, %v927
  %v929 = vpop.f32.mrf.mxu0
  %v930 = vand.u32 %v220, 4294901760
  %931 = vmatprep.mubr.f32.mxu0 %v930
  %v932 = vand.u32 %v219, 4294901760
  %933 = vmatmul.mubr.f32.gmra.mxu0 %v932
  %v934 = vpop.f32.mrf.mxu0
  %v935 = vadd.f32 %v494, %v934
  %v936 = vpop.f32.mrf.mxu0
  %v937 = vand.u32 %v224, 4294901760
  %938 = vmatprep.mubr.f32.mxu0 %v937
  %v939 = vand.u32 %v223, 4294901760
  %940 = vmatmul.mubr.f32.gmra.mxu0 %v939
  %v941 = vpop.f32.mrf.mxu0
  %v942 = vadd.f32 %v509, %v941
  %v943 = vpop.f32.mrf.mxu0
  %v944 = vand.u32 %v228, 4294901760
  %945 = vmatprep.mubr.f32.mxu0 %v944
  %v946 = vand.u32 %v227, 4294901760
  %947 = vmatmul.mubr.f32.gmra.mxu0 %v946
  %v948 = vpop.f32.mrf.mxu0
  %v949 = vadd.f32 %v524, %v948
  %v950 = vpop.f32.mrf.mxu0
  %v951 = vand.u32 %v232, 4294901760
  %952 = vmatprep.mubr.f32.mxu0 %v951
  %v953 = vand.u32 %v231, 4294901760
  %954 = vmatmul.mubr.f32.gmra.mxu0 %v953
  %v955 = vpop.f32.mrf.mxu0
  %v956 = vadd.f32 %v539, %v955
  %v957 = vpop.f32.mrf.mxu0
  %v958 = vand.u32 %v236, 4294901760
  %959 = vmatprep.mubr.f32.mxu0 %v958
  %v960 = vand.u32 %v235, 4294901760
  %961 = vmatmul.mubr.f32.gmra.mxu0 %v960
  %v962 = vpop.f32.mrf.mxu0
  %v963 = vadd.f32 %v554, %v962
  %v964 = vpop.f32.mrf.mxu0
  %v965 = vand.u32 %v240, 4294901760
  %966 = vmatprep.mubr.f32.mxu0 %v965
  %v967 = vand.u32 %v239, 4294901760
  %968 = vmatmul.mubr.f32.gmra.mxu0 %v967
  %v969 = vpop.f32.mrf.mxu0
  %v970 = vadd.f32 %v569, %v969
  %v971 = vpop.f32.mrf.mxu0
  %v972 = vand.u32 %v244, 4294901760
  %973 = vmatprep.mubr.f32.mxu0 %v972
  %v974 = vand.u32 %v243, 4294901760
  %975 = vmatmul.mubr.f32.gmra.mxu0 %v974
  %v976 = vpop.f32.mrf.mxu0
  %v977 = vadd.f32 %v584, %v976
  %v978 = vpop.f32.mrf.mxu0
  %v979 = vand.u32 %v248, 4294901760
  %980 = vmatprep.mubr.f32.mxu0 %v979
  %v981 = vand.u32 %v247, 4294901760
  %982 = vmatmul.mubr.f32.gmra.mxu0 %v981
  %v983 = vpop.f32.mrf.mxu0
  %v984 = vadd.f32 %v599, %v983
  %v985 = vpop.f32.mrf.mxu0
  %v986 = vand.u32 %v252, 4294901760
  %987 = vmatprep.mubr.f32.mxu0 %v986
  %v988 = vand.u32 %v251, 4294901760
  %989 = vmatmul.mubr.f32.gmra.mxu0 %v988
  %v990 = vpop.f32.mrf.mxu0
  %v991 = vadd.f32 %v614, %v990
  %v992 = vpop.f32.mrf.mxu0
  %v993 = vand.u32 %v256, 4294901760
  %994 = vmatprep.mubr.f32.mxu0 %v993
  %v995 = vand.u32 %v255, 4294901760
  %996 = vmatmul.mubr.f32.gmra.mxu0 %v995
  %v997 = vpop.f32.mrf.mxu0
  %v998 = vadd.f32 %v629, %v997
  %v999 = vpop.f32.mrf.mxu0
  %v1000 = vand.u32 %v260, 4294901760
  %1001 = vmatprep.mubr.f32.mxu0 %v1000
  %v1002 = vand.u32 %v259, 4294901760
  %1003 = vmatmul.mubr.f32.gmra.mxu0 %v1002
  %v1004 = vpop.f32.mrf.mxu0
  %v1005 = vadd.f32 %v644, %v1004
  %v1006 = vpop.f32.mrf.mxu0
  %v1007 = vand.u32 %v264, 4294901760
  %1008 = vmatprep.mubr.f32.mxu0 %v1007
  %v1009 = vand.u32 %v263, 4294901760
  %1010 = vmatmul.mubr.f32.gmra.mxu0 %v1009
  %v1011 = vpop.f32.mrf.mxu0
  %v1012 = vadd.f32 %v659, %v1011
  %v1013 = vpop.f32.mrf.mxu0
  %v1014 = vand.u32 %v268, 4294901760
  %1015 = vmatprep.mubr.f32.mxu0 %v1014
  %v1016 = vand.u32 %v267, 4294901760
  %1017 = vmatmul.mubr.f32.gmra.mxu0 %v1016
  %v1018 = vpop.f32.mrf.mxu0
  %v1019 = vadd.f32 %v674, %v1018
  %v1020 = vpop.f32.mrf.mxu0
  %v1021 = vand.u32 %v272, 4294901760
  %1022 = vmatprep.mubr.f32.mxu0 %v1021
  %v1023 = vand.u32 %v271, 4294901760
  %1024 = vmatmul.mubr.f32.gmra.mxu0 %v1023
  %v1025 = vpop.f32.mrf.mxu0
  %v1026 = vadd.f32 %v689, %v1025
  %v1027 = vpop.f32.mrf.mxu0
  %1028 = vdwg.mxu0
  %1029 = vmatprep.subr.mxu0 0.0
  %v1030 = vand.u32 %v290, 4294901760
  %v1031 = vsub.f32 %v290, %v1030
  %1032 = vmatpush1.msra.mxu0 %v1031
  %1033 = vmatprep.subr.mxu0 0.0
  %v1034 = vand.u32 %v289, 4294901760
  %v1035 = vsub.f32 %v289, %v1034
  %1036 = vmatpush1.msra.mxu0 %v1035
  %1037 = vmatprep.subr.mxu0 0.0
  %v1038 = vand.u32 %v288, 4294901760
  %v1039 = vsub.f32 %v288, %v1038
  %1040 = vmatpush1.msra.mxu0 %v1039
  %1041 = vmatprep.subr.mxu0 0.0
  %v1042 = vand.u32 %v287, 4294901760
  %v1043 = vsub.f32 %v287, %v1042
  %1044 = vmatpush1.msra.mxu0 %v1043
  %1045 = vmatprep.subr.mxu0 0.0
  %v1046 = vand.u32 %v286, 4294901760
  %v1047 = vsub.f32 %v286, %v1046
  %1048 = vmatpush1.msra.mxu0 %v1047
  %1049 = vmatprep.subr.mxu0 0.0
  %v1050 = vand.u32 %v285, 4294901760
  %v1051 = vsub.f32 %v285, %v1050
  %1052 = vmatpush1.msra.mxu0 %v1051
  %1053 = vmatprep.subr.mxu0 0.0
  %v1054 = vand.u32 %v284, 4294901760
  %v1055 = vsub.f32 %v284, %v1054
  %1056 = vmatpush1.msra.mxu0 %v1055
  %1057 = vmatprep.subr.mxu0 0.0
  %v1058 = vand.u32 %v283, 4294901760
  %v1059 = vsub.f32 %v283, %v1058
  %1060 = vmatpush1.msra.mxu0 %v1059
  %1061 = vmatprep.subr.mxu0 0.0
  %v1062 = vand.u32 %v282, 4294901760
  %v1063 = vsub.f32 %v282, %v1062
  %1064 = vmatpush1.msra.mxu0 %v1063
  %1065 = vmatprep.subr.mxu0 0.0
  %v1066 = vand.u32 %v281, 4294901760
  %v1067 = vsub.f32 %v281, %v1066
  %1068 = vmatpush1.msra.mxu0 %v1067
  %1069 = vmatprep.subr.mxu0 0.0
  %v1070 = vand.u32 %v280, 4294901760
  %v1071 = vsub.f32 %v280, %v1070
  %1072 = vmatpush1.msra.mxu0 %v1071
  %1073 = vmatprep.subr.mxu0 0.0
  %v1074 = vand.u32 %v279, 4294901760
  %v1075 = vsub.f32 %v279, %v1074
  %1076 = vmatpush1.msra.mxu0 %v1075
  %1077 = vmatprep.subr.mxu0 0.0
  %v1078 = vand.u32 %v278, 4294901760
  %v1079 = vsub.f32 %v278, %v1078
  %1080 = vmatpush1.msra.mxu0 %v1079
  %1081 = vmatprep.subr.mxu0 0.0
  %v1082 = vand.u32 %v277, 4294901760
  %v1083 = vsub.f32 %v277, %v1082
  %1084 = vmatpush1.msra.mxu0 %v1083
  %1085 = vmatprep.subr.mxu0 0.0
  %v1086 = vand.u32 %v276, 4294901760
  %v1087 = vsub.f32 %v276, %v1086
  %1088 = vmatpush1.msra.mxu0 %v1087
  %1089 = vmatprep.subr.mxu0 0.0
  %v1090 = vand.u32 %v275, 4294901760
  %v1091 = vsub.f32 %v275, %v1090
  %1092 = vmatpush1.msra.mxu0 %v1091
  %1093 = vmatprep.subr.mxu0 0.0
  %v1094 = vand.u32 %v306, 4294901760
  %v1095 = vsub.f32 %v306, %v1094
  %1096 = vmatpush2.msra.mxu0 %v1095
  %1097 = vmatprep.subr.mxu0 0.0
  %v1098 = vand.u32 %v305, 4294901760
  %v1099 = vsub.f32 %v305, %v1098
  %1100 = vmatpush2.msra.mxu0 %v1099
  %1101 = vmatprep.subr.mxu0 0.0
  %v1102 = vand.u32 %v304, 4294901760
  %v1103 = vsub.f32 %v304, %v1102
  %1104 = vmatpush2.msra.mxu0 %v1103
  %1105 = vmatprep.subr.mxu0 0.0
  %v1106 = vand.u32 %v303, 4294901760
  %v1107 = vsub.f32 %v303, %v1106
  %1108 = vmatpush2.msra.mxu0 %v1107
  %1109 = vmatprep.subr.mxu0 0.0
  %v1110 = vand.u32 %v302, 4294901760
  %v1111 = vsub.f32 %v302, %v1110
  %1112 = vmatpush2.msra.mxu0 %v1111
  %1113 = vmatprep.subr.mxu0 0.0
  %v1114 = vand.u32 %v301, 4294901760
  %v1115 = vsub.f32 %v301, %v1114
  %1116 = vmatpush2.msra.mxu0 %v1115
  %1117 = vmatprep.subr.mxu0 0.0
  %v1118 = vand.u32 %v300, 4294901760
  %v1119 = vsub.f32 %v300, %v1118
  %1120 = vmatpush2.msra.mxu0 %v1119
  %1121 = vmatprep.subr.mxu0 0.0
  %v1122 = vand.u32 %v299, 4294901760
  %v1123 = vsub.f32 %v299, %v1122
  %1124 = vmatpush2.msra.mxu0 %v1123
  %1125 = vmatprep.subr.mxu0 0.0
  %v1126 = vand.u32 %v298, 4294901760
  %v1127 = vsub.f32 %v298, %v1126
  %1128 = vmatpush2.msra.mxu0 %v1127
  %1129 = vmatprep.subr.mxu0 0.0
  %v1130 = vand.u32 %v297, 4294901760
  %v1131 = vsub.f32 %v297, %v1130
  %1132 = vmatpush2.msra.mxu0 %v1131
  %1133 = vmatprep.subr.mxu0 0.0
  %v1134 = vand.u32 %v296, 4294901760
  %v1135 = vsub.f32 %v296, %v1134
  %1136 = vmatpush2.msra.mxu0 %v1135
  %1137 = vmatprep.subr.mxu0 0.0
  %v1138 = vand.u32 %v295, 4294901760
  %v1139 = vsub.f32 %v295, %v1138
  %1140 = vmatpush2.msra.mxu0 %v1139
  %1141 = vmatprep.subr.mxu0 0.0
  %v1142 = vand.u32 %v294, 4294901760
  %v1143 = vsub.f32 %v294, %v1142
  %1144 = vmatpush2.msra.mxu0 %v1143
  %1145 = vmatprep.subr.mxu0 0.0
  %v1146 = vand.u32 %v293, 4294901760
  %v1147 = vsub.f32 %v293, %v1146
  %1148 = vmatpush2.msra.mxu0 %v1147
  %1149 = vmatprep.subr.mxu0 0.0
  %v1150 = vand.u32 %v292, 4294901760
  %v1151 = vsub.f32 %v292, %v1150
  %1152 = vmatpush2.msra.mxu0 %v1151
  %1153 = vmatprep.subr.mxu0 0.0
  %v1154 = vand.u32 %v291, 4294901760
  %v1155 = vsub.f32 %v291, %v1154
  %1156 = vmatpush2.msra.mxu0 %v1155
  %v1157 = vand.u32 %v212, 4294901760
  %v1158 = vsub.f32 %v212, %v1157
  %1159 = vmatprep.mubr.f32.mxu0 %v1158
  %v1160 = vand.u32 %v211, 4294901760
  %v1161 = vsub.f32 %v211, %v1160
  %1162 = vmatmul.mubr.f32.gmra.mxu0 %v1161
  %v1163 = vpop.f32.mrf.mxu0
  %v1164 = vadd.f32 %v921, %v1163
  %v1165 = vpop.f32.mrf.mxu0
  %v1166 = vand.u32 %v216, 4294901760
  %v1167 = vsub.f32 %v216, %v1166
  %1168 = vmatprep.mubr.f32.mxu0 %v1167
  %v1169 = vand.u32 %v215, 4294901760
  %v1170 = vsub.f32 %v215, %v1169
  %1171 = vmatmul.mubr.f32.gmra.mxu0 %v1170
  %v1172 = vpop.f32.mrf.mxu0
  %v1173 = vadd.f32 %v928, %v1172
  %v1174 = vpop.f32.mrf.mxu0
  %v1175 = vand.u32 %v220, 4294901760
  %v1176 = vsub.f32 %v220, %v1175
  %1177 = vmatprep.mubr.f32.mxu0 %v1176
  %v1178 = vand.u32 %v219, 4294901760
  %v1179 = vsub.f32 %v219, %v1178
  %1180 = vmatmul.mubr.f32.gmra.mxu0 %v1179
  %v1181 = vpop.f32.mrf.mxu0
  %v1182 = vadd.f32 %v935, %v1181
  %v1183 = vpop.f32.mrf.mxu0
  %v1184 = vand.u32 %v224, 4294901760
  %v1185 = vsub.f32 %v224, %v1184
  %1186 = vmatprep.mubr.f32.mxu0 %v1185
  %v1187 = vand.u32 %v223, 4294901760
  %v1188 = vsub.f32 %v223, %v1187
  %1189 = vmatmul.mubr.f32.gmra.mxu0 %v1188
  %v1190 = vpop.f32.mrf.mxu0
  %v1191 = vadd.f32 %v942, %v1190
  %v1192 = vpop.f32.mrf.mxu0
  %v1193 = vand.u32 %v228, 4294901760
  %v1194 = vsub.f32 %v228, %v1193
  %1195 = vmatprep.mubr.f32.mxu0 %v1194
  %v1196 = vand.u32 %v227, 4294901760
  %v1197 = vsub.f32 %v227, %v1196
  %1198 = vmatmul.mubr.f32.gmra.mxu0 %v1197
  %v1199 = vpop.f32.mrf.mxu0
  %v1200 = vadd.f32 %v949, %v1199
  %v1201 = vpop.f32.mrf.mxu0
  %v1202 = vand.u32 %v232, 4294901760
  %v1203 = vsub.f32 %v232, %v1202
  %1204 = vmatprep.mubr.f32.mxu0 %v1203
  %v1205 = vand.u32 %v231, 4294901760
  %v1206 = vsub.f32 %v231, %v1205
  %1207 = vmatmul.mubr.f32.gmra.mxu0 %v1206
  %v1208 = vpop.f32.mrf.mxu0
  %v1209 = vadd.f32 %v956, %v1208
  %v1210 = vpop.f32.mrf.mxu0
  %v1211 = vand.u32 %v236, 4294901760
  %v1212 = vsub.f32 %v236, %v1211
  %1213 = vmatprep.mubr.f32.mxu0 %v1212
  %v1214 = vand.u32 %v235, 4294901760
  %v1215 = vsub.f32 %v235, %v1214
  %1216 = vmatmul.mubr.f32.gmra.mxu0 %v1215
  %v1217 = vpop.f32.mrf.mxu0
  %v1218 = vadd.f32 %v963, %v1217
  %v1219 = vpop.f32.mrf.mxu0
  %v1220 = vand.u32 %v240, 4294901760
  %v1221 = vsub.f32 %v240, %v1220
  %1222 = vmatprep.mubr.f32.mxu0 %v1221
  %v1223 = vand.u32 %v239, 4294901760
  %v1224 = vsub.f32 %v239, %v1223
  %1225 = vmatmul.mubr.f32.gmra.mxu0 %v1224
  %v1226 = vpop.f32.mrf.mxu0
  %v1227 = vadd.f32 %v970, %v1226
  %v1228 = vpop.f32.mrf.mxu0
  %v1229 = vand.u32 %v244, 4294901760
  %v1230 = vsub.f32 %v244, %v1229
  %1231 = vmatprep.mubr.f32.mxu0 %v1230
  %v1232 = vand.u32 %v243, 4294901760
  %v1233 = vsub.f32 %v243, %v1232
  %1234 = vmatmul.mubr.f32.gmra.mxu0 %v1233
  %v1235 = vpop.f32.mrf.mxu0
  %v1236 = vadd.f32 %v977, %v1235
  %v1237 = vpop.f32.mrf.mxu0
  %v1238 = vand.u32 %v248, 4294901760
  %v1239 = vsub.f32 %v248, %v1238
  %1240 = vmatprep.mubr.f32.mxu0 %v1239
  %v1241 = vand.u32 %v247, 4294901760
  %v1242 = vsub.f32 %v247, %v1241
  %1243 = vmatmul.mubr.f32.gmra.mxu0 %v1242
  %v1244 = vpop.f32.mrf.mxu0
  %v1245 = vadd.f32 %v984, %v1244
  %v1246 = vpop.f32.mrf.mxu0
  %v1247 = vand.u32 %v252, 4294901760
  %v1248 = vsub.f32 %v252, %v1247
  %1249 = vmatprep.mubr.f32.mxu0 %v1248
  %v1250 = vand.u32 %v251, 4294901760
  %v1251 = vsub.f32 %v251, %v1250
  %1252 = vmatmul.mubr.f32.gmra.mxu0 %v1251
  %v1253 = vpop.f32.mrf.mxu0
  %v1254 = vadd.f32 %v991, %v1253
  %v1255 = vpop.f32.mrf.mxu0
  %v1256 = vand.u32 %v256, 4294901760
  %v1257 = vsub.f32 %v256, %v1256
  %1258 = vmatprep.mubr.f32.mxu0 %v1257
  %v1259 = vand.u32 %v255, 4294901760
  %v1260 = vsub.f32 %v255, %v1259
  %1261 = vmatmul.mubr.f32.gmra.mxu0 %v1260
  %v1262 = vpop.f32.mrf.mxu0
  %v1263 = vadd.f32 %v998, %v1262
  %v1264 = vpop.f32.mrf.mxu0
  %v1265 = vand.u32 %v260, 4294901760
  %v1266 = vsub.f32 %v260, %v1265
  %1267 = vmatprep.mubr.f32.mxu0 %v1266
  %v1268 = vand.u32 %v259, 4294901760
  %v1269 = vsub.f32 %v259, %v1268
  %1270 = vmatmul.mubr.f32.gmra.mxu0 %v1269
  %v1271 = vpop.f32.mrf.mxu0
  %v1272 = vadd.f32 %v1005, %v1271
  %v1273 = vpop.f32.mrf.mxu0
  %v1274 = vand.u32 %v264, 4294901760
  %v1275 = vsub.f32 %v264, %v1274
  %1276 = vmatprep.mubr.f32.mxu0 %v1275
  %v1277 = vand.u32 %v263, 4294901760
  %v1278 = vsub.f32 %v263, %v1277
  %1279 = vmatmul.mubr.f32.gmra.mxu0 %v1278
  %v1280 = vpop.f32.mrf.mxu0
  %v1281 = vadd.f32 %v1012, %v1280
  %v1282 = vpop.f32.mrf.mxu0
  %v1283 = vand.u32 %v268, 4294901760
  %v1284 = vsub.f32 %v268, %v1283
  %1285 = vmatprep.mubr.f32.mxu0 %v1284
  %v1286 = vand.u32 %v267, 4294901760
  %v1287 = vsub.f32 %v267, %v1286
  %1288 = vmatmul.mubr.f32.gmra.mxu0 %v1287
  %v1289 = vpop.f32.mrf.mxu0
  %v1290 = vadd.f32 %v1019, %v1289
  %v1291 = vpop.f32.mrf.mxu0
  %v1292 = vand.u32 %v272, 4294901760
  %v1293 = vsub.f32 %v272, %v1292
  %1294 = vmatprep.mubr.f32.mxu0 %v1293
  %v1295 = vand.u32 %v271, 4294901760
  %v1296 = vsub.f32 %v271, %v1295
  %1297 = vmatmul.mubr.f32.gmra.mxu0 %v1296
  %v1298 = vpop.f32.mrf.mxu0
  %v1299 = vadd.f32 %v1026, %v1298
  %v1300 = vpop.f32.mrf.mxu0
  %1301 = vdwg.mxu0
  %1302 = vmatprep.subr.mxu0 0.0
  %v1303 = vand.u32 %v290, 4294901760
  %1304 = vmatpush1.msra.mxu0 %v1303
  %1305 = vmatprep.subr.mxu0 0.0
  %v1306 = vand.u32 %v289, 4294901760
  %1307 = vmatpush1.msra.mxu0 %v1306
  %1308 = vmatprep.subr.mxu0 0.0
  %v1309 = vand.u32 %v288, 4294901760
  %1310 = vmatpush1.msra.mxu0 %v1309
  %1311 = vmatprep.subr.mxu0 0.0
  %v1312 = vand.u32 %v287, 4294901760
  %1313 = vmatpush1.msra.mxu0 %v1312
  %1314 = vmatprep.subr.mxu0 0.0
  %v1315 = vand.u32 %v286, 4294901760
  %1316 = vmatpush1.msra.mxu0 %v1315
  %1317 = vmatprep.subr.mxu0 0.0
  %v1318 = vand.u32 %v285, 4294901760
  %1319 = vmatpush1.msra.mxu0 %v1318
  %1320 = vmatprep.subr.mxu0 0.0
  %v1321 = vand.u32 %v284, 4294901760
  %1322 = vmatpush1.msra.mxu0 %v1321
  %1323 = vmatprep.subr.mxu0 0.0
  %v1324 = vand.u32 %v283, 4294901760
  %1325 = vmatpush1.msra.mxu0 %v1324
  %1326 = vmatprep.subr.mxu0 0.0
  %v1327 = vand.u32 %v282, 4294901760
  %1328 = vmatpush1.msra.mxu0 %v1327
  %1329 = vmatprep.subr.mxu0 0.0
  %v1330 = vand.u32 %v281, 4294901760
  %1331 = vmatpush1.msra.mxu0 %v1330
  %1332 = vmatprep.subr.mxu0 0.0
  %v1333 = vand.u32 %v280, 4294901760
  %1334 = vmatpush1.msra.mxu0 %v1333
  %1335 = vmatprep.subr.mxu0 0.0
  %v1336 = vand.u32 %v279, 4294901760
  %1337 = vmatpush1.msra.mxu0 %v1336
  %1338 = vmatprep.subr.mxu0 0.0
  %v1339 = vand.u32 %v278, 4294901760
  %1340 = vmatpush1.msra.mxu0 %v1339
  %1341 = vmatprep.subr.mxu0 0.0
  %v1342 = vand.u32 %v277, 4294901760
  %1343 = vmatpush1.msra.mxu0 %v1342
  %1344 = vmatprep.subr.mxu0 0.0
  %v1345 = vand.u32 %v276, 4294901760
  %1346 = vmatpush1.msra.mxu0 %v1345
  %1347 = vmatprep.subr.mxu0 0.0
  %v1348 = vand.u32 %v275, 4294901760
  %1349 = vmatpush1.msra.mxu0 %v1348
  %1350 = vmatprep.subr.mxu0 0.0
  %v1351 = vand.u32 %v306, 4294901760
  %1352 = vmatpush2.msra.mxu0 %v1351
  %1353 = vmatprep.subr.mxu0 0.0
  %v1354 = vand.u32 %v305, 4294901760
  %1355 = vmatpush2.msra.mxu0 %v1354
  %1356 = vmatprep.subr.mxu0 0.0
  %v1357 = vand.u32 %v304, 4294901760
  %1358 = vmatpush2.msra.mxu0 %v1357
  %1359 = vmatprep.subr.mxu0 0.0
  %v1360 = vand.u32 %v303, 4294901760
  %1361 = vmatpush2.msra.mxu0 %v1360
  %1362 = vmatprep.subr.mxu0 0.0
  %v1363 = vand.u32 %v302, 4294901760
  %1364 = vmatpush2.msra.mxu0 %v1363
  %1365 = vmatprep.subr.mxu0 0.0
  %v1366 = vand.u32 %v301, 4294901760
  %1367 = vmatpush2.msra.mxu0 %v1366
  %1368 = vmatprep.subr.mxu0 0.0
  %v1369 = vand.u32 %v300, 4294901760
  %1370 = vmatpush2.msra.mxu0 %v1369
  %1371 = vmatprep.subr.mxu0 0.0
  %v1372 = vand.u32 %v299, 4294901760
  %1373 = vmatpush2.msra.mxu0 %v1372
  %1374 = vmatprep.subr.mxu0 0.0
  %v1375 = vand.u32 %v298, 4294901760
  %1376 = vmatpush2.msra.mxu0 %v1375
  %1377 = vmatprep.subr.mxu0 0.0
  %v1378 = vand.u32 %v297, 4294901760
  %1379 = vmatpush2.msra.mxu0 %v1378
  %1380 = vmatprep.subr.mxu0 0.0
  %v1381 = vand.u32 %v296, 4294901760
  %1382 = vmatpush2.msra.mxu0 %v1381
  %1383 = vmatprep.subr.mxu0 0.0
  %v1384 = vand.u32 %v295, 4294901760
  %1385 = vmatpush2.msra.mxu0 %v1384
  %1386 = vmatprep.subr.mxu0 0.0
  %v1387 = vand.u32 %v294, 4294901760
  %1388 = vmatpush2.msra.mxu0 %v1387
  %1389 = vmatprep.subr.mxu0 0.0
  %v1390 = vand.u32 %v293, 4294901760
  %1391 = vmatpush2.msra.mxu0 %v1390
  %1392 = vmatprep.subr.mxu0 0.0
  %v1393 = vand.u32 %v292, 4294901760
  %1394 = vmatpush2.msra.mxu0 %v1393
  %1395 = vmatprep.subr.mxu0 0.0
  %v1396 = vand.u32 %v291, 4294901760
  %1397 = vmatpush2.msra.mxu0 %v1396
  %v1398 = vand.u32 %v212, 4294901760
  %v1399 = vsub.f32 %v212, %v1398
  %v1400 = vand.u32 %v1399, 4294901760
  %1401 = vmatprep.mubr.f32.mxu0 %v1400
  %v1402 = vand.u32 %v211, 4294901760
  %v1403 = vsub.f32 %v211, %v1402
  %v1404 = vand.u32 %v1403, 4294901760
  %1405 = vmatmul.mubr.f32.gmra.mxu0 %v1404
  %v1406 = vpop.f32.mrf.mxu0
  %v1407 = vadd.f32 %v1164, %v1406
  %v1408 = vpop.f32.mrf.mxu0
  %v1409 = vand.u32 %v216, 4294901760
  %v1410 = vsub.f32 %v216, %v1409
  %v1411 = vand.u32 %v1410, 4294901760
  %1412 = vmatprep.mubr.f32.mxu0 %v1411
  %v1413 = vand.u32 %v215, 4294901760
  %v1414 = vsub.f32 %v215, %v1413
  %v1415 = vand.u32 %v1414, 4294901760
  %1416 = vmatmul.mubr.f32.gmra.mxu0 %v1415
  %v1417 = vpop.f32.mrf.mxu0
  %v1418 = vadd.f32 %v1173, %v1417
  %v1419 = vpop.f32.mrf.mxu0
  %v1420 = vand.u32 %v220, 4294901760
  %v1421 = vsub.f32 %v220, %v1420
  %v1422 = vand.u32 %v1421, 4294901760
  %1423 = vmatprep.mubr.f32.mxu0 %v1422
  %v1424 = vand.u32 %v219, 4294901760
  %v1425 = vsub.f32 %v219, %v1424
  %v1426 = vand.u32 %v1425, 4294901760
  %1427 = vmatmul.mubr.f32.gmra.mxu0 %v1426
  %v1428 = vpop.f32.mrf.mxu0
  %v1429 = vadd.f32 %v1182, %v1428
  %v1430 = vpop.f32.mrf.mxu0
  %v1431 = vand.u32 %v224, 4294901760
  %v1432 = vsub.f32 %v224, %v1431
  %v1433 = vand.u32 %v1432, 4294901760
  %1434 = vmatprep.mubr.f32.mxu0 %v1433
  %v1435 = vand.u32 %v223, 4294901760
  %v1436 = vsub.f32 %v223, %v1435
  %v1437 = vand.u32 %v1436, 4294901760
  %1438 = vmatmul.mubr.f32.gmra.mxu0 %v1437
  %v1439 = vpop.f32.mrf.mxu0
  %v1440 = vadd.f32 %v1191, %v1439
  %v1441 = vpop.f32.mrf.mxu0
  %v1442 = vand.u32 %v228, 4294901760
  %v1443 = vsub.f32 %v228, %v1442
  %v1444 = vand.u32 %v1443, 4294901760
  %1445 = vmatprep.mubr.f32.mxu0 %v1444
  %v1446 = vand.u32 %v227, 4294901760
  %v1447 = vsub.f32 %v227, %v1446
  %v1448 = vand.u32 %v1447, 4294901760
  %1449 = vmatmul.mubr.f32.gmra.mxu0 %v1448
  %v1450 = vpop.f32.mrf.mxu0
  %v1451 = vadd.f32 %v1200, %v1450
  %v1452 = vpop.f32.mrf.mxu0
  %v1453 = vand.u32 %v232, 4294901760
  %v1454 = vsub.f32 %v232, %v1453
  %v1455 = vand.u32 %v1454, 4294901760
  %1456 = vmatprep.mubr.f32.mxu0 %v1455
  %v1457 = vand.u32 %v231, 4294901760
  %v1458 = vsub.f32 %v231, %v1457
  %v1459 = vand.u32 %v1458, 4294901760
  %1460 = vmatmul.mubr.f32.gmra.mxu0 %v1459
  %v1461 = vpop.f32.mrf.mxu0
  %v1462 = vadd.f32 %v1209, %v1461
  %v1463 = vpop.f32.mrf.mxu0
  %v1464 = vand.u32 %v236, 4294901760
  %v1465 = vsub.f32 %v236, %v1464
  %v1466 = vand.u32 %v1465, 4294901760
  %1467 = vmatprep.mubr.f32.mxu0 %v1466
  %v1468 = vand.u32 %v235, 4294901760
  %v1469 = vsub.f32 %v235, %v1468
  %v1470 = vand.u32 %v1469, 4294901760
  %1471 = vmatmul.mubr.f32.gmra.mxu0 %v1470
  %v1472 = vpop.f32.mrf.mxu0
  %v1473 = vadd.f32 %v1218, %v1472
  %v1474 = vpop.f32.mrf.mxu0
  %v1475 = vand.u32 %v240, 4294901760
  %v1476 = vsub.f32 %v240, %v1475
  %v1477 = vand.u32 %v1476, 4294901760
  %1478 = vmatprep.mubr.f32.mxu0 %v1477
  %v1479 = vand.u32 %v239, 4294901760
  %v1480 = vsub.f32 %v239, %v1479
  %v1481 = vand.u32 %v1480, 4294901760
  %1482 = vmatmul.mubr.f32.gmra.mxu0 %v1481
  %v1483 = vpop.f32.mrf.mxu0
  %v1484 = vadd.f32 %v1227, %v1483
  %v1485 = vpop.f32.mrf.mxu0
  %v1486 = vand.u32 %v244, 4294901760
  %v1487 = vsub.f32 %v244, %v1486
  %v1488 = vand.u32 %v1487, 4294901760
  %1489 = vmatprep.mubr.f32.mxu0 %v1488
  %v1490 = vand.u32 %v243, 4294901760
  %v1491 = vsub.f32 %v243, %v1490
  %v1492 = vand.u32 %v1491, 4294901760
  %1493 = vmatmul.mubr.f32.gmra.mxu0 %v1492
  %v1494 = vpop.f32.mrf.mxu0
  %v1495 = vadd.f32 %v1236, %v1494
  %v1496 = vpop.f32.mrf.mxu0
  %v1497 = vand.u32 %v248, 4294901760
  %v1498 = vsub.f32 %v248, %v1497
  %v1499 = vand.u32 %v1498, 4294901760
  %1500 = vmatprep.mubr.f32.mxu0 %v1499
  %v1501 = vand.u32 %v247, 4294901760
  %v1502 = vsub.f32 %v247, %v1501
  %v1503 = vand.u32 %v1502, 4294901760
  %1504 = vmatmul.mubr.f32.gmra.mxu0 %v1503
  %v1505 = vpop.f32.mrf.mxu0
  %v1506 = vadd.f32 %v1245, %v1505
  %v1507 = vpop.f32.mrf.mxu0
  %v1508 = vand.u32 %v252, 4294901760
  %v1509 = vsub.f32 %v252, %v1508
  %v1510 = vand.u32 %v1509, 4294901760
  %1511 = vmatprep.mubr.f32.mxu0 %v1510
  %v1512 = vand.u32 %v251, 4294901760
  %v1513 = vsub.f32 %v251, %v1512
  %v1514 = vand.u32 %v1513, 4294901760
  %1515 = vmatmul.mubr.f32.gmra.mxu0 %v1514
  %v1516 = vpop.f32.mrf.mxu0
  %v1517 = vadd.f32 %v1254, %v1516
  %v1518 = vpop.f32.mrf.mxu0
  %v1519 = vand.u32 %v256, 4294901760
  %v1520 = vsub.f32 %v256, %v1519
  %v1521 = vand.u32 %v1520, 4294901760
  %1522 = vmatprep.mubr.f32.mxu0 %v1521
  %v1523 = vand.u32 %v255, 4294901760
  %v1524 = vsub.f32 %v255, %v1523
  %v1525 = vand.u32 %v1524, 4294901760
  %1526 = vmatmul.mubr.f32.gmra.mxu0 %v1525
  %v1527 = vpop.f32.mrf.mxu0
  %v1528 = vadd.f32 %v1263, %v1527
  %v1529 = vpop.f32.mrf.mxu0
  %v1530 = vand.u32 %v260, 4294901760
  %v1531 = vsub.f32 %v260, %v1530
  %v1532 = vand.u32 %v1531, 4294901760
  %1533 = vmatprep.mubr.f32.mxu0 %v1532
  %v1534 = vand.u32 %v259, 4294901760
  %v1535 = vsub.f32 %v259, %v1534
  %v1536 = vand.u32 %v1535, 4294901760
  %1537 = vmatmul.mubr.f32.gmra.mxu0 %v1536
  %v1538 = vpop.f32.mrf.mxu0
  %v1539 = vadd.f32 %v1272, %v1538
  %v1540 = vpop.f32.mrf.mxu0
  %v1541 = vand.u32 %v264, 4294901760
  %v1542 = vsub.f32 %v264, %v1541
  %v1543 = vand.u32 %v1542, 4294901760
  %1544 = vmatprep.mubr.f32.mxu0 %v1543
  %v1545 = vand.u32 %v263, 4294901760
  %v1546 = vsub.f32 %v263, %v1545
  %v1547 = vand.u32 %v1546, 4294901760
  %1548 = vmatmul.mubr.f32.gmra.mxu0 %v1547
  %v1549 = vpop.f32.mrf.mxu0
  %v1550 = vadd.f32 %v1281, %v1549
  %v1551 = vpop.f32.mrf.mxu0
  %v1552 = vand.u32 %v268, 4294901760
  %v1553 = vsub.f32 %v268, %v1552
  %v1554 = vand.u32 %v1553, 4294901760
  %1555 = vmatprep.mubr.f32.mxu0 %v1554
  %v1556 = vand.u32 %v267, 4294901760
  %v1557 = vsub.f32 %v267, %v1556
  %v1558 = vand.u32 %v1557, 4294901760
  %1559 = vmatmul.mubr.f32.gmra.mxu0 %v1558
  %v1560 = vpop.f32.mrf.mxu0
  %v1561 = vadd.f32 %v1290, %v1560
  %v1562 = vpop.f32.mrf.mxu0
  %v1563 = vand.u32 %v272, 4294901760
  %v1564 = vsub.f32 %v272, %v1563
  %v1565 = vand.u32 %v1564, 4294901760
  %1566 = vmatprep.mubr.f32.mxu0 %v1565
  %v1567 = vand.u32 %v271, 4294901760
  %v1568 = vsub.f32 %v271, %v1567
  %v1569 = vand.u32 %v1568, 4294901760
  %1570 = vmatmul.mubr.f32.gmra.mxu0 %v1569
  %v1571 = vpop.f32.mrf.mxu0
  %v1572 = vadd.f32 %v1299, %v1571
  %v1573 = vpop.f32.mrf.mxu0
  %1574 = vdwg.mxu0
  %1575 = vmatprep.subr.mxu0 0.0
  %v1576 = vand.u32 %v290, 4294901760
  %v1577 = vsub.f32 %v290, %v1576
  %v1578 = vand.u32 %v1577, 4294901760
  %1579 = vmatpush1.msra.mxu0 %v1578
  %1580 = vmatprep.subr.mxu0 0.0
  %v1581 = vand.u32 %v289, 4294901760
  %v1582 = vsub.f32 %v289, %v1581
  %v1583 = vand.u32 %v1582, 4294901760
  %1584 = vmatpush1.msra.mxu0 %v1583
  %1585 = vmatprep.subr.mxu0 0.0
  %v1586 = vand.u32 %v288, 4294901760
  %v1587 = vsub.f32 %v288, %v1586
  %v1588 = vand.u32 %v1587, 4294901760
  %1589 = vmatpush1.msra.mxu0 %v1588
  %1590 = vmatprep.subr.mxu0 0.0
  %v1591 = vand.u32 %v287, 4294901760
  %v1592 = vsub.f32 %v287, %v1591
  %v1593 = vand.u32 %v1592, 4294901760
  %1594 = vmatpush1.msra.mxu0 %v1593
  %1595 = vmatprep.subr.mxu0 0.0
  %v1596 = vand.u32 %v286, 4294901760
  %v1597 = vsub.f32 %v286, %v1596
  %v1598 = vand.u32 %v1597, 4294901760
  %1599 = vmatpush1.msra.mxu0 %v1598
  %1600 = vmatprep.subr.mxu0 0.0
  %v1601 = vand.u32 %v285, 4294901760
  %v1602 = vsub.f32 %v285, %v1601
  %v1603 = vand.u32 %v1602, 4294901760
  %1604 = vmatpush1.msra.mxu0 %v1603
  %1605 = vmatprep.subr.mxu0 0.0
  %v1606 = vand.u32 %v284, 4294901760
  %v1607 = vsub.f32 %v284, %v1606
  %v1608 = vand.u32 %v1607, 4294901760
  %1609 = vmatpush1.msra.mxu0 %v1608
  %1610 = vmatprep.subr.mxu0 0.0
  %v1611 = vand.u32 %v283, 4294901760
  %v1612 = vsub.f32 %v283, %v1611
  %v1613 = vand.u32 %v1612, 4294901760
  %1614 = vmatpush1.msra.mxu0 %v1613
  %1615 = vmatprep.subr.mxu0 0.0
  %v1616 = vand.u32 %v282, 4294901760
  %v1617 = vsub.f32 %v282, %v1616
  %v1618 = vand.u32 %v1617, 4294901760
  %1619 = vmatpush1.msra.mxu0 %v1618
  %1620 = vmatprep.subr.mxu0 0.0
  %v1621 = vand.u32 %v281, 4294901760
  %v1622 = vsub.f32 %v281, %v1621
  %v1623 = vand.u32 %v1622, 4294901760
  %1624 = vmatpush1.msra.mxu0 %v1623
  %1625 = vmatprep.subr.mxu0 0.0
  %v1626 = vand.u32 %v280, 4294901760
  %v1627 = vsub.f32 %v280, %v1626
  %v1628 = vand.u32 %v1627, 4294901760
  %1629 = vmatpush1.msra.mxu0 %v1628
  %1630 = vmatprep.subr.mxu0 0.0
  %v1631 = vand.u32 %v279, 4294901760
  %v1632 = vsub.f32 %v279, %v1631
  %v1633 = vand.u32 %v1632, 4294901760
  %1634 = vmatpush1.msra.mxu0 %v1633
  %1635 = vmatprep.subr.mxu0 0.0
  %v1636 = vand.u32 %v278, 4294901760
  %v1637 = vsub.f32 %v278, %v1636
  %v1638 = vand.u32 %v1637, 4294901760
  %1639 = vmatpush1.msra.mxu0 %v1638
  %1640 = vmatprep.subr.mxu0 0.0
  %v1641 = vand.u32 %v277, 4294901760
  %v1642 = vsub.f32 %v277, %v1641
  %v1643 = vand.u32 %v1642, 4294901760
  %1644 = vmatpush1.msra.mxu0 %v1643
  %1645 = vmatprep.subr.mxu0 0.0
  %v1646 = vand.u32 %v276, 4294901760
  %v1647 = vsub.f32 %v276, %v1646
  %v1648 = vand.u32 %v1647, 4294901760
  %1649 = vmatpush1.msra.mxu0 %v1648
  %1650 = vmatprep.subr.mxu0 0.0
  %v1651 = vand.u32 %v275, 4294901760
  %v1652 = vsub.f32 %v275, %v1651
  %v1653 = vand.u32 %v1652, 4294901760
  %1654 = vmatpush1.msra.mxu0 %v1653
  %1655 = vmatprep.subr.mxu0 0.0
  %v1656 = vand.u32 %v306, 4294901760
  %v1657 = vsub.f32 %v306, %v1656
  %v1658 = vand.u32 %v1657, 4294901760
  %1659 = vmatpush2.msra.mxu0 %v1658
  %1660 = vmatprep.subr.mxu0 0.0
  %v1661 = vand.u32 %v305, 4294901760
  %v1662 = vsub.f32 %v305, %v1661
  %v1663 = vand.u32 %v1662, 4294901760
  %1664 = vmatpush2.msra.mxu0 %v1663
  %1665 = vmatprep.subr.mxu0 0.0
  %v1666 = vand.u32 %v304, 4294901760
  %v1667 = vsub.f32 %v304, %v1666
  %v1668 = vand.u32 %v1667, 4294901760
  %1669 = vmatpush2.msra.mxu0 %v1668
  %1670 = vmatprep.subr.mxu0 0.0
  %v1671 = vand.u32 %v303, 4294901760
  %v1672 = vsub.f32 %v303, %v1671
  %v1673 = vand.u32 %v1672, 4294901760
  %1674 = vmatpush2.msra.mxu0 %v1673
  %1675 = vmatprep.subr.mxu0 0.0
  %v1676 = vand.u32 %v302, 4294901760
  %v1677 = vsub.f32 %v302, %v1676
  %v1678 = vand.u32 %v1677, 4294901760
  %1679 = vmatpush2.msra.mxu0 %v1678
  %1680 = vmatprep.subr.mxu0 0.0
  %v1681 = vand.u32 %v301, 4294901760
  %v1682 = vsub.f32 %v301, %v1681
  %v1683 = vand.u32 %v1682, 4294901760
  %1684 = vmatpush2.msra.mxu0 %v1683
  %1685 = vmatprep.subr.mxu0 0.0
  %v1686 = vand.u32 %v300, 4294901760
  %v1687 = vsub.f32 %v300, %v1686
  %v1688 = vand.u32 %v1687, 4294901760
  %1689 = vmatpush2.msra.mxu0 %v1688
  %1690 = vmatprep.subr.mxu0 0.0
  %v1691 = vand.u32 %v299, 4294901760
  %v1692 = vsub.f32 %v299, %v1691
  %v1693 = vand.u32 %v1692, 4294901760
  %1694 = vmatpush2.msra.mxu0 %v1693
  %1695 = vmatprep.subr.mxu0 0.0
  %v1696 = vand.u32 %v298, 4294901760
  %v1697 = vsub.f32 %v298, %v1696
  %v1698 = vand.u32 %v1697, 4294901760
  %1699 = vmatpush2.msra.mxu0 %v1698
  %1700 = vmatprep.subr.mxu0 0.0
  %v1701 = vand.u32 %v297, 4294901760
  %v1702 = vsub.f32 %v297, %v1701
  %v1703 = vand.u32 %v1702, 4294901760
  %1704 = vmatpush2.msra.mxu0 %v1703
  %1705 = vmatprep.subr.mxu0 0.0
  %v1706 = vand.u32 %v296, 4294901760
  %v1707 = vsub.f32 %v296, %v1706
  %v1708 = vand.u32 %v1707, 4294901760
  %1709 = vmatpush2.msra.mxu0 %v1708
  %1710 = vmatprep.subr.mxu0 0.0
  %v1711 = vand.u32 %v295, 4294901760
  %v1712 = vsub.f32 %v295, %v1711
  %v1713 = vand.u32 %v1712, 4294901760
  %1714 = vmatpush2.msra.mxu0 %v1713
  %1715 = vmatprep.subr.mxu0 0.0
  %v1716 = vand.u32 %v294, 4294901760
  %v1717 = vsub.f32 %v294, %v1716
  %v1718 = vand.u32 %v1717, 4294901760
  %1719 = vmatpush2.msra.mxu0 %v1718
  %1720 = vmatprep.subr.mxu0 0.0
  %v1721 = vand.u32 %v293, 4294901760
  %v1722 = vsub.f32 %v293, %v1721
  %v1723 = vand.u32 %v1722, 4294901760
  %1724 = vmatpush2.msra.mxu0 %v1723
  %1725 = vmatprep.subr.mxu0 0.0
  %v1726 = vand.u32 %v292, 4294901760
  %v1727 = vsub.f32 %v292, %v1726
  %v1728 = vand.u32 %v1727, 4294901760
  %1729 = vmatpush2.msra.mxu0 %v1728
  %1730 = vmatprep.subr.mxu0 0.0
  %v1731 = vand.u32 %v291, 4294901760
  %v1732 = vsub.f32 %v291, %v1731
  %v1733 = vand.u32 %v1732, 4294901760
  %1734 = vmatpush2.msra.mxu0 %v1733
  %v1735 = vand.u32 %v212, 4294901760
  %1736 = vmatprep.mubr.f32.mxu0 %v1735
  %v1737 = vand.u32 %v211, 4294901760
  %1738 = vmatmul.mubr.f32.gmra.mxu0 %v1737
  %v1739 = vpop.f32.mrf.mxu0
  %v1740 = vadd.f32 %v1407, %v1739
  %v1741 = vpop.f32.mrf.mxu0
  %v1742 = vand.u32 %v216, 4294901760
  %1743 = vmatprep.mubr.f32.mxu0 %v1742
  %v1744 = vand.u32 %v215, 4294901760
  %1745 = vmatmul.mubr.f32.gmra.mxu0 %v1744
  %v1746 = vpop.f32.mrf.mxu0
  %v1747 = vadd.f32 %v1418, %v1746
  %v1748 = vpop.f32.mrf.mxu0
  %v1749 = vand.u32 %v220, 4294901760
  %1750 = vmatprep.mubr.f32.mxu0 %v1749
  %v1751 = vand.u32 %v219, 4294901760
  %1752 = vmatmul.mubr.f32.gmra.mxu0 %v1751
  %v1753 = vpop.f32.mrf.mxu0
  %v1754 = vadd.f32 %v1429, %v1753
  %v1755 = vpop.f32.mrf.mxu0
  %v1756 = vand.u32 %v224, 4294901760
  %1757 = vmatprep.mubr.f32.mxu0 %v1756
  %v1758 = vand.u32 %v223, 4294901760
  %1759 = vmatmul.mubr.f32.gmra.mxu0 %v1758
  %v1760 = vpop.f32.mrf.mxu0
  %v1761 = vadd.f32 %v1440, %v1760
  %v1762 = vpop.f32.mrf.mxu0
  %v1763 = vand.u32 %v228, 4294901760
  %1764 = vmatprep.mubr.f32.mxu0 %v1763
  %v1765 = vand.u32 %v227, 4294901760
  %1766 = vmatmul.mubr.f32.gmra.mxu0 %v1765
  %v1767 = vpop.f32.mrf.mxu0
  %v1768 = vadd.f32 %v1451, %v1767
  %v1769 = vpop.f32.mrf.mxu0
  %v1770 = vand.u32 %v232, 4294901760
  %1771 = vmatprep.mubr.f32.mxu0 %v1770
  %v1772 = vand.u32 %v231, 4294901760
  %1773 = vmatmul.mubr.f32.gmra.mxu0 %v1772
  %v1774 = vpop.f32.mrf.mxu0
  %v1775 = vadd.f32 %v1462, %v1774
  %v1776 = vpop.f32.mrf.mxu0
  %v1777 = vand.u32 %v236, 4294901760
  %1778 = vmatprep.mubr.f32.mxu0 %v1777
  %v1779 = vand.u32 %v235, 4294901760
  %1780 = vmatmul.mubr.f32.gmra.mxu0 %v1779
  %v1781 = vpop.f32.mrf.mxu0
  %v1782 = vadd.f32 %v1473, %v1781
  %v1783 = vpop.f32.mrf.mxu0
  %v1784 = vand.u32 %v240, 4294901760
  %1785 = vmatprep.mubr.f32.mxu0 %v1784
  %v1786 = vand.u32 %v239, 4294901760
  %1787 = vmatmul.mubr.f32.gmra.mxu0 %v1786
  %v1788 = vpop.f32.mrf.mxu0
  %v1789 = vadd.f32 %v1484, %v1788
  %v1790 = vpop.f32.mrf.mxu0
  %v1791 = vand.u32 %v244, 4294901760
  %1792 = vmatprep.mubr.f32.mxu0 %v1791
  %v1793 = vand.u32 %v243, 4294901760
  %1794 = vmatmul.mubr.f32.gmra.mxu0 %v1793
  %v1795 = vpop.f32.mrf.mxu0
  %v1796 = vadd.f32 %v1495, %v1795
  %v1797 = vpop.f32.mrf.mxu0
  %v1798 = vand.u32 %v248, 4294901760
  %1799 = vmatprep.mubr.f32.mxu0 %v1798
  %v1800 = vand.u32 %v247, 4294901760
  %1801 = vmatmul.mubr.f32.gmra.mxu0 %v1800
  %v1802 = vpop.f32.mrf.mxu0
  %v1803 = vadd.f32 %v1506, %v1802
  %v1804 = vpop.f32.mrf.mxu0
  %v1805 = vand.u32 %v252, 4294901760
  %1806 = vmatprep.mubr.f32.mxu0 %v1805
  %v1807 = vand.u32 %v251, 4294901760
  %1808 = vmatmul.mubr.f32.gmra.mxu0 %v1807
  %v1809 = vpop.f32.mrf.mxu0
  %v1810 = vadd.f32 %v1517, %v1809
  %v1811 = vpop.f32.mrf.mxu0
  %v1812 = vand.u32 %v256, 4294901760
  %1813 = vmatprep.mubr.f32.mxu0 %v1812
  %v1814 = vand.u32 %v255, 4294901760
  %1815 = vmatmul.mubr.f32.gmra.mxu0 %v1814
  %v1816 = vpop.f32.mrf.mxu0
  %v1817 = vadd.f32 %v1528, %v1816
  %v1818 = vpop.f32.mrf.mxu0
  %v1819 = vand.u32 %v260, 4294901760
  %1820 = vmatprep.mubr.f32.mxu0 %v1819
  %v1821 = vand.u32 %v259, 4294901760
  %1822 = vmatmul.mubr.f32.gmra.mxu0 %v1821
  %v1823 = vpop.f32.mrf.mxu0
  %v1824 = vadd.f32 %v1539, %v1823
  %v1825 = vpop.f32.mrf.mxu0
  %v1826 = vand.u32 %v264, 4294901760
  %1827 = vmatprep.mubr.f32.mxu0 %v1826
  %v1828 = vand.u32 %v263, 4294901760
  %1829 = vmatmul.mubr.f32.gmra.mxu0 %v1828
  %v1830 = vpop.f32.mrf.mxu0
  %v1831 = vadd.f32 %v1550, %v1830
  %v1832 = vpop.f32.mrf.mxu0
  %v1833 = vand.u32 %v268, 4294901760
  %1834 = vmatprep.mubr.f32.mxu0 %v1833
  %v1835 = vand.u32 %v267, 4294901760
  %1836 = vmatmul.mubr.f32.gmra.mxu0 %v1835
  %v1837 = vpop.f32.mrf.mxu0
  %v1838 = vadd.f32 %v1561, %v1837
  %v1839 = vpop.f32.mrf.mxu0
  %v1840 = vand.u32 %v272, 4294901760
  %1841 = vmatprep.mubr.f32.mxu0 %v1840
  %v1842 = vand.u32 %v271, 4294901760
  %1843 = vmatmul.mubr.f32.gmra.mxu0 %v1842
  %v1844 = vpop.f32.mrf.mxu0
  %v1845 = vadd.f32 %v1572, %v1844
  %v1846 = vpop.f32.mrf.mxu0
  %1847 = vdwg.mxu0
  %1848 = vmatprep.subr.mxu0 0.0
  %v1849 = vand.u32 %v290, 4294901760
  %1850 = vmatpush1.msra.mxu0 %v1849
  %1851 = vmatprep.subr.mxu0 0.0
  %v1852 = vand.u32 %v289, 4294901760
  %1853 = vmatpush1.msra.mxu0 %v1852
  %1854 = vmatprep.subr.mxu0 0.0
  %v1855 = vand.u32 %v288, 4294901760
  %1856 = vmatpush1.msra.mxu0 %v1855
  %1857 = vmatprep.subr.mxu0 0.0
  %v1858 = vand.u32 %v287, 4294901760
  %1859 = vmatpush1.msra.mxu0 %v1858
  %1860 = vmatprep.subr.mxu0 0.0
  %v1861 = vand.u32 %v286, 4294901760
  %1862 = vmatpush1.msra.mxu0 %v1861
  %1863 = vmatprep.subr.mxu0 0.0
  %v1864 = vand.u32 %v285, 4294901760
  %1865 = vmatpush1.msra.mxu0 %v1864
  %1866 = vmatprep.subr.mxu0 0.0
  %v1867 = vand.u32 %v284, 4294901760
  %1868 = vmatpush1.msra.mxu0 %v1867
  %1869 = vmatprep.subr.mxu0 0.0
  %v1870 = vand.u32 %v283, 4294901760
  %1871 = vmatpush1.msra.mxu0 %v1870
  %1872 = vmatprep.subr.mxu0 0.0
  %v1873 = vand.u32 %v282, 4294901760
  %1874 = vmatpush1.msra.mxu0 %v1873
  %1875 = vmatprep.subr.mxu0 0.0
  %v1876 = vand.u32 %v281, 4294901760
  %1877 = vmatpush1.msra.mxu0 %v1876
  %1878 = vmatprep.subr.mxu0 0.0
  %v1879 = vand.u32 %v280, 4294901760
  %1880 = vmatpush1.msra.mxu0 %v1879
  %1881 = vmatprep.subr.mxu0 0.0
  %v1882 = vand.u32 %v279, 4294901760
  %1883 = vmatpush1.msra.mxu0 %v1882
  %1884 = vmatprep.subr.mxu0 0.0
  %v1885 = vand.u32 %v278, 4294901760
  %1886 = vmatpush1.msra.mxu0 %v1885
  %1887 = vmatprep.subr.mxu0 0.0
  %v1888 = vand.u32 %v277, 4294901760
  %1889 = vmatpush1.msra.mxu0 %v1888
  %1890 = vmatprep.subr.mxu0 0.0
  %v1891 = vand.u32 %v276, 4294901760
  %1892 = vmatpush1.msra.mxu0 %v1891
  %1893 = vmatprep.subr.mxu0 0.0
  %v1894 = vand.u32 %v275, 4294901760
  %1895 = vmatpush1.msra.mxu0 %v1894
  %1896 = vmatprep.subr.mxu0 0.0
  %v1897 = vand.u32 %v306, 4294901760
  %1898 = vmatpush2.msra.mxu0 %v1897
  %1899 = vmatprep.subr.mxu0 0.0
  %v1900 = vand.u32 %v305, 4294901760
  %1901 = vmatpush2.msra.mxu0 %v1900
  %1902 = vmatprep.subr.mxu0 0.0
  %v1903 = vand.u32 %v304, 4294901760
  %1904 = vmatpush2.msra.mxu0 %v1903
  %1905 = vmatprep.subr.mxu0 0.0
  %v1906 = vand.u32 %v303, 4294901760
  %1907 = vmatpush2.msra.mxu0 %v1906
  %1908 = vmatprep.subr.mxu0 0.0
  %v1909 = vand.u32 %v302, 4294901760
  %1910 = vmatpush2.msra.mxu0 %v1909
  %1911 = vmatprep.subr.mxu0 0.0
  %v1912 = vand.u32 %v301, 4294901760
  %1913 = vmatpush2.msra.mxu0 %v1912
  %1914 = vmatprep.subr.mxu0 0.0
  %v1915 = vand.u32 %v300, 4294901760
  %1916 = vmatpush2.msra.mxu0 %v1915
  %1917 = vmatprep.subr.mxu0 0.0
  %v1918 = vand.u32 %v299, 4294901760
  %1919 = vmatpush2.msra.mxu0 %v1918
  %1920 = vmatprep.subr.mxu0 0.0
  %v1921 = vand.u32 %v298, 4294901760
  %1922 = vmatpush2.msra.mxu0 %v1921
  %1923 = vmatprep.subr.mxu0 0.0
  %v1924 = vand.u32 %v297, 4294901760
  %1925 = vmatpush2.msra.mxu0 %v1924
  %1926 = vmatprep.subr.mxu0 0.0
  %v1927 = vand.u32 %v296, 4294901760
  %1928 = vmatpush2.msra.mxu0 %v1927
  %1929 = vmatprep.subr.mxu0 0.0
  %v1930 = vand.u32 %v295, 4294901760
  %1931 = vmatpush2.msra.mxu0 %v1930
  %1932 = vmatprep.subr.mxu0 0.0
  %v1933 = vand.u32 %v294, 4294901760
  %1934 = vmatpush2.msra.mxu0 %v1933
  %1935 = vmatprep.subr.mxu0 0.0
  %v1936 = vand.u32 %v293, 4294901760
  %1937 = vmatpush2.msra.mxu0 %v1936
  %1938 = vmatprep.subr.mxu0 0.0
  %v1939 = vand.u32 %v292, 4294901760
  %1940 = vmatpush2.msra.mxu0 %v1939
  %1941 = vmatprep.subr.mxu0 0.0
  %v1942 = vand.u32 %v291, 4294901760
  %1943 = vmatpush2.msra.mxu0 %v1942
  %v1944 = vand.u32 %v212, 4294901760
  %1945 = vmatprep.mubr.f32.mxu0 %v1944
  %v1946 = vand.u32 %v211, 4294901760
  %1947 = vmatmul.mubr.f32.gmra.mxu0 %v1946
  %v1948 = vpop.f32.mrf.mxu0
  %v1949 = vadd.f32 %v1740, %v1948
  %v1950 = vpop.f32.mrf.mxu0
  %v1951 = vand.u32 %v216, 4294901760
  %1952 = vmatprep.mubr.f32.mxu0 %v1951
  %v1953 = vand.u32 %v215, 4294901760
  %1954 = vmatmul.mubr.f32.gmra.mxu0 %v1953
  %v1955 = vpop.f32.mrf.mxu0
  %v1956 = vadd.f32 %v1747, %v1955
  %v1957 = vpop.f32.mrf.mxu0
  %v1958 = vand.u32 %v220, 4294901760
  %1959 = vmatprep.mubr.f32.mxu0 %v1958
  %v1960 = vand.u32 %v219, 4294901760
  %1961 = vmatmul.mubr.f32.gmra.mxu0 %v1960
  %v1962 = vpop.f32.mrf.mxu0
  %v1963 = vadd.f32 %v1754, %v1962
  %v1964 = vpop.f32.mrf.mxu0
  %v1965 = vand.u32 %v224, 4294901760
  %1966 = vmatprep.mubr.f32.mxu0 %v1965
  %v1967 = vand.u32 %v223, 4294901760
  %1968 = vmatmul.mubr.f32.gmra.mxu0 %v1967
  %v1969 = vpop.f32.mrf.mxu0
  %v1970 = vadd.f32 %v1761, %v1969
  %v1971 = vpop.f32.mrf.mxu0
  %v1972 = vand.u32 %v228, 4294901760
  %1973 = vmatprep.mubr.f32.mxu0 %v1972
  %v1974 = vand.u32 %v227, 4294901760
  %1975 = vmatmul.mubr.f32.gmra.mxu0 %v1974
  %v1976 = vpop.f32.mrf.mxu0
  %v1977 = vadd.f32 %v1768, %v1976
  %v1978 = vpop.f32.mrf.mxu0
  %v1979 = vand.u32 %v232, 4294901760
  %1980 = vmatprep.mubr.f32.mxu0 %v1979
  %v1981 = vand.u32 %v231, 4294901760
  %1982 = vmatmul.mubr.f32.gmra.mxu0 %v1981
  %v1983 = vpop.f32.mrf.mxu0
  %v1984 = vadd.f32 %v1775, %v1983
  %v1985 = vpop.f32.mrf.mxu0
  %v1986 = vand.u32 %v236, 4294901760
  %1987 = vmatprep.mubr.f32.mxu0 %v1986
  %v1988 = vand.u32 %v235, 4294901760
  %1989 = vmatmul.mubr.f32.gmra.mxu0 %v1988
  %v1990 = vpop.f32.mrf.mxu0
  %v1991 = vadd.f32 %v1782, %v1990
  %v1992 = vpop.f32.mrf.mxu0
  %v1993 = vand.u32 %v240, 4294901760
  %1994 = vmatprep.mubr.f32.mxu0 %v1993
  %v1995 = vand.u32 %v239, 4294901760
  %1996 = vmatmul.mubr.f32.gmra.mxu0 %v1995
  %v1997 = vpop.f32.mrf.mxu0
  %v1998 = vadd.f32 %v1789, %v1997
  %v1999 = vpop.f32.mrf.mxu0
  %v2000 = vand.u32 %v244, 4294901760
  %2001 = vmatprep.mubr.f32.mxu0 %v2000
  %v2002 = vand.u32 %v243, 4294901760
  %2003 = vmatmul.mubr.f32.gmra.mxu0 %v2002
  %v2004 = vpop.f32.mrf.mxu0
  %v2005 = vadd.f32 %v1796, %v2004
  %v2006 = vpop.f32.mrf.mxu0
  %v2007 = vand.u32 %v248, 4294901760
  %2008 = vmatprep.mubr.f32.mxu0 %v2007
  %v2009 = vand.u32 %v247, 4294901760
  %2010 = vmatmul.mubr.f32.gmra.mxu0 %v2009
  %v2011 = vpop.f32.mrf.mxu0
  %v2012 = vadd.f32 %v1803, %v2011
  %v2013 = vpop.f32.mrf.mxu0
  %v2014 = vand.u32 %v252, 4294901760
  %2015 = vmatprep.mubr.f32.mxu0 %v2014
  %v2016 = vand.u32 %v251, 4294901760
  %2017 = vmatmul.mubr.f32.gmra.mxu0 %v2016
  %v2018 = vpop.f32.mrf.mxu0
  %v2019 = vadd.f32 %v1810, %v2018
  %v2020 = vpop.f32.mrf.mxu0
  %v2021 = vand.u32 %v256, 4294901760
  %2022 = vmatprep.mubr.f32.mxu0 %v2021
  %v2023 = vand.u32 %v255, 4294901760
  %2024 = vmatmul.mubr.f32.gmra.mxu0 %v2023
  %v2025 = vpop.f32.mrf.mxu0
  %v2026 = vadd.f32 %v1817, %v2025
  %v2027 = vpop.f32.mrf.mxu0
  %v2028 = vand.u32 %v260, 4294901760
  %2029 = vmatprep.mubr.f32.mxu0 %v2028
  %v2030 = vand.u32 %v259, 4294901760
  %2031 = vmatmul.mubr.f32.gmra.mxu0 %v2030
  %v2032 = vpop.f32.mrf.mxu0
  %v2033 = vadd.f32 %v1824, %v2032
  %v2034 = vpop.f32.mrf.mxu0
  %v2035 = vand.u32 %v264, 4294901760
  %2036 = vmatprep.mubr.f32.mxu0 %v2035
  %v2037 = vand.u32 %v263, 4294901760
  %2038 = vmatmul.mubr.f32.gmra.mxu0 %v2037
  %v2039 = vpop.f32.mrf.mxu0
  %v2040 = vadd.f32 %v1831, %v2039
  %v2041 = vpop.f32.mrf.mxu0
  %v2042 = vand.u32 %v268, 4294901760
  %2043 = vmatprep.mubr.f32.mxu0 %v2042
  %v2044 = vand.u32 %v267, 4294901760
  %2045 = vmatmul.mubr.f32.gmra.mxu0 %v2044
  %v2046 = vpop.f32.mrf.mxu0
  %v2047 = vadd.f32 %v1838, %v2046
  %v2048 = vpop.f32.mrf.mxu0
  %v2049 = vand.u32 %v272, 4294901760
  %2050 = vmatprep.mubr.f32.mxu0 %v2049
  %v2051 = vand.u32 %v271, 4294901760
  %2052 = vmatmul.mubr.f32.gmra.mxu0 %v2051
  %v2053 = vpop.f32.mrf.mxu0
  %v2054 = vadd.f32 %v1845, %v2053
  %v2055 = vpop.f32.mrf.mxu0
  %2056 = vdwg.mxu0
  %2057 = vmatprep.subr.mxu0 0.0
  %v2058 = vand.u32 %v322, 4294901760
  %2059 = vmatpush1.msra.mxu0 %v2058
  %2060 = vmatprep.subr.mxu0 0.0
  %v2061 = vand.u32 %v321, 4294901760
  %2062 = vmatpush1.msra.mxu0 %v2061
  %2063 = vmatprep.subr.mxu0 0.0
  %v2064 = vand.u32 %v320, 4294901760
  %2065 = vmatpush1.msra.mxu0 %v2064
  %2066 = vmatprep.subr.mxu0 0.0
  %v2067 = vand.u32 %v319, 4294901760
  %2068 = vmatpush1.msra.mxu0 %v2067
  %2069 = vmatprep.subr.mxu0 0.0
  %v2070 = vand.u32 %v318, 4294901760
  %2071 = vmatpush1.msra.mxu0 %v2070
  %2072 = vmatprep.subr.mxu0 0.0
  %v2073 = vand.u32 %v317, 4294901760
  %2074 = vmatpush1.msra.mxu0 %v2073
  %2075 = vmatprep.subr.mxu0 0.0
  %v2076 = vand.u32 %v316, 4294901760
  %2077 = vmatpush1.msra.mxu0 %v2076
  %2078 = vmatprep.subr.mxu0 0.0
  %v2079 = vand.u32 %v315, 4294901760
  %2080 = vmatpush1.msra.mxu0 %v2079
  %2081 = vmatprep.subr.mxu0 0.0
  %v2082 = vand.u32 %v314, 4294901760
  %2083 = vmatpush1.msra.mxu0 %v2082
  %2084 = vmatprep.subr.mxu0 0.0
  %v2085 = vand.u32 %v313, 4294901760
  %2086 = vmatpush1.msra.mxu0 %v2085
  %2087 = vmatprep.subr.mxu0 0.0
  %v2088 = vand.u32 %v312, 4294901760
  %2089 = vmatpush1.msra.mxu0 %v2088
  %2090 = vmatprep.subr.mxu0 0.0
  %v2091 = vand.u32 %v311, 4294901760
  %2092 = vmatpush1.msra.mxu0 %v2091
  %2093 = vmatprep.subr.mxu0 0.0
  %v2094 = vand.u32 %v310, 4294901760
  %2095 = vmatpush1.msra.mxu0 %v2094
  %2096 = vmatprep.subr.mxu0 0.0
  %v2097 = vand.u32 %v309, 4294901760
  %2098 = vmatpush1.msra.mxu0 %v2097
  %2099 = vmatprep.subr.mxu0 0.0
  %v2100 = vand.u32 %v308, 4294901760
  %2101 = vmatpush1.msra.mxu0 %v2100
  %2102 = vmatprep.subr.mxu0 0.0
  %v2103 = vand.u32 %v307, 4294901760
  %2104 = vmatpush1.msra.mxu0 %v2103
  %2105 = vmatprep.subr.mxu0 0.0
  %v2106 = vand.u32 %v338, 4294901760
  %2107 = vmatpush2.msra.mxu0 %v2106
  %2108 = vmatprep.subr.mxu0 0.0
  %v2109 = vand.u32 %v337, 4294901760
  %2110 = vmatpush2.msra.mxu0 %v2109
  %2111 = vmatprep.subr.mxu0 0.0
  %v2112 = vand.u32 %v336, 4294901760
  %2113 = vmatpush2.msra.mxu0 %v2112
  %2114 = vmatprep.subr.mxu0 0.0
  %v2115 = vand.u32 %v335, 4294901760
  %2116 = vmatpush2.msra.mxu0 %v2115
  %2117 = vmatprep.subr.mxu0 0.0
  %v2118 = vand.u32 %v334, 4294901760
  %2119 = vmatpush2.msra.mxu0 %v2118
  %2120 = vmatprep.subr.mxu0 0.0
  %v2121 = vand.u32 %v333, 4294901760
  %2122 = vmatpush2.msra.mxu0 %v2121
  %2123 = vmatprep.subr.mxu0 0.0
  %v2124 = vand.u32 %v332, 4294901760
  %2125 = vmatpush2.msra.mxu0 %v2124
  %2126 = vmatprep.subr.mxu0 0.0
  %v2127 = vand.u32 %v331, 4294901760
  %2128 = vmatpush2.msra.mxu0 %v2127
  %2129 = vmatprep.subr.mxu0 0.0
  %v2130 = vand.u32 %v330, 4294901760
  %2131 = vmatpush2.msra.mxu0 %v2130
  %2132 = vmatprep.subr.mxu0 0.0
  %v2133 = vand.u32 %v329, 4294901760
  %2134 = vmatpush2.msra.mxu0 %v2133
  %2135 = vmatprep.subr.mxu0 0.0
  %v2136 = vand.u32 %v328, 4294901760
  %2137 = vmatpush2.msra.mxu0 %v2136
  %2138 = vmatprep.subr.mxu0 0.0
  %v2139 = vand.u32 %v327, 4294901760
  %2140 = vmatpush2.msra.mxu0 %v2139
  %2141 = vmatprep.subr.mxu0 0.0
  %v2142 = vand.u32 %v326, 4294901760
  %2143 = vmatpush2.msra.mxu0 %v2142
  %2144 = vmatprep.subr.mxu0 0.0
  %v2145 = vand.u32 %v325, 4294901760
  %2146 = vmatpush2.msra.mxu0 %v2145
  %2147 = vmatprep.subr.mxu0 0.0
  %v2148 = vand.u32 %v324, 4294901760
  %2149 = vmatpush2.msra.mxu0 %v2148
  %2150 = vmatprep.subr.mxu0 0.0
  %v2151 = vand.u32 %v323, 4294901760
  %2152 = vmatpush2.msra.mxu0 %v2151
  %v2153 = vand.u32 %v214, 4294901760
  %v2154 = vsub.f32 %v214, %v2153
  %v2155 = vand.u32 %v2154, 4294901760
  %v2156 = vsub.f32 %v2154, %v2155
  %v2157 = vand.u32 %v2156, 4294901760
  %2158 = vmatprep.mubr.f32.mxu0 %v2157
  %v2159 = vand.u32 %v213, 4294901760
  %v2160 = vsub.f32 %v213, %v2159
  %v2161 = vand.u32 %v2160, 4294901760
  %v2162 = vsub.f32 %v2160, %v2161
  %v2163 = vand.u32 %v2162, 4294901760
  %2164 = vmatmul.mubr.f32.gmra.mxu0 %v2163
  %v2165 = vpop.f32.mrf.mxu0
  %v2166 = vadd.f32 %v1949, %v2165
  %v2167 = vpop.f32.mrf.mxu0
  %v2168 = vand.u32 %v218, 4294901760
  %v2169 = vsub.f32 %v218, %v2168
  %v2170 = vand.u32 %v2169, 4294901760
  %v2171 = vsub.f32 %v2169, %v2170
  %v2172 = vand.u32 %v2171, 4294901760
  %2173 = vmatprep.mubr.f32.mxu0 %v2172
  %v2174 = vand.u32 %v217, 4294901760
  %v2175 = vsub.f32 %v217, %v2174
  %v2176 = vand.u32 %v2175, 4294901760
  %v2177 = vsub.f32 %v2175, %v2176
  %v2178 = vand.u32 %v2177, 4294901760
  %2179 = vmatmul.mubr.f32.gmra.mxu0 %v2178
  %v2180 = vpop.f32.mrf.mxu0
  %v2181 = vadd.f32 %v1956, %v2180
  %v2182 = vpop.f32.mrf.mxu0
  %v2183 = vand.u32 %v222, 4294901760
  %v2184 = vsub.f32 %v222, %v2183
  %v2185 = vand.u32 %v2184, 4294901760
  %v2186 = vsub.f32 %v2184, %v2185
  %v2187 = vand.u32 %v2186, 4294901760
  %2188 = vmatprep.mubr.f32.mxu0 %v2187
  %v2189 = vand.u32 %v221, 4294901760
  %v2190 = vsub.f32 %v221, %v2189
  %v2191 = vand.u32 %v2190, 4294901760
  %v2192 = vsub.f32 %v2190, %v2191
  %v2193 = vand.u32 %v2192, 4294901760
  %2194 = vmatmul.mubr.f32.gmra.mxu0 %v2193
  %v2195 = vpop.f32.mrf.mxu0
  %v2196 = vadd.f32 %v1963, %v2195
  %v2197 = vpop.f32.mrf.mxu0
  %v2198 = vand.u32 %v226, 4294901760
  %v2199 = vsub.f32 %v226, %v2198
  %v2200 = vand.u32 %v2199, 4294901760
  %v2201 = vsub.f32 %v2199, %v2200
  %v2202 = vand.u32 %v2201, 4294901760
  %2203 = vmatprep.mubr.f32.mxu0 %v2202
  %v2204 = vand.u32 %v225, 4294901760
  %v2205 = vsub.f32 %v225, %v2204
  %v2206 = vand.u32 %v2205, 4294901760
  %v2207 = vsub.f32 %v2205, %v2206
  %v2208 = vand.u32 %v2207, 4294901760
  %2209 = vmatmul.mubr.f32.gmra.mxu0 %v2208
  %v2210 = vpop.f32.mrf.mxu0
  %v2211 = vadd.f32 %v1970, %v2210
  %v2212 = vpop.f32.mrf.mxu0
  %v2213 = vand.u32 %v230, 4294901760
  %v2214 = vsub.f32 %v230, %v2213
  %v2215 = vand.u32 %v2214, 4294901760
  %v2216 = vsub.f32 %v2214, %v2215
  %v2217 = vand.u32 %v2216, 4294901760
  %2218 = vmatprep.mubr.f32.mxu0 %v2217
  %v2219 = vand.u32 %v229, 4294901760
  %v2220 = vsub.f32 %v229, %v2219
  %v2221 = vand.u32 %v2220, 4294901760
  %v2222 = vsub.f32 %v2220, %v2221
  %v2223 = vand.u32 %v2222, 4294901760
  %2224 = vmatmul.mubr.f32.gmra.mxu0 %v2223
  %v2225 = vpop.f32.mrf.mxu0
  %v2226 = vadd.f32 %v1977, %v2225
  %v2227 = vpop.f32.mrf.mxu0
  %v2228 = vand.u32 %v234, 4294901760
  %v2229 = vsub.f32 %v234, %v2228
  %v2230 = vand.u32 %v2229, 4294901760
  %v2231 = vsub.f32 %v2229, %v2230
  %v2232 = vand.u32 %v2231, 4294901760
  %2233 = vmatprep.mubr.f32.mxu0 %v2232
  %v2234 = vand.u32 %v233, 4294901760
  %v2235 = vsub.f32 %v233, %v2234
  %v2236 = vand.u32 %v2235, 4294901760
  %v2237 = vsub.f32 %v2235, %v2236
  %v2238 = vand.u32 %v2237, 4294901760
  %2239 = vmatmul.mubr.f32.gmra.mxu0 %v2238
  %v2240 = vpop.f32.mrf.mxu0
  %v2241 = vadd.f32 %v1984, %v2240
  %v2242 = vpop.f32.mrf.mxu0
  %v2243 = vand.u32 %v238, 4294901760
  %v2244 = vsub.f32 %v238, %v2243
  %v2245 = vand.u32 %v2244, 4294901760
  %v2246 = vsub.f32 %v2244, %v2245
  %v2247 = vand.u32 %v2246, 4294901760
  %2248 = vmatprep.mubr.f32.mxu0 %v2247
  %v2249 = vand.u32 %v237, 4294901760
  %v2250 = vsub.f32 %v237, %v2249
  %v2251 = vand.u32 %v2250, 4294901760
  %v2252 = vsub.f32 %v2250, %v2251
  %v2253 = vand.u32 %v2252, 4294901760
  %2254 = vmatmul.mubr.f32.gmra.mxu0 %v2253
  %v2255 = vpop.f32.mrf.mxu0
  %v2256 = vadd.f32 %v1991, %v2255
  %v2257 = vpop.f32.mrf.mxu0
  %v2258 = vand.u32 %v242, 4294901760
  %v2259 = vsub.f32 %v242, %v2258
  %v2260 = vand.u32 %v2259, 4294901760
  %v2261 = vsub.f32 %v2259, %v2260
  %v2262 = vand.u32 %v2261, 4294901760
  %2263 = vmatprep.mubr.f32.mxu0 %v2262
  %v2264 = vand.u32 %v241, 4294901760
  %v2265 = vsub.f32 %v241, %v2264
  %v2266 = vand.u32 %v2265, 4294901760
  %v2267 = vsub.f32 %v2265, %v2266
  %v2268 = vand.u32 %v2267, 4294901760
  %2269 = vmatmul.mubr.f32.gmra.mxu0 %v2268
  %v2270 = vpop.f32.mrf.mxu0
  %v2271 = vadd.f32 %v1998, %v2270
  %v2272 = vpop.f32.mrf.mxu0
  %v2273 = vand.u32 %v246, 4294901760
  %v2274 = vsub.f32 %v246, %v2273
  %v2275 = vand.u32 %v2274, 4294901760
  %v2276 = vsub.f32 %v2274, %v2275
  %v2277 = vand.u32 %v2276, 4294901760
  %2278 = vmatprep.mubr.f32.mxu0 %v2277
  %v2279 = vand.u32 %v245, 4294901760
  %v2280 = vsub.f32 %v245, %v2279
  %v2281 = vand.u32 %v2280, 4294901760
  %v2282 = vsub.f32 %v2280, %v2281
  %v2283 = vand.u32 %v2282, 4294901760
  %2284 = vmatmul.mubr.f32.gmra.mxu0 %v2283
  %v2285 = vpop.f32.mrf.mxu0
  %v2286 = vadd.f32 %v2005, %v2285
  %v2287 = vpop.f32.mrf.mxu0
  %v2288 = vand.u32 %v250, 4294901760
  %v2289 = vsub.f32 %v250, %v2288
  %v2290 = vand.u32 %v2289, 4294901760
  %v2291 = vsub.f32 %v2289, %v2290
  %v2292 = vand.u32 %v2291, 4294901760
  %2293 = vmatprep.mubr.f32.mxu0 %v2292
  %v2294 = vand.u32 %v249, 4294901760
  %v2295 = vsub.f32 %v249, %v2294
  %v2296 = vand.u32 %v2295, 4294901760
  %v2297 = vsub.f32 %v2295, %v2296
  %v2298 = vand.u32 %v2297, 4294901760
  %2299 = vmatmul.mubr.f32.gmra.mxu0 %v2298
  %v2300 = vpop.f32.mrf.mxu0
  %v2301 = vadd.f32 %v2012, %v2300
  %v2302 = vpop.f32.mrf.mxu0
  %v2303 = vand.u32 %v254, 4294901760
  %v2304 = vsub.f32 %v254, %v2303
  %v2305 = vand.u32 %v2304, 4294901760
  %v2306 = vsub.f32 %v2304, %v2305
  %v2307 = vand.u32 %v2306, 4294901760
  %2308 = vmatprep.mubr.f32.mxu0 %v2307
  %v2309 = vand.u32 %v253, 4294901760
  %v2310 = vsub.f32 %v253, %v2309
  %v2311 = vand.u32 %v2310, 4294901760
  %v2312 = vsub.f32 %v2310, %v2311
  %v2313 = vand.u32 %v2312, 4294901760
  %2314 = vmatmul.mubr.f32.gmra.mxu0 %v2313
  %v2315 = vpop.f32.mrf.mxu0
  %v2316 = vadd.f32 %v2019, %v2315
  %v2317 = vpop.f32.mrf.mxu0
  %v2318 = vand.u32 %v258, 4294901760
  %v2319 = vsub.f32 %v258, %v2318
  %v2320 = vand.u32 %v2319, 4294901760
  %v2321 = vsub.f32 %v2319, %v2320
  %v2322 = vand.u32 %v2321, 4294901760
  %2323 = vmatprep.mubr.f32.mxu0 %v2322
  %v2324 = vand.u32 %v257, 4294901760
  %v2325 = vsub.f32 %v257, %v2324
  %v2326 = vand.u32 %v2325, 4294901760
  %v2327 = vsub.f32 %v2325, %v2326
  %v2328 = vand.u32 %v2327, 4294901760
  %2329 = vmatmul.mubr.f32.gmra.mxu0 %v2328
  %v2330 = vpop.f32.mrf.mxu0
  %v2331 = vadd.f32 %v2026, %v2330
  %v2332 = vpop.f32.mrf.mxu0
  %v2333 = vand.u32 %v262, 4294901760
  %v2334 = vsub.f32 %v262, %v2333
  %v2335 = vand.u32 %v2334, 4294901760
  %v2336 = vsub.f32 %v2334, %v2335
  %v2337 = vand.u32 %v2336, 4294901760
  %2338 = vmatprep.mubr.f32.mxu0 %v2337
  %v2339 = vand.u32 %v261, 4294901760
  %v2340 = vsub.f32 %v261, %v2339
  %v2341 = vand.u32 %v2340, 4294901760
  %v2342 = vsub.f32 %v2340, %v2341
  %v2343 = vand.u32 %v2342, 4294901760
  %2344 = vmatmul.mubr.f32.gmra.mxu0 %v2343
  %v2345 = vpop.f32.mrf.mxu0
  %v2346 = vadd.f32 %v2033, %v2345
  %v2347 = vpop.f32.mrf.mxu0
  %v2348 = vand.u32 %v266, 4294901760
  %v2349 = vsub.f32 %v266, %v2348
  %v2350 = vand.u32 %v2349, 4294901760
  %v2351 = vsub.f32 %v2349, %v2350
  %v2352 = vand.u32 %v2351, 4294901760
  %2353 = vmatprep.mubr.f32.mxu0 %v2352
  %v2354 = vand.u32 %v265, 4294901760
  %v2355 = vsub.f32 %v265, %v2354
  %v2356 = vand.u32 %v2355, 4294901760
  %v2357 = vsub.f32 %v2355, %v2356
  %v2358 = vand.u32 %v2357, 4294901760
  %2359 = vmatmul.mubr.f32.gmra.mxu0 %v2358
  %v2360 = vpop.f32.mrf.mxu0
  %v2361 = vadd.f32 %v2040, %v2360
  %v2362 = vpop.f32.mrf.mxu0
  %v2363 = vand.u32 %v270, 4294901760
  %v2364 = vsub.f32 %v270, %v2363
  %v2365 = vand.u32 %v2364, 4294901760
  %v2366 = vsub.f32 %v2364, %v2365
  %v2367 = vand.u32 %v2366, 4294901760
  %2368 = vmatprep.mubr.f32.mxu0 %v2367
  %v2369 = vand.u32 %v269, 4294901760
  %v2370 = vsub.f32 %v269, %v2369
  %v2371 = vand.u32 %v2370, 4294901760
  %v2372 = vsub.f32 %v2370, %v2371
  %v2373 = vand.u32 %v2372, 4294901760
  %2374 = vmatmul.mubr.f32.gmra.mxu0 %v2373
  %v2375 = vpop.f32.mrf.mxu0
  %v2376 = vadd.f32 %v2047, %v2375
  %v2377 = vpop.f32.mrf.mxu0
  %v2378 = vand.u32 %v274, 4294901760
  %v2379 = vsub.f32 %v274, %v2378
  %v2380 = vand.u32 %v2379, 4294901760
  %v2381 = vsub.f32 %v2379, %v2380
  %v2382 = vand.u32 %v2381, 4294901760
  %2383 = vmatprep.mubr.f32.mxu0 %v2382
  %v2384 = vand.u32 %v273, 4294901760
  %v2385 = vsub.f32 %v273, %v2384
  %v2386 = vand.u32 %v2385, 4294901760
  %v2387 = vsub.f32 %v2385, %v2386
  %v2388 = vand.u32 %v2387, 4294901760
  %2389 = vmatmul.mubr.f32.gmra.mxu0 %v2388
  %v2390 = vpop.f32.mrf.mxu0
  %v2391 = vadd.f32 %v2054, %v2390
  %v2392 = vpop.f32.mrf.mxu0
  %2393 = vdwg.mxu0
  %2394 = vmatprep.subr.mxu0 0.0
  %v2395 = vand.u32 %v322, 4294901760
  %v2396 = vsub.f32 %v322, %v2395
  %v2397 = vand.u32 %v2396, 4294901760
  %v2398 = vsub.f32 %v2396, %v2397
  %v2399 = vand.u32 %v2398, 4294901760
  %2400 = vmatpush1.msra.mxu0 %v2399
  %2401 = vmatprep.subr.mxu0 0.0
  %v2402 = vand.u32 %v321, 4294901760
  %v2403 = vsub.f32 %v321, %v2402
  %v2404 = vand.u32 %v2403, 4294901760
  %v2405 = vsub.f32 %v2403, %v2404
  %v2406 = vand.u32 %v2405, 4294901760
  %2407 = vmatpush1.msra.mxu0 %v2406
  %2408 = vmatprep.subr.mxu0 0.0
  %v2409 = vand.u32 %v320, 4294901760
  %v2410 = vsub.f32 %v320, %v2409
  %v2411 = vand.u32 %v2410, 4294901760
  %v2412 = vsub.f32 %v2410, %v2411
  %v2413 = vand.u32 %v2412, 4294901760
  %2414 = vmatpush1.msra.mxu0 %v2413
  %2415 = vmatprep.subr.mxu0 0.0
  %v2416 = vand.u32 %v319, 4294901760
  %v2417 = vsub.f32 %v319, %v2416
  %v2418 = vand.u32 %v2417, 4294901760
  %v2419 = vsub.f32 %v2417, %v2418
  %v2420 = vand.u32 %v2419, 4294901760
  %2421 = vmatpush1.msra.mxu0 %v2420
  %2422 = vmatprep.subr.mxu0 0.0
  %v2423 = vand.u32 %v318, 4294901760
  %v2424 = vsub.f32 %v318, %v2423
  %v2425 = vand.u32 %v2424, 4294901760
  %v2426 = vsub.f32 %v2424, %v2425
  %v2427 = vand.u32 %v2426, 4294901760
  %2428 = vmatpush1.msra.mxu0 %v2427
  %2429 = vmatprep.subr.mxu0 0.0
  %v2430 = vand.u32 %v317, 4294901760
  %v2431 = vsub.f32 %v317, %v2430
  %v2432 = vand.u32 %v2431, 4294901760
  %v2433 = vsub.f32 %v2431, %v2432
  %v2434 = vand.u32 %v2433, 4294901760
  %2435 = vmatpush1.msra.mxu0 %v2434
  %2436 = vmatprep.subr.mxu0 0.0
  %v2437 = vand.u32 %v316, 4294901760
  %v2438 = vsub.f32 %v316, %v2437
  %v2439 = vand.u32 %v2438, 4294901760
  %v2440 = vsub.f32 %v2438, %v2439
  %v2441 = vand.u32 %v2440, 4294901760
  %2442 = vmatpush1.msra.mxu0 %v2441
  %2443 = vmatprep.subr.mxu0 0.0
  %v2444 = vand.u32 %v315, 4294901760
  %v2445 = vsub.f32 %v315, %v2444
  %v2446 = vand.u32 %v2445, 4294901760
  %v2447 = vsub.f32 %v2445, %v2446
  %v2448 = vand.u32 %v2447, 4294901760
  %2449 = vmatpush1.msra.mxu0 %v2448
  %2450 = vmatprep.subr.mxu0 0.0
  %v2451 = vand.u32 %v314, 4294901760
  %v2452 = vsub.f32 %v314, %v2451
  %v2453 = vand.u32 %v2452, 4294901760
  %v2454 = vsub.f32 %v2452, %v2453
  %v2455 = vand.u32 %v2454, 4294901760
  %2456 = vmatpush1.msra.mxu0 %v2455
  %2457 = vmatprep.subr.mxu0 0.0
  %v2458 = vand.u32 %v313, 4294901760
  %v2459 = vsub.f32 %v313, %v2458
  %v2460 = vand.u32 %v2459, 4294901760
  %v2461 = vsub.f32 %v2459, %v2460
  %v2462 = vand.u32 %v2461, 4294901760
  %2463 = vmatpush1.msra.mxu0 %v2462
  %2464 = vmatprep.subr.mxu0 0.0
  %v2465 = vand.u32 %v312, 4294901760
  %v2466 = vsub.f32 %v312, %v2465
  %v2467 = vand.u32 %v2466, 4294901760
  %v2468 = vsub.f32 %v2466, %v2467
  %v2469 = vand.u32 %v2468, 4294901760
  %2470 = vmatpush1.msra.mxu0 %v2469
  %2471 = vmatprep.subr.mxu0 0.0
  %v2472 = vand.u32 %v311, 4294901760
  %v2473 = vsub.f32 %v311, %v2472
  %v2474 = vand.u32 %v2473, 4294901760
  %v2475 = vsub.f32 %v2473, %v2474
  %v2476 = vand.u32 %v2475, 4294901760
  %2477 = vmatpush1.msra.mxu0 %v2476
  %2478 = vmatprep.subr.mxu0 0.0
  %v2479 = vand.u32 %v310, 4294901760
  %v2480 = vsub.f32 %v310, %v2479
  %v2481 = vand.u32 %v2480, 4294901760
  %v2482 = vsub.f32 %v2480, %v2481
  %v2483 = vand.u32 %v2482, 4294901760
  %2484 = vmatpush1.msra.mxu0 %v2483
  %2485 = vmatprep.subr.mxu0 0.0
  %v2486 = vand.u32 %v309, 4294901760
  %v2487 = vsub.f32 %v309, %v2486
  %v2488 = vand.u32 %v2487, 4294901760
  %v2489 = vsub.f32 %v2487, %v2488
  %v2490 = vand.u32 %v2489, 4294901760
  %2491 = vmatpush1.msra.mxu0 %v2490
  %2492 = vmatprep.subr.mxu0 0.0
  %v2493 = vand.u32 %v308, 4294901760
  %v2494 = vsub.f32 %v308, %v2493
  %v2495 = vand.u32 %v2494, 4294901760
  %v2496 = vsub.f32 %v2494, %v2495
  %v2497 = vand.u32 %v2496, 4294901760
  %2498 = vmatpush1.msra.mxu0 %v2497
  %2499 = vmatprep.subr.mxu0 0.0
  %v2500 = vand.u32 %v307, 4294901760
  %v2501 = vsub.f32 %v307, %v2500
  %v2502 = vand.u32 %v2501, 4294901760
  %v2503 = vsub.f32 %v2501, %v2502
  %v2504 = vand.u32 %v2503, 4294901760
  %2505 = vmatpush1.msra.mxu0 %v2504
  %2506 = vmatprep.subr.mxu0 0.0
  %v2507 = vand.u32 %v338, 4294901760
  %v2508 = vsub.f32 %v338, %v2507
  %v2509 = vand.u32 %v2508, 4294901760
  %v2510 = vsub.f32 %v2508, %v2509
  %v2511 = vand.u32 %v2510, 4294901760
  %2512 = vmatpush2.msra.mxu0 %v2511
  %2513 = vmatprep.subr.mxu0 0.0
  %v2514 = vand.u32 %v337, 4294901760
  %v2515 = vsub.f32 %v337, %v2514
  %v2516 = vand.u32 %v2515, 4294901760
  %v2517 = vsub.f32 %v2515, %v2516
  %v2518 = vand.u32 %v2517, 4294901760
  %2519 = vmatpush2.msra.mxu0 %v2518
  %2520 = vmatprep.subr.mxu0 0.0
  %v2521 = vand.u32 %v336, 4294901760
  %v2522 = vsub.f32 %v336, %v2521
  %v2523 = vand.u32 %v2522, 4294901760
  %v2524 = vsub.f32 %v2522, %v2523
  %v2525 = vand.u32 %v2524, 4294901760
  %2526 = vmatpush2.msra.mxu0 %v2525
  %2527 = vmatprep.subr.mxu0 0.0
  %v2528 = vand.u32 %v335, 4294901760
  %v2529 = vsub.f32 %v335, %v2528
  %v2530 = vand.u32 %v2529, 4294901760
  %v2531 = vsub.f32 %v2529, %v2530
  %v2532 = vand.u32 %v2531, 4294901760
  %2533 = vmatpush2.msra.mxu0 %v2532
  %2534 = vmatprep.subr.mxu0 0.0
  %v2535 = vand.u32 %v334, 4294901760
  %v2536 = vsub.f32 %v334, %v2535
  %v2537 = vand.u32 %v2536, 4294901760
  %v2538 = vsub.f32 %v2536, %v2537
  %v2539 = vand.u32 %v2538, 4294901760
  %2540 = vmatpush2.msra.mxu0 %v2539
  %2541 = vmatprep.subr.mxu0 0.0
  %v2542 = vand.u32 %v333, 4294901760
  %v2543 = vsub.f32 %v333, %v2542
  %v2544 = vand.u32 %v2543, 4294901760
  %v2545 = vsub.f32 %v2543, %v2544
  %v2546 = vand.u32 %v2545, 4294901760
  %2547 = vmatpush2.msra.mxu0 %v2546
  %2548 = vmatprep.subr.mxu0 0.0
  %v2549 = vand.u32 %v332, 4294901760
  %v2550 = vsub.f32 %v332, %v2549
  %v2551 = vand.u32 %v2550, 4294901760
  %v2552 = vsub.f32 %v2550, %v2551
  %v2553 = vand.u32 %v2552, 4294901760
  %2554 = vmatpush2.msra.mxu0 %v2553
  %2555 = vmatprep.subr.mxu0 0.0
  %v2556 = vand.u32 %v331, 4294901760
  %v2557 = vsub.f32 %v331, %v2556
  %v2558 = vand.u32 %v2557, 4294901760
  %v2559 = vsub.f32 %v2557, %v2558
  %v2560 = vand.u32 %v2559, 4294901760
  %2561 = vmatpush2.msra.mxu0 %v2560
  %2562 = vmatprep.subr.mxu0 0.0
  %v2563 = vand.u32 %v330, 4294901760
  %v2564 = vsub.f32 %v330, %v2563
  %v2565 = vand.u32 %v2564, 4294901760
  %v2566 = vsub.f32 %v2564, %v2565
  %v2567 = vand.u32 %v2566, 4294901760
  %2568 = vmatpush2.msra.mxu0 %v2567
  %2569 = vmatprep.subr.mxu0 0.0
  %v2570 = vand.u32 %v329, 4294901760
  %v2571 = vsub.f32 %v329, %v2570
  %v2572 = vand.u32 %v2571, 4294901760
  %v2573 = vsub.f32 %v2571, %v2572
  %v2574 = vand.u32 %v2573, 4294901760
  %2575 = vmatpush2.msra.mxu0 %v2574
  %2576 = vmatprep.subr.mxu0 0.0
  %v2577 = vand.u32 %v328, 4294901760
  %v2578 = vsub.f32 %v328, %v2577
  %v2579 = vand.u32 %v2578, 4294901760
  %v2580 = vsub.f32 %v2578, %v2579
  %v2581 = vand.u32 %v2580, 4294901760
  %2582 = vmatpush2.msra.mxu0 %v2581
  %2583 = vmatprep.subr.mxu0 0.0
  %v2584 = vand.u32 %v327, 4294901760
  %v2585 = vsub.f32 %v327, %v2584
  %v2586 = vand.u32 %v2585, 4294901760
  %v2587 = vsub.f32 %v2585, %v2586
  %v2588 = vand.u32 %v2587, 4294901760
  %2589 = vmatpush2.msra.mxu0 %v2588
  %2590 = vmatprep.subr.mxu0 0.0
  %v2591 = vand.u32 %v326, 4294901760
  %v2592 = vsub.f32 %v326, %v2591
  %v2593 = vand.u32 %v2592, 4294901760
  %v2594 = vsub.f32 %v2592, %v2593
  %v2595 = vand.u32 %v2594, 4294901760
  %2596 = vmatpush2.msra.mxu0 %v2595
  %2597 = vmatprep.subr.mxu0 0.0
  %v2598 = vand.u32 %v325, 4294901760
  %v2599 = vsub.f32 %v325, %v2598
  %v2600 = vand.u32 %v2599, 4294901760
  %v2601 = vsub.f32 %v2599, %v2600
  %v2602 = vand.u32 %v2601, 4294901760
  %2603 = vmatpush2.msra.mxu0 %v2602
  %2604 = vmatprep.subr.mxu0 0.0
  %v2605 = vand.u32 %v324, 4294901760
  %v2606 = vsub.f32 %v324, %v2605
  %v2607 = vand.u32 %v2606, 4294901760
  %v2608 = vsub.f32 %v2606, %v2607
  %v2609 = vand.u32 %v2608, 4294901760
  %2610 = vmatpush2.msra.mxu0 %v2609
  %2611 = vmatprep.subr.mxu0 0.0
  %v2612 = vand.u32 %v323, 4294901760
  %v2613 = vsub.f32 %v323, %v2612
  %v2614 = vand.u32 %v2613, 4294901760
  %v2615 = vsub.f32 %v2613, %v2614
  %v2616 = vand.u32 %v2615, 4294901760
  %2617 = vmatpush2.msra.mxu0 %v2616
  %v2618 = vand.u32 %v214, 4294901760
  %2619 = vmatprep.mubr.f32.mxu0 %v2618
  %v2620 = vand.u32 %v213, 4294901760
  %2621 = vmatmul.mubr.f32.gmra.mxu0 %v2620
  %v2622 = vpop.f32.mrf.mxu0
  %v2623 = vadd.f32 %v2166, %v2622
  %v2624 = vpop.f32.mrf.mxu0
  %v2625 = vand.u32 %v218, 4294901760
  %2626 = vmatprep.mubr.f32.mxu0 %v2625
  %v2627 = vand.u32 %v217, 4294901760
  %2628 = vmatmul.mubr.f32.gmra.mxu0 %v2627
  %v2629 = vpop.f32.mrf.mxu0
  %v2630 = vadd.f32 %v2181, %v2629
  %v2631 = vpop.f32.mrf.mxu0
  %v2632 = vand.u32 %v222, 4294901760
  %2633 = vmatprep.mubr.f32.mxu0 %v2632
  %v2634 = vand.u32 %v221, 4294901760
  %2635 = vmatmul.mubr.f32.gmra.mxu0 %v2634
  %v2636 = vpop.f32.mrf.mxu0
  %v2637 = vadd.f32 %v2196, %v2636
  %v2638 = vpop.f32.mrf.mxu0
  %v2639 = vand.u32 %v226, 4294901760
  %2640 = vmatprep.mubr.f32.mxu0 %v2639
  %v2641 = vand.u32 %v225, 4294901760
  %2642 = vmatmul.mubr.f32.gmra.mxu0 %v2641
  %v2643 = vpop.f32.mrf.mxu0
  %v2644 = vadd.f32 %v2211, %v2643
  %v2645 = vpop.f32.mrf.mxu0
  %v2646 = vand.u32 %v230, 4294901760
  %2647 = vmatprep.mubr.f32.mxu0 %v2646
  %v2648 = vand.u32 %v229, 4294901760
  %2649 = vmatmul.mubr.f32.gmra.mxu0 %v2648
  %v2650 = vpop.f32.mrf.mxu0
  %v2651 = vadd.f32 %v2226, %v2650
  %v2652 = vpop.f32.mrf.mxu0
  %v2653 = vand.u32 %v234, 4294901760
  %2654 = vmatprep.mubr.f32.mxu0 %v2653
  %v2655 = vand.u32 %v233, 4294901760
  %2656 = vmatmul.mubr.f32.gmra.mxu0 %v2655
  %v2657 = vpop.f32.mrf.mxu0
  %v2658 = vadd.f32 %v2241, %v2657
  %v2659 = vpop.f32.mrf.mxu0
  %v2660 = vand.u32 %v238, 4294901760
  %2661 = vmatprep.mubr.f32.mxu0 %v2660
  %v2662 = vand.u32 %v237, 4294901760
  %2663 = vmatmul.mubr.f32.gmra.mxu0 %v2662
  %v2664 = vpop.f32.mrf.mxu0
  %v2665 = vadd.f32 %v2256, %v2664
  %v2666 = vpop.f32.mrf.mxu0
  %v2667 = vand.u32 %v242, 4294901760
  %2668 = vmatprep.mubr.f32.mxu0 %v2667
  %v2669 = vand.u32 %v241, 4294901760
  %2670 = vmatmul.mubr.f32.gmra.mxu0 %v2669
  %v2671 = vpop.f32.mrf.mxu0
  %v2672 = vadd.f32 %v2271, %v2671
  %v2673 = vpop.f32.mrf.mxu0
  %v2674 = vand.u32 %v246, 4294901760
  %2675 = vmatprep.mubr.f32.mxu0 %v2674
  %v2676 = vand.u32 %v245, 4294901760
  %2677 = vmatmul.mubr.f32.gmra.mxu0 %v2676
  %v2678 = vpop.f32.mrf.mxu0
  %v2679 = vadd.f32 %v2286, %v2678
  %v2680 = vpop.f32.mrf.mxu0
  %v2681 = vand.u32 %v250, 4294901760
  %2682 = vmatprep.mubr.f32.mxu0 %v2681
  %v2683 = vand.u32 %v249, 4294901760
  %2684 = vmatmul.mubr.f32.gmra.mxu0 %v2683
  %v2685 = vpop.f32.mrf.mxu0
  %v2686 = vadd.f32 %v2301, %v2685
  %v2687 = vpop.f32.mrf.mxu0
  %v2688 = vand.u32 %v254, 4294901760
  %2689 = vmatprep.mubr.f32.mxu0 %v2688
  %v2690 = vand.u32 %v253, 4294901760
  %2691 = vmatmul.mubr.f32.gmra.mxu0 %v2690
  %v2692 = vpop.f32.mrf.mxu0
  %v2693 = vadd.f32 %v2316, %v2692
  %v2694 = vpop.f32.mrf.mxu0
  %v2695 = vand.u32 %v258, 4294901760
  %2696 = vmatprep.mubr.f32.mxu0 %v2695
  %v2697 = vand.u32 %v257, 4294901760
  %2698 = vmatmul.mubr.f32.gmra.mxu0 %v2697
  %v2699 = vpop.f32.mrf.mxu0
  %v2700 = vadd.f32 %v2331, %v2699
  %v2701 = vpop.f32.mrf.mxu0
  %v2702 = vand.u32 %v262, 4294901760
  %2703 = vmatprep.mubr.f32.mxu0 %v2702
  %v2704 = vand.u32 %v261, 4294901760
  %2705 = vmatmul.mubr.f32.gmra.mxu0 %v2704
  %v2706 = vpop.f32.mrf.mxu0
  %v2707 = vadd.f32 %v2346, %v2706
  %v2708 = vpop.f32.mrf.mxu0
  %v2709 = vand.u32 %v266, 4294901760
  %2710 = vmatprep.mubr.f32.mxu0 %v2709
  %v2711 = vand.u32 %v265, 4294901760
  %2712 = vmatmul.mubr.f32.gmra.mxu0 %v2711
  %v2713 = vpop.f32.mrf.mxu0
  %v2714 = vadd.f32 %v2361, %v2713
  %v2715 = vpop.f32.mrf.mxu0
  %v2716 = vand.u32 %v270, 4294901760
  %2717 = vmatprep.mubr.f32.mxu0 %v2716
  %v2718 = vand.u32 %v269, 4294901760
  %2719 = vmatmul.mubr.f32.gmra.mxu0 %v2718
  %v2720 = vpop.f32.mrf.mxu0
  %v2721 = vadd.f32 %v2376, %v2720
  %v2722 = vpop.f32.mrf.mxu0
  %v2723 = vand.u32 %v274, 4294901760
  %2724 = vmatprep.mubr.f32.mxu0 %v2723
  %v2725 = vand.u32 %v273, 4294901760
  %2726 = vmatmul.mubr.f32.gmra.mxu0 %v2725
  %v2727 = vpop.f32.mrf.mxu0
  %v2728 = vadd.f32 %v2391, %v2727
  %v2729 = vpop.f32.mrf.mxu0
  %2730 = vdwg.mxu0
  %2731 = vmatprep.subr.mxu0 0.0
  %v2732 = vand.u32 %v322, 4294901760
  %v2733 = vsub.f32 %v322, %v2732
  %2734 = vmatpush1.msra.mxu0 %v2733
  %2735 = vmatprep.subr.mxu0 0.0
  %v2736 = vand.u32 %v321, 4294901760
  %v2737 = vsub.f32 %v321, %v2736
  %2738 = vmatpush1.msra.mxu0 %v2737
  %2739 = vmatprep.subr.mxu0 0.0
  %v2740 = vand.u32 %v320, 4294901760
  %v2741 = vsub.f32 %v320, %v2740
  %2742 = vmatpush1.msra.mxu0 %v2741
  %2743 = vmatprep.subr.mxu0 0.0
  %v2744 = vand.u32 %v319, 4294901760
  %v2745 = vsub.f32 %v319, %v2744
  %2746 = vmatpush1.msra.mxu0 %v2745
  %2747 = vmatprep.subr.mxu0 0.0
  %v2748 = vand.u32 %v318, 4294901760
  %v2749 = vsub.f32 %v318, %v2748
  %2750 = vmatpush1.msra.mxu0 %v2749
  %2751 = vmatprep.subr.mxu0 0.0
  %v2752 = vand.u32 %v317, 4294901760
  %v2753 = vsub.f32 %v317, %v2752
  %2754 = vmatpush1.msra.mxu0 %v2753
  %2755 = vmatprep.subr.mxu0 0.0
  %v2756 = vand.u32 %v316, 4294901760
  %v2757 = vsub.f32 %v316, %v2756
  %2758 = vmatpush1.msra.mxu0 %v2757
  %2759 = vmatprep.subr.mxu0 0.0
  %v2760 = vand.u32 %v315, 4294901760
  %v2761 = vsub.f32 %v315, %v2760
  %2762 = vmatpush1.msra.mxu0 %v2761
  %2763 = vmatprep.subr.mxu0 0.0
  %v2764 = vand.u32 %v314, 4294901760
  %v2765 = vsub.f32 %v314, %v2764
  %2766 = vmatpush1.msra.mxu0 %v2765
  %2767 = vmatprep.subr.mxu0 0.0
  %v2768 = vand.u32 %v313, 4294901760
  %v2769 = vsub.f32 %v313, %v2768
  %2770 = vmatpush1.msra.mxu0 %v2769
  %2771 = vmatprep.subr.mxu0 0.0
  %v2772 = vand.u32 %v312, 4294901760
  %v2773 = vsub.f32 %v312, %v2772
  %2774 = vmatpush1.msra.mxu0 %v2773
  %2775 = vmatprep.subr.mxu0 0.0
  %v2776 = vand.u32 %v311, 4294901760
  %v2777 = vsub.f32 %v311, %v2776
  %2778 = vmatpush1.msra.mxu0 %v2777
  %2779 = vmatprep.subr.mxu0 0.0
  %v2780 = vand.u32 %v310, 4294901760
  %v2781 = vsub.f32 %v310, %v2780
  %2782 = vmatpush1.msra.mxu0 %v2781
  %2783 = vmatprep.subr.mxu0 0.0
  %v2784 = vand.u32 %v309, 4294901760
  %v2785 = vsub.f32 %v309, %v2784
  %2786 = vmatpush1.msra.mxu0 %v2785
  %2787 = vmatprep.subr.mxu0 0.0
  %v2788 = vand.u32 %v308, 4294901760
  %v2789 = vsub.f32 %v308, %v2788
  %2790 = vmatpush1.msra.mxu0 %v2789
  %2791 = vmatprep.subr.mxu0 0.0
  %v2792 = vand.u32 %v307, 4294901760
  %v2793 = vsub.f32 %v307, %v2792
  %2794 = vmatpush1.msra.mxu0 %v2793
  %2795 = vmatprep.subr.mxu0 0.0
  %v2796 = vand.u32 %v338, 4294901760
  %v2797 = vsub.f32 %v338, %v2796
  %2798 = vmatpush2.msra.mxu0 %v2797
  %2799 = vmatprep.subr.mxu0 0.0
  %v2800 = vand.u32 %v337, 4294901760
  %v2801 = vsub.f32 %v337, %v2800
  %2802 = vmatpush2.msra.mxu0 %v2801
  %2803 = vmatprep.subr.mxu0 0.0
  %v2804 = vand.u32 %v336, 4294901760
  %v2805 = vsub.f32 %v336, %v2804
  %2806 = vmatpush2.msra.mxu0 %v2805
  %2807 = vmatprep.subr.mxu0 0.0
  %v2808 = vand.u32 %v335, 4294901760
  %v2809 = vsub.f32 %v335, %v2808
  %2810 = vmatpush2.msra.mxu0 %v2809
  %2811 = vmatprep.subr.mxu0 0.0
  %v2812 = vand.u32 %v334, 4294901760
  %v2813 = vsub.f32 %v334, %v2812
  %2814 = vmatpush2.msra.mxu0 %v2813
  %2815 = vmatprep.subr.mxu0 0.0
  %v2816 = vand.u32 %v333, 4294901760
  %v2817 = vsub.f32 %v333, %v2816
  %2818 = vmatpush2.msra.mxu0 %v2817
  %2819 = vmatprep.subr.mxu0 0.0
  %v2820 = vand.u32 %v332, 4294901760
  %v2821 = vsub.f32 %v332, %v2820
  %2822 = vmatpush2.msra.mxu0 %v2821
  %2823 = vmatprep.subr.mxu0 0.0
  %v2824 = vand.u32 %v331, 4294901760
  %v2825 = vsub.f32 %v331, %v2824
  %2826 = vmatpush2.msra.mxu0 %v2825
  %2827 = vmatprep.subr.mxu0 0.0
  %v2828 = vand.u32 %v330, 4294901760
  %v2829 = vsub.f32 %v330, %v2828
  %2830 = vmatpush2.msra.mxu0 %v2829
  %2831 = vmatprep.subr.mxu0 0.0
  %v2832 = vand.u32 %v329, 4294901760
  %v2833 = vsub.f32 %v329, %v2832
  %2834 = vmatpush2.msra.mxu0 %v2833
  %2835 = vmatprep.subr.mxu0 0.0
  %v2836 = vand.u32 %v328, 4294901760
  %v2837 = vsub.f32 %v328, %v2836
  %2838 = vmatpush2.msra.mxu0 %v2837
  %2839 = vmatprep.subr.mxu0 0.0
  %v2840 = vand.u32 %v327, 4294901760
  %v2841 = vsub.f32 %v327, %v2840
  %2842 = vmatpush2.msra.mxu0 %v2841
  %2843 = vmatprep.subr.mxu0 0.0
  %v2844 = vand.u32 %v326, 4294901760
  %v2845 = vsub.f32 %v326, %v2844
  %2846 = vmatpush2.msra.mxu0 %v2845
  %2847 = vmatprep.subr.mxu0 0.0
  %v2848 = vand.u32 %v325, 4294901760
  %v2849 = vsub.f32 %v325, %v2848
  %2850 = vmatpush2.msra.mxu0 %v2849
  %2851 = vmatprep.subr.mxu0 0.0
  %v2852 = vand.u32 %v324, 4294901760
  %v2853 = vsub.f32 %v324, %v2852
  %2854 = vmatpush2.msra.mxu0 %v2853
  %2855 = vmatprep.subr.mxu0 0.0
  %v2856 = vand.u32 %v323, 4294901760
  %v2857 = vsub.f32 %v323, %v2856
  %2858 = vmatpush2.msra.mxu0 %v2857
  %v2859 = vand.u32 %v214, 4294901760
  %v2860 = vsub.f32 %v214, %v2859
  %2861 = vmatprep.mubr.f32.mxu0 %v2860
  %v2862 = vand.u32 %v213, 4294901760
  %v2863 = vsub.f32 %v213, %v2862
  %2864 = vmatmul.mubr.f32.gmra.mxu0 %v2863
  %v2865 = vpop.f32.mrf.mxu0
  %v2866 = vadd.f32 %v2623, %v2865
  %v2867 = vpop.f32.mrf.mxu0
  %v2868 = vand.u32 %v218, 4294901760
  %v2869 = vsub.f32 %v218, %v2868
  %2870 = vmatprep.mubr.f32.mxu0 %v2869
  %v2871 = vand.u32 %v217, 4294901760
  %v2872 = vsub.f32 %v217, %v2871
  %2873 = vmatmul.mubr.f32.gmra.mxu0 %v2872
  %v2874 = vpop.f32.mrf.mxu0
  %v2875 = vadd.f32 %v2630, %v2874
  %v2876 = vpop.f32.mrf.mxu0
  %v2877 = vand.u32 %v222, 4294901760
  %v2878 = vsub.f32 %v222, %v2877
  %2879 = vmatprep.mubr.f32.mxu0 %v2878
  %v2880 = vand.u32 %v221, 4294901760
  %v2881 = vsub.f32 %v221, %v2880
  %2882 = vmatmul.mubr.f32.gmra.mxu0 %v2881
  %v2883 = vpop.f32.mrf.mxu0
  %v2884 = vadd.f32 %v2637, %v2883
  %v2885 = vpop.f32.mrf.mxu0
  %v2886 = vand.u32 %v226, 4294901760
  %v2887 = vsub.f32 %v226, %v2886
  %2888 = vmatprep.mubr.f32.mxu0 %v2887
  %v2889 = vand.u32 %v225, 4294901760
  %v2890 = vsub.f32 %v225, %v2889
  %2891 = vmatmul.mubr.f32.gmra.mxu0 %v2890
  %v2892 = vpop.f32.mrf.mxu0
  %v2893 = vadd.f32 %v2644, %v2892
  %v2894 = vpop.f32.mrf.mxu0
  %v2895 = vand.u32 %v230, 4294901760
  %v2896 = vsub.f32 %v230, %v2895
  %2897 = vmatprep.mubr.f32.mxu0 %v2896
  %v2898 = vand.u32 %v229, 4294901760
  %v2899 = vsub.f32 %v229, %v2898
  %2900 = vmatmul.mubr.f32.gmra.mxu0 %v2899
  %v2901 = vpop.f32.mrf.mxu0
  %v2902 = vadd.f32 %v2651, %v2901
  %v2903 = vpop.f32.mrf.mxu0
  %v2904 = vand.u32 %v234, 4294901760
  %v2905 = vsub.f32 %v234, %v2904
  %2906 = vmatprep.mubr.f32.mxu0 %v2905
  %v2907 = vand.u32 %v233, 4294901760
  %v2908 = vsub.f32 %v233, %v2907
  %2909 = vmatmul.mubr.f32.gmra.mxu0 %v2908
  %v2910 = vpop.f32.mrf.mxu0
  %v2911 = vadd.f32 %v2658, %v2910
  %v2912 = vpop.f32.mrf.mxu0
  %v2913 = vand.u32 %v238, 4294901760
  %v2914 = vsub.f32 %v238, %v2913
  %2915 = vmatprep.mubr.f32.mxu0 %v2914
  %v2916 = vand.u32 %v237, 4294901760
  %v2917 = vsub.f32 %v237, %v2916
  %2918 = vmatmul.mubr.f32.gmra.mxu0 %v2917
  %v2919 = vpop.f32.mrf.mxu0
  %v2920 = vadd.f32 %v2665, %v2919
  %v2921 = vpop.f32.mrf.mxu0
  %v2922 = vand.u32 %v242, 4294901760
  %v2923 = vsub.f32 %v242, %v2922
  %2924 = vmatprep.mubr.f32.mxu0 %v2923
  %v2925 = vand.u32 %v241, 4294901760
  %v2926 = vsub.f32 %v241, %v2925
  %2927 = vmatmul.mubr.f32.gmra.mxu0 %v2926
  %v2928 = vpop.f32.mrf.mxu0
  %v2929 = vadd.f32 %v2672, %v2928
  %v2930 = vpop.f32.mrf.mxu0
  %v2931 = vand.u32 %v246, 4294901760
  %v2932 = vsub.f32 %v246, %v2931
  %2933 = vmatprep.mubr.f32.mxu0 %v2932
  %v2934 = vand.u32 %v245, 4294901760
  %v2935 = vsub.f32 %v245, %v2934
  %2936 = vmatmul.mubr.f32.gmra.mxu0 %v2935
  %v2937 = vpop.f32.mrf.mxu0
  %v2938 = vadd.f32 %v2679, %v2937
  %v2939 = vpop.f32.mrf.mxu0
  %v2940 = vand.u32 %v250, 4294901760
  %v2941 = vsub.f32 %v250, %v2940
  %2942 = vmatprep.mubr.f32.mxu0 %v2941
  %v2943 = vand.u32 %v249, 4294901760
  %v2944 = vsub.f32 %v249, %v2943
  %2945 = vmatmul.mubr.f32.gmra.mxu0 %v2944
  %v2946 = vpop.f32.mrf.mxu0
  %v2947 = vadd.f32 %v2686, %v2946
  %v2948 = vpop.f32.mrf.mxu0
  %v2949 = vand.u32 %v254, 4294901760
  %v2950 = vsub.f32 %v254, %v2949
  %2951 = vmatprep.mubr.f32.mxu0 %v2950
  %v2952 = vand.u32 %v253, 4294901760
  %v2953 = vsub.f32 %v253, %v2952
  %2954 = vmatmul.mubr.f32.gmra.mxu0 %v2953
  %v2955 = vpop.f32.mrf.mxu0
  %v2956 = vadd.f32 %v2693, %v2955
  %v2957 = vpop.f32.mrf.mxu0
  %v2958 = vand.u32 %v258, 4294901760
  %v2959 = vsub.f32 %v258, %v2958
  %2960 = vmatprep.mubr.f32.mxu0 %v2959
  %v2961 = vand.u32 %v257, 4294901760
  %v2962 = vsub.f32 %v257, %v2961
  %2963 = vmatmul.mubr.f32.gmra.mxu0 %v2962
  %v2964 = vpop.f32.mrf.mxu0
  %v2965 = vadd.f32 %v2700, %v2964
  %v2966 = vpop.f32.mrf.mxu0
  %v2967 = vand.u32 %v262, 4294901760
  %v2968 = vsub.f32 %v262, %v2967
  %2969 = vmatprep.mubr.f32.mxu0 %v2968
  %v2970 = vand.u32 %v261, 4294901760
  %v2971 = vsub.f32 %v261, %v2970
  %2972 = vmatmul.mubr.f32.gmra.mxu0 %v2971
  %v2973 = vpop.f32.mrf.mxu0
  %v2974 = vadd.f32 %v2707, %v2973
  %v2975 = vpop.f32.mrf.mxu0
  %v2976 = vand.u32 %v266, 4294901760
  %v2977 = vsub.f32 %v266, %v2976
  %2978 = vmatprep.mubr.f32.mxu0 %v2977
  %v2979 = vand.u32 %v265, 4294901760
  %v2980 = vsub.f32 %v265, %v2979
  %2981 = vmatmul.mubr.f32.gmra.mxu0 %v2980
  %v2982 = vpop.f32.mrf.mxu0
  %v2983 = vadd.f32 %v2714, %v2982
  %v2984 = vpop.f32.mrf.mxu0
  %v2985 = vand.u32 %v270, 4294901760
  %v2986 = vsub.f32 %v270, %v2985
  %2987 = vmatprep.mubr.f32.mxu0 %v2986
  %v2988 = vand.u32 %v269, 4294901760
  %v2989 = vsub.f32 %v269, %v2988
  %2990 = vmatmul.mubr.f32.gmra.mxu0 %v2989
  %v2991 = vpop.f32.mrf.mxu0
  %v2992 = vadd.f32 %v2721, %v2991
  %v2993 = vpop.f32.mrf.mxu0
  %v2994 = vand.u32 %v274, 4294901760
  %v2995 = vsub.f32 %v274, %v2994
  %2996 = vmatprep.mubr.f32.mxu0 %v2995
  %v2997 = vand.u32 %v273, 4294901760
  %v2998 = vsub.f32 %v273, %v2997
  %2999 = vmatmul.mubr.f32.gmra.mxu0 %v2998
  %v3000 = vpop.f32.mrf.mxu0
  %v3001 = vadd.f32 %v2728, %v3000
  %v3002 = vpop.f32.mrf.mxu0
  %3003 = vdwg.mxu0
  %3004 = vmatprep.subr.mxu0 0.0
  %v3005 = vand.u32 %v322, 4294901760
  %3006 = vmatpush1.msra.mxu0 %v3005
  %3007 = vmatprep.subr.mxu0 0.0
  %v3008 = vand.u32 %v321, 4294901760
  %3009 = vmatpush1.msra.mxu0 %v3008
  %3010 = vmatprep.subr.mxu0 0.0
  %v3011 = vand.u32 %v320, 4294901760
  %3012 = vmatpush1.msra.mxu0 %v3011
  %3013 = vmatprep.subr.mxu0 0.0
  %v3014 = vand.u32 %v319, 4294901760
  %3015 = vmatpush1.msra.mxu0 %v3014
  %3016 = vmatprep.subr.mxu0 0.0
  %v3017 = vand.u32 %v318, 4294901760
  %3018 = vmatpush1.msra.mxu0 %v3017
  %3019 = vmatprep.subr.mxu0 0.0
  %v3020 = vand.u32 %v317, 4294901760
  %3021 = vmatpush1.msra.mxu0 %v3020
  %3022 = vmatprep.subr.mxu0 0.0
  %v3023 = vand.u32 %v316, 4294901760
  %3024 = vmatpush1.msra.mxu0 %v3023
  %3025 = vmatprep.subr.mxu0 0.0
  %v3026 = vand.u32 %v315, 4294901760
  %3027 = vmatpush1.msra.mxu0 %v3026
  %3028 = vmatprep.subr.mxu0 0.0
  %v3029 = vand.u32 %v314, 4294901760
  %3030 = vmatpush1.msra.mxu0 %v3029
  %3031 = vmatprep.subr.mxu0 0.0
  %v3032 = vand.u32 %v313, 4294901760
  %3033 = vmatpush1.msra.mxu0 %v3032
  %3034 = vmatprep.subr.mxu0 0.0
  %v3035 = vand.u32 %v312, 4294901760
  %3036 = vmatpush1.msra.mxu0 %v3035
  %3037 = vmatprep.subr.mxu0 0.0
  %v3038 = vand.u32 %v311, 4294901760
  %3039 = vmatpush1.msra.mxu0 %v3038
  %3040 = vmatprep.subr.mxu0 0.0
  %v3041 = vand.u32 %v310, 4294901760
  %3042 = vmatpush1.msra.mxu0 %v3041
  %3043 = vmatprep.subr.mxu0 0.0
  %v3044 = vand.u32 %v309, 4294901760
  %3045 = vmatpush1.msra.mxu0 %v3044
  %3046 = vmatprep.subr.mxu0 0.0
  %v3047 = vand.u32 %v308, 4294901760
  %3048 = vmatpush1.msra.mxu0 %v3047
  %3049 = vmatprep.subr.mxu0 0.0
  %v3050 = vand.u32 %v307, 4294901760
  %3051 = vmatpush1.msra.mxu0 %v3050
  %3052 = vmatprep.subr.mxu0 0.0
  %v3053 = vand.u32 %v338, 4294901760
  %3054 = vmatpush2.msra.mxu0 %v3053
  %3055 = vmatprep.subr.mxu0 0.0
  %v3056 = vand.u32 %v337, 4294901760
  %3057 = vmatpush2.msra.mxu0 %v3056
  %3058 = vmatprep.subr.mxu0 0.0
  %v3059 = vand.u32 %v336, 4294901760
  %3060 = vmatpush2.msra.mxu0 %v3059
  %3061 = vmatprep.subr.mxu0 0.0
  %v3062 = vand.u32 %v335, 4294901760
  %3063 = vmatpush2.msra.mxu0 %v3062
  %3064 = vmatprep.subr.mxu0 0.0
  %v3065 = vand.u32 %v334, 4294901760
  %3066 = vmatpush2.msra.mxu0 %v3065
  %3067 = vmatprep.subr.mxu0 0.0
  %v3068 = vand.u32 %v333, 4294901760
  %3069 = vmatpush2.msra.mxu0 %v3068
  %3070 = vmatprep.subr.mxu0 0.0
  %v3071 = vand.u32 %v332, 4294901760
  %3072 = vmatpush2.msra.mxu0 %v3071
  %3073 = vmatprep.subr.mxu0 0.0
  %v3074 = vand.u32 %v331, 4294901760
  %3075 = vmatpush2.msra.mxu0 %v3074
  %3076 = vmatprep.subr.mxu0 0.0
  %v3077 = vand.u32 %v330, 4294901760
  %3078 = vmatpush2.msra.mxu0 %v3077
  %3079 = vmatprep.subr.mxu0 0.0
  %v3080 = vand.u32 %v329, 4294901760
  %3081 = vmatpush2.msra.mxu0 %v3080
  %3082 = vmatprep.subr.mxu0 0.0
  %v3083 = vand.u32 %v328, 4294901760
  %3084 = vmatpush2.msra.mxu0 %v3083
  %3085 = vmatprep.subr.mxu0 0.0
  %v3086 = vand.u32 %v327, 4294901760
  %3087 = vmatpush2.msra.mxu0 %v3086
  %3088 = vmatprep.subr.mxu0 0.0
  %v3089 = vand.u32 %v326, 4294901760
  %3090 = vmatpush2.msra.mxu0 %v3089
  %3091 = vmatprep.subr.mxu0 0.0
  %v3092 = vand.u32 %v325, 4294901760
  %3093 = vmatpush2.msra.mxu0 %v3092
  %3094 = vmatprep.subr.mxu0 0.0
  %v3095 = vand.u32 %v324, 4294901760
  %3096 = vmatpush2.msra.mxu0 %v3095
  %3097 = vmatprep.subr.mxu0 0.0
  %v3098 = vand.u32 %v323, 4294901760
  %3099 = vmatpush2.msra.mxu0 %v3098
  %v3100 = vand.u32 %v214, 4294901760
  %v3101 = vsub.f32 %v214, %v3100
  %v3102 = vand.u32 %v3101, 4294901760
  %3103 = vmatprep.mubr.f32.mxu0 %v3102
  %v3104 = vand.u32 %v213, 4294901760
  %v3105 = vsub.f32 %v213, %v3104
  %v3106 = vand.u32 %v3105, 4294901760
  %3107 = vmatmul.mubr.f32.gmra.mxu0 %v3106
  %v3108 = vpop.f32.mrf.mxu0
  %v3109 = vadd.f32 %v2866, %v3108
  %v3110 = vpop.f32.mrf.mxu0
  %v3111 = vand.u32 %v218, 4294901760
  %v3112 = vsub.f32 %v218, %v3111
  %v3113 = vand.u32 %v3112, 4294901760
  %3114 = vmatprep.mubr.f32.mxu0 %v3113
  %v3115 = vand.u32 %v217, 4294901760
  %v3116 = vsub.f32 %v217, %v3115
  %v3117 = vand.u32 %v3116, 4294901760
  %3118 = vmatmul.mubr.f32.gmra.mxu0 %v3117
  %v3119 = vpop.f32.mrf.mxu0
  %v3120 = vadd.f32 %v2875, %v3119
  %v3121 = vpop.f32.mrf.mxu0
  %v3122 = vand.u32 %v222, 4294901760
  %v3123 = vsub.f32 %v222, %v3122
  %v3124 = vand.u32 %v3123, 4294901760
  %3125 = vmatprep.mubr.f32.mxu0 %v3124
  %v3126 = vand.u32 %v221, 4294901760
  %v3127 = vsub.f32 %v221, %v3126
  %v3128 = vand.u32 %v3127, 4294901760
  %3129 = vmatmul.mubr.f32.gmra.mxu0 %v3128
  %v3130 = vpop.f32.mrf.mxu0
  %v3131 = vadd.f32 %v2884, %v3130
  %v3132 = vpop.f32.mrf.mxu0
  %v3133 = vand.u32 %v226, 4294901760
  %v3134 = vsub.f32 %v226, %v3133
  %v3135 = vand.u32 %v3134, 4294901760
  %3136 = vmatprep.mubr.f32.mxu0 %v3135
  %v3137 = vand.u32 %v225, 4294901760
  %v3138 = vsub.f32 %v225, %v3137
  %v3139 = vand.u32 %v3138, 4294901760
  %3140 = vmatmul.mubr.f32.gmra.mxu0 %v3139
  %v3141 = vpop.f32.mrf.mxu0
  %v3142 = vadd.f32 %v2893, %v3141
  %v3143 = vpop.f32.mrf.mxu0
  %v3144 = vand.u32 %v230, 4294901760
  %v3145 = vsub.f32 %v230, %v3144
  %v3146 = vand.u32 %v3145, 4294901760
  %3147 = vmatprep.mubr.f32.mxu0 %v3146
  %v3148 = vand.u32 %v229, 4294901760
  %v3149 = vsub.f32 %v229, %v3148
  %v3150 = vand.u32 %v3149, 4294901760
  %3151 = vmatmul.mubr.f32.gmra.mxu0 %v3150
  %v3152 = vpop.f32.mrf.mxu0
  %v3153 = vadd.f32 %v2902, %v3152
  %v3154 = vpop.f32.mrf.mxu0
  %v3155 = vand.u32 %v234, 4294901760
  %v3156 = vsub.f32 %v234, %v3155
  %v3157 = vand.u32 %v3156, 4294901760
  %3158 = vmatprep.mubr.f32.mxu0 %v3157
  %v3159 = vand.u32 %v233, 4294901760
  %v3160 = vsub.f32 %v233, %v3159
  %v3161 = vand.u32 %v3160, 4294901760
  %3162 = vmatmul.mubr.f32.gmra.mxu0 %v3161
  %v3163 = vpop.f32.mrf.mxu0
  %v3164 = vadd.f32 %v2911, %v3163
  %v3165 = vpop.f32.mrf.mxu0
  %v3166 = vand.u32 %v238, 4294901760
  %v3167 = vsub.f32 %v238, %v3166
  %v3168 = vand.u32 %v3167, 4294901760
  %3169 = vmatprep.mubr.f32.mxu0 %v3168
  %v3170 = vand.u32 %v237, 4294901760
  %v3171 = vsub.f32 %v237, %v3170
  %v3172 = vand.u32 %v3171, 4294901760
  %3173 = vmatmul.mubr.f32.gmra.mxu0 %v3172
  %v3174 = vpop.f32.mrf.mxu0
  %v3175 = vadd.f32 %v2920, %v3174
  %v3176 = vpop.f32.mrf.mxu0
  %v3177 = vand.u32 %v242, 4294901760
  %v3178 = vsub.f32 %v242, %v3177
  %v3179 = vand.u32 %v3178, 4294901760
  %3180 = vmatprep.mubr.f32.mxu0 %v3179
  %v3181 = vand.u32 %v241, 4294901760
  %v3182 = vsub.f32 %v241, %v3181
  %v3183 = vand.u32 %v3182, 4294901760
  %3184 = vmatmul.mubr.f32.gmra.mxu0 %v3183
  %v3185 = vpop.f32.mrf.mxu0
  %v3186 = vadd.f32 %v2929, %v3185
  %v3187 = vpop.f32.mrf.mxu0
  %v3188 = vand.u32 %v246, 4294901760
  %v3189 = vsub.f32 %v246, %v3188
  %v3190 = vand.u32 %v3189, 4294901760
  %3191 = vmatprep.mubr.f32.mxu0 %v3190
  %v3192 = vand.u32 %v245, 4294901760
  %v3193 = vsub.f32 %v245, %v3192
  %v3194 = vand.u32 %v3193, 4294901760
  %3195 = vmatmul.mubr.f32.gmra.mxu0 %v3194
  %v3196 = vpop.f32.mrf.mxu0
  %v3197 = vadd.f32 %v2938, %v3196
  %v3198 = vpop.f32.mrf.mxu0
  %v3199 = vand.u32 %v250, 4294901760
  %v3200 = vsub.f32 %v250, %v3199
  %v3201 = vand.u32 %v3200, 4294901760
  %3202 = vmatprep.mubr.f32.mxu0 %v3201
  %v3203 = vand.u32 %v249, 4294901760
  %v3204 = vsub.f32 %v249, %v3203
  %v3205 = vand.u32 %v3204, 4294901760
  %3206 = vmatmul.mubr.f32.gmra.mxu0 %v3205
  %v3207 = vpop.f32.mrf.mxu0
  %v3208 = vadd.f32 %v2947, %v3207
  %v3209 = vpop.f32.mrf.mxu0
  %v3210 = vand.u32 %v254, 4294901760
  %v3211 = vsub.f32 %v254, %v3210
  %v3212 = vand.u32 %v3211, 4294901760
  %3213 = vmatprep.mubr.f32.mxu0 %v3212
  %v3214 = vand.u32 %v253, 4294901760
  %v3215 = vsub.f32 %v253, %v3214
  %v3216 = vand.u32 %v3215, 4294901760
  %3217 = vmatmul.mubr.f32.gmra.mxu0 %v3216
  %v3218 = vpop.f32.mrf.mxu0
  %v3219 = vadd.f32 %v2956, %v3218
  %v3220 = vpop.f32.mrf.mxu0
  %v3221 = vand.u32 %v258, 4294901760
  %v3222 = vsub.f32 %v258, %v3221
  %v3223 = vand.u32 %v3222, 4294901760
  %3224 = vmatprep.mubr.f32.mxu0 %v3223
  %v3225 = vand.u32 %v257, 4294901760
  %v3226 = vsub.f32 %v257, %v3225
  %v3227 = vand.u32 %v3226, 4294901760
  %3228 = vmatmul.mubr.f32.gmra.mxu0 %v3227
  %v3229 = vpop.f32.mrf.mxu0
  %v3230 = vadd.f32 %v2965, %v3229
  %v3231 = vpop.f32.mrf.mxu0
  %v3232 = vand.u32 %v262, 4294901760
  %v3233 = vsub.f32 %v262, %v3232
  %v3234 = vand.u32 %v3233, 4294901760
  %3235 = vmatprep.mubr.f32.mxu0 %v3234
  %v3236 = vand.u32 %v261, 4294901760
  %v3237 = vsub.f32 %v261, %v3236
  %v3238 = vand.u32 %v3237, 4294901760
  %3239 = vmatmul.mubr.f32.gmra.mxu0 %v3238
  %v3240 = vpop.f32.mrf.mxu0
  %v3241 = vadd.f32 %v2974, %v3240
  %v3242 = vpop.f32.mrf.mxu0
  %v3243 = vand.u32 %v266, 4294901760
  %v3244 = vsub.f32 %v266, %v3243
  %v3245 = vand.u32 %v3244, 4294901760
  %3246 = vmatprep.mubr.f32.mxu0 %v3245
  %v3247 = vand.u32 %v265, 4294901760
  %v3248 = vsub.f32 %v265, %v3247
  %v3249 = vand.u32 %v3248, 4294901760
  %3250 = vmatmul.mubr.f32.gmra.mxu0 %v3249
  %v3251 = vpop.f32.mrf.mxu0
  %v3252 = vadd.f32 %v2983, %v3251
  %v3253 = vpop.f32.mrf.mxu0
  %v3254 = vand.u32 %v270, 4294901760
  %v3255 = vsub.f32 %v270, %v3254
  %v3256 = vand.u32 %v3255, 4294901760
  %3257 = vmatprep.mubr.f32.mxu0 %v3256
  %v3258 = vand.u32 %v269, 4294901760
  %v3259 = vsub.f32 %v269, %v3258
  %v3260 = vand.u32 %v3259, 4294901760
  %3261 = vmatmul.mubr.f32.gmra.mxu0 %v3260
  %v3262 = vpop.f32.mrf.mxu0
  %v3263 = vadd.f32 %v2992, %v3262
  %v3264 = vpop.f32.mrf.mxu0
  %v3265 = vand.u32 %v274, 4294901760
  %v3266 = vsub.f32 %v274, %v3265
  %v3267 = vand.u32 %v3266, 4294901760
  %3268 = vmatprep.mubr.f32.mxu0 %v3267
  %v3269 = vand.u32 %v273, 4294901760
  %v3270 = vsub.f32 %v273, %v3269
  %v3271 = vand.u32 %v3270, 4294901760
  %3272 = vmatmul.mubr.f32.gmra.mxu0 %v3271
  %v3273 = vpop.f32.mrf.mxu0
  %v3274 = vadd.f32 %v3001, %v3273
  %v3275 = vpop.f32.mrf.mxu0
  %3276 = vdwg.mxu0
  %3277 = vmatprep.subr.mxu0 0.0
  %v3278 = vand.u32 %v322, 4294901760
  %v3279 = vsub.f32 %v322, %v3278
  %v3280 = vand.u32 %v3279, 4294901760
  %3281 = vmatpush1.msra.mxu0 %v3280
  %3282 = vmatprep.subr.mxu0 0.0
  %v3283 = vand.u32 %v321, 4294901760
  %v3284 = vsub.f32 %v321, %v3283
  %v3285 = vand.u32 %v3284, 4294901760
  %3286 = vmatpush1.msra.mxu0 %v3285
  %3287 = vmatprep.subr.mxu0 0.0
  %v3288 = vand.u32 %v320, 4294901760
  %v3289 = vsub.f32 %v320, %v3288
  %v3290 = vand.u32 %v3289, 4294901760
  %3291 = vmatpush1.msra.mxu0 %v3290
  %3292 = vmatprep.subr.mxu0 0.0
  %v3293 = vand.u32 %v319, 4294901760
  %v3294 = vsub.f32 %v319, %v3293
  %v3295 = vand.u32 %v3294, 4294901760
  %3296 = vmatpush1.msra.mxu0 %v3295
  %3297 = vmatprep.subr.mxu0 0.0
  %v3298 = vand.u32 %v318, 4294901760
  %v3299 = vsub.f32 %v318, %v3298
  %v3300 = vand.u32 %v3299, 4294901760
  %3301 = vmatpush1.msra.mxu0 %v3300
  %3302 = vmatprep.subr.mxu0 0.0
  %v3303 = vand.u32 %v317, 4294901760
  %v3304 = vsub.f32 %v317, %v3303
  %v3305 = vand.u32 %v3304, 4294901760
  %3306 = vmatpush1.msra.mxu0 %v3305
  %3307 = vmatprep.subr.mxu0 0.0
  %v3308 = vand.u32 %v316, 4294901760
  %v3309 = vsub.f32 %v316, %v3308
  %v3310 = vand.u32 %v3309, 4294901760
  %3311 = vmatpush1.msra.mxu0 %v3310
  %3312 = vmatprep.subr.mxu0 0.0
  %v3313 = vand.u32 %v315, 4294901760
  %v3314 = vsub.f32 %v315, %v3313
  %v3315 = vand.u32 %v3314, 4294901760
  %3316 = vmatpush1.msra.mxu0 %v3315
  %3317 = vmatprep.subr.mxu0 0.0
  %v3318 = vand.u32 %v314, 4294901760
  %v3319 = vsub.f32 %v314, %v3318
  %v3320 = vand.u32 %v3319, 4294901760
  %3321 = vmatpush1.msra.mxu0 %v3320
  %3322 = vmatprep.subr.mxu0 0.0
  %v3323 = vand.u32 %v313, 4294901760
  %v3324 = vsub.f32 %v313, %v3323
  %v3325 = vand.u32 %v3324, 4294901760
  %3326 = vmatpush1.msra.mxu0 %v3325
  %3327 = vmatprep.subr.mxu0 0.0
  %v3328 = vand.u32 %v312, 4294901760
  %v3329 = vsub.f32 %v312, %v3328
  %v3330 = vand.u32 %v3329, 4294901760
  %3331 = vmatpush1.msra.mxu0 %v3330
  %3332 = vmatprep.subr.mxu0 0.0
  %v3333 = vand.u32 %v311, 4294901760
  %v3334 = vsub.f32 %v311, %v3333
  %v3335 = vand.u32 %v3334, 4294901760
  %3336 = vmatpush1.msra.mxu0 %v3335
  %3337 = vmatprep.subr.mxu0 0.0
  %v3338 = vand.u32 %v310, 4294901760
  %v3339 = vsub.f32 %v310, %v3338
  %v3340 = vand.u32 %v3339, 4294901760
  %3341 = vmatpush1.msra.mxu0 %v3340
  %3342 = vmatprep.subr.mxu0 0.0
  %v3343 = vand.u32 %v309, 4294901760
  %v3344 = vsub.f32 %v309, %v3343
  %v3345 = vand.u32 %v3344, 4294901760
  %3346 = vmatpush1.msra.mxu0 %v3345
  %3347 = vmatprep.subr.mxu0 0.0
  %v3348 = vand.u32 %v308, 4294901760
  %v3349 = vsub.f32 %v308, %v3348
  %v3350 = vand.u32 %v3349, 4294901760
  %3351 = vmatpush1.msra.mxu0 %v3350
  %3352 = vmatprep.subr.mxu0 0.0
  %v3353 = vand.u32 %v307, 4294901760
  %v3354 = vsub.f32 %v307, %v3353
  %v3355 = vand.u32 %v3354, 4294901760
  %3356 = vmatpush1.msra.mxu0 %v3355
  %3357 = vmatprep.subr.mxu0 0.0
  %v3358 = vand.u32 %v338, 4294901760
  %v3359 = vsub.f32 %v338, %v3358
  %v3360 = vand.u32 %v3359, 4294901760
  %3361 = vmatpush2.msra.mxu0 %v3360
  %3362 = vmatprep.subr.mxu0 0.0
  %v3363 = vand.u32 %v337, 4294901760
  %v3364 = vsub.f32 %v337, %v3363
  %v3365 = vand.u32 %v3364, 4294901760
  %3366 = vmatpush2.msra.mxu0 %v3365
  %3367 = vmatprep.subr.mxu0 0.0
  %v3368 = vand.u32 %v336, 4294901760
  %v3369 = vsub.f32 %v336, %v3368
  %v3370 = vand.u32 %v3369, 4294901760
  %3371 = vmatpush2.msra.mxu0 %v3370
  %3372 = vmatprep.subr.mxu0 0.0
  %v3373 = vand.u32 %v335, 4294901760
  %v3374 = vsub.f32 %v335, %v3373
  %v3375 = vand.u32 %v3374, 4294901760
  %3376 = vmatpush2.msra.mxu0 %v3375
  %3377 = vmatprep.subr.mxu0 0.0
  %v3378 = vand.u32 %v334, 4294901760
  %v3379 = vsub.f32 %v334, %v3378
  %v3380 = vand.u32 %v3379, 4294901760
  %3381 = vmatpush2.msra.mxu0 %v3380
  %3382 = vmatprep.subr.mxu0 0.0
  %v3383 = vand.u32 %v333, 4294901760
  %v3384 = vsub.f32 %v333, %v3383
  %v3385 = vand.u32 %v3384, 4294901760
  %3386 = vmatpush2.msra.mxu0 %v3385
  %3387 = vmatprep.subr.mxu0 0.0
  %v3388 = vand.u32 %v332, 4294901760
  %v3389 = vsub.f32 %v332, %v3388
  %v3390 = vand.u32 %v3389, 4294901760
  %3391 = vmatpush2.msra.mxu0 %v3390
  %3392 = vmatprep.subr.mxu0 0.0
  %v3393 = vand.u32 %v331, 4294901760
  %v3394 = vsub.f32 %v331, %v3393
  %v3395 = vand.u32 %v3394, 4294901760
  %3396 = vmatpush2.msra.mxu0 %v3395
  %3397 = vmatprep.subr.mxu0 0.0
  %v3398 = vand.u32 %v330, 4294901760
  %v3399 = vsub.f32 %v330, %v3398
  %v3400 = vand.u32 %v3399, 4294901760
  %3401 = vmatpush2.msra.mxu0 %v3400
  %3402 = vmatprep.subr.mxu0 0.0
  %v3403 = vand.u32 %v329, 4294901760
  %v3404 = vsub.f32 %v329, %v3403
  %v3405 = vand.u32 %v3404, 4294901760
  %3406 = vmatpush2.msra.mxu0 %v3405
  %3407 = vmatprep.subr.mxu0 0.0
  %v3408 = vand.u32 %v328, 4294901760
  %v3409 = vsub.f32 %v328, %v3408
  %v3410 = vand.u32 %v3409, 4294901760
  %3411 = vmatpush2.msra.mxu0 %v3410
  %3412 = vmatprep.subr.mxu0 0.0
  %v3413 = vand.u32 %v327, 4294901760
  %v3414 = vsub.f32 %v327, %v3413
  %v3415 = vand.u32 %v3414, 4294901760
  %3416 = vmatpush2.msra.mxu0 %v3415
  %3417 = vmatprep.subr.mxu0 0.0
  %v3418 = vand.u32 %v326, 4294901760
  %v3419 = vsub.f32 %v326, %v3418
  %v3420 = vand.u32 %v3419, 4294901760
  %3421 = vmatpush2.msra.mxu0 %v3420
  %3422 = vmatprep.subr.mxu0 0.0
  %v3423 = vand.u32 %v325, 4294901760
  %v3424 = vsub.f32 %v325, %v3423
  %v3425 = vand.u32 %v3424, 4294901760
  %3426 = vmatpush2.msra.mxu0 %v3425
  %3427 = vmatprep.subr.mxu0 0.0
  %v3428 = vand.u32 %v324, 4294901760
  %v3429 = vsub.f32 %v324, %v3428
  %v3430 = vand.u32 %v3429, 4294901760
  %3431 = vmatpush2.msra.mxu0 %v3430
  %3432 = vmatprep.subr.mxu0 0.0
  %v3433 = vand.u32 %v323, 4294901760
  %v3434 = vsub.f32 %v323, %v3433
  %v3435 = vand.u32 %v3434, 4294901760
  %3436 = vmatpush2.msra.mxu0 %v3435
  %v3437 = vand.u32 %v214, 4294901760
  %3438 = vmatprep.mubr.f32.mxu0 %v3437
  %v3439 = vand.u32 %v213, 4294901760
  %3440 = vmatmul.mubr.f32.gmra.mxu0 %v3439
  %v3441 = vpop.f32.mrf.mxu0
  %v3442 = vadd.f32 %v3109, %v3441
  %v3443 = vpop.f32.mrf.mxu0
  %v3444 = vand.u32 %v218, 4294901760
  %3445 = vmatprep.mubr.f32.mxu0 %v3444
  %v3446 = vand.u32 %v217, 4294901760
  %3447 = vmatmul.mubr.f32.gmra.mxu0 %v3446
  %v3448 = vpop.f32.mrf.mxu0
  %v3449 = vadd.f32 %v3120, %v3448
  %v3450 = vpop.f32.mrf.mxu0
  %v3451 = vand.u32 %v222, 4294901760
  %3452 = vmatprep.mubr.f32.mxu0 %v3451
  %v3453 = vand.u32 %v221, 4294901760
  %3454 = vmatmul.mubr.f32.gmra.mxu0 %v3453
  %v3455 = vpop.f32.mrf.mxu0
  %v3456 = vadd.f32 %v3131, %v3455
  %v3457 = vpop.f32.mrf.mxu0
  %v3458 = vand.u32 %v226, 4294901760
  %3459 = vmatprep.mubr.f32.mxu0 %v3458
  %v3460 = vand.u32 %v225, 4294901760
  %3461 = vmatmul.mubr.f32.gmra.mxu0 %v3460
  %v3462 = vpop.f32.mrf.mxu0
  %v3463 = vadd.f32 %v3142, %v3462
  %v3464 = vpop.f32.mrf.mxu0
  %v3465 = vand.u32 %v230, 4294901760
  %3466 = vmatprep.mubr.f32.mxu0 %v3465
  %v3467 = vand.u32 %v229, 4294901760
  %3468 = vmatmul.mubr.f32.gmra.mxu0 %v3467
  %v3469 = vpop.f32.mrf.mxu0
  %v3470 = vadd.f32 %v3153, %v3469
  %v3471 = vpop.f32.mrf.mxu0
  %v3472 = vand.u32 %v234, 4294901760
  %3473 = vmatprep.mubr.f32.mxu0 %v3472
  %v3474 = vand.u32 %v233, 4294901760
  %3475 = vmatmul.mubr.f32.gmra.mxu0 %v3474
  %v3476 = vpop.f32.mrf.mxu0
  %v3477 = vadd.f32 %v3164, %v3476
  %v3478 = vpop.f32.mrf.mxu0
  %v3479 = vand.u32 %v238, 4294901760
  %3480 = vmatprep.mubr.f32.mxu0 %v3479
  %v3481 = vand.u32 %v237, 4294901760
  %3482 = vmatmul.mubr.f32.gmra.mxu0 %v3481
  %v3483 = vpop.f32.mrf.mxu0
  %v3484 = vadd.f32 %v3175, %v3483
  %v3485 = vpop.f32.mrf.mxu0
  %v3486 = vand.u32 %v242, 4294901760
  %3487 = vmatprep.mubr.f32.mxu0 %v3486
  %v3488 = vand.u32 %v241, 4294901760
  %3489 = vmatmul.mubr.f32.gmra.mxu0 %v3488
  %v3490 = vpop.f32.mrf.mxu0
  %v3491 = vadd.f32 %v3186, %v3490
  %v3492 = vpop.f32.mrf.mxu0
  %v3493 = vand.u32 %v246, 4294901760
  %3494 = vmatprep.mubr.f32.mxu0 %v3493
  %v3495 = vand.u32 %v245, 4294901760
  %3496 = vmatmul.mubr.f32.gmra.mxu0 %v3495
  %v3497 = vpop.f32.mrf.mxu0
  %v3498 = vadd.f32 %v3197, %v3497
  %v3499 = vpop.f32.mrf.mxu0
  %v3500 = vand.u32 %v250, 4294901760
  %3501 = vmatprep.mubr.f32.mxu0 %v3500
  %v3502 = vand.u32 %v249, 4294901760
  %3503 = vmatmul.mubr.f32.gmra.mxu0 %v3502
  %v3504 = vpop.f32.mrf.mxu0
  %v3505 = vadd.f32 %v3208, %v3504
  %v3506 = vpop.f32.mrf.mxu0
  %v3507 = vand.u32 %v254, 4294901760
  %3508 = vmatprep.mubr.f32.mxu0 %v3507
  %v3509 = vand.u32 %v253, 4294901760
  %3510 = vmatmul.mubr.f32.gmra.mxu0 %v3509
  %v3511 = vpop.f32.mrf.mxu0
  %v3512 = vadd.f32 %v3219, %v3511
  %v3513 = vpop.f32.mrf.mxu0
  %v3514 = vand.u32 %v258, 4294901760
  %3515 = vmatprep.mubr.f32.mxu0 %v3514
  %v3516 = vand.u32 %v257, 4294901760
  %3517 = vmatmul.mubr.f32.gmra.mxu0 %v3516
  %v3518 = vpop.f32.mrf.mxu0
  %v3519 = vadd.f32 %v3230, %v3518
  %v3520 = vpop.f32.mrf.mxu0
  %v3521 = vand.u32 %v262, 4294901760
  %3522 = vmatprep.mubr.f32.mxu0 %v3521
  %v3523 = vand.u32 %v261, 4294901760
  %3524 = vmatmul.mubr.f32.gmra.mxu0 %v3523
  %v3525 = vpop.f32.mrf.mxu0
  %v3526 = vadd.f32 %v3241, %v3525
  %v3527 = vpop.f32.mrf.mxu0
  %v3528 = vand.u32 %v266, 4294901760
  %3529 = vmatprep.mubr.f32.mxu0 %v3528
  %v3530 = vand.u32 %v265, 4294901760
  %3531 = vmatmul.mubr.f32.gmra.mxu0 %v3530
  %v3532 = vpop.f32.mrf.mxu0
  %v3533 = vadd.f32 %v3252, %v3532
  %v3534 = vpop.f32.mrf.mxu0
  %v3535 = vand.u32 %v270, 4294901760
  %3536 = vmatprep.mubr.f32.mxu0 %v3535
  %v3537 = vand.u32 %v269, 4294901760
  %3538 = vmatmul.mubr.f32.gmra.mxu0 %v3537
  %v3539 = vpop.f32.mrf.mxu0
  %v3540 = vadd.f32 %v3263, %v3539
  %v3541 = vpop.f32.mrf.mxu0
  %v3542 = vand.u32 %v274, 4294901760
  %3543 = vmatprep.mubr.f32.mxu0 %v3542
  %v3544 = vand.u32 %v273, 4294901760
  %3545 = vmatmul.mubr.f32.gmra.mxu0 %v3544
  %v3546 = vpop.f32.mrf.mxu0
  %v3547 = vadd.f32 %v3274, %v3546
  %v3548 = vpop.f32.mrf.mxu0
  %3549 = vdwg.mxu0
  %3550 = vmatprep.subr.mxu0 0.0
  %v3551 = vand.u32 %v322, 4294901760
  %3552 = vmatpush1.msra.mxu0 %v3551
  %3553 = vmatprep.subr.mxu0 0.0
  %v3554 = vand.u32 %v321, 4294901760
  %3555 = vmatpush1.msra.mxu0 %v3554
  %3556 = vmatprep.subr.mxu0 0.0
  %v3557 = vand.u32 %v320, 4294901760
  %3558 = vmatpush1.msra.mxu0 %v3557
  %3559 = vmatprep.subr.mxu0 0.0
  %v3560 = vand.u32 %v319, 4294901760
  %3561 = vmatpush1.msra.mxu0 %v3560
  %3562 = vmatprep.subr.mxu0 0.0
  %v3563 = vand.u32 %v318, 4294901760
  %3564 = vmatpush1.msra.mxu0 %v3563
  %3565 = vmatprep.subr.mxu0 0.0
  %v3566 = vand.u32 %v317, 4294901760
  %3567 = vmatpush1.msra.mxu0 %v3566
  %3568 = vmatprep.subr.mxu0 0.0
  %v3569 = vand.u32 %v316, 4294901760
  %3570 = vmatpush1.msra.mxu0 %v3569
  %3571 = vmatprep.subr.mxu0 0.0
  %v3572 = vand.u32 %v315, 4294901760
  %3573 = vmatpush1.msra.mxu0 %v3572
  %3574 = vmatprep.subr.mxu0 0.0
  %v3575 = vand.u32 %v314, 4294901760
  %3576 = vmatpush1.msra.mxu0 %v3575
  %3577 = vmatprep.subr.mxu0 0.0
  %v3578 = vand.u32 %v313, 4294901760
  %3579 = vmatpush1.msra.mxu0 %v3578
  %3580 = vmatprep.subr.mxu0 0.0
  %v3581 = vand.u32 %v312, 4294901760
  %3582 = vmatpush1.msra.mxu0 %v3581
  %3583 = vmatprep.subr.mxu0 0.0
  %v3584 = vand.u32 %v311, 4294901760
  %3585 = vmatpush1.msra.mxu0 %v3584
  %3586 = vmatprep.subr.mxu0 0.0
  %v3587 = vand.u32 %v310, 4294901760
  %3588 = vmatpush1.msra.mxu0 %v3587
  %3589 = vmatprep.subr.mxu0 0.0
  %v3590 = vand.u32 %v309, 4294901760
  %3591 = vmatpush1.msra.mxu0 %v3590
  %3592 = vmatprep.subr.mxu0 0.0
  %v3593 = vand.u32 %v308, 4294901760
  %3594 = vmatpush1.msra.mxu0 %v3593
  %3595 = vmatprep.subr.mxu0 0.0
  %v3596 = vand.u32 %v307, 4294901760
  %3597 = vmatpush1.msra.mxu0 %v3596
  %3598 = vmatprep.subr.mxu0 0.0
  %v3599 = vand.u32 %v338, 4294901760
  %3600 = vmatpush2.msra.mxu0 %v3599
  %3601 = vmatprep.subr.mxu0 0.0
  %v3602 = vand.u32 %v337, 4294901760
  %3603 = vmatpush2.msra.mxu0 %v3602
  %3604 = vmatprep.subr.mxu0 0.0
  %v3605 = vand.u32 %v336, 4294901760
  %3606 = vmatpush2.msra.mxu0 %v3605
  %3607 = vmatprep.subr.mxu0 0.0
  %v3608 = vand.u32 %v335, 4294901760
  %3609 = vmatpush2.msra.mxu0 %v3608
  %3610 = vmatprep.subr.mxu0 0.0
  %v3611 = vand.u32 %v334, 4294901760
  %3612 = vmatpush2.msra.mxu0 %v3611
  %3613 = vmatprep.subr.mxu0 0.0
  %v3614 = vand.u32 %v333, 4294901760
  %3615 = vmatpush2.msra.mxu0 %v3614
  %3616 = vmatprep.subr.mxu0 0.0
  %v3617 = vand.u32 %v332, 4294901760
  %3618 = vmatpush2.msra.mxu0 %v3617
  %3619 = vmatprep.subr.mxu0 0.0
  %v3620 = vand.u32 %v331, 4294901760
  %3621 = vmatpush2.msra.mxu0 %v3620
  %3622 = vmatprep.subr.mxu0 0.0
  %v3623 = vand.u32 %v330, 4294901760
  %3624 = vmatpush2.msra.mxu0 %v3623
  %3625 = vmatprep.subr.mxu0 0.0
  %v3626 = vand.u32 %v329, 4294901760
  %3627 = vmatpush2.msra.mxu0 %v3626
  %3628 = vmatprep.subr.mxu0 0.0
  %v3629 = vand.u32 %v328, 4294901760
  %3630 = vmatpush2.msra.mxu0 %v3629
  %3631 = vmatprep.subr.mxu0 0.0
  %v3632 = vand.u32 %v327, 4294901760
  %3633 = vmatpush2.msra.mxu0 %v3632
  %3634 = vmatprep.subr.mxu0 0.0
  %v3635 = vand.u32 %v326, 4294901760
  %3636 = vmatpush2.msra.mxu0 %v3635
  %3637 = vmatprep.subr.mxu0 0.0
  %v3638 = vand.u32 %v325, 4294901760
  %3639 = vmatpush2.msra.mxu0 %v3638
  %3640 = vmatprep.subr.mxu0 0.0
  %v3641 = vand.u32 %v324, 4294901760
  %3642 = vmatpush2.msra.mxu0 %v3641
  %3643 = vmatprep.subr.mxu0 0.0
  %v3644 = vand.u32 %v323, 4294901760
  %3645 = vmatpush2.msra.mxu0 %v3644
  %v3646 = vand.u32 %v214, 4294901760
  %3647 = vmatprep.mubr.f32.mxu0 %v3646
  %v3648 = vand.u32 %v213, 4294901760
  %3649 = vmatmul.mubr.f32.gmra.mxu0 %v3648
  %v3650 = vpop.f32.mrf.mxu0
  %v3651 = vadd.f32 %v3442, %v3650
  %v3652 = vpop.f32.mrf.mxu0
  %v3653 = vand.u32 %v218, 4294901760
  %3654 = vmatprep.mubr.f32.mxu0 %v3653
  %v3655 = vand.u32 %v217, 4294901760
  %3656 = vmatmul.mubr.f32.gmra.mxu0 %v3655
  %v3657 = vpop.f32.mrf.mxu0
  %v3658 = vadd.f32 %v3449, %v3657
  %v3659 = vpop.f32.mrf.mxu0
  %v3660 = vand.u32 %v222, 4294901760
  %3661 = vmatprep.mubr.f32.mxu0 %v3660
  %v3662 = vand.u32 %v221, 4294901760
  %3663 = vmatmul.mubr.f32.gmra.mxu0 %v3662
  %v3664 = vpop.f32.mrf.mxu0
  %v3665 = vadd.f32 %v3456, %v3664
  %v3666 = vpop.f32.mrf.mxu0
  %v3667 = vand.u32 %v226, 4294901760
  %3668 = vmatprep.mubr.f32.mxu0 %v3667
  %v3669 = vand.u32 %v225, 4294901760
  %3670 = vmatmul.mubr.f32.gmra.mxu0 %v3669
  %v3671 = vpop.f32.mrf.mxu0
  %v3672 = vadd.f32 %v3463, %v3671
  %v3673 = vpop.f32.mrf.mxu0
  %v3674 = vand.u32 %v230, 4294901760
  %3675 = vmatprep.mubr.f32.mxu0 %v3674
  %v3676 = vand.u32 %v229, 4294901760
  %3677 = vmatmul.mubr.f32.gmra.mxu0 %v3676
  %v3678 = vpop.f32.mrf.mxu0
  %v3679 = vadd.f32 %v3470, %v3678
  %v3680 = vpop.f32.mrf.mxu0
  %v3681 = vand.u32 %v234, 4294901760
  %3682 = vmatprep.mubr.f32.mxu0 %v3681
  %v3683 = vand.u32 %v233, 4294901760
  %3684 = vmatmul.mubr.f32.gmra.mxu0 %v3683
  %v3685 = vpop.f32.mrf.mxu0
  %v3686 = vadd.f32 %v3477, %v3685
  %v3687 = vpop.f32.mrf.mxu0
  %v3688 = vand.u32 %v238, 4294901760
  %3689 = vmatprep.mubr.f32.mxu0 %v3688
  %v3690 = vand.u32 %v237, 4294901760
  %3691 = vmatmul.mubr.f32.gmra.mxu0 %v3690
  %v3692 = vpop.f32.mrf.mxu0
  %v3693 = vadd.f32 %v3484, %v3692
  %v3694 = vpop.f32.mrf.mxu0
  %v3695 = vand.u32 %v242, 4294901760
  %3696 = vmatprep.mubr.f32.mxu0 %v3695
  %v3697 = vand.u32 %v241, 4294901760
  %3698 = vmatmul.mubr.f32.gmra.mxu0 %v3697
  %v3699 = vpop.f32.mrf.mxu0
  %v3700 = vadd.f32 %v3491, %v3699
  %v3701 = vpop.f32.mrf.mxu0
  %v3702 = vand.u32 %v246, 4294901760
  %3703 = vmatprep.mubr.f32.mxu0 %v3702
  %v3704 = vand.u32 %v245, 4294901760
  %3705 = vmatmul.mubr.f32.gmra.mxu0 %v3704
  %v3706 = vpop.f32.mrf.mxu0
  %v3707 = vadd.f32 %v3498, %v3706
  %v3708 = vpop.f32.mrf.mxu0
  %v3709 = vand.u32 %v250, 4294901760
  %3710 = vmatprep.mubr.f32.mxu0 %v3709
  %v3711 = vand.u32 %v249, 4294901760
  %3712 = vmatmul.mubr.f32.gmra.mxu0 %v3711
  %v3713 = vpop.f32.mrf.mxu0
  %v3714 = vadd.f32 %v3505, %v3713
  %v3715 = vpop.f32.mrf.mxu0
  %v3716 = vand.u32 %v254, 4294901760
  %3717 = vmatprep.mubr.f32.mxu0 %v3716
  %v3718 = vand.u32 %v253, 4294901760
  %3719 = vmatmul.mubr.f32.gmra.mxu0 %v3718
  %v3720 = vpop.f32.mrf.mxu0
  %v3721 = vadd.f32 %v3512, %v3720
  %v3722 = vpop.f32.mrf.mxu0
  %v3723 = vand.u32 %v258, 4294901760
  %3724 = vmatprep.mubr.f32.mxu0 %v3723
  %v3725 = vand.u32 %v257, 4294901760
  %3726 = vmatmul.mubr.f32.gmra.mxu0 %v3725
  %v3727 = vpop.f32.mrf.mxu0
  %v3728 = vadd.f32 %v3519, %v3727
  %v3729 = vpop.f32.mrf.mxu0
  %v3730 = vand.u32 %v262, 4294901760
  %3731 = vmatprep.mubr.f32.mxu0 %v3730
  %v3732 = vand.u32 %v261, 4294901760
  %3733 = vmatmul.mubr.f32.gmra.mxu0 %v3732
  %v3734 = vpop.f32.mrf.mxu0
  %v3735 = vadd.f32 %v3526, %v3734
  %v3736 = vpop.f32.mrf.mxu0
  %v3737 = vand.u32 %v266, 4294901760
  %3738 = vmatprep.mubr.f32.mxu0 %v3737
  %v3739 = vand.u32 %v265, 4294901760
  %3740 = vmatmul.mubr.f32.gmra.mxu0 %v3739
  %v3741 = vpop.f32.mrf.mxu0
  %v3742 = vadd.f32 %v3533, %v3741
  %v3743 = vpop.f32.mrf.mxu0
  %v3744 = vand.u32 %v270, 4294901760
  %3745 = vmatprep.mubr.f32.mxu0 %v3744
  %v3746 = vand.u32 %v269, 4294901760
  %3747 = vmatmul.mubr.f32.gmra.mxu0 %v3746
  %v3748 = vpop.f32.mrf.mxu0
  %v3749 = vadd.f32 %v3540, %v3748
  %v3750 = vpop.f32.mrf.mxu0
  %v3751 = vand.u32 %v274, 4294901760
  %3752 = vmatprep.mubr.f32.mxu0 %v3751
  %v3753 = vand.u32 %v273, 4294901760
  %3754 = vmatmul.mubr.f32.gmra.mxu0 %v3753
  %v3755 = vpop.f32.mrf.mxu0
  %v3756 = vadd.f32 %v3547, %v3755
  %v3757 = vpop.f32.mrf.mxu0
  %3758 = vdwg.mxu0
  %v3759 = vadd.f32 %v339, %v3651
  %v3760 = vadd.f32 %v340, %v3658
  %v3761 = vadd.f32 %v341, %v3665
  %v3762 = vadd.f32 %v342, %v3672
  %v3763 = vadd.f32 %v343, %v3679
  %v3764 = vadd.f32 %v344, %v3686
  %v3765 = vadd.f32 %v345, %v3693
  %v3766 = vadd.f32 %v346, %v3700
  %v3767 = vadd.f32 %v347, %v3707
  %v3768 = vadd.f32 %v348, %v3714
  %v3769 = vadd.f32 %v349, %v3721
  %v3770 = vadd.f32 %v350, %v3728
  %v3771 = vadd.f32 %v351, %v3735
  %v3772 = vadd.f32 %v352, %v3742
  %v3773 = vadd.f32 %v353, %v3749
  %v3774 = vadd.f32 %v354, %v3756
  %3775 = vst [vmem:[%s2] sm:$0xff] %v3759
  %3776 = vst [vmem:[%s2 + $0x8] sm:$0xff] %v3760
  %3777 = vst [vmem:[%s2 + $0x10] sm:$0xff] %v3761
  %3778 = vst [vmem:[%s2 + $0x18] sm:$0xff] %v3762
  %3779 = vst [vmem:[%s2 + $0x20] sm:$0xff] %v3763
  %3780 = vst [vmem:[%s2 + $0x28] sm:$0xff] %v3764
  %3781 = vst [vmem:[%s2 + $0x30] sm:$0xff] %v3765
  %3782 = vst [vmem:[%s2 + $0x38] sm:$0xff] %v3766
  %3783 = vst [vmem:[%s2 + $0x40] sm:$0xff] %v3767
  %3784 = vst [vmem:[%s2 + $0x48] sm:$0xff] %v3768
  %3785 = vst [vmem:[%s2 + $0x50] sm:$0xff] %v3769
  %3786 = vst [vmem:[%s2 + $0x58] sm:$0xff] %v3770
  %3787 = vst [vmem:[%s2 + $0x60] sm:$0xff] %v3771
  %3788 = vst [vmem:[%s2 + $0x68] sm:$0xff] %v3772
  %3789 = vst [vmem:[%s2 + $0x70] sm:$0xff] %v3773
  %3790 = vst [vmem:[%s2 + $0x78] sm:$0xff] %v3774
  %v3791 = vld [vmem:[%s3] sm:$0xff]
  %v3792 = vld [vmem:[%s3 + $0x8] sm:$0xff]
  %v3793 = vld [vmem:[%s3 + $0x10] sm:$0xff]
  %v3794 = vld [vmem:[%s3 + $0x18] sm:$0xff]
  %v3795 = vld [vmem:[%s3 + $0x20] sm:$0xff]
  %v3796 = vld [vmem:[%s3 + $0x28] sm:$0xff]
  %v3797 = vld [vmem:[%s3 + $0x30] sm:$0xff]
  %v3798 = vld [vmem:[%s3 + $0x38] sm:$0xff]
  %v3799 = vld [vmem:[%s3 + $0x40] sm:$0xff]
  %v3800 = vld [vmem:[%s3 + $0x48] sm:$0xff]
  %v3801 = vld [vmem:[%s3 + $0x50] sm:$0xff]
  %v3802 = vld [vmem:[%s3 + $0x58] sm:$0xff]
  %v3803 = vld [vmem:[%s3 + $0x60] sm:$0xff]
  %v3804 = vld [vmem:[%s3 + $0x68] sm:$0xff]
  %v3805 = vld [vmem:[%s3 + $0x70] sm:$0xff]
  %v3806 = vld [vmem:[%s3 + $0x78] sm:$0xff]
  %v3807 = vmul.f32 %v275, %v275
  %v3808 = vmul.f32 %v276, %v276
  %v3809 = vmul.f32 %v277, %v277
  %v3810 = vmul.f32 %v278, %v278
  %v3811 = vmul.f32 %v279, %v279
  %v3812 = vmul.f32 %v280, %v280
  %v3813 = vmul.f32 %v281, %v281
  %v3814 = vmul.f32 %v282, %v282
  %v3815 = vmul.f32 %v283, %v283
  %v3816 = vmul.f32 %v284, %v284
  %v3817 = vmul.f32 %v285, %v285
  %v3818 = vmul.f32 %v286, %v286
  %v3819 = vmul.f32 %v287, %v287
  %v3820 = vmul.f32 %v288, %v288
  %v3821 = vmul.f32 %v289, %v289
  %v3822 = vmul.f32 %v290, %v290
  %v3823 = vmul.f32 %v291, %v291
  %v3824 = vmul.f32 %v292, %v292
  %v3825 = vmul.f32 %v293, %v293
  %v3826 = vmul.f32 %v294, %v294
  %v3827 = vmul.f32 %v295, %v295
  %v3828 = vmul.f32 %v296, %v296
  %v3829 = vmul.f32 %v297, %v297
  %v3830 = vmul.f32 %v298, %v298
  %v3831 = vmul.f32 %v299, %v299
  %v3832 = vmul.f32 %v300, %v300
  %v3833 = vmul.f32 %v301, %v301
  %v3834 = vmul.f32 %v302, %v302
  %v3835 = vmul.f32 %v303, %v303
  %v3836 = vmul.f32 %v304, %v304
  %v3837 = vmul.f32 %v305, %v305
  %v3838 = vmul.f32 %v306, %v306
  %v3839 = vmul.f32 %v307, %v307
  %v3840 = vmul.f32 %v308, %v308
  %v3841 = vmul.f32 %v309, %v309
  %v3842 = vmul.f32 %v310, %v310
  %v3843 = vmul.f32 %v311, %v311
  %v3844 = vmul.f32 %v312, %v312
  %v3845 = vmul.f32 %v313, %v313
  %v3846 = vmul.f32 %v314, %v314
  %v3847 = vmul.f32 %v315, %v315
  %v3848 = vmul.f32 %v316, %v316
  %v3849 = vmul.f32 %v317, %v317
  %v3850 = vmul.f32 %v318, %v318
  %v3851 = vmul.f32 %v319, %v319
  %v3852 = vmul.f32 %v320, %v320
  %v3853 = vmul.f32 %v321, %v321
  %v3854 = vmul.f32 %v322, %v322
  %v3855 = vmul.f32 %v323, %v323
  %v3856 = vmul.f32 %v324, %v324
  %v3857 = vmul.f32 %v325, %v325
  %v3858 = vmul.f32 %v326, %v326
  %v3859 = vmul.f32 %v327, %v327
  %v3860 = vmul.f32 %v328, %v328
  %v3861 = vmul.f32 %v329, %v329
  %v3862 = vmul.f32 %v330, %v330
  %v3863 = vmul.f32 %v331, %v331
  %v3864 = vmul.f32 %v332, %v332
  %v3865 = vmul.f32 %v333, %v333
  %v3866 = vmul.f32 %v334, %v334
  %v3867 = vmul.f32 %v335, %v335
  %v3868 = vmul.f32 %v336, %v336
  %v3869 = vmul.f32 %v337, %v337
  %v3870 = vmul.f32 %v338, %v338
  %3871 = vmatprep.subr.mxu0 0.0
  %v3872 = vand.u32 %v3822, 4294901760
  %3873 = vmatpush1.msra.mxu0 %v3872
  %3874 = vmatprep.subr.mxu0 0.0
  %v3875 = vand.u32 %v3821, 4294901760
  %3876 = vmatpush1.msra.mxu0 %v3875
  %3877 = vmatprep.subr.mxu0 0.0
  %v3878 = vand.u32 %v3820, 4294901760
  %3879 = vmatpush1.msra.mxu0 %v3878
  %3880 = vmatprep.subr.mxu0 0.0
  %v3881 = vand.u32 %v3819, 4294901760
  %3882 = vmatpush1.msra.mxu0 %v3881
  %3883 = vmatprep.subr.mxu0 0.0
  %v3884 = vand.u32 %v3818, 4294901760
  %3885 = vmatpush1.msra.mxu0 %v3884
  %3886 = vmatprep.subr.mxu0 0.0
  %v3887 = vand.u32 %v3817, 4294901760
  %3888 = vmatpush1.msra.mxu0 %v3887
  %3889 = vmatprep.subr.mxu0 0.0
  %v3890 = vand.u32 %v3816, 4294901760
  %3891 = vmatpush1.msra.mxu0 %v3890
  %3892 = vmatprep.subr.mxu0 0.0
  %v3893 = vand.u32 %v3815, 4294901760
  %3894 = vmatpush1.msra.mxu0 %v3893
  %3895 = vmatprep.subr.mxu0 0.0
  %v3896 = vand.u32 %v3814, 4294901760
  %3897 = vmatpush1.msra.mxu0 %v3896
  %3898 = vmatprep.subr.mxu0 0.0
  %v3899 = vand.u32 %v3813, 4294901760
  %3900 = vmatpush1.msra.mxu0 %v3899
  %3901 = vmatprep.subr.mxu0 0.0
  %v3902 = vand.u32 %v3812, 4294901760
  %3903 = vmatpush1.msra.mxu0 %v3902
  %3904 = vmatprep.subr.mxu0 0.0
  %v3905 = vand.u32 %v3811, 4294901760
  %3906 = vmatpush1.msra.mxu0 %v3905
  %3907 = vmatprep.subr.mxu0 0.0
  %v3908 = vand.u32 %v3810, 4294901760
  %3909 = vmatpush1.msra.mxu0 %v3908
  %3910 = vmatprep.subr.mxu0 0.0
  %v3911 = vand.u32 %v3809, 4294901760
  %3912 = vmatpush1.msra.mxu0 %v3911
  %3913 = vmatprep.subr.mxu0 0.0
  %v3914 = vand.u32 %v3808, 4294901760
  %3915 = vmatpush1.msra.mxu0 %v3914
  %3916 = vmatprep.subr.mxu0 0.0
  %v3917 = vand.u32 %v3807, 4294901760
  %3918 = vmatpush1.msra.mxu0 %v3917
  %3919 = vmatprep.subr.mxu0 0.0
  %v3920 = vand.u32 %v3838, 4294901760
  %3921 = vmatpush2.msra.mxu0 %v3920
  %3922 = vmatprep.subr.mxu0 0.0
  %v3923 = vand.u32 %v3837, 4294901760
  %3924 = vmatpush2.msra.mxu0 %v3923
  %3925 = vmatprep.subr.mxu0 0.0
  %v3926 = vand.u32 %v3836, 4294901760
  %3927 = vmatpush2.msra.mxu0 %v3926
  %3928 = vmatprep.subr.mxu0 0.0
  %v3929 = vand.u32 %v3835, 4294901760
  %3930 = vmatpush2.msra.mxu0 %v3929
  %3931 = vmatprep.subr.mxu0 0.0
  %v3932 = vand.u32 %v3834, 4294901760
  %3933 = vmatpush2.msra.mxu0 %v3932
  %3934 = vmatprep.subr.mxu0 0.0
  %v3935 = vand.u32 %v3833, 4294901760
  %3936 = vmatpush2.msra.mxu0 %v3935
  %3937 = vmatprep.subr.mxu0 0.0
  %v3938 = vand.u32 %v3832, 4294901760
  %3939 = vmatpush2.msra.mxu0 %v3938
  %3940 = vmatprep.subr.mxu0 0.0
  %v3941 = vand.u32 %v3831, 4294901760
  %3942 = vmatpush2.msra.mxu0 %v3941
  %3943 = vmatprep.subr.mxu0 0.0
  %v3944 = vand.u32 %v3830, 4294901760
  %3945 = vmatpush2.msra.mxu0 %v3944
  %3946 = vmatprep.subr.mxu0 0.0
  %v3947 = vand.u32 %v3829, 4294901760
  %3948 = vmatpush2.msra.mxu0 %v3947
  %3949 = vmatprep.subr.mxu0 0.0
  %v3950 = vand.u32 %v3828, 4294901760
  %3951 = vmatpush2.msra.mxu0 %v3950
  %3952 = vmatprep.subr.mxu0 0.0
  %v3953 = vand.u32 %v3827, 4294901760
  %3954 = vmatpush2.msra.mxu0 %v3953
  %3955 = vmatprep.subr.mxu0 0.0
  %v3956 = vand.u32 %v3826, 4294901760
  %3957 = vmatpush2.msra.mxu0 %v3956
  %3958 = vmatprep.subr.mxu0 0.0
  %v3959 = vand.u32 %v3825, 4294901760
  %3960 = vmatpush2.msra.mxu0 %v3959
  %3961 = vmatprep.subr.mxu0 0.0
  %v3962 = vand.u32 %v3824, 4294901760
  %3963 = vmatpush2.msra.mxu0 %v3962
  %3964 = vmatprep.subr.mxu0 0.0
  %v3965 = vand.u32 %v3823, 4294901760
  %3966 = vmatpush2.msra.mxu0 %v3965
  %v3967 = vand.u32 %v212, 4294901760
  %v3968 = vsub.f32 %v212, %v3967
  %v3969 = vand.u32 %v3968, 4294901760
  %v3970 = vsub.f32 %v3968, %v3969
  %v3971 = vand.u32 %v3970, 4294901760
  %3972 = vmatprep.mubr.f32.mxu0 %v3971
  %v3973 = vand.u32 %v211, 4294901760
  %v3974 = vsub.f32 %v211, %v3973
  %v3975 = vand.u32 %v3974, 4294901760
  %v3976 = vsub.f32 %v3974, %v3975
  %v3977 = vand.u32 %v3976, 4294901760
  %3978 = vmatmul.mubr.f32.gmra.mxu0 %v3977
  %v3979 = vpop.f32.mrf.mxu0
  %v3980 = vadd.f32 0.0, %v3979
  %v3981 = vpop.f32.mrf.mxu0
  %v3982 = vand.u32 %v216, 4294901760
  %v3983 = vsub.f32 %v216, %v3982
  %v3984 = vand.u32 %v3983, 4294901760
  %v3985 = vsub.f32 %v3983, %v3984
  %v3986 = vand.u32 %v3985, 4294901760
  %3987 = vmatprep.mubr.f32.mxu0 %v3986
  %v3988 = vand.u32 %v215, 4294901760
  %v3989 = vsub.f32 %v215, %v3988
  %v3990 = vand.u32 %v3989, 4294901760
  %v3991 = vsub.f32 %v3989, %v3990
  %v3992 = vand.u32 %v3991, 4294901760
  %3993 = vmatmul.mubr.f32.gmra.mxu0 %v3992
  %v3994 = vpop.f32.mrf.mxu0
  %v3995 = vadd.f32 0.0, %v3994
  %v3996 = vpop.f32.mrf.mxu0
  %v3997 = vand.u32 %v220, 4294901760
  %v3998 = vsub.f32 %v220, %v3997
  %v3999 = vand.u32 %v3998, 4294901760
  %v4000 = vsub.f32 %v3998, %v3999
  %v4001 = vand.u32 %v4000, 4294901760
  %4002 = vmatprep.mubr.f32.mxu0 %v4001
  %v4003 = vand.u32 %v219, 4294901760
  %v4004 = vsub.f32 %v219, %v4003
  %v4005 = vand.u32 %v4004, 4294901760
  %v4006 = vsub.f32 %v4004, %v4005
  %v4007 = vand.u32 %v4006, 4294901760
  %4008 = vmatmul.mubr.f32.gmra.mxu0 %v4007
  %v4009 = vpop.f32.mrf.mxu0
  %v4010 = vadd.f32 0.0, %v4009
  %v4011 = vpop.f32.mrf.mxu0
  %v4012 = vand.u32 %v224, 4294901760
  %v4013 = vsub.f32 %v224, %v4012
  %v4014 = vand.u32 %v4013, 4294901760
  %v4015 = vsub.f32 %v4013, %v4014
  %v4016 = vand.u32 %v4015, 4294901760
  %4017 = vmatprep.mubr.f32.mxu0 %v4016
  %v4018 = vand.u32 %v223, 4294901760
  %v4019 = vsub.f32 %v223, %v4018
  %v4020 = vand.u32 %v4019, 4294901760
  %v4021 = vsub.f32 %v4019, %v4020
  %v4022 = vand.u32 %v4021, 4294901760
  %4023 = vmatmul.mubr.f32.gmra.mxu0 %v4022
  %v4024 = vpop.f32.mrf.mxu0
  %v4025 = vadd.f32 0.0, %v4024
  %v4026 = vpop.f32.mrf.mxu0
  %v4027 = vand.u32 %v228, 4294901760
  %v4028 = vsub.f32 %v228, %v4027
  %v4029 = vand.u32 %v4028, 4294901760
  %v4030 = vsub.f32 %v4028, %v4029
  %v4031 = vand.u32 %v4030, 4294901760
  %4032 = vmatprep.mubr.f32.mxu0 %v4031
  %v4033 = vand.u32 %v227, 4294901760
  %v4034 = vsub.f32 %v227, %v4033
  %v4035 = vand.u32 %v4034, 4294901760
  %v4036 = vsub.f32 %v4034, %v4035
  %v4037 = vand.u32 %v4036, 4294901760
  %4038 = vmatmul.mubr.f32.gmra.mxu0 %v4037
  %v4039 = vpop.f32.mrf.mxu0
  %v4040 = vadd.f32 0.0, %v4039
  %v4041 = vpop.f32.mrf.mxu0
  %v4042 = vand.u32 %v232, 4294901760
  %v4043 = vsub.f32 %v232, %v4042
  %v4044 = vand.u32 %v4043, 4294901760
  %v4045 = vsub.f32 %v4043, %v4044
  %v4046 = vand.u32 %v4045, 4294901760
  %4047 = vmatprep.mubr.f32.mxu0 %v4046
  %v4048 = vand.u32 %v231, 4294901760
  %v4049 = vsub.f32 %v231, %v4048
  %v4050 = vand.u32 %v4049, 4294901760
  %v4051 = vsub.f32 %v4049, %v4050
  %v4052 = vand.u32 %v4051, 4294901760
  %4053 = vmatmul.mubr.f32.gmra.mxu0 %v4052
  %v4054 = vpop.f32.mrf.mxu0
  %v4055 = vadd.f32 0.0, %v4054
  %v4056 = vpop.f32.mrf.mxu0
  %v4057 = vand.u32 %v236, 4294901760
  %v4058 = vsub.f32 %v236, %v4057
  %v4059 = vand.u32 %v4058, 4294901760
  %v4060 = vsub.f32 %v4058, %v4059
  %v4061 = vand.u32 %v4060, 4294901760
  %4062 = vmatprep.mubr.f32.mxu0 %v4061
  %v4063 = vand.u32 %v235, 4294901760
  %v4064 = vsub.f32 %v235, %v4063
  %v4065 = vand.u32 %v4064, 4294901760
  %v4066 = vsub.f32 %v4064, %v4065
  %v4067 = vand.u32 %v4066, 4294901760
  %4068 = vmatmul.mubr.f32.gmra.mxu0 %v4067
  %v4069 = vpop.f32.mrf.mxu0
  %v4070 = vadd.f32 0.0, %v4069
  %v4071 = vpop.f32.mrf.mxu0
  %v4072 = vand.u32 %v240, 4294901760
  %v4073 = vsub.f32 %v240, %v4072
  %v4074 = vand.u32 %v4073, 4294901760
  %v4075 = vsub.f32 %v4073, %v4074
  %v4076 = vand.u32 %v4075, 4294901760
  %4077 = vmatprep.mubr.f32.mxu0 %v4076
  %v4078 = vand.u32 %v239, 4294901760
  %v4079 = vsub.f32 %v239, %v4078
  %v4080 = vand.u32 %v4079, 4294901760
  %v4081 = vsub.f32 %v4079, %v4080
  %v4082 = vand.u32 %v4081, 4294901760
  %4083 = vmatmul.mubr.f32.gmra.mxu0 %v4082
  %v4084 = vpop.f32.mrf.mxu0
  %v4085 = vadd.f32 0.0, %v4084
  %v4086 = vpop.f32.mrf.mxu0
  %v4087 = vand.u32 %v244, 4294901760
  %v4088 = vsub.f32 %v244, %v4087
  %v4089 = vand.u32 %v4088, 4294901760
  %v4090 = vsub.f32 %v4088, %v4089
  %v4091 = vand.u32 %v4090, 4294901760
  %4092 = vmatprep.mubr.f32.mxu0 %v4091
  %v4093 = vand.u32 %v243, 4294901760
  %v4094 = vsub.f32 %v243, %v4093
  %v4095 = vand.u32 %v4094, 4294901760
  %v4096 = vsub.f32 %v4094, %v4095
  %v4097 = vand.u32 %v4096, 4294901760
  %4098 = vmatmul.mubr.f32.gmra.mxu0 %v4097
  %v4099 = vpop.f32.mrf.mxu0
  %v4100 = vadd.f32 0.0, %v4099
  %v4101 = vpop.f32.mrf.mxu0
  %v4102 = vand.u32 %v248, 4294901760
  %v4103 = vsub.f32 %v248, %v4102
  %v4104 = vand.u32 %v4103, 4294901760
  %v4105 = vsub.f32 %v4103, %v4104
  %v4106 = vand.u32 %v4105, 4294901760
  %4107 = vmatprep.mubr.f32.mxu0 %v4106
  %v4108 = vand.u32 %v247, 4294901760
  %v4109 = vsub.f32 %v247, %v4108
  %v4110 = vand.u32 %v4109, 4294901760
  %v4111 = vsub.f32 %v4109, %v4110
  %v4112 = vand.u32 %v4111, 4294901760
  %4113 = vmatmul.mubr.f32.gmra.mxu0 %v4112
  %v4114 = vpop.f32.mrf.mxu0
  %v4115 = vadd.f32 0.0, %v4114
  %v4116 = vpop.f32.mrf.mxu0
  %v4117 = vand.u32 %v252, 4294901760
  %v4118 = vsub.f32 %v252, %v4117
  %v4119 = vand.u32 %v4118, 4294901760
  %v4120 = vsub.f32 %v4118, %v4119
  %v4121 = vand.u32 %v4120, 4294901760
  %4122 = vmatprep.mubr.f32.mxu0 %v4121
  %v4123 = vand.u32 %v251, 4294901760
  %v4124 = vsub.f32 %v251, %v4123
  %v4125 = vand.u32 %v4124, 4294901760
  %v4126 = vsub.f32 %v4124, %v4125
  %v4127 = vand.u32 %v4126, 4294901760
  %4128 = vmatmul.mubr.f32.gmra.mxu0 %v4127
  %v4129 = vpop.f32.mrf.mxu0
  %v4130 = vadd.f32 0.0, %v4129
  %v4131 = vpop.f32.mrf.mxu0
  %v4132 = vand.u32 %v256, 4294901760
  %v4133 = vsub.f32 %v256, %v4132
  %v4134 = vand.u32 %v4133, 4294901760
  %v4135 = vsub.f32 %v4133, %v4134
  %v4136 = vand.u32 %v4135, 4294901760
  %4137 = vmatprep.mubr.f32.mxu0 %v4136
  %v4138 = vand.u32 %v255, 4294901760
  %v4139 = vsub.f32 %v255, %v4138
  %v4140 = vand.u32 %v4139, 4294901760
  %v4141 = vsub.f32 %v4139, %v4140
  %v4142 = vand.u32 %v4141, 4294901760
  %4143 = vmatmul.mubr.f32.gmra.mxu0 %v4142
  %v4144 = vpop.f32.mrf.mxu0
  %v4145 = vadd.f32 0.0, %v4144
  %v4146 = vpop.f32.mrf.mxu0
  %v4147 = vand.u32 %v260, 4294901760
  %v4148 = vsub.f32 %v260, %v4147
  %v4149 = vand.u32 %v4148, 4294901760
  %v4150 = vsub.f32 %v4148, %v4149
  %v4151 = vand.u32 %v4150, 4294901760
  %4152 = vmatprep.mubr.f32.mxu0 %v4151
  %v4153 = vand.u32 %v259, 4294901760
  %v4154 = vsub.f32 %v259, %v4153
  %v4155 = vand.u32 %v4154, 4294901760
  %v4156 = vsub.f32 %v4154, %v4155
  %v4157 = vand.u32 %v4156, 4294901760
  %4158 = vmatmul.mubr.f32.gmra.mxu0 %v4157
  %v4159 = vpop.f32.mrf.mxu0
  %v4160 = vadd.f32 0.0, %v4159
  %v4161 = vpop.f32.mrf.mxu0
  %v4162 = vand.u32 %v264, 4294901760
  %v4163 = vsub.f32 %v264, %v4162
  %v4164 = vand.u32 %v4163, 4294901760
  %v4165 = vsub.f32 %v4163, %v4164
  %v4166 = vand.u32 %v4165, 4294901760
  %4167 = vmatprep.mubr.f32.mxu0 %v4166
  %v4168 = vand.u32 %v263, 4294901760
  %v4169 = vsub.f32 %v263, %v4168
  %v4170 = vand.u32 %v4169, 4294901760
  %v4171 = vsub.f32 %v4169, %v4170
  %v4172 = vand.u32 %v4171, 4294901760
  %4173 = vmatmul.mubr.f32.gmra.mxu0 %v4172
  %v4174 = vpop.f32.mrf.mxu0
  %v4175 = vadd.f32 0.0, %v4174
  %v4176 = vpop.f32.mrf.mxu0
  %v4177 = vand.u32 %v268, 4294901760
  %v4178 = vsub.f32 %v268, %v4177
  %v4179 = vand.u32 %v4178, 4294901760
  %v4180 = vsub.f32 %v4178, %v4179
  %v4181 = vand.u32 %v4180, 4294901760
  %4182 = vmatprep.mubr.f32.mxu0 %v4181
  %v4183 = vand.u32 %v267, 4294901760
  %v4184 = vsub.f32 %v267, %v4183
  %v4185 = vand.u32 %v4184, 4294901760
  %v4186 = vsub.f32 %v4184, %v4185
  %v4187 = vand.u32 %v4186, 4294901760
  %4188 = vmatmul.mubr.f32.gmra.mxu0 %v4187
  %v4189 = vpop.f32.mrf.mxu0
  %v4190 = vadd.f32 0.0, %v4189
  %v4191 = vpop.f32.mrf.mxu0
  %v4192 = vand.u32 %v272, 4294901760
  %v4193 = vsub.f32 %v272, %v4192
  %v4194 = vand.u32 %v4193, 4294901760
  %v4195 = vsub.f32 %v4193, %v4194
  %v4196 = vand.u32 %v4195, 4294901760
  %4197 = vmatprep.mubr.f32.mxu0 %v4196
  %v4198 = vand.u32 %v271, 4294901760
  %v4199 = vsub.f32 %v271, %v4198
  %v4200 = vand.u32 %v4199, 4294901760
  %v4201 = vsub.f32 %v4199, %v4200
  %v4202 = vand.u32 %v4201, 4294901760
  %4203 = vmatmul.mubr.f32.gmra.mxu0 %v4202
  %v4204 = vpop.f32.mrf.mxu0
  %v4205 = vadd.f32 0.0, %v4204
  %v4206 = vpop.f32.mrf.mxu0
  %4207 = vdwg.mxu0
  %4208 = vmatprep.subr.mxu0 0.0
  %v4209 = vand.u32 %v3822, 4294901760
  %v4210 = vsub.f32 %v3822, %v4209
  %v4211 = vand.u32 %v4210, 4294901760
  %v4212 = vsub.f32 %v4210, %v4211
  %v4213 = vand.u32 %v4212, 4294901760
  %4214 = vmatpush1.msra.mxu0 %v4213
  %4215 = vmatprep.subr.mxu0 0.0
  %v4216 = vand.u32 %v3821, 4294901760
  %v4217 = vsub.f32 %v3821, %v4216
  %v4218 = vand.u32 %v4217, 4294901760
  %v4219 = vsub.f32 %v4217, %v4218
  %v4220 = vand.u32 %v4219, 4294901760
  %4221 = vmatpush1.msra.mxu0 %v4220
  %4222 = vmatprep.subr.mxu0 0.0
  %v4223 = vand.u32 %v3820, 4294901760
  %v4224 = vsub.f32 %v3820, %v4223
  %v4225 = vand.u32 %v4224, 4294901760
  %v4226 = vsub.f32 %v4224, %v4225
  %v4227 = vand.u32 %v4226, 4294901760
  %4228 = vmatpush1.msra.mxu0 %v4227
  %4229 = vmatprep.subr.mxu0 0.0
  %v4230 = vand.u32 %v3819, 4294901760
  %v4231 = vsub.f32 %v3819, %v4230
  %v4232 = vand.u32 %v4231, 4294901760
  %v4233 = vsub.f32 %v4231, %v4232
  %v4234 = vand.u32 %v4233, 4294901760
  %4235 = vmatpush1.msra.mxu0 %v4234
  %4236 = vmatprep.subr.mxu0 0.0
  %v4237 = vand.u32 %v3818, 4294901760
  %v4238 = vsub.f32 %v3818, %v4237
  %v4239 = vand.u32 %v4238, 4294901760
  %v4240 = vsub.f32 %v4238, %v4239
  %v4241 = vand.u32 %v4240, 4294901760
  %4242 = vmatpush1.msra.mxu0 %v4241
  %4243 = vmatprep.subr.mxu0 0.0
  %v4244 = vand.u32 %v3817, 4294901760
  %v4245 = vsub.f32 %v3817, %v4244
  %v4246 = vand.u32 %v4245, 4294901760
  %v4247 = vsub.f32 %v4245, %v4246
  %v4248 = vand.u32 %v4247, 4294901760
  %4249 = vmatpush1.msra.mxu0 %v4248
  %4250 = vmatprep.subr.mxu0 0.0
  %v4251 = vand.u32 %v3816, 4294901760
  %v4252 = vsub.f32 %v3816, %v4251
  %v4253 = vand.u32 %v4252, 4294901760
  %v4254 = vsub.f32 %v4252, %v4253
  %v4255 = vand.u32 %v4254, 4294901760
  %4256 = vmatpush1.msra.mxu0 %v4255
  %4257 = vmatprep.subr.mxu0 0.0
  %v4258 = vand.u32 %v3815, 4294901760
  %v4259 = vsub.f32 %v3815, %v4258
  %v4260 = vand.u32 %v4259, 4294901760
  %v4261 = vsub.f32 %v4259, %v4260
  %v4262 = vand.u32 %v4261, 4294901760
  %4263 = vmatpush1.msra.mxu0 %v4262
  %4264 = vmatprep.subr.mxu0 0.0
  %v4265 = vand.u32 %v3814, 4294901760
  %v4266 = vsub.f32 %v3814, %v4265
  %v4267 = vand.u32 %v4266, 4294901760
  %v4268 = vsub.f32 %v4266, %v4267
  %v4269 = vand.u32 %v4268, 4294901760
  %4270 = vmatpush1.msra.mxu0 %v4269
  %4271 = vmatprep.subr.mxu0 0.0
  %v4272 = vand.u32 %v3813, 4294901760
  %v4273 = vsub.f32 %v3813, %v4272
  %v4274 = vand.u32 %v4273, 4294901760
  %v4275 = vsub.f32 %v4273, %v4274
  %v4276 = vand.u32 %v4275, 4294901760
  %4277 = vmatpush1.msra.mxu0 %v4276
  %4278 = vmatprep.subr.mxu0 0.0
  %v4279 = vand.u32 %v3812, 4294901760
  %v4280 = vsub.f32 %v3812, %v4279
  %v4281 = vand.u32 %v4280, 4294901760
  %v4282 = vsub.f32 %v4280, %v4281
  %v4283 = vand.u32 %v4282, 4294901760
  %4284 = vmatpush1.msra.mxu0 %v4283
  %4285 = vmatprep.subr.mxu0 0.0
  %v4286 = vand.u32 %v3811, 4294901760
  %v4287 = vsub.f32 %v3811, %v4286
  %v4288 = vand.u32 %v4287, 4294901760
  %v4289 = vsub.f32 %v4287, %v4288
  %v4290 = vand.u32 %v4289, 4294901760
  %4291 = vmatpush1.msra.mxu0 %v4290
  %4292 = vmatprep.subr.mxu0 0.0
  %v4293 = vand.u32 %v3810, 4294901760
  %v4294 = vsub.f32 %v3810, %v4293
  %v4295 = vand.u32 %v4294, 4294901760
  %v4296 = vsub.f32 %v4294, %v4295
  %v4297 = vand.u32 %v4296, 4294901760
  %4298 = vmatpush1.msra.mxu0 %v4297
  %4299 = vmatprep.subr.mxu0 0.0
  %v4300 = vand.u32 %v3809, 4294901760
  %v4301 = vsub.f32 %v3809, %v4300
  %v4302 = vand.u32 %v4301, 4294901760
  %v4303 = vsub.f32 %v4301, %v4302
  %v4304 = vand.u32 %v4303, 4294901760
  %4305 = vmatpush1.msra.mxu0 %v4304
  %4306 = vmatprep.subr.mxu0 0.0
  %v4307 = vand.u32 %v3808, 4294901760
  %v4308 = vsub.f32 %v3808, %v4307
  %v4309 = vand.u32 %v4308, 4294901760
  %v4310 = vsub.f32 %v4308, %v4309
  %v4311 = vand.u32 %v4310, 4294901760
  %4312 = vmatpush1.msra.mxu0 %v4311
  %4313 = vmatprep.subr.mxu0 0.0
  %v4314 = vand.u32 %v3807, 4294901760
  %v4315 = vsub.f32 %v3807, %v4314
  %v4316 = vand.u32 %v4315, 4294901760
  %v4317 = vsub.f32 %v4315, %v4316
  %v4318 = vand.u32 %v4317, 4294901760
  %4319 = vmatpush1.msra.mxu0 %v4318
  %4320 = vmatprep.subr.mxu0 0.0
  %v4321 = vand.u32 %v3838, 4294901760
  %v4322 = vsub.f32 %v3838, %v4321
  %v4323 = vand.u32 %v4322, 4294901760
  %v4324 = vsub.f32 %v4322, %v4323
  %v4325 = vand.u32 %v4324, 4294901760
  %4326 = vmatpush2.msra.mxu0 %v4325
  %4327 = vmatprep.subr.mxu0 0.0
  %v4328 = vand.u32 %v3837, 4294901760
  %v4329 = vsub.f32 %v3837, %v4328
  %v4330 = vand.u32 %v4329, 4294901760
  %v4331 = vsub.f32 %v4329, %v4330
  %v4332 = vand.u32 %v4331, 4294901760
  %4333 = vmatpush2.msra.mxu0 %v4332
  %4334 = vmatprep.subr.mxu0 0.0
  %v4335 = vand.u32 %v3836, 4294901760
  %v4336 = vsub.f32 %v3836, %v4335
  %v4337 = vand.u32 %v4336, 4294901760
  %v4338 = vsub.f32 %v4336, %v4337
  %v4339 = vand.u32 %v4338, 4294901760
  %4340 = vmatpush2.msra.mxu0 %v4339
  %4341 = vmatprep.subr.mxu0 0.0
  %v4342 = vand.u32 %v3835, 4294901760
  %v4343 = vsub.f32 %v3835, %v4342
  %v4344 = vand.u32 %v4343, 4294901760
  %v4345 = vsub.f32 %v4343, %v4344
  %v4346 = vand.u32 %v4345, 4294901760
  %4347 = vmatpush2.msra.mxu0 %v4346
  %4348 = vmatprep.subr.mxu0 0.0
  %v4349 = vand.u32 %v3834, 4294901760
  %v4350 = vsub.f32 %v3834, %v4349
  %v4351 = vand.u32 %v4350, 4294901760
  %v4352 = vsub.f32 %v4350, %v4351
  %v4353 = vand.u32 %v4352, 4294901760
  %4354 = vmatpush2.msra.mxu0 %v4353
  %4355 = vmatprep.subr.mxu0 0.0
  %v4356 = vand.u32 %v3833, 4294901760
  %v4357 = vsub.f32 %v3833, %v4356
  %v4358 = vand.u32 %v4357, 4294901760
  %v4359 = vsub.f32 %v4357, %v4358
  %v4360 = vand.u32 %v4359, 4294901760
  %4361 = vmatpush2.msra.mxu0 %v4360
  %4362 = vmatprep.subr.mxu0 0.0
  %v4363 = vand.u32 %v3832, 4294901760
  %v4364 = vsub.f32 %v3832, %v4363
  %v4365 = vand.u32 %v4364, 4294901760
  %v4366 = vsub.f32 %v4364, %v4365
  %v4367 = vand.u32 %v4366, 4294901760
  %4368 = vmatpush2.msra.mxu0 %v4367
  %4369 = vmatprep.subr.mxu0 0.0
  %v4370 = vand.u32 %v3831, 4294901760
  %v4371 = vsub.f32 %v3831, %v4370
  %v4372 = vand.u32 %v4371, 4294901760
  %v4373 = vsub.f32 %v4371, %v4372
  %v4374 = vand.u32 %v4373, 4294901760
  %4375 = vmatpush2.msra.mxu0 %v4374
  %4376 = vmatprep.subr.mxu0 0.0
  %v4377 = vand.u32 %v3830, 4294901760
  %v4378 = vsub.f32 %v3830, %v4377
  %v4379 = vand.u32 %v4378, 4294901760
  %v4380 = vsub.f32 %v4378, %v4379
  %v4381 = vand.u32 %v4380, 4294901760
  %4382 = vmatpush2.msra.mxu0 %v4381
  %4383 = vmatprep.subr.mxu0 0.0
  %v4384 = vand.u32 %v3829, 4294901760
  %v4385 = vsub.f32 %v3829, %v4384
  %v4386 = vand.u32 %v4385, 4294901760
  %v4387 = vsub.f32 %v4385, %v4386
  %v4388 = vand.u32 %v4387, 4294901760
  %4389 = vmatpush2.msra.mxu0 %v4388
  %4390 = vmatprep.subr.mxu0 0.0
  %v4391 = vand.u32 %v3828, 4294901760
  %v4392 = vsub.f32 %v3828, %v4391
  %v4393 = vand.u32 %v4392, 4294901760
  %v4394 = vsub.f32 %v4392, %v4393
  %v4395 = vand.u32 %v4394, 4294901760
  %4396 = vmatpush2.msra.mxu0 %v4395
  %4397 = vmatprep.subr.mxu0 0.0
  %v4398 = vand.u32 %v3827, 4294901760
  %v4399 = vsub.f32 %v3827, %v4398
  %v4400 = vand.u32 %v4399, 4294901760
  %v4401 = vsub.f32 %v4399, %v4400
  %v4402 = vand.u32 %v4401, 4294901760
  %4403 = vmatpush2.msra.mxu0 %v4402
  %4404 = vmatprep.subr.mxu0 0.0
  %v4405 = vand.u32 %v3826, 4294901760
  %v4406 = vsub.f32 %v3826, %v4405
  %v4407 = vand.u32 %v4406, 4294901760
  %v4408 = vsub.f32 %v4406, %v4407
  %v4409 = vand.u32 %v4408, 4294901760
  %4410 = vmatpush2.msra.mxu0 %v4409
  %4411 = vmatprep.subr.mxu0 0.0
  %v4412 = vand.u32 %v3825, 4294901760
  %v4413 = vsub.f32 %v3825, %v4412
  %v4414 = vand.u32 %v4413, 4294901760
  %v4415 = vsub.f32 %v4413, %v4414
  %v4416 = vand.u32 %v4415, 4294901760
  %4417 = vmatpush2.msra.mxu0 %v4416
  %4418 = vmatprep.subr.mxu0 0.0
  %v4419 = vand.u32 %v3824, 4294901760
  %v4420 = vsub.f32 %v3824, %v4419
  %v4421 = vand.u32 %v4420, 4294901760
  %v4422 = vsub.f32 %v4420, %v4421
  %v4423 = vand.u32 %v4422, 4294901760
  %4424 = vmatpush2.msra.mxu0 %v4423
  %4425 = vmatprep.subr.mxu0 0.0
  %v4426 = vand.u32 %v3823, 4294901760
  %v4427 = vsub.f32 %v3823, %v4426
  %v4428 = vand.u32 %v4427, 4294901760
  %v4429 = vsub.f32 %v4427, %v4428
  %v4430 = vand.u32 %v4429, 4294901760
  %4431 = vmatpush2.msra.mxu0 %v4430
  %v4432 = vand.u32 %v212, 4294901760
  %4433 = vmatprep.mubr.f32.mxu0 %v4432
  %v4434 = vand.u32 %v211, 4294901760
  %4435 = vmatmul.mubr.f32.gmra.mxu0 %v4434
  %v4436 = vpop.f32.mrf.mxu0
  %v4437 = vadd.f32 %v3980, %v4436
  %v4438 = vpop.f32.mrf.mxu0
  %v4439 = vand.u32 %v216, 4294901760
  %4440 = vmatprep.mubr.f32.mxu0 %v4439
  %v4441 = vand.u32 %v215, 4294901760
  %4442 = vmatmul.mubr.f32.gmra.mxu0 %v4441
  %v4443 = vpop.f32.mrf.mxu0
  %v4444 = vadd.f32 %v3995, %v4443
  %v4445 = vpop.f32.mrf.mxu0
  %v4446 = vand.u32 %v220, 4294901760
  %4447 = vmatprep.mubr.f32.mxu0 %v4446
  %v4448 = vand.u32 %v219, 4294901760
  %4449 = vmatmul.mubr.f32.gmra.mxu0 %v4448
  %v4450 = vpop.f32.mrf.mxu0
  %v4451 = vadd.f32 %v4010, %v4450
  %v4452 = vpop.f32.mrf.mxu0
  %v4453 = vand.u32 %v224, 4294901760
  %4454 = vmatprep.mubr.f32.mxu0 %v4453
  %v4455 = vand.u32 %v223, 4294901760
  %4456 = vmatmul.mubr.f32.gmra.mxu0 %v4455
  %v4457 = vpop.f32.mrf.mxu0
  %v4458 = vadd.f32 %v4025, %v4457
  %v4459 = vpop.f32.mrf.mxu0
  %v4460 = vand.u32 %v228, 4294901760
  %4461 = vmatprep.mubr.f32.mxu0 %v4460
  %v4462 = vand.u32 %v227, 4294901760
  %4463 = vmatmul.mubr.f32.gmra.mxu0 %v4462
  %v4464 = vpop.f32.mrf.mxu0
  %v4465 = vadd.f32 %v4040, %v4464
  %v4466 = vpop.f32.mrf.mxu0
  %v4467 = vand.u32 %v232, 4294901760
  %4468 = vmatprep.mubr.f32.mxu0 %v4467
  %v4469 = vand.u32 %v231, 4294901760
  %4470 = vmatmul.mubr.f32.gmra.mxu0 %v4469
  %v4471 = vpop.f32.mrf.mxu0
  %v4472 = vadd.f32 %v4055, %v4471
  %v4473 = vpop.f32.mrf.mxu0
  %v4474 = vand.u32 %v236, 4294901760
  %4475 = vmatprep.mubr.f32.mxu0 %v4474
  %v4476 = vand.u32 %v235, 4294901760
  %4477 = vmatmul.mubr.f32.gmra.mxu0 %v4476
  %v4478 = vpop.f32.mrf.mxu0
  %v4479 = vadd.f32 %v4070, %v4478
  %v4480 = vpop.f32.mrf.mxu0
  %v4481 = vand.u32 %v240, 4294901760
  %4482 = vmatprep.mubr.f32.mxu0 %v4481
  %v4483 = vand.u32 %v239, 4294901760
  %4484 = vmatmul.mubr.f32.gmra.mxu0 %v4483
  %v4485 = vpop.f32.mrf.mxu0
  %v4486 = vadd.f32 %v4085, %v4485
  %v4487 = vpop.f32.mrf.mxu0
  %v4488 = vand.u32 %v244, 4294901760
  %4489 = vmatprep.mubr.f32.mxu0 %v4488
  %v4490 = vand.u32 %v243, 4294901760
  %4491 = vmatmul.mubr.f32.gmra.mxu0 %v4490
  %v4492 = vpop.f32.mrf.mxu0
  %v4493 = vadd.f32 %v4100, %v4492
  %v4494 = vpop.f32.mrf.mxu0
  %v4495 = vand.u32 %v248, 4294901760
  %4496 = vmatprep.mubr.f32.mxu0 %v4495
  %v4497 = vand.u32 %v247, 4294901760
  %4498 = vmatmul.mubr.f32.gmra.mxu0 %v4497
  %v4499 = vpop.f32.mrf.mxu0
  %v4500 = vadd.f32 %v4115, %v4499
  %v4501 = vpop.f32.mrf.mxu0
  %v4502 = vand.u32 %v252, 4294901760
  %4503 = vmatprep.mubr.f32.mxu0 %v4502
  %v4504 = vand.u32 %v251, 4294901760
  %4505 = vmatmul.mubr.f32.gmra.mxu0 %v4504
  %v4506 = vpop.f32.mrf.mxu0
  %v4507 = vadd.f32 %v4130, %v4506
  %v4508 = vpop.f32.mrf.mxu0
  %v4509 = vand.u32 %v256, 4294901760
  %4510 = vmatprep.mubr.f32.mxu0 %v4509
  %v4511 = vand.u32 %v255, 4294901760
  %4512 = vmatmul.mubr.f32.gmra.mxu0 %v4511
  %v4513 = vpop.f32.mrf.mxu0
  %v4514 = vadd.f32 %v4145, %v4513
  %v4515 = vpop.f32.mrf.mxu0
  %v4516 = vand.u32 %v260, 4294901760
  %4517 = vmatprep.mubr.f32.mxu0 %v4516
  %v4518 = vand.u32 %v259, 4294901760
  %4519 = vmatmul.mubr.f32.gmra.mxu0 %v4518
  %v4520 = vpop.f32.mrf.mxu0
  %v4521 = vadd.f32 %v4160, %v4520
  %v4522 = vpop.f32.mrf.mxu0
  %v4523 = vand.u32 %v264, 4294901760
  %4524 = vmatprep.mubr.f32.mxu0 %v4523
  %v4525 = vand.u32 %v263, 4294901760
  %4526 = vmatmul.mubr.f32.gmra.mxu0 %v4525
  %v4527 = vpop.f32.mrf.mxu0
  %v4528 = vadd.f32 %v4175, %v4527
  %v4529 = vpop.f32.mrf.mxu0
  %v4530 = vand.u32 %v268, 4294901760
  %4531 = vmatprep.mubr.f32.mxu0 %v4530
  %v4532 = vand.u32 %v267, 4294901760
  %4533 = vmatmul.mubr.f32.gmra.mxu0 %v4532
  %v4534 = vpop.f32.mrf.mxu0
  %v4535 = vadd.f32 %v4190, %v4534
  %v4536 = vpop.f32.mrf.mxu0
  %v4537 = vand.u32 %v272, 4294901760
  %4538 = vmatprep.mubr.f32.mxu0 %v4537
  %v4539 = vand.u32 %v271, 4294901760
  %4540 = vmatmul.mubr.f32.gmra.mxu0 %v4539
  %v4541 = vpop.f32.mrf.mxu0
  %v4542 = vadd.f32 %v4205, %v4541
  %v4543 = vpop.f32.mrf.mxu0
  %4544 = vdwg.mxu0
  %4545 = vmatprep.subr.mxu0 0.0
  %v4546 = vand.u32 %v3822, 4294901760
  %v4547 = vsub.f32 %v3822, %v4546
  %4548 = vmatpush1.msra.mxu0 %v4547
  %4549 = vmatprep.subr.mxu0 0.0
  %v4550 = vand.u32 %v3821, 4294901760
  %v4551 = vsub.f32 %v3821, %v4550
  %4552 = vmatpush1.msra.mxu0 %v4551
  %4553 = vmatprep.subr.mxu0 0.0
  %v4554 = vand.u32 %v3820, 4294901760
  %v4555 = vsub.f32 %v3820, %v4554
  %4556 = vmatpush1.msra.mxu0 %v4555
  %4557 = vmatprep.subr.mxu0 0.0
  %v4558 = vand.u32 %v3819, 4294901760
  %v4559 = vsub.f32 %v3819, %v4558
  %4560 = vmatpush1.msra.mxu0 %v4559
  %4561 = vmatprep.subr.mxu0 0.0
  %v4562 = vand.u32 %v3818, 4294901760
  %v4563 = vsub.f32 %v3818, %v4562
  %4564 = vmatpush1.msra.mxu0 %v4563
  %4565 = vmatprep.subr.mxu0 0.0
  %v4566 = vand.u32 %v3817, 4294901760
  %v4567 = vsub.f32 %v3817, %v4566
  %4568 = vmatpush1.msra.mxu0 %v4567
  %4569 = vmatprep.subr.mxu0 0.0
  %v4570 = vand.u32 %v3816, 4294901760
  %v4571 = vsub.f32 %v3816, %v4570
  %4572 = vmatpush1.msra.mxu0 %v4571
  %4573 = vmatprep.subr.mxu0 0.0
  %v4574 = vand.u32 %v3815, 4294901760
  %v4575 = vsub.f32 %v3815, %v4574
  %4576 = vmatpush1.msra.mxu0 %v4575
  %4577 = vmatprep.subr.mxu0 0.0
  %v4578 = vand.u32 %v3814, 4294901760
  %v4579 = vsub.f32 %v3814, %v4578
  %4580 = vmatpush1.msra.mxu0 %v4579
  %4581 = vmatprep.subr.mxu0 0.0
  %v4582 = vand.u32 %v3813, 4294901760
  %v4583 = vsub.f32 %v3813, %v4582
  %4584 = vmatpush1.msra.mxu0 %v4583
  %4585 = vmatprep.subr.mxu0 0.0
  %v4586 = vand.u32 %v3812, 4294901760
  %v4587 = vsub.f32 %v3812, %v4586
  %4588 = vmatpush1.msra.mxu0 %v4587
  %4589 = vmatprep.subr.mxu0 0.0
  %v4590 = vand.u32 %v3811, 4294901760
  %v4591 = vsub.f32 %v3811, %v4590
  %4592 = vmatpush1.msra.mxu0 %v4591
  %4593 = vmatprep.subr.mxu0 0.0
  %v4594 = vand.u32 %v3810, 4294901760
  %v4595 = vsub.f32 %v3810, %v4594
  %4596 = vmatpush1.msra.mxu0 %v4595
  %4597 = vmatprep.subr.mxu0 0.0
  %v4598 = vand.u32 %v3809, 4294901760
  %v4599 = vsub.f32 %v3809, %v4598
  %4600 = vmatpush1.msra.mxu0 %v4599
  %4601 = vmatprep.subr.mxu0 0.0
  %v4602 = vand.u32 %v3808, 4294901760
  %v4603 = vsub.f32 %v3808, %v4602
  %4604 = vmatpush1.msra.mxu0 %v4603
  %4605 = vmatprep.subr.mxu0 0.0
  %v4606 = vand.u32 %v3807, 4294901760
  %v4607 = vsub.f32 %v3807, %v4606
  %4608 = vmatpush1.msra.mxu0 %v4607
  %4609 = vmatprep.subr.mxu0 0.0
  %v4610 = vand.u32 %v3838, 4294901760
  %v4611 = vsub.f32 %v3838, %v4610
  %4612 = vmatpush2.msra.mxu0 %v4611
  %4613 = vmatprep.subr.mxu0 0.0
  %v4614 = vand.u32 %v3837, 4294901760
  %v4615 = vsub.f32 %v3837, %v4614
  %4616 = vmatpush2.msra.mxu0 %v4615
  %4617 = vmatprep.subr.mxu0 0.0
  %v4618 = vand.u32 %v3836, 4294901760
  %v4619 = vsub.f32 %v3836, %v4618
  %4620 = vmatpush2.msra.mxu0 %v4619
  %4621 = vmatprep.subr.mxu0 0.0
  %v4622 = vand.u32 %v3835, 4294901760
  %v4623 = vsub.f32 %v3835, %v4622
  %4624 = vmatpush2.msra.mxu0 %v4623
  %4625 = vmatprep.subr.mxu0 0.0
  %v4626 = vand.u32 %v3834, 4294901760
  %v4627 = vsub.f32 %v3834, %v4626
  %4628 = vmatpush2.msra.mxu0 %v4627
  %4629 = vmatprep.subr.mxu0 0.0
  %v4630 = vand.u32 %v3833, 4294901760
  %v4631 = vsub.f32 %v3833, %v4630
  %4632 = vmatpush2.msra.mxu0 %v4631
  %4633 = vmatprep.subr.mxu0 0.0
  %v4634 = vand.u32 %v3832, 4294901760
  %v4635 = vsub.f32 %v3832, %v4634
  %4636 = vmatpush2.msra.mxu0 %v4635
  %4637 = vmatprep.subr.mxu0 0.0
  %v4638 = vand.u32 %v3831, 4294901760
  %v4639 = vsub.f32 %v3831, %v4638
  %4640 = vmatpush2.msra.mxu0 %v4639
  %4641 = vmatprep.subr.mxu0 0.0
  %v4642 = vand.u32 %v3830, 4294901760
  %v4643 = vsub.f32 %v3830, %v4642
  %4644 = vmatpush2.msra.mxu0 %v4643
  %4645 = vmatprep.subr.mxu0 0.0
  %v4646 = vand.u32 %v3829, 4294901760
  %v4647 = vsub.f32 %v3829, %v4646
  %4648 = vmatpush2.msra.mxu0 %v4647
  %4649 = vmatprep.subr.mxu0 0.0
  %v4650 = vand.u32 %v3828, 4294901760
  %v4651 = vsub.f32 %v3828, %v4650
  %4652 = vmatpush2.msra.mxu0 %v4651
  %4653 = vmatprep.subr.mxu0 0.0
  %v4654 = vand.u32 %v3827, 4294901760
  %v4655 = vsub.f32 %v3827, %v4654
  %4656 = vmatpush2.msra.mxu0 %v4655
  %4657 = vmatprep.subr.mxu0 0.0
  %v4658 = vand.u32 %v3826, 4294901760
  %v4659 = vsub.f32 %v3826, %v4658
  %4660 = vmatpush2.msra.mxu0 %v4659
  %4661 = vmatprep.subr.mxu0 0.0
  %v4662 = vand.u32 %v3825, 4294901760
  %v4663 = vsub.f32 %v3825, %v4662
  %4664 = vmatpush2.msra.mxu0 %v4663
  %4665 = vmatprep.subr.mxu0 0.0
  %v4666 = vand.u32 %v3824, 4294901760
  %v4667 = vsub.f32 %v3824, %v4666
  %4668 = vmatpush2.msra.mxu0 %v4667
  %4669 = vmatprep.subr.mxu0 0.0
  %v4670 = vand.u32 %v3823, 4294901760
  %v4671 = vsub.f32 %v3823, %v4670
  %4672 = vmatpush2.msra.mxu0 %v4671
  %v4673 = vand.u32 %v212, 4294901760
  %v4674 = vsub.f32 %v212, %v4673
  %4675 = vmatprep.mubr.f32.mxu0 %v4674
  %v4676 = vand.u32 %v211, 4294901760
  %v4677 = vsub.f32 %v211, %v4676
  %4678 = vmatmul.mubr.f32.gmra.mxu0 %v4677
  %v4679 = vpop.f32.mrf.mxu0
  %v4680 = vadd.f32 %v4437, %v4679
  %v4681 = vpop.f32.mrf.mxu0
  %v4682 = vand.u32 %v216, 4294901760
  %v4683 = vsub.f32 %v216, %v4682
  %4684 = vmatprep.mubr.f32.mxu0 %v4683
  %v4685 = vand.u32 %v215, 4294901760
  %v4686 = vsub.f32 %v215, %v4685
  %4687 = vmatmul.mubr.f32.gmra.mxu0 %v4686
  %v4688 = vpop.f32.mrf.mxu0
  %v4689 = vadd.f32 %v4444, %v4688
  %v4690 = vpop.f32.mrf.mxu0
  %v4691 = vand.u32 %v220, 4294901760
  %v4692 = vsub.f32 %v220, %v4691
  %4693 = vmatprep.mubr.f32.mxu0 %v4692
  %v4694 = vand.u32 %v219, 4294901760
  %v4695 = vsub.f32 %v219, %v4694
  %4696 = vmatmul.mubr.f32.gmra.mxu0 %v4695
  %v4697 = vpop.f32.mrf.mxu0
  %v4698 = vadd.f32 %v4451, %v4697
  %v4699 = vpop.f32.mrf.mxu0
  %v4700 = vand.u32 %v224, 4294901760
  %v4701 = vsub.f32 %v224, %v4700
  %4702 = vmatprep.mubr.f32.mxu0 %v4701
  %v4703 = vand.u32 %v223, 4294901760
  %v4704 = vsub.f32 %v223, %v4703
  %4705 = vmatmul.mubr.f32.gmra.mxu0 %v4704
  %v4706 = vpop.f32.mrf.mxu0
  %v4707 = vadd.f32 %v4458, %v4706
  %v4708 = vpop.f32.mrf.mxu0
  %v4709 = vand.u32 %v228, 4294901760
  %v4710 = vsub.f32 %v228, %v4709
  %4711 = vmatprep.mubr.f32.mxu0 %v4710
  %v4712 = vand.u32 %v227, 4294901760
  %v4713 = vsub.f32 %v227, %v4712
  %4714 = vmatmul.mubr.f32.gmra.mxu0 %v4713
  %v4715 = vpop.f32.mrf.mxu0
  %v4716 = vadd.f32 %v4465, %v4715
  %v4717 = vpop.f32.mrf.mxu0
  %v4718 = vand.u32 %v232, 4294901760
  %v4719 = vsub.f32 %v232, %v4718
  %4720 = vmatprep.mubr.f32.mxu0 %v4719
  %v4721 = vand.u32 %v231, 4294901760
  %v4722 = vsub.f32 %v231, %v4721
  %4723 = vmatmul.mubr.f32.gmra.mxu0 %v4722
  %v4724 = vpop.f32.mrf.mxu0
  %v4725 = vadd.f32 %v4472, %v4724
  %v4726 = vpop.f32.mrf.mxu0
  %v4727 = vand.u32 %v236, 4294901760
  %v4728 = vsub.f32 %v236, %v4727
  %4729 = vmatprep.mubr.f32.mxu0 %v4728
  %v4730 = vand.u32 %v235, 4294901760
  %v4731 = vsub.f32 %v235, %v4730
  %4732 = vmatmul.mubr.f32.gmra.mxu0 %v4731
  %v4733 = vpop.f32.mrf.mxu0
  %v4734 = vadd.f32 %v4479, %v4733
  %v4735 = vpop.f32.mrf.mxu0
  %v4736 = vand.u32 %v240, 4294901760
  %v4737 = vsub.f32 %v240, %v4736
  %4738 = vmatprep.mubr.f32.mxu0 %v4737
  %v4739 = vand.u32 %v239, 4294901760
  %v4740 = vsub.f32 %v239, %v4739
  %4741 = vmatmul.mubr.f32.gmra.mxu0 %v4740
  %v4742 = vpop.f32.mrf.mxu0
  %v4743 = vadd.f32 %v4486, %v4742
  %v4744 = vpop.f32.mrf.mxu0
  %v4745 = vand.u32 %v244, 4294901760
  %v4746 = vsub.f32 %v244, %v4745
  %4747 = vmatprep.mubr.f32.mxu0 %v4746
  %v4748 = vand.u32 %v243, 4294901760
  %v4749 = vsub.f32 %v243, %v4748
  %4750 = vmatmul.mubr.f32.gmra.mxu0 %v4749
  %v4751 = vpop.f32.mrf.mxu0
  %v4752 = vadd.f32 %v4493, %v4751
  %v4753 = vpop.f32.mrf.mxu0
  %v4754 = vand.u32 %v248, 4294901760
  %v4755 = vsub.f32 %v248, %v4754
  %4756 = vmatprep.mubr.f32.mxu0 %v4755
  %v4757 = vand.u32 %v247, 4294901760
  %v4758 = vsub.f32 %v247, %v4757
  %4759 = vmatmul.mubr.f32.gmra.mxu0 %v4758
  %v4760 = vpop.f32.mrf.mxu0
  %v4761 = vadd.f32 %v4500, %v4760
  %v4762 = vpop.f32.mrf.mxu0
  %v4763 = vand.u32 %v252, 4294901760
  %v4764 = vsub.f32 %v252, %v4763
  %4765 = vmatprep.mubr.f32.mxu0 %v4764
  %v4766 = vand.u32 %v251, 4294901760
  %v4767 = vsub.f32 %v251, %v4766
  %4768 = vmatmul.mubr.f32.gmra.mxu0 %v4767
  %v4769 = vpop.f32.mrf.mxu0
  %v4770 = vadd.f32 %v4507, %v4769
  %v4771 = vpop.f32.mrf.mxu0
  %v4772 = vand.u32 %v256, 4294901760
  %v4773 = vsub.f32 %v256, %v4772
  %4774 = vmatprep.mubr.f32.mxu0 %v4773
  %v4775 = vand.u32 %v255, 4294901760
  %v4776 = vsub.f32 %v255, %v4775
  %4777 = vmatmul.mubr.f32.gmra.mxu0 %v4776
  %v4778 = vpop.f32.mrf.mxu0
  %v4779 = vadd.f32 %v4514, %v4778
  %v4780 = vpop.f32.mrf.mxu0
  %v4781 = vand.u32 %v260, 4294901760
  %v4782 = vsub.f32 %v260, %v4781
  %4783 = vmatprep.mubr.f32.mxu0 %v4782
  %v4784 = vand.u32 %v259, 4294901760
  %v4785 = vsub.f32 %v259, %v4784
  %4786 = vmatmul.mubr.f32.gmra.mxu0 %v4785
  %v4787 = vpop.f32.mrf.mxu0
  %v4788 = vadd.f32 %v4521, %v4787
  %v4789 = vpop.f32.mrf.mxu0
  %v4790 = vand.u32 %v264, 4294901760
  %v4791 = vsub.f32 %v264, %v4790
  %4792 = vmatprep.mubr.f32.mxu0 %v4791
  %v4793 = vand.u32 %v263, 4294901760
  %v4794 = vsub.f32 %v263, %v4793
  %4795 = vmatmul.mubr.f32.gmra.mxu0 %v4794
  %v4796 = vpop.f32.mrf.mxu0
  %v4797 = vadd.f32 %v4528, %v4796
  %v4798 = vpop.f32.mrf.mxu0
  %v4799 = vand.u32 %v268, 4294901760
  %v4800 = vsub.f32 %v268, %v4799
  %4801 = vmatprep.mubr.f32.mxu0 %v4800
  %v4802 = vand.u32 %v267, 4294901760
  %v4803 = vsub.f32 %v267, %v4802
  %4804 = vmatmul.mubr.f32.gmra.mxu0 %v4803
  %v4805 = vpop.f32.mrf.mxu0
  %v4806 = vadd.f32 %v4535, %v4805
  %v4807 = vpop.f32.mrf.mxu0
  %v4808 = vand.u32 %v272, 4294901760
  %v4809 = vsub.f32 %v272, %v4808
  %4810 = vmatprep.mubr.f32.mxu0 %v4809
  %v4811 = vand.u32 %v271, 4294901760
  %v4812 = vsub.f32 %v271, %v4811
  %4813 = vmatmul.mubr.f32.gmra.mxu0 %v4812
  %v4814 = vpop.f32.mrf.mxu0
  %v4815 = vadd.f32 %v4542, %v4814
  %v4816 = vpop.f32.mrf.mxu0
  %4817 = vdwg.mxu0
  %4818 = vmatprep.subr.mxu0 0.0
  %v4819 = vand.u32 %v3822, 4294901760
  %4820 = vmatpush1.msra.mxu0 %v4819
  %4821 = vmatprep.subr.mxu0 0.0
  %v4822 = vand.u32 %v3821, 4294901760
  %4823 = vmatpush1.msra.mxu0 %v4822
  %4824 = vmatprep.subr.mxu0 0.0
  %v4825 = vand.u32 %v3820, 4294901760
  %4826 = vmatpush1.msra.mxu0 %v4825
  %4827 = vmatprep.subr.mxu0 0.0
  %v4828 = vand.u32 %v3819, 4294901760
  %4829 = vmatpush1.msra.mxu0 %v4828
  %4830 = vmatprep.subr.mxu0 0.0
  %v4831 = vand.u32 %v3818, 4294901760
  %4832 = vmatpush1.msra.mxu0 %v4831
  %4833 = vmatprep.subr.mxu0 0.0
  %v4834 = vand.u32 %v3817, 4294901760
  %4835 = vmatpush1.msra.mxu0 %v4834
  %4836 = vmatprep.subr.mxu0 0.0
  %v4837 = vand.u32 %v3816, 4294901760
  %4838 = vmatpush1.msra.mxu0 %v4837
  %4839 = vmatprep.subr.mxu0 0.0
  %v4840 = vand.u32 %v3815, 4294901760
  %4841 = vmatpush1.msra.mxu0 %v4840
  %4842 = vmatprep.subr.mxu0 0.0
  %v4843 = vand.u32 %v3814, 4294901760
  %4844 = vmatpush1.msra.mxu0 %v4843
  %4845 = vmatprep.subr.mxu0 0.0
  %v4846 = vand.u32 %v3813, 4294901760
  %4847 = vmatpush1.msra.mxu0 %v4846
  %4848 = vmatprep.subr.mxu0 0.0
  %v4849 = vand.u32 %v3812, 4294901760
  %4850 = vmatpush1.msra.mxu0 %v4849
  %4851 = vmatprep.subr.mxu0 0.0
  %v4852 = vand.u32 %v3811, 4294901760
  %4853 = vmatpush1.msra.mxu0 %v4852
  %4854 = vmatprep.subr.mxu0 0.0
  %v4855 = vand.u32 %v3810, 4294901760
  %4856 = vmatpush1.msra.mxu0 %v4855
  %4857 = vmatprep.subr.mxu0 0.0
  %v4858 = vand.u32 %v3809, 4294901760
  %4859 = vmatpush1.msra.mxu0 %v4858
  %4860 = vmatprep.subr.mxu0 0.0
  %v4861 = vand.u32 %v3808, 4294901760
  %4862 = vmatpush1.msra.mxu0 %v4861
  %4863 = vmatprep.subr.mxu0 0.0
  %v4864 = vand.u32 %v3807, 4294901760
  %4865 = vmatpush1.msra.mxu0 %v4864
  %4866 = vmatprep.subr.mxu0 0.0
  %v4867 = vand.u32 %v3838, 4294901760
  %4868 = vmatpush2.msra.mxu0 %v4867
  %4869 = vmatprep.subr.mxu0 0.0
  %v4870 = vand.u32 %v3837, 4294901760
  %4871 = vmatpush2.msra.mxu0 %v4870
  %4872 = vmatprep.subr.mxu0 0.0
  %v4873 = vand.u32 %v3836, 4294901760
  %4874 = vmatpush2.msra.mxu0 %v4873
  %4875 = vmatprep.subr.mxu0 0.0
  %v4876 = vand.u32 %v3835, 4294901760
  %4877 = vmatpush2.msra.mxu0 %v4876
  %4878 = vmatprep.subr.mxu0 0.0
  %v4879 = vand.u32 %v3834, 4294901760
  %4880 = vmatpush2.msra.mxu0 %v4879
  %4881 = vmatprep.subr.mxu0 0.0
  %v4882 = vand.u32 %v3833, 4294901760
  %4883 = vmatpush2.msra.mxu0 %v4882
  %4884 = vmatprep.subr.mxu0 0.0
  %v4885 = vand.u32 %v3832, 4294901760
  %4886 = vmatpush2.msra.mxu0 %v4885
  %4887 = vmatprep.subr.mxu0 0.0
  %v4888 = vand.u32 %v3831, 4294901760
  %4889 = vmatpush2.msra.mxu0 %v4888
  %4890 = vmatprep.subr.mxu0 0.0
  %v4891 = vand.u32 %v3830, 4294901760
  %4892 = vmatpush2.msra.mxu0 %v4891
  %4893 = vmatprep.subr.mxu0 0.0
  %v4894 = vand.u32 %v3829, 4294901760
  %4895 = vmatpush2.msra.mxu0 %v4894
  %4896 = vmatprep.subr.mxu0 0.0
  %v4897 = vand.u32 %v3828, 4294901760
  %4898 = vmatpush2.msra.mxu0 %v4897
  %4899 = vmatprep.subr.mxu0 0.0
  %v4900 = vand.u32 %v3827, 4294901760
  %4901 = vmatpush2.msra.mxu0 %v4900
  %4902 = vmatprep.subr.mxu0 0.0
  %v4903 = vand.u32 %v3826, 4294901760
  %4904 = vmatpush2.msra.mxu0 %v4903
  %4905 = vmatprep.subr.mxu0 0.0
  %v4906 = vand.u32 %v3825, 4294901760
  %4907 = vmatpush2.msra.mxu0 %v4906
  %4908 = vmatprep.subr.mxu0 0.0
  %v4909 = vand.u32 %v3824, 4294901760
  %4910 = vmatpush2.msra.mxu0 %v4909
  %4911 = vmatprep.subr.mxu0 0.0
  %v4912 = vand.u32 %v3823, 4294901760
  %4913 = vmatpush2.msra.mxu0 %v4912
  %v4914 = vand.u32 %v212, 4294901760
  %v4915 = vsub.f32 %v212, %v4914
  %v4916 = vand.u32 %v4915, 4294901760
  %4917 = vmatprep.mubr.f32.mxu0 %v4916
  %v4918 = vand.u32 %v211, 4294901760
  %v4919 = vsub.f32 %v211, %v4918
  %v4920 = vand.u32 %v4919, 4294901760
  %4921 = vmatmul.mubr.f32.gmra.mxu0 %v4920
  %v4922 = vpop.f32.mrf.mxu0
  %v4923 = vadd.f32 %v4680, %v4922
  %v4924 = vpop.f32.mrf.mxu0
  %v4925 = vand.u32 %v216, 4294901760
  %v4926 = vsub.f32 %v216, %v4925
  %v4927 = vand.u32 %v4926, 4294901760
  %4928 = vmatprep.mubr.f32.mxu0 %v4927
  %v4929 = vand.u32 %v215, 4294901760
  %v4930 = vsub.f32 %v215, %v4929
  %v4931 = vand.u32 %v4930, 4294901760
  %4932 = vmatmul.mubr.f32.gmra.mxu0 %v4931
  %v4933 = vpop.f32.mrf.mxu0
  %v4934 = vadd.f32 %v4689, %v4933
  %v4935 = vpop.f32.mrf.mxu0
  %v4936 = vand.u32 %v220, 4294901760
  %v4937 = vsub.f32 %v220, %v4936
  %v4938 = vand.u32 %v4937, 4294901760
  %4939 = vmatprep.mubr.f32.mxu0 %v4938
  %v4940 = vand.u32 %v219, 4294901760
  %v4941 = vsub.f32 %v219, %v4940
  %v4942 = vand.u32 %v4941, 4294901760
  %4943 = vmatmul.mubr.f32.gmra.mxu0 %v4942
  %v4944 = vpop.f32.mrf.mxu0
  %v4945 = vadd.f32 %v4698, %v4944
  %v4946 = vpop.f32.mrf.mxu0
  %v4947 = vand.u32 %v224, 4294901760
  %v4948 = vsub.f32 %v224, %v4947
  %v4949 = vand.u32 %v4948, 4294901760
  %4950 = vmatprep.mubr.f32.mxu0 %v4949
  %v4951 = vand.u32 %v223, 4294901760
  %v4952 = vsub.f32 %v223, %v4951
  %v4953 = vand.u32 %v4952, 4294901760
  %4954 = vmatmul.mubr.f32.gmra.mxu0 %v4953
  %v4955 = vpop.f32.mrf.mxu0
  %v4956 = vadd.f32 %v4707, %v4955
  %v4957 = vpop.f32.mrf.mxu0
  %v4958 = vand.u32 %v228, 4294901760
  %v4959 = vsub.f32 %v228, %v4958
  %v4960 = vand.u32 %v4959, 4294901760
  %4961 = vmatprep.mubr.f32.mxu0 %v4960
  %v4962 = vand.u32 %v227, 4294901760
  %v4963 = vsub.f32 %v227, %v4962
  %v4964 = vand.u32 %v4963, 4294901760
  %4965 = vmatmul.mubr.f32.gmra.mxu0 %v4964
  %v4966 = vpop.f32.mrf.mxu0
  %v4967 = vadd.f32 %v4716, %v4966
  %v4968 = vpop.f32.mrf.mxu0
  %v4969 = vand.u32 %v232, 4294901760
  %v4970 = vsub.f32 %v232, %v4969
  %v4971 = vand.u32 %v4970, 4294901760
  %4972 = vmatprep.mubr.f32.mxu0 %v4971
  %v4973 = vand.u32 %v231, 4294901760
  %v4974 = vsub.f32 %v231, %v4973
  %v4975 = vand.u32 %v4974, 4294901760
  %4976 = vmatmul.mubr.f32.gmra.mxu0 %v4975
  %v4977 = vpop.f32.mrf.mxu0
  %v4978 = vadd.f32 %v4725, %v4977
  %v4979 = vpop.f32.mrf.mxu0
  %v4980 = vand.u32 %v236, 4294901760
  %v4981 = vsub.f32 %v236, %v4980
  %v4982 = vand.u32 %v4981, 4294901760
  %4983 = vmatprep.mubr.f32.mxu0 %v4982
  %v4984 = vand.u32 %v235, 4294901760
  %v4985 = vsub.f32 %v235, %v4984
  %v4986 = vand.u32 %v4985, 4294901760
  %4987 = vmatmul.mubr.f32.gmra.mxu0 %v4986
  %v4988 = vpop.f32.mrf.mxu0
  %v4989 = vadd.f32 %v4734, %v4988
  %v4990 = vpop.f32.mrf.mxu0
  %v4991 = vand.u32 %v240, 4294901760
  %v4992 = vsub.f32 %v240, %v4991
  %v4993 = vand.u32 %v4992, 4294901760
  %4994 = vmatprep.mubr.f32.mxu0 %v4993
  %v4995 = vand.u32 %v239, 4294901760
  %v4996 = vsub.f32 %v239, %v4995
  %v4997 = vand.u32 %v4996, 4294901760
  %4998 = vmatmul.mubr.f32.gmra.mxu0 %v4997
  %v4999 = vpop.f32.mrf.mxu0
  %v5000 = vadd.f32 %v4743, %v4999
  %v5001 = vpop.f32.mrf.mxu0
  %v5002 = vand.u32 %v244, 4294901760
  %v5003 = vsub.f32 %v244, %v5002
  %v5004 = vand.u32 %v5003, 4294901760
  %5005 = vmatprep.mubr.f32.mxu0 %v5004
  %v5006 = vand.u32 %v243, 4294901760
  %v5007 = vsub.f32 %v243, %v5006
  %v5008 = vand.u32 %v5007, 4294901760
  %5009 = vmatmul.mubr.f32.gmra.mxu0 %v5008
  %v5010 = vpop.f32.mrf.mxu0
  %v5011 = vadd.f32 %v4752, %v5010
  %v5012 = vpop.f32.mrf.mxu0
  %v5013 = vand.u32 %v248, 4294901760
  %v5014 = vsub.f32 %v248, %v5013
  %v5015 = vand.u32 %v5014, 4294901760
  %5016 = vmatprep.mubr.f32.mxu0 %v5015
  %v5017 = vand.u32 %v247, 4294901760
  %v5018 = vsub.f32 %v247, %v5017
  %v5019 = vand.u32 %v5018, 4294901760
  %5020 = vmatmul.mubr.f32.gmra.mxu0 %v5019
  %v5021 = vpop.f32.mrf.mxu0
  %v5022 = vadd.f32 %v4761, %v5021
  %v5023 = vpop.f32.mrf.mxu0
  %v5024 = vand.u32 %v252, 4294901760
  %v5025 = vsub.f32 %v252, %v5024
  %v5026 = vand.u32 %v5025, 4294901760
  %5027 = vmatprep.mubr.f32.mxu0 %v5026
  %v5028 = vand.u32 %v251, 4294901760
  %v5029 = vsub.f32 %v251, %v5028
  %v5030 = vand.u32 %v5029, 4294901760
  %5031 = vmatmul.mubr.f32.gmra.mxu0 %v5030
  %v5032 = vpop.f32.mrf.mxu0
  %v5033 = vadd.f32 %v4770, %v5032
  %v5034 = vpop.f32.mrf.mxu0
  %v5035 = vand.u32 %v256, 4294901760
  %v5036 = vsub.f32 %v256, %v5035
  %v5037 = vand.u32 %v5036, 4294901760
  %5038 = vmatprep.mubr.f32.mxu0 %v5037
  %v5039 = vand.u32 %v255, 4294901760
  %v5040 = vsub.f32 %v255, %v5039
  %v5041 = vand.u32 %v5040, 4294901760
  %5042 = vmatmul.mubr.f32.gmra.mxu0 %v5041
  %v5043 = vpop.f32.mrf.mxu0
  %v5044 = vadd.f32 %v4779, %v5043
  %v5045 = vpop.f32.mrf.mxu0
  %v5046 = vand.u32 %v260, 4294901760
  %v5047 = vsub.f32 %v260, %v5046
  %v5048 = vand.u32 %v5047, 4294901760
  %5049 = vmatprep.mubr.f32.mxu0 %v5048
  %v5050 = vand.u32 %v259, 4294901760
  %v5051 = vsub.f32 %v259, %v5050
  %v5052 = vand.u32 %v5051, 4294901760
  %5053 = vmatmul.mubr.f32.gmra.mxu0 %v5052
  %v5054 = vpop.f32.mrf.mxu0
  %v5055 = vadd.f32 %v4788, %v5054
  %v5056 = vpop.f32.mrf.mxu0
  %v5057 = vand.u32 %v264, 4294901760
  %v5058 = vsub.f32 %v264, %v5057
  %v5059 = vand.u32 %v5058, 4294901760
  %5060 = vmatprep.mubr.f32.mxu0 %v5059
  %v5061 = vand.u32 %v263, 4294901760
  %v5062 = vsub.f32 %v263, %v5061
  %v5063 = vand.u32 %v5062, 4294901760
  %5064 = vmatmul.mubr.f32.gmra.mxu0 %v5063
  %v5065 = vpop.f32.mrf.mxu0
  %v5066 = vadd.f32 %v4797, %v5065
  %v5067 = vpop.f32.mrf.mxu0
  %v5068 = vand.u32 %v268, 4294901760
  %v5069 = vsub.f32 %v268, %v5068
  %v5070 = vand.u32 %v5069, 4294901760
  %5071 = vmatprep.mubr.f32.mxu0 %v5070
  %v5072 = vand.u32 %v267, 4294901760
  %v5073 = vsub.f32 %v267, %v5072
  %v5074 = vand.u32 %v5073, 4294901760
  %5075 = vmatmul.mubr.f32.gmra.mxu0 %v5074
  %v5076 = vpop.f32.mrf.mxu0
  %v5077 = vadd.f32 %v4806, %v5076
  %v5078 = vpop.f32.mrf.mxu0
  %v5079 = vand.u32 %v272, 4294901760
  %v5080 = vsub.f32 %v272, %v5079
  %v5081 = vand.u32 %v5080, 4294901760
  %5082 = vmatprep.mubr.f32.mxu0 %v5081
  %v5083 = vand.u32 %v271, 4294901760
  %v5084 = vsub.f32 %v271, %v5083
  %v5085 = vand.u32 %v5084, 4294901760
  %5086 = vmatmul.mubr.f32.gmra.mxu0 %v5085
  %v5087 = vpop.f32.mrf.mxu0
  %v5088 = vadd.f32 %v4815, %v5087
  %v5089 = vpop.f32.mrf.mxu0
  %5090 = vdwg.mxu0
  %5091 = vmatprep.subr.mxu0 0.0
  %v5092 = vand.u32 %v3822, 4294901760
  %v5093 = vsub.f32 %v3822, %v5092
  %v5094 = vand.u32 %v5093, 4294901760
  %5095 = vmatpush1.msra.mxu0 %v5094
  %5096 = vmatprep.subr.mxu0 0.0
  %v5097 = vand.u32 %v3821, 4294901760
  %v5098 = vsub.f32 %v3821, %v5097
  %v5099 = vand.u32 %v5098, 4294901760
  %5100 = vmatpush1.msra.mxu0 %v5099
  %5101 = vmatprep.subr.mxu0 0.0
  %v5102 = vand.u32 %v3820, 4294901760
  %v5103 = vsub.f32 %v3820, %v5102
  %v5104 = vand.u32 %v5103, 4294901760
  %5105 = vmatpush1.msra.mxu0 %v5104
  %5106 = vmatprep.subr.mxu0 0.0
  %v5107 = vand.u32 %v3819, 4294901760
  %v5108 = vsub.f32 %v3819, %v5107
  %v5109 = vand.u32 %v5108, 4294901760
  %5110 = vmatpush1.msra.mxu0 %v5109
  %5111 = vmatprep.subr.mxu0 0.0
  %v5112 = vand.u32 %v3818, 4294901760
  %v5113 = vsub.f32 %v3818, %v5112
  %v5114 = vand.u32 %v5113, 4294901760
  %5115 = vmatpush1.msra.mxu0 %v5114
  %5116 = vmatprep.subr.mxu0 0.0
  %v5117 = vand.u32 %v3817, 4294901760
  %v5118 = vsub.f32 %v3817, %v5117
  %v5119 = vand.u32 %v5118, 4294901760
  %5120 = vmatpush1.msra.mxu0 %v5119
  %5121 = vmatprep.subr.mxu0 0.0
  %v5122 = vand.u32 %v3816, 4294901760
  %v5123 = vsub.f32 %v3816, %v5122
  %v5124 = vand.u32 %v5123, 4294901760
  %5125 = vmatpush1.msra.mxu0 %v5124
  %5126 = vmatprep.subr.mxu0 0.0
  %v5127 = vand.u32 %v3815, 4294901760
  %v5128 = vsub.f32 %v3815, %v5127
  %v5129 = vand.u32 %v5128, 4294901760
  %5130 = vmatpush1.msra.mxu0 %v5129
  %5131 = vmatprep.subr.mxu0 0.0
  %v5132 = vand.u32 %v3814, 4294901760
  %v5133 = vsub.f32 %v3814, %v5132
  %v5134 = vand.u32 %v5133, 4294901760
  %5135 = vmatpush1.msra.mxu0 %v5134
  %5136 = vmatprep.subr.mxu0 0.0
  %v5137 = vand.u32 %v3813, 4294901760
  %v5138 = vsub.f32 %v3813, %v5137
  %v5139 = vand.u32 %v5138, 4294901760
  %5140 = vmatpush1.msra.mxu0 %v5139
  %5141 = vmatprep.subr.mxu0 0.0
  %v5142 = vand.u32 %v3812, 4294901760
  %v5143 = vsub.f32 %v3812, %v5142
  %v5144 = vand.u32 %v5143, 4294901760
  %5145 = vmatpush1.msra.mxu0 %v5144
  %5146 = vmatprep.subr.mxu0 0.0
  %v5147 = vand.u32 %v3811, 4294901760
  %v5148 = vsub.f32 %v3811, %v5147
  %v5149 = vand.u32 %v5148, 4294901760
  %5150 = vmatpush1.msra.mxu0 %v5149
  %5151 = vmatprep.subr.mxu0 0.0
  %v5152 = vand.u32 %v3810, 4294901760
  %v5153 = vsub.f32 %v3810, %v5152
  %v5154 = vand.u32 %v5153, 4294901760
  %5155 = vmatpush1.msra.mxu0 %v5154
  %5156 = vmatprep.subr.mxu0 0.0
  %v5157 = vand.u32 %v3809, 4294901760
  %v5158 = vsub.f32 %v3809, %v5157
  %v5159 = vand.u32 %v5158, 4294901760
  %5160 = vmatpush1.msra.mxu0 %v5159
  %5161 = vmatprep.subr.mxu0 0.0
  %v5162 = vand.u32 %v3808, 4294901760
  %v5163 = vsub.f32 %v3808, %v5162
  %v5164 = vand.u32 %v5163, 4294901760
  %5165 = vmatpush1.msra.mxu0 %v5164
  %5166 = vmatprep.subr.mxu0 0.0
  %v5167 = vand.u32 %v3807, 4294901760
  %v5168 = vsub.f32 %v3807, %v5167
  %v5169 = vand.u32 %v5168, 4294901760
  %5170 = vmatpush1.msra.mxu0 %v5169
  %5171 = vmatprep.subr.mxu0 0.0
  %v5172 = vand.u32 %v3838, 4294901760
  %v5173 = vsub.f32 %v3838, %v5172
  %v5174 = vand.u32 %v5173, 4294901760
  %5175 = vmatpush2.msra.mxu0 %v5174
  %5176 = vmatprep.subr.mxu0 0.0
  %v5177 = vand.u32 %v3837, 4294901760
  %v5178 = vsub.f32 %v3837, %v5177
  %v5179 = vand.u32 %v5178, 4294901760
  %5180 = vmatpush2.msra.mxu0 %v5179
  %5181 = vmatprep.subr.mxu0 0.0
  %v5182 = vand.u32 %v3836, 4294901760
  %v5183 = vsub.f32 %v3836, %v5182
  %v5184 = vand.u32 %v5183, 4294901760
  %5185 = vmatpush2.msra.mxu0 %v5184
  %5186 = vmatprep.subr.mxu0 0.0
  %v5187 = vand.u32 %v3835, 4294901760
  %v5188 = vsub.f32 %v3835, %v5187
  %v5189 = vand.u32 %v5188, 4294901760
  %5190 = vmatpush2.msra.mxu0 %v5189
  %5191 = vmatprep.subr.mxu0 0.0
  %v5192 = vand.u32 %v3834, 4294901760
  %v5193 = vsub.f32 %v3834, %v5192
  %v5194 = vand.u32 %v5193, 4294901760
  %5195 = vmatpush2.msra.mxu0 %v5194
  %5196 = vmatprep.subr.mxu0 0.0
  %v5197 = vand.u32 %v3833, 4294901760
  %v5198 = vsub.f32 %v3833, %v5197
  %v5199 = vand.u32 %v5198, 4294901760
  %5200 = vmatpush2.msra.mxu0 %v5199
  %5201 = vmatprep.subr.mxu0 0.0
  %v5202 = vand.u32 %v3832, 4294901760
  %v5203 = vsub.f32 %v3832, %v5202
  %v5204 = vand.u32 %v5203, 4294901760
  %5205 = vmatpush2.msra.mxu0 %v5204
  %5206 = vmatprep.subr.mxu0 0.0
  %v5207 = vand.u32 %v3831, 4294901760
  %v5208 = vsub.f32 %v3831, %v5207
  %v5209 = vand.u32 %v5208, 4294901760
  %5210 = vmatpush2.msra.mxu0 %v5209
  %5211 = vmatprep.subr.mxu0 0.0
  %v5212 = vand.u32 %v3830, 4294901760
  %v5213 = vsub.f32 %v3830, %v5212
  %v5214 = vand.u32 %v5213, 4294901760
  %5215 = vmatpush2.msra.mxu0 %v5214
  %5216 = vmatprep.subr.mxu0 0.0
  %v5217 = vand.u32 %v3829, 4294901760
  %v5218 = vsub.f32 %v3829, %v5217
  %v5219 = vand.u32 %v5218, 4294901760
  %5220 = vmatpush2.msra.mxu0 %v5219
  %5221 = vmatprep.subr.mxu0 0.0
  %v5222 = vand.u32 %v3828, 4294901760
  %v5223 = vsub.f32 %v3828, %v5222
  %v5224 = vand.u32 %v5223, 4294901760
  %5225 = vmatpush2.msra.mxu0 %v5224
  %5226 = vmatprep.subr.mxu0 0.0
  %v5227 = vand.u32 %v3827, 4294901760
  %v5228 = vsub.f32 %v3827, %v5227
  %v5229 = vand.u32 %v5228, 4294901760
  %5230 = vmatpush2.msra.mxu0 %v5229
  %5231 = vmatprep.subr.mxu0 0.0
  %v5232 = vand.u32 %v3826, 4294901760
  %v5233 = vsub.f32 %v3826, %v5232
  %v5234 = vand.u32 %v5233, 4294901760
  %5235 = vmatpush2.msra.mxu0 %v5234
  %5236 = vmatprep.subr.mxu0 0.0
  %v5237 = vand.u32 %v3825, 4294901760
  %v5238 = vsub.f32 %v3825, %v5237
  %v5239 = vand.u32 %v5238, 4294901760
  %5240 = vmatpush2.msra.mxu0 %v5239
  %5241 = vmatprep.subr.mxu0 0.0
  %v5242 = vand.u32 %v3824, 4294901760
  %v5243 = vsub.f32 %v3824, %v5242
  %v5244 = vand.u32 %v5243, 4294901760
  %5245 = vmatpush2.msra.mxu0 %v5244
  %5246 = vmatprep.subr.mxu0 0.0
  %v5247 = vand.u32 %v3823, 4294901760
  %v5248 = vsub.f32 %v3823, %v5247
  %v5249 = vand.u32 %v5248, 4294901760
  %5250 = vmatpush2.msra.mxu0 %v5249
  %v5251 = vand.u32 %v212, 4294901760
  %5252 = vmatprep.mubr.f32.mxu0 %v5251
  %v5253 = vand.u32 %v211, 4294901760
  %5254 = vmatmul.mubr.f32.gmra.mxu0 %v5253
  %v5255 = vpop.f32.mrf.mxu0
  %v5256 = vadd.f32 %v4923, %v5255
  %v5257 = vpop.f32.mrf.mxu0
  %v5258 = vand.u32 %v216, 4294901760
  %5259 = vmatprep.mubr.f32.mxu0 %v5258
  %v5260 = vand.u32 %v215, 4294901760
  %5261 = vmatmul.mubr.f32.gmra.mxu0 %v5260
  %v5262 = vpop.f32.mrf.mxu0
  %v5263 = vadd.f32 %v4934, %v5262
  %v5264 = vpop.f32.mrf.mxu0
  %v5265 = vand.u32 %v220, 4294901760
  %5266 = vmatprep.mubr.f32.mxu0 %v5265
  %v5267 = vand.u32 %v219, 4294901760
  %5268 = vmatmul.mubr.f32.gmra.mxu0 %v5267
  %v5269 = vpop.f32.mrf.mxu0
  %v5270 = vadd.f32 %v4945, %v5269
  %v5271 = vpop.f32.mrf.mxu0
  %v5272 = vand.u32 %v224, 4294901760
  %5273 = vmatprep.mubr.f32.mxu0 %v5272
  %v5274 = vand.u32 %v223, 4294901760
  %5275 = vmatmul.mubr.f32.gmra.mxu0 %v5274
  %v5276 = vpop.f32.mrf.mxu0
  %v5277 = vadd.f32 %v4956, %v5276
  %v5278 = vpop.f32.mrf.mxu0
  %v5279 = vand.u32 %v228, 4294901760
  %5280 = vmatprep.mubr.f32.mxu0 %v5279
  %v5281 = vand.u32 %v227, 4294901760
  %5282 = vmatmul.mubr.f32.gmra.mxu0 %v5281
  %v5283 = vpop.f32.mrf.mxu0
  %v5284 = vadd.f32 %v4967, %v5283
  %v5285 = vpop.f32.mrf.mxu0
  %v5286 = vand.u32 %v232, 4294901760
  %5287 = vmatprep.mubr.f32.mxu0 %v5286
  %v5288 = vand.u32 %v231, 4294901760
  %5289 = vmatmul.mubr.f32.gmra.mxu0 %v5288
  %v5290 = vpop.f32.mrf.mxu0
  %v5291 = vadd.f32 %v4978, %v5290
  %v5292 = vpop.f32.mrf.mxu0
  %v5293 = vand.u32 %v236, 4294901760
  %5294 = vmatprep.mubr.f32.mxu0 %v5293
  %v5295 = vand.u32 %v235, 4294901760
  %5296 = vmatmul.mubr.f32.gmra.mxu0 %v5295
  %v5297 = vpop.f32.mrf.mxu0
  %v5298 = vadd.f32 %v4989, %v5297
  %v5299 = vpop.f32.mrf.mxu0
  %v5300 = vand.u32 %v240, 4294901760
  %5301 = vmatprep.mubr.f32.mxu0 %v5300
  %v5302 = vand.u32 %v239, 4294901760
  %5303 = vmatmul.mubr.f32.gmra.mxu0 %v5302
  %v5304 = vpop.f32.mrf.mxu0
  %v5305 = vadd.f32 %v5000, %v5304
  %v5306 = vpop.f32.mrf.mxu0
  %v5307 = vand.u32 %v244, 4294901760
  %5308 = vmatprep.mubr.f32.mxu0 %v5307
  %v5309 = vand.u32 %v243, 4294901760
  %5310 = vmatmul.mubr.f32.gmra.mxu0 %v5309
  %v5311 = vpop.f32.mrf.mxu0
  %v5312 = vadd.f32 %v5011, %v5311
  %v5313 = vpop.f32.mrf.mxu0
  %v5314 = vand.u32 %v248, 4294901760
  %5315 = vmatprep.mubr.f32.mxu0 %v5314
  %v5316 = vand.u32 %v247, 4294901760
  %5317 = vmatmul.mubr.f32.gmra.mxu0 %v5316
  %v5318 = vpop.f32.mrf.mxu0
  %v5319 = vadd.f32 %v5022, %v5318
  %v5320 = vpop.f32.mrf.mxu0
  %v5321 = vand.u32 %v252, 4294901760
  %5322 = vmatprep.mubr.f32.mxu0 %v5321
  %v5323 = vand.u32 %v251, 4294901760
  %5324 = vmatmul.mubr.f32.gmra.mxu0 %v5323
  %v5325 = vpop.f32.mrf.mxu0
  %v5326 = vadd.f32 %v5033, %v5325
  %v5327 = vpop.f32.mrf.mxu0
  %v5328 = vand.u32 %v256, 4294901760
  %5329 = vmatprep.mubr.f32.mxu0 %v5328
  %v5330 = vand.u32 %v255, 4294901760
  %5331 = vmatmul.mubr.f32.gmra.mxu0 %v5330
  %v5332 = vpop.f32.mrf.mxu0
  %v5333 = vadd.f32 %v5044, %v5332
  %v5334 = vpop.f32.mrf.mxu0
  %v5335 = vand.u32 %v260, 4294901760
  %5336 = vmatprep.mubr.f32.mxu0 %v5335
  %v5337 = vand.u32 %v259, 4294901760
  %5338 = vmatmul.mubr.f32.gmra.mxu0 %v5337
  %v5339 = vpop.f32.mrf.mxu0
  %v5340 = vadd.f32 %v5055, %v5339
  %v5341 = vpop.f32.mrf.mxu0
  %v5342 = vand.u32 %v264, 4294901760
  %5343 = vmatprep.mubr.f32.mxu0 %v5342
  %v5344 = vand.u32 %v263, 4294901760
  %5345 = vmatmul.mubr.f32.gmra.mxu0 %v5344
  %v5346 = vpop.f32.mrf.mxu0
  %v5347 = vadd.f32 %v5066, %v5346
  %v5348 = vpop.f32.mrf.mxu0
  %v5349 = vand.u32 %v268, 4294901760
  %5350 = vmatprep.mubr.f32.mxu0 %v5349
  %v5351 = vand.u32 %v267, 4294901760
  %5352 = vmatmul.mubr.f32.gmra.mxu0 %v5351
  %v5353 = vpop.f32.mrf.mxu0
  %v5354 = vadd.f32 %v5077, %v5353
  %v5355 = vpop.f32.mrf.mxu0
  %v5356 = vand.u32 %v272, 4294901760
  %5357 = vmatprep.mubr.f32.mxu0 %v5356
  %v5358 = vand.u32 %v271, 4294901760
  %5359 = vmatmul.mubr.f32.gmra.mxu0 %v5358
  %v5360 = vpop.f32.mrf.mxu0
  %v5361 = vadd.f32 %v5088, %v5360
  %v5362 = vpop.f32.mrf.mxu0
  %5363 = vdwg.mxu0
  %5364 = vmatprep.subr.mxu0 0.0
  %v5365 = vand.u32 %v3822, 4294901760
  %5366 = vmatpush1.msra.mxu0 %v5365
  %5367 = vmatprep.subr.mxu0 0.0
  %v5368 = vand.u32 %v3821, 4294901760
  %5369 = vmatpush1.msra.mxu0 %v5368
  %5370 = vmatprep.subr.mxu0 0.0
  %v5371 = vand.u32 %v3820, 4294901760
  %5372 = vmatpush1.msra.mxu0 %v5371
  %5373 = vmatprep.subr.mxu0 0.0
  %v5374 = vand.u32 %v3819, 4294901760
  %5375 = vmatpush1.msra.mxu0 %v5374
  %5376 = vmatprep.subr.mxu0 0.0
  %v5377 = vand.u32 %v3818, 4294901760
  %5378 = vmatpush1.msra.mxu0 %v5377
  %5379 = vmatprep.subr.mxu0 0.0
  %v5380 = vand.u32 %v3817, 4294901760
  %5381 = vmatpush1.msra.mxu0 %v5380
  %5382 = vmatprep.subr.mxu0 0.0
  %v5383 = vand.u32 %v3816, 4294901760
  %5384 = vmatpush1.msra.mxu0 %v5383
  %5385 = vmatprep.subr.mxu0 0.0
  %v5386 = vand.u32 %v3815, 4294901760
  %5387 = vmatpush1.msra.mxu0 %v5386
  %5388 = vmatprep.subr.mxu0 0.0
  %v5389 = vand.u32 %v3814, 4294901760
  %5390 = vmatpush1.msra.mxu0 %v5389
  %5391 = vmatprep.subr.mxu0 0.0
  %v5392 = vand.u32 %v3813, 4294901760
  %5393 = vmatpush1.msra.mxu0 %v5392
  %5394 = vmatprep.subr.mxu0 0.0
  %v5395 = vand.u32 %v3812, 4294901760
  %5396 = vmatpush1.msra.mxu0 %v5395
  %5397 = vmatprep.subr.mxu0 0.0
  %v5398 = vand.u32 %v3811, 4294901760
  %5399 = vmatpush1.msra.mxu0 %v5398
  %5400 = vmatprep.subr.mxu0 0.0
  %v5401 = vand.u32 %v3810, 4294901760
  %5402 = vmatpush1.msra.mxu0 %v5401
  %5403 = vmatprep.subr.mxu0 0.0
  %v5404 = vand.u32 %v3809, 4294901760
  %5405 = vmatpush1.msra.mxu0 %v5404
  %5406 = vmatprep.subr.mxu0 0.0
  %v5407 = vand.u32 %v3808, 4294901760
  %5408 = vmatpush1.msra.mxu0 %v5407
  %5409 = vmatprep.subr.mxu0 0.0
  %v5410 = vand.u32 %v3807, 4294901760
  %5411 = vmatpush1.msra.mxu0 %v5410
  %5412 = vmatprep.subr.mxu0 0.0
  %v5413 = vand.u32 %v3838, 4294901760
  %5414 = vmatpush2.msra.mxu0 %v5413
  %5415 = vmatprep.subr.mxu0 0.0
  %v5416 = vand.u32 %v3837, 4294901760
  %5417 = vmatpush2.msra.mxu0 %v5416
  %5418 = vmatprep.subr.mxu0 0.0
  %v5419 = vand.u32 %v3836, 4294901760
  %5420 = vmatpush2.msra.mxu0 %v5419
  %5421 = vmatprep.subr.mxu0 0.0
  %v5422 = vand.u32 %v3835, 4294901760
  %5423 = vmatpush2.msra.mxu0 %v5422
  %5424 = vmatprep.subr.mxu0 0.0
  %v5425 = vand.u32 %v3834, 4294901760
  %5426 = vmatpush2.msra.mxu0 %v5425
  %5427 = vmatprep.subr.mxu0 0.0
  %v5428 = vand.u32 %v3833, 4294901760
  %5429 = vmatpush2.msra.mxu0 %v5428
  %5430 = vmatprep.subr.mxu0 0.0
  %v5431 = vand.u32 %v3832, 4294901760
  %5432 = vmatpush2.msra.mxu0 %v5431
  %5433 = vmatprep.subr.mxu0 0.0
  %v5434 = vand.u32 %v3831, 4294901760
  %5435 = vmatpush2.msra.mxu0 %v5434
  %5436 = vmatprep.subr.mxu0 0.0
  %v5437 = vand.u32 %v3830, 4294901760
  %5438 = vmatpush2.msra.mxu0 %v5437
  %5439 = vmatprep.subr.mxu0 0.0
  %v5440 = vand.u32 %v3829, 4294901760
  %5441 = vmatpush2.msra.mxu0 %v5440
  %5442 = vmatprep.subr.mxu0 0.0
  %v5443 = vand.u32 %v3828, 4294901760
  %5444 = vmatpush2.msra.mxu0 %v5443
  %5445 = vmatprep.subr.mxu0 0.0
  %v5446 = vand.u32 %v3827, 4294901760
  %5447 = vmatpush2.msra.mxu0 %v5446
  %5448 = vmatprep.subr.mxu0 0.0
  %v5449 = vand.u32 %v3826, 4294901760
  %5450 = vmatpush2.msra.mxu0 %v5449
  %5451 = vmatprep.subr.mxu0 0.0
  %v5452 = vand.u32 %v3825, 4294901760
  %5453 = vmatpush2.msra.mxu0 %v5452
  %5454 = vmatprep.subr.mxu0 0.0
  %v5455 = vand.u32 %v3824, 4294901760
  %5456 = vmatpush2.msra.mxu0 %v5455
  %5457 = vmatprep.subr.mxu0 0.0
  %v5458 = vand.u32 %v3823, 4294901760
  %5459 = vmatpush2.msra.mxu0 %v5458
  %v5460 = vand.u32 %v212, 4294901760
  %5461 = vmatprep.mubr.f32.mxu0 %v5460
  %v5462 = vand.u32 %v211, 4294901760
  %5463 = vmatmul.mubr.f32.gmra.mxu0 %v5462
  %v5464 = vpop.f32.mrf.mxu0
  %v5465 = vadd.f32 %v5256, %v5464
  %v5466 = vpop.f32.mrf.mxu0
  %v5467 = vand.u32 %v216, 4294901760
  %5468 = vmatprep.mubr.f32.mxu0 %v5467
  %v5469 = vand.u32 %v215, 4294901760
  %5470 = vmatmul.mubr.f32.gmra.mxu0 %v5469
  %v5471 = vpop.f32.mrf.mxu0
  %v5472 = vadd.f32 %v5263, %v5471
  %v5473 = vpop.f32.mrf.mxu0
  %v5474 = vand.u32 %v220, 4294901760
  %5475 = vmatprep.mubr.f32.mxu0 %v5474
  %v5476 = vand.u32 %v219, 4294901760
  %5477 = vmatmul.mubr.f32.gmra.mxu0 %v5476
  %v5478 = vpop.f32.mrf.mxu0
  %v5479 = vadd.f32 %v5270, %v5478
  %v5480 = vpop.f32.mrf.mxu0
  %v5481 = vand.u32 %v224, 4294901760
  %5482 = vmatprep.mubr.f32.mxu0 %v5481
  %v5483 = vand.u32 %v223, 4294901760
  %5484 = vmatmul.mubr.f32.gmra.mxu0 %v5483
  %v5485 = vpop.f32.mrf.mxu0
  %v5486 = vadd.f32 %v5277, %v5485
  %v5487 = vpop.f32.mrf.mxu0
  %v5488 = vand.u32 %v228, 4294901760
  %5489 = vmatprep.mubr.f32.mxu0 %v5488
  %v5490 = vand.u32 %v227, 4294901760
  %5491 = vmatmul.mubr.f32.gmra.mxu0 %v5490
  %v5492 = vpop.f32.mrf.mxu0
  %v5493 = vadd.f32 %v5284, %v5492
  %v5494 = vpop.f32.mrf.mxu0
  %v5495 = vand.u32 %v232, 4294901760
  %5496 = vmatprep.mubr.f32.mxu0 %v5495
  %v5497 = vand.u32 %v231, 4294901760
  %5498 = vmatmul.mubr.f32.gmra.mxu0 %v5497
  %v5499 = vpop.f32.mrf.mxu0
  %v5500 = vadd.f32 %v5291, %v5499
  %v5501 = vpop.f32.mrf.mxu0
  %v5502 = vand.u32 %v236, 4294901760
  %5503 = vmatprep.mubr.f32.mxu0 %v5502
  %v5504 = vand.u32 %v235, 4294901760
  %5505 = vmatmul.mubr.f32.gmra.mxu0 %v5504
  %v5506 = vpop.f32.mrf.mxu0
  %v5507 = vadd.f32 %v5298, %v5506
  %v5508 = vpop.f32.mrf.mxu0
  %v5509 = vand.u32 %v240, 4294901760
  %5510 = vmatprep.mubr.f32.mxu0 %v5509
  %v5511 = vand.u32 %v239, 4294901760
  %5512 = vmatmul.mubr.f32.gmra.mxu0 %v5511
  %v5513 = vpop.f32.mrf.mxu0
  %v5514 = vadd.f32 %v5305, %v5513
  %v5515 = vpop.f32.mrf.mxu0
  %v5516 = vand.u32 %v244, 4294901760
  %5517 = vmatprep.mubr.f32.mxu0 %v5516
  %v5518 = vand.u32 %v243, 4294901760
  %5519 = vmatmul.mubr.f32.gmra.mxu0 %v5518
  %v5520 = vpop.f32.mrf.mxu0
  %v5521 = vadd.f32 %v5312, %v5520
  %v5522 = vpop.f32.mrf.mxu0
  %v5523 = vand.u32 %v248, 4294901760
  %5524 = vmatprep.mubr.f32.mxu0 %v5523
  %v5525 = vand.u32 %v247, 4294901760
  %5526 = vmatmul.mubr.f32.gmra.mxu0 %v5525
  %v5527 = vpop.f32.mrf.mxu0
  %v5528 = vadd.f32 %v5319, %v5527
  %v5529 = vpop.f32.mrf.mxu0
  %v5530 = vand.u32 %v252, 4294901760
  %5531 = vmatprep.mubr.f32.mxu0 %v5530
  %v5532 = vand.u32 %v251, 4294901760
  %5533 = vmatmul.mubr.f32.gmra.mxu0 %v5532
  %v5534 = vpop.f32.mrf.mxu0
  %v5535 = vadd.f32 %v5326, %v5534
  %v5536 = vpop.f32.mrf.mxu0
  %v5537 = vand.u32 %v256, 4294901760
  %5538 = vmatprep.mubr.f32.mxu0 %v5537
  %v5539 = vand.u32 %v255, 4294901760
  %5540 = vmatmul.mubr.f32.gmra.mxu0 %v5539
  %v5541 = vpop.f32.mrf.mxu0
  %v5542 = vadd.f32 %v5333, %v5541
  %v5543 = vpop.f32.mrf.mxu0
  %v5544 = vand.u32 %v260, 4294901760
  %5545 = vmatprep.mubr.f32.mxu0 %v5544
  %v5546 = vand.u32 %v259, 4294901760
  %5547 = vmatmul.mubr.f32.gmra.mxu0 %v5546
  %v5548 = vpop.f32.mrf.mxu0
  %v5549 = vadd.f32 %v5340, %v5548
  %v5550 = vpop.f32.mrf.mxu0
  %v5551 = vand.u32 %v264, 4294901760
  %5552 = vmatprep.mubr.f32.mxu0 %v5551
  %v5553 = vand.u32 %v263, 4294901760
  %5554 = vmatmul.mubr.f32.gmra.mxu0 %v5553
  %v5555 = vpop.f32.mrf.mxu0
  %v5556 = vadd.f32 %v5347, %v5555
  %v5557 = vpop.f32.mrf.mxu0
  %v5558 = vand.u32 %v268, 4294901760
  %5559 = vmatprep.mubr.f32.mxu0 %v5558
  %v5560 = vand.u32 %v267, 4294901760
  %5561 = vmatmul.mubr.f32.gmra.mxu0 %v5560
  %v5562 = vpop.f32.mrf.mxu0
  %v5563 = vadd.f32 %v5354, %v5562
  %v5564 = vpop.f32.mrf.mxu0
  %v5565 = vand.u32 %v272, 4294901760
  %5566 = vmatprep.mubr.f32.mxu0 %v5565
  %v5567 = vand.u32 %v271, 4294901760
  %5568 = vmatmul.mubr.f32.gmra.mxu0 %v5567
  %v5569 = vpop.f32.mrf.mxu0
  %v5570 = vadd.f32 %v5361, %v5569
  %v5571 = vpop.f32.mrf.mxu0
  %5572 = vdwg.mxu0
  %5573 = vmatprep.subr.mxu0 0.0
  %v5574 = vand.u32 %v3854, 4294901760
  %5575 = vmatpush1.msra.mxu0 %v5574
  %5576 = vmatprep.subr.mxu0 0.0
  %v5577 = vand.u32 %v3853, 4294901760
  %5578 = vmatpush1.msra.mxu0 %v5577
  %5579 = vmatprep.subr.mxu0 0.0
  %v5580 = vand.u32 %v3852, 4294901760
  %5581 = vmatpush1.msra.mxu0 %v5580
  %5582 = vmatprep.subr.mxu0 0.0
  %v5583 = vand.u32 %v3851, 4294901760
  %5584 = vmatpush1.msra.mxu0 %v5583
  %5585 = vmatprep.subr.mxu0 0.0
  %v5586 = vand.u32 %v3850, 4294901760
  %5587 = vmatpush1.msra.mxu0 %v5586
  %5588 = vmatprep.subr.mxu0 0.0
  %v5589 = vand.u32 %v3849, 4294901760
  %5590 = vmatpush1.msra.mxu0 %v5589
  %5591 = vmatprep.subr.mxu0 0.0
  %v5592 = vand.u32 %v3848, 4294901760
  %5593 = vmatpush1.msra.mxu0 %v5592
  %5594 = vmatprep.subr.mxu0 0.0
  %v5595 = vand.u32 %v3847, 4294901760
  %5596 = vmatpush1.msra.mxu0 %v5595
  %5597 = vmatprep.subr.mxu0 0.0
  %v5598 = vand.u32 %v3846, 4294901760
  %5599 = vmatpush1.msra.mxu0 %v5598
  %5600 = vmatprep.subr.mxu0 0.0
  %v5601 = vand.u32 %v3845, 4294901760
  %5602 = vmatpush1.msra.mxu0 %v5601
  %5603 = vmatprep.subr.mxu0 0.0
  %v5604 = vand.u32 %v3844, 4294901760
  %5605 = vmatpush1.msra.mxu0 %v5604
  %5606 = vmatprep.subr.mxu0 0.0
  %v5607 = vand.u32 %v3843, 4294901760
  %5608 = vmatpush1.msra.mxu0 %v5607
  %5609 = vmatprep.subr.mxu0 0.0
  %v5610 = vand.u32 %v3842, 4294901760
  %5611 = vmatpush1.msra.mxu0 %v5610
  %5612 = vmatprep.subr.mxu0 0.0
  %v5613 = vand.u32 %v3841, 4294901760
  %5614 = vmatpush1.msra.mxu0 %v5613
  %5615 = vmatprep.subr.mxu0 0.0
  %v5616 = vand.u32 %v3840, 4294901760
  %5617 = vmatpush1.msra.mxu0 %v5616
  %5618 = vmatprep.subr.mxu0 0.0
  %v5619 = vand.u32 %v3839, 4294901760
  %5620 = vmatpush1.msra.mxu0 %v5619
  %5621 = vmatprep.subr.mxu0 0.0
  %v5622 = vand.u32 %v3870, 4294901760
  %5623 = vmatpush2.msra.mxu0 %v5622
  %5624 = vmatprep.subr.mxu0 0.0
  %v5625 = vand.u32 %v3869, 4294901760
  %5626 = vmatpush2.msra.mxu0 %v5625
  %5627 = vmatprep.subr.mxu0 0.0
  %v5628 = vand.u32 %v3868, 4294901760
  %5629 = vmatpush2.msra.mxu0 %v5628
  %5630 = vmatprep.subr.mxu0 0.0
  %v5631 = vand.u32 %v3867, 4294901760
  %5632 = vmatpush2.msra.mxu0 %v5631
  %5633 = vmatprep.subr.mxu0 0.0
  %v5634 = vand.u32 %v3866, 4294901760
  %5635 = vmatpush2.msra.mxu0 %v5634
  %5636 = vmatprep.subr.mxu0 0.0
  %v5637 = vand.u32 %v3865, 4294901760
  %5638 = vmatpush2.msra.mxu0 %v5637
  %5639 = vmatprep.subr.mxu0 0.0
  %v5640 = vand.u32 %v3864, 4294901760
  %5641 = vmatpush2.msra.mxu0 %v5640
  %5642 = vmatprep.subr.mxu0 0.0
  %v5643 = vand.u32 %v3863, 4294901760
  %5644 = vmatpush2.msra.mxu0 %v5643
  %5645 = vmatprep.subr.mxu0 0.0
  %v5646 = vand.u32 %v3862, 4294901760
  %5647 = vmatpush2.msra.mxu0 %v5646
  %5648 = vmatprep.subr.mxu0 0.0
  %v5649 = vand.u32 %v3861, 4294901760
  %5650 = vmatpush2.msra.mxu0 %v5649
  %5651 = vmatprep.subr.mxu0 0.0
  %v5652 = vand.u32 %v3860, 4294901760
  %5653 = vmatpush2.msra.mxu0 %v5652
  %5654 = vmatprep.subr.mxu0 0.0
  %v5655 = vand.u32 %v3859, 4294901760
  %5656 = vmatpush2.msra.mxu0 %v5655
  %5657 = vmatprep.subr.mxu0 0.0
  %v5658 = vand.u32 %v3858, 4294901760
  %5659 = vmatpush2.msra.mxu0 %v5658
  %5660 = vmatprep.subr.mxu0 0.0
  %v5661 = vand.u32 %v3857, 4294901760
  %5662 = vmatpush2.msra.mxu0 %v5661
  %5663 = vmatprep.subr.mxu0 0.0
  %v5664 = vand.u32 %v3856, 4294901760
  %5665 = vmatpush2.msra.mxu0 %v5664
  %5666 = vmatprep.subr.mxu0 0.0
  %v5667 = vand.u32 %v3855, 4294901760
  %5668 = vmatpush2.msra.mxu0 %v5667
  %v5669 = vand.u32 %v214, 4294901760
  %v5670 = vsub.f32 %v214, %v5669
  %v5671 = vand.u32 %v5670, 4294901760
  %v5672 = vsub.f32 %v5670, %v5671
  %v5673 = vand.u32 %v5672, 4294901760
  %5674 = vmatprep.mubr.f32.mxu0 %v5673
  %v5675 = vand.u32 %v213, 4294901760
  %v5676 = vsub.f32 %v213, %v5675
  %v5677 = vand.u32 %v5676, 4294901760
  %v5678 = vsub.f32 %v5676, %v5677
  %v5679 = vand.u32 %v5678, 4294901760
  %5680 = vmatmul.mubr.f32.gmra.mxu0 %v5679
  %v5681 = vpop.f32.mrf.mxu0
  %v5682 = vadd.f32 %v5465, %v5681
  %v5683 = vpop.f32.mrf.mxu0
  %v5684 = vand.u32 %v218, 4294901760
  %v5685 = vsub.f32 %v218, %v5684
  %v5686 = vand.u32 %v5685, 4294901760
  %v5687 = vsub.f32 %v5685, %v5686
  %v5688 = vand.u32 %v5687, 4294901760
  %5689 = vmatprep.mubr.f32.mxu0 %v5688
  %v5690 = vand.u32 %v217, 4294901760
  %v5691 = vsub.f32 %v217, %v5690
  %v5692 = vand.u32 %v5691, 4294901760
  %v5693 = vsub.f32 %v5691, %v5692
  %v5694 = vand.u32 %v5693, 4294901760
  %5695 = vmatmul.mubr.f32.gmra.mxu0 %v5694
  %v5696 = vpop.f32.mrf.mxu0
  %v5697 = vadd.f32 %v5472, %v5696
  %v5698 = vpop.f32.mrf.mxu0
  %v5699 = vand.u32 %v222, 4294901760
  %v5700 = vsub.f32 %v222, %v5699
  %v5701 = vand.u32 %v5700, 4294901760
  %v5702 = vsub.f32 %v5700, %v5701
  %v5703 = vand.u32 %v5702, 4294901760
  %5704 = vmatprep.mubr.f32.mxu0 %v5703
  %v5705 = vand.u32 %v221, 4294901760
  %v5706 = vsub.f32 %v221, %v5705
  %v5707 = vand.u32 %v5706, 4294901760
  %v5708 = vsub.f32 %v5706, %v5707
  %v5709 = vand.u32 %v5708, 4294901760
  %5710 = vmatmul.mubr.f32.gmra.mxu0 %v5709
  %v5711 = vpop.f32.mrf.mxu0
  %v5712 = vadd.f32 %v5479, %v5711
  %v5713 = vpop.f32.mrf.mxu0
  %v5714 = vand.u32 %v226, 4294901760
  %v5715 = vsub.f32 %v226, %v5714
  %v5716 = vand.u32 %v5715, 4294901760
  %v5717 = vsub.f32 %v5715, %v5716
  %v5718 = vand.u32 %v5717, 4294901760
  %5719 = vmatprep.mubr.f32.mxu0 %v5718
  %v5720 = vand.u32 %v225, 4294901760
  %v5721 = vsub.f32 %v225, %v5720
  %v5722 = vand.u32 %v5721, 4294901760
  %v5723 = vsub.f32 %v5721, %v5722
  %v5724 = vand.u32 %v5723, 4294901760
  %5725 = vmatmul.mubr.f32.gmra.mxu0 %v5724
  %v5726 = vpop.f32.mrf.mxu0
  %v5727 = vadd.f32 %v5486, %v5726
  %v5728 = vpop.f32.mrf.mxu0
  %v5729 = vand.u32 %v230, 4294901760
  %v5730 = vsub.f32 %v230, %v5729
  %v5731 = vand.u32 %v5730, 4294901760
  %v5732 = vsub.f32 %v5730, %v5731
  %v5733 = vand.u32 %v5732, 4294901760
  %5734 = vmatprep.mubr.f32.mxu0 %v5733
  %v5735 = vand.u32 %v229, 4294901760
  %v5736 = vsub.f32 %v229, %v5735
  %v5737 = vand.u32 %v5736, 4294901760
  %v5738 = vsub.f32 %v5736, %v5737
  %v5739 = vand.u32 %v5738, 4294901760
  %5740 = vmatmul.mubr.f32.gmra.mxu0 %v5739
  %v5741 = vpop.f32.mrf.mxu0
  %v5742 = vadd.f32 %v5493, %v5741
  %v5743 = vpop.f32.mrf.mxu0
  %v5744 = vand.u32 %v234, 4294901760
  %v5745 = vsub.f32 %v234, %v5744
  %v5746 = vand.u32 %v5745, 4294901760
  %v5747 = vsub.f32 %v5745, %v5746
  %v5748 = vand.u32 %v5747, 4294901760
  %5749 = vmatprep.mubr.f32.mxu0 %v5748
  %v5750 = vand.u32 %v233, 4294901760
  %v5751 = vsub.f32 %v233, %v5750
  %v5752 = vand.u32 %v5751, 4294901760
  %v5753 = vsub.f32 %v5751, %v5752
  %v5754 = vand.u32 %v5753, 4294901760
  %5755 = vmatmul.mubr.f32.gmra.mxu0 %v5754
  %v5756 = vpop.f32.mrf.mxu0
  %v5757 = vadd.f32 %v5500, %v5756
  %v5758 = vpop.f32.mrf.mxu0
  %v5759 = vand.u32 %v238, 4294901760
  %v5760 = vsub.f32 %v238, %v5759
  %v5761 = vand.u32 %v5760, 4294901760
  %v5762 = vsub.f32 %v5760, %v5761
  %v5763 = vand.u32 %v5762, 4294901760
  %5764 = vmatprep.mubr.f32.mxu0 %v5763
  %v5765 = vand.u32 %v237, 4294901760
  %v5766 = vsub.f32 %v237, %v5765
  %v5767 = vand.u32 %v5766, 4294901760
  %v5768 = vsub.f32 %v5766, %v5767
  %v5769 = vand.u32 %v5768, 4294901760
  %5770 = vmatmul.mubr.f32.gmra.mxu0 %v5769
  %v5771 = vpop.f32.mrf.mxu0
  %v5772 = vadd.f32 %v5507, %v5771
  %v5773 = vpop.f32.mrf.mxu0
  %v5774 = vand.u32 %v242, 4294901760
  %v5775 = vsub.f32 %v242, %v5774
  %v5776 = vand.u32 %v5775, 4294901760
  %v5777 = vsub.f32 %v5775, %v5776
  %v5778 = vand.u32 %v5777, 4294901760
  %5779 = vmatprep.mubr.f32.mxu0 %v5778
  %v5780 = vand.u32 %v241, 4294901760
  %v5781 = vsub.f32 %v241, %v5780
  %v5782 = vand.u32 %v5781, 4294901760
  %v5783 = vsub.f32 %v5781, %v5782
  %v5784 = vand.u32 %v5783, 4294901760
  %5785 = vmatmul.mubr.f32.gmra.mxu0 %v5784
  %v5786 = vpop.f32.mrf.mxu0
  %v5787 = vadd.f32 %v5514, %v5786
  %v5788 = vpop.f32.mrf.mxu0
  %v5789 = vand.u32 %v246, 4294901760
  %v5790 = vsub.f32 %v246, %v5789
  %v5791 = vand.u32 %v5790, 4294901760
  %v5792 = vsub.f32 %v5790, %v5791
  %v5793 = vand.u32 %v5792, 4294901760
  %5794 = vmatprep.mubr.f32.mxu0 %v5793
  %v5795 = vand.u32 %v245, 4294901760
  %v5796 = vsub.f32 %v245, %v5795
  %v5797 = vand.u32 %v5796, 4294901760
  %v5798 = vsub.f32 %v5796, %v5797
  %v5799 = vand.u32 %v5798, 4294901760
  %5800 = vmatmul.mubr.f32.gmra.mxu0 %v5799
  %v5801 = vpop.f32.mrf.mxu0
  %v5802 = vadd.f32 %v5521, %v5801
  %v5803 = vpop.f32.mrf.mxu0
  %v5804 = vand.u32 %v250, 4294901760
  %v5805 = vsub.f32 %v250, %v5804
  %v5806 = vand.u32 %v5805, 4294901760
  %v5807 = vsub.f32 %v5805, %v5806
  %v5808 = vand.u32 %v5807, 4294901760
  %5809 = vmatprep.mubr.f32.mxu0 %v5808
  %v5810 = vand.u32 %v249, 4294901760
  %v5811 = vsub.f32 %v249, %v5810
  %v5812 = vand.u32 %v5811, 4294901760
  %v5813 = vsub.f32 %v5811, %v5812
  %v5814 = vand.u32 %v5813, 4294901760
  %5815 = vmatmul.mubr.f32.gmra.mxu0 %v5814
  %v5816 = vpop.f32.mrf.mxu0
  %v5817 = vadd.f32 %v5528, %v5816
  %v5818 = vpop.f32.mrf.mxu0
  %v5819 = vand.u32 %v254, 4294901760
  %v5820 = vsub.f32 %v254, %v5819
  %v5821 = vand.u32 %v5820, 4294901760
  %v5822 = vsub.f32 %v5820, %v5821
  %v5823 = vand.u32 %v5822, 4294901760
  %5824 = vmatprep.mubr.f32.mxu0 %v5823
  %v5825 = vand.u32 %v253, 4294901760
  %v5826 = vsub.f32 %v253, %v5825
  %v5827 = vand.u32 %v5826, 4294901760
  %v5828 = vsub.f32 %v5826, %v5827
  %v5829 = vand.u32 %v5828, 4294901760
  %5830 = vmatmul.mubr.f32.gmra.mxu0 %v5829
  %v5831 = vpop.f32.mrf.mxu0
  %v5832 = vadd.f32 %v5535, %v5831
  %v5833 = vpop.f32.mrf.mxu0
  %v5834 = vand.u32 %v258, 4294901760
  %v5835 = vsub.f32 %v258, %v5834
  %v5836 = vand.u32 %v5835, 4294901760
  %v5837 = vsub.f32 %v5835, %v5836
  %v5838 = vand.u32 %v5837, 4294901760
  %5839 = vmatprep.mubr.f32.mxu0 %v5838
  %v5840 = vand.u32 %v257, 4294901760
  %v5841 = vsub.f32 %v257, %v5840
  %v5842 = vand.u32 %v5841, 4294901760
  %v5843 = vsub.f32 %v5841, %v5842
  %v5844 = vand.u32 %v5843, 4294901760
  %5845 = vmatmul.mubr.f32.gmra.mxu0 %v5844
  %v5846 = vpop.f32.mrf.mxu0
  %v5847 = vadd.f32 %v5542, %v5846
  %v5848 = vpop.f32.mrf.mxu0
  %v5849 = vand.u32 %v262, 4294901760
  %v5850 = vsub.f32 %v262, %v5849
  %v5851 = vand.u32 %v5850, 4294901760
  %v5852 = vsub.f32 %v5850, %v5851
  %v5853 = vand.u32 %v5852, 4294901760
  %5854 = vmatprep.mubr.f32.mxu0 %v5853
  %v5855 = vand.u32 %v261, 4294901760
  %v5856 = vsub.f32 %v261, %v5855
  %v5857 = vand.u32 %v5856, 4294901760
  %v5858 = vsub.f32 %v5856, %v5857
  %v5859 = vand.u32 %v5858, 4294901760
  %5860 = vmatmul.mubr.f32.gmra.mxu0 %v5859
  %v5861 = vpop.f32.mrf.mxu0
  %v5862 = vadd.f32 %v5549, %v5861
  %v5863 = vpop.f32.mrf.mxu0
  %v5864 = vand.u32 %v266, 4294901760
  %v5865 = vsub.f32 %v266, %v5864
  %v5866 = vand.u32 %v5865, 4294901760
  %v5867 = vsub.f32 %v5865, %v5866
  %v5868 = vand.u32 %v5867, 4294901760
  %5869 = vmatprep.mubr.f32.mxu0 %v5868
  %v5870 = vand.u32 %v265, 4294901760
  %v5871 = vsub.f32 %v265, %v5870
  %v5872 = vand.u32 %v5871, 4294901760
  %v5873 = vsub.f32 %v5871, %v5872
  %v5874 = vand.u32 %v5873, 4294901760
  %5875 = vmatmul.mubr.f32.gmra.mxu0 %v5874
  %v5876 = vpop.f32.mrf.mxu0
  %v5877 = vadd.f32 %v5556, %v5876
  %v5878 = vpop.f32.mrf.mxu0
  %v5879 = vand.u32 %v270, 4294901760
  %v5880 = vsub.f32 %v270, %v5879
  %v5881 = vand.u32 %v5880, 4294901760
  %v5882 = vsub.f32 %v5880, %v5881
  %v5883 = vand.u32 %v5882, 4294901760
  %5884 = vmatprep.mubr.f32.mxu0 %v5883
  %v5885 = vand.u32 %v269, 4294901760
  %v5886 = vsub.f32 %v269, %v5885
  %v5887 = vand.u32 %v5886, 4294901760
  %v5888 = vsub.f32 %v5886, %v5887
  %v5889 = vand.u32 %v5888, 4294901760
  %5890 = vmatmul.mubr.f32.gmra.mxu0 %v5889
  %v5891 = vpop.f32.mrf.mxu0
  %v5892 = vadd.f32 %v5563, %v5891
  %v5893 = vpop.f32.mrf.mxu0
  %v5894 = vand.u32 %v274, 4294901760
  %v5895 = vsub.f32 %v274, %v5894
  %v5896 = vand.u32 %v5895, 4294901760
  %v5897 = vsub.f32 %v5895, %v5896
  %v5898 = vand.u32 %v5897, 4294901760
  %5899 = vmatprep.mubr.f32.mxu0 %v5898
  %v5900 = vand.u32 %v273, 4294901760
  %v5901 = vsub.f32 %v273, %v5900
  %v5902 = vand.u32 %v5901, 4294901760
  %v5903 = vsub.f32 %v5901, %v5902
  %v5904 = vand.u32 %v5903, 4294901760
  %5905 = vmatmul.mubr.f32.gmra.mxu0 %v5904
  %v5906 = vpop.f32.mrf.mxu0
  %v5907 = vadd.f32 %v5570, %v5906
  %v5908 = vpop.f32.mrf.mxu0
  %5909 = vdwg.mxu0
  %5910 = vmatprep.subr.mxu0 0.0
  %v5911 = vand.u32 %v3854, 4294901760
  %v5912 = vsub.f32 %v3854, %v5911
  %v5913 = vand.u32 %v5912, 4294901760
  %v5914 = vsub.f32 %v5912, %v5913
  %v5915 = vand.u32 %v5914, 4294901760
  %5916 = vmatpush1.msra.mxu0 %v5915
  %5917 = vmatprep.subr.mxu0 0.0
  %v5918 = vand.u32 %v3853, 4294901760
  %v5919 = vsub.f32 %v3853, %v5918
  %v5920 = vand.u32 %v5919, 4294901760
  %v5921 = vsub.f32 %v5919, %v5920
  %v5922 = vand.u32 %v5921, 4294901760
  %5923 = vmatpush1.msra.mxu0 %v5922
  %5924 = vmatprep.subr.mxu0 0.0
  %v5925 = vand.u32 %v3852, 4294901760
  %v5926 = vsub.f32 %v3852, %v5925
  %v5927 = vand.u32 %v5926, 4294901760
  %v5928 = vsub.f32 %v5926, %v5927
  %v5929 = vand.u32 %v5928, 4294901760
  %5930 = vmatpush1.msra.mxu0 %v5929
  %5931 = vmatprep.subr.mxu0 0.0
  %v5932 = vand.u32 %v3851, 4294901760
  %v5933 = vsub.f32 %v3851, %v5932
  %v5934 = vand.u32 %v5933, 4294901760
  %v5935 = vsub.f32 %v5933, %v5934
  %v5936 = vand.u32 %v5935, 4294901760
  %5937 = vmatpush1.msra.mxu0 %v5936
  %5938 = vmatprep.subr.mxu0 0.0
  %v5939 = vand.u32 %v3850, 4294901760
  %v5940 = vsub.f32 %v3850, %v5939
  %v5941 = vand.u32 %v5940, 4294901760
  %v5942 = vsub.f32 %v5940, %v5941
  %v5943 = vand.u32 %v5942, 4294901760
  %5944 = vmatpush1.msra.mxu0 %v5943
  %5945 = vmatprep.subr.mxu0 0.0
  %v5946 = vand.u32 %v3849, 4294901760
  %v5947 = vsub.f32 %v3849, %v5946
  %v5948 = vand.u32 %v5947, 4294901760
  %v5949 = vsub.f32 %v5947, %v5948
  %v5950 = vand.u32 %v5949, 4294901760
  %5951 = vmatpush1.msra.mxu0 %v5950
  %5952 = vmatprep.subr.mxu0 0.0
  %v5953 = vand.u32 %v3848, 4294901760
  %v5954 = vsub.f32 %v3848, %v5953
  %v5955 = vand.u32 %v5954, 4294901760
  %v5956 = vsub.f32 %v5954, %v5955
  %v5957 = vand.u32 %v5956, 4294901760
  %5958 = vmatpush1.msra.mxu0 %v5957
  %5959 = vmatprep.subr.mxu0 0.0
  %v5960 = vand.u32 %v3847, 4294901760
  %v5961 = vsub.f32 %v3847, %v5960
  %v5962 = vand.u32 %v5961, 4294901760
  %v5963 = vsub.f32 %v5961, %v5962
  %v5964 = vand.u32 %v5963, 4294901760
  %5965 = vmatpush1.msra.mxu0 %v5964
  %5966 = vmatprep.subr.mxu0 0.0
  %v5967 = vand.u32 %v3846, 4294901760
  %v5968 = vsub.f32 %v3846, %v5967
  %v5969 = vand.u32 %v5968, 4294901760
  %v5970 = vsub.f32 %v5968, %v5969
  %v5971 = vand.u32 %v5970, 4294901760
  %5972 = vmatpush1.msra.mxu0 %v5971
  %5973 = vmatprep.subr.mxu0 0.0
  %v5974 = vand.u32 %v3845, 4294901760
  %v5975 = vsub.f32 %v3845, %v5974
  %v5976 = vand.u32 %v5975, 4294901760
  %v5977 = vsub.f32 %v5975, %v5976
  %v5978 = vand.u32 %v5977, 4294901760
  %5979 = vmatpush1.msra.mxu0 %v5978
  %5980 = vmatprep.subr.mxu0 0.0
  %v5981 = vand.u32 %v3844, 4294901760
  %v5982 = vsub.f32 %v3844, %v5981
  %v5983 = vand.u32 %v5982, 4294901760
  %v5984 = vsub.f32 %v5982, %v5983
  %v5985 = vand.u32 %v5984, 4294901760
  %5986 = vmatpush1.msra.mxu0 %v5985
  %5987 = vmatprep.subr.mxu0 0.0
  %v5988 = vand.u32 %v3843, 4294901760
  %v5989 = vsub.f32 %v3843, %v5988
  %v5990 = vand.u32 %v5989, 4294901760
  %v5991 = vsub.f32 %v5989, %v5990
  %v5992 = vand.u32 %v5991, 4294901760
  %5993 = vmatpush1.msra.mxu0 %v5992
  %5994 = vmatprep.subr.mxu0 0.0
  %v5995 = vand.u32 %v3842, 4294901760
  %v5996 = vsub.f32 %v3842, %v5995
  %v5997 = vand.u32 %v5996, 4294901760
  %v5998 = vsub.f32 %v5996, %v5997
  %v5999 = vand.u32 %v5998, 4294901760
  %6000 = vmatpush1.msra.mxu0 %v5999
  %6001 = vmatprep.subr.mxu0 0.0
  %v6002 = vand.u32 %v3841, 4294901760
  %v6003 = vsub.f32 %v3841, %v6002
  %v6004 = vand.u32 %v6003, 4294901760
  %v6005 = vsub.f32 %v6003, %v6004
  %v6006 = vand.u32 %v6005, 4294901760
  %6007 = vmatpush1.msra.mxu0 %v6006
  %6008 = vmatprep.subr.mxu0 0.0
  %v6009 = vand.u32 %v3840, 4294901760
  %v6010 = vsub.f32 %v3840, %v6009
  %v6011 = vand.u32 %v6010, 4294901760
  %v6012 = vsub.f32 %v6010, %v6011
  %v6013 = vand.u32 %v6012, 4294901760
  %6014 = vmatpush1.msra.mxu0 %v6013
  %6015 = vmatprep.subr.mxu0 0.0
  %v6016 = vand.u32 %v3839, 4294901760
  %v6017 = vsub.f32 %v3839, %v6016
  %v6018 = vand.u32 %v6017, 4294901760
  %v6019 = vsub.f32 %v6017, %v6018
  %v6020 = vand.u32 %v6019, 4294901760
  %6021 = vmatpush1.msra.mxu0 %v6020
  %6022 = vmatprep.subr.mxu0 0.0
  %v6023 = vand.u32 %v3870, 4294901760
  %v6024 = vsub.f32 %v3870, %v6023
  %v6025 = vand.u32 %v6024, 4294901760
  %v6026 = vsub.f32 %v6024, %v6025
  %v6027 = vand.u32 %v6026, 4294901760
  %6028 = vmatpush2.msra.mxu0 %v6027
  %6029 = vmatprep.subr.mxu0 0.0
  %v6030 = vand.u32 %v3869, 4294901760
  %v6031 = vsub.f32 %v3869, %v6030
  %v6032 = vand.u32 %v6031, 4294901760
  %v6033 = vsub.f32 %v6031, %v6032
  %v6034 = vand.u32 %v6033, 4294901760
  %6035 = vmatpush2.msra.mxu0 %v6034
  %6036 = vmatprep.subr.mxu0 0.0
  %v6037 = vand.u32 %v3868, 4294901760
  %v6038 = vsub.f32 %v3868, %v6037
  %v6039 = vand.u32 %v6038, 4294901760
  %v6040 = vsub.f32 %v6038, %v6039
  %v6041 = vand.u32 %v6040, 4294901760
  %6042 = vmatpush2.msra.mxu0 %v6041
  %6043 = vmatprep.subr.mxu0 0.0
  %v6044 = vand.u32 %v3867, 4294901760
  %v6045 = vsub.f32 %v3867, %v6044
  %v6046 = vand.u32 %v6045, 4294901760
  %v6047 = vsub.f32 %v6045, %v6046
  %v6048 = vand.u32 %v6047, 4294901760
  %6049 = vmatpush2.msra.mxu0 %v6048
  %6050 = vmatprep.subr.mxu0 0.0
  %v6051 = vand.u32 %v3866, 4294901760
  %v6052 = vsub.f32 %v3866, %v6051
  %v6053 = vand.u32 %v6052, 4294901760
  %v6054 = vsub.f32 %v6052, %v6053
  %v6055 = vand.u32 %v6054, 4294901760
  %6056 = vmatpush2.msra.mxu0 %v6055
  %6057 = vmatprep.subr.mxu0 0.0
  %v6058 = vand.u32 %v3865, 4294901760
  %v6059 = vsub.f32 %v3865, %v6058
  %v6060 = vand.u32 %v6059, 4294901760
  %v6061 = vsub.f32 %v6059, %v6060
  %v6062 = vand.u32 %v6061, 4294901760
  %6063 = vmatpush2.msra.mxu0 %v6062
  %6064 = vmatprep.subr.mxu0 0.0
  %v6065 = vand.u32 %v3864, 4294901760
  %v6066 = vsub.f32 %v3864, %v6065
  %v6067 = vand.u32 %v6066, 4294901760
  %v6068 = vsub.f32 %v6066, %v6067
  %v6069 = vand.u32 %v6068, 4294901760
  %6070 = vmatpush2.msra.mxu0 %v6069
  %6071 = vmatprep.subr.mxu0 0.0
  %v6072 = vand.u32 %v3863, 4294901760
  %v6073 = vsub.f32 %v3863, %v6072
  %v6074 = vand.u32 %v6073, 4294901760
  %v6075 = vsub.f32 %v6073, %v6074
  %v6076 = vand.u32 %v6075, 4294901760
  %6077 = vmatpush2.msra.mxu0 %v6076
  %6078 = vmatprep.subr.mxu0 0.0
  %v6079 = vand.u32 %v3862, 4294901760
  %v6080 = vsub.f32 %v3862, %v6079
  %v6081 = vand.u32 %v6080, 4294901760
  %v6082 = vsub.f32 %v6080, %v6081
  %v6083 = vand.u32 %v6082, 4294901760
  %6084 = vmatpush2.msra.mxu0 %v6083
  %6085 = vmatprep.subr.mxu0 0.0
  %v6086 = vand.u32 %v3861, 4294901760
  %v6087 = vsub.f32 %v3861, %v6086
  %v6088 = vand.u32 %v6087, 4294901760
  %v6089 = vsub.f32 %v6087, %v6088
  %v6090 = vand.u32 %v6089, 4294901760
  %6091 = vmatpush2.msra.mxu0 %v6090
  %6092 = vmatprep.subr.mxu0 0.0
  %v6093 = vand.u32 %v3860, 4294901760
  %v6094 = vsub.f32 %v3860, %v6093
  %v6095 = vand.u32 %v6094, 4294901760
  %v6096 = vsub.f32 %v6094, %v6095
  %v6097 = vand.u32 %v6096, 4294901760
  %6098 = vmatpush2.msra.mxu0 %v6097
  %6099 = vmatprep.subr.mxu0 0.0
  %v6100 = vand.u32 %v3859, 4294901760
  %v6101 = vsub.f32 %v3859, %v6100
  %v6102 = vand.u32 %v6101, 4294901760
  %v6103 = vsub.f32 %v6101, %v6102
  %v6104 = vand.u32 %v6103, 4294901760
  %6105 = vmatpush2.msra.mxu0 %v6104
  %6106 = vmatprep.subr.mxu0 0.0
  %v6107 = vand.u32 %v3858, 4294901760
  %v6108 = vsub.f32 %v3858, %v6107
  %v6109 = vand.u32 %v6108, 4294901760
  %v6110 = vsub.f32 %v6108, %v6109
  %v6111 = vand.u32 %v6110, 4294901760
  %6112 = vmatpush2.msra.mxu0 %v6111
  %6113 = vmatprep.subr.mxu0 0.0
  %v6114 = vand.u32 %v3857, 4294901760
  %v6115 = vsub.f32 %v3857, %v6114
  %v6116 = vand.u32 %v6115, 4294901760
  %v6117 = vsub.f32 %v6115, %v6116
  %v6118 = vand.u32 %v6117, 4294901760
  %6119 = vmatpush2.msra.mxu0 %v6118
  %6120 = vmatprep.subr.mxu0 0.0
  %v6121 = vand.u32 %v3856, 4294901760
  %v6122 = vsub.f32 %v3856, %v6121
  %v6123 = vand.u32 %v6122, 4294901760
  %v6124 = vsub.f32 %v6122, %v6123
  %v6125 = vand.u32 %v6124, 4294901760
  %6126 = vmatpush2.msra.mxu0 %v6125
  %6127 = vmatprep.subr.mxu0 0.0
  %v6128 = vand.u32 %v3855, 4294901760
  %v6129 = vsub.f32 %v3855, %v6128
  %v6130 = vand.u32 %v6129, 4294901760
  %v6131 = vsub.f32 %v6129, %v6130
  %v6132 = vand.u32 %v6131, 4294901760
  %6133 = vmatpush2.msra.mxu0 %v6132
  %v6134 = vand.u32 %v214, 4294901760
  %6135 = vmatprep.mubr.f32.mxu0 %v6134
  %v6136 = vand.u32 %v213, 4294901760
  %6137 = vmatmul.mubr.f32.gmra.mxu0 %v6136
  %v6138 = vpop.f32.mrf.mxu0
  %v6139 = vadd.f32 %v5682, %v6138
  %v6140 = vpop.f32.mrf.mxu0
  %v6141 = vand.u32 %v218, 4294901760
  %6142 = vmatprep.mubr.f32.mxu0 %v6141
  %v6143 = vand.u32 %v217, 4294901760
  %6144 = vmatmul.mubr.f32.gmra.mxu0 %v6143
  %v6145 = vpop.f32.mrf.mxu0
  %v6146 = vadd.f32 %v5697, %v6145
  %v6147 = vpop.f32.mrf.mxu0
  %v6148 = vand.u32 %v222, 4294901760
  %6149 = vmatprep.mubr.f32.mxu0 %v6148
  %v6150 = vand.u32 %v221, 4294901760
  %6151 = vmatmul.mubr.f32.gmra.mxu0 %v6150
  %v6152 = vpop.f32.mrf.mxu0
  %v6153 = vadd.f32 %v5712, %v6152
  %v6154 = vpop.f32.mrf.mxu0
  %v6155 = vand.u32 %v226, 4294901760
  %6156 = vmatprep.mubr.f32.mxu0 %v6155
  %v6157 = vand.u32 %v225, 4294901760
  %6158 = vmatmul.mubr.f32.gmra.mxu0 %v6157
  %v6159 = vpop.f32.mrf.mxu0
  %v6160 = vadd.f32 %v5727, %v6159
  %v6161 = vpop.f32.mrf.mxu0
  %v6162 = vand.u32 %v230, 4294901760
  %6163 = vmatprep.mubr.f32.mxu0 %v6162
  %v6164 = vand.u32 %v229, 4294901760
  %6165 = vmatmul.mubr.f32.gmra.mxu0 %v6164
  %v6166 = vpop.f32.mrf.mxu0
  %v6167 = vadd.f32 %v5742, %v6166
  %v6168 = vpop.f32.mrf.mxu0
  %v6169 = vand.u32 %v234, 4294901760
  %6170 = vmatprep.mubr.f32.mxu0 %v6169
  %v6171 = vand.u32 %v233, 4294901760
  %6172 = vmatmul.mubr.f32.gmra.mxu0 %v6171
  %v6173 = vpop.f32.mrf.mxu0
  %v6174 = vadd.f32 %v5757, %v6173
  %v6175 = vpop.f32.mrf.mxu0
  %v6176 = vand.u32 %v238, 4294901760
  %6177 = vmatprep.mubr.f32.mxu0 %v6176
  %v6178 = vand.u32 %v237, 4294901760
  %6179 = vmatmul.mubr.f32.gmra.mxu0 %v6178
  %v6180 = vpop.f32.mrf.mxu0
  %v6181 = vadd.f32 %v5772, %v6180
  %v6182 = vpop.f32.mrf.mxu0
  %v6183 = vand.u32 %v242, 4294901760
  %6184 = vmatprep.mubr.f32.mxu0 %v6183
  %v6185 = vand.u32 %v241, 4294901760
  %6186 = vmatmul.mubr.f32.gmra.mxu0 %v6185
  %v6187 = vpop.f32.mrf.mxu0
  %v6188 = vadd.f32 %v5787, %v6187
  %v6189 = vpop.f32.mrf.mxu0
  %v6190 = vand.u32 %v246, 4294901760
  %6191 = vmatprep.mubr.f32.mxu0 %v6190
  %v6192 = vand.u32 %v245, 4294901760
  %6193 = vmatmul.mubr.f32.gmra.mxu0 %v6192
  %v6194 = vpop.f32.mrf.mxu0
  %v6195 = vadd.f32 %v5802, %v6194
  %v6196 = vpop.f32.mrf.mxu0
  %v6197 = vand.u32 %v250, 4294901760
  %6198 = vmatprep.mubr.f32.mxu0 %v6197
  %v6199 = vand.u32 %v249, 4294901760
  %6200 = vmatmul.mubr.f32.gmra.mxu0 %v6199
  %v6201 = vpop.f32.mrf.mxu0
  %v6202 = vadd.f32 %v5817, %v6201
  %v6203 = vpop.f32.mrf.mxu0
  %v6204 = vand.u32 %v254, 4294901760
  %6205 = vmatprep.mubr.f32.mxu0 %v6204
  %v6206 = vand.u32 %v253, 4294901760
  %6207 = vmatmul.mubr.f32.gmra.mxu0 %v6206
  %v6208 = vpop.f32.mrf.mxu0
  %v6209 = vadd.f32 %v5832, %v6208
  %v6210 = vpop.f32.mrf.mxu0
  %v6211 = vand.u32 %v258, 4294901760
  %6212 = vmatprep.mubr.f32.mxu0 %v6211
  %v6213 = vand.u32 %v257, 4294901760
  %6214 = vmatmul.mubr.f32.gmra.mxu0 %v6213
  %v6215 = vpop.f32.mrf.mxu0
  %v6216 = vadd.f32 %v5847, %v6215
  %v6217 = vpop.f32.mrf.mxu0
  %v6218 = vand.u32 %v262, 4294901760
  %6219 = vmatprep.mubr.f32.mxu0 %v6218
  %v6220 = vand.u32 %v261, 4294901760
  %6221 = vmatmul.mubr.f32.gmra.mxu0 %v6220
  %v6222 = vpop.f32.mrf.mxu0
  %v6223 = vadd.f32 %v5862, %v6222
  %v6224 = vpop.f32.mrf.mxu0
  %v6225 = vand.u32 %v266, 4294901760
  %6226 = vmatprep.mubr.f32.mxu0 %v6225
  %v6227 = vand.u32 %v265, 4294901760
  %6228 = vmatmul.mubr.f32.gmra.mxu0 %v6227
  %v6229 = vpop.f32.mrf.mxu0
  %v6230 = vadd.f32 %v5877, %v6229
  %v6231 = vpop.f32.mrf.mxu0
  %v6232 = vand.u32 %v270, 4294901760
  %6233 = vmatprep.mubr.f32.mxu0 %v6232
  %v6234 = vand.u32 %v269, 4294901760
  %6235 = vmatmul.mubr.f32.gmra.mxu0 %v6234
  %v6236 = vpop.f32.mrf.mxu0
  %v6237 = vadd.f32 %v5892, %v6236
  %v6238 = vpop.f32.mrf.mxu0
  %v6239 = vand.u32 %v274, 4294901760
  %6240 = vmatprep.mubr.f32.mxu0 %v6239
  %v6241 = vand.u32 %v273, 4294901760
  %6242 = vmatmul.mubr.f32.gmra.mxu0 %v6241
  %v6243 = vpop.f32.mrf.mxu0
  %v6244 = vadd.f32 %v5907, %v6243
  %v6245 = vpop.f32.mrf.mxu0
  %6246 = vdwg.mxu0
  %6247 = vmatprep.subr.mxu0 0.0
  %v6248 = vand.u32 %v3854, 4294901760
  %v6249 = vsub.f32 %v3854, %v6248
  %6250 = vmatpush1.msra.mxu0 %v6249
  %6251 = vmatprep.subr.mxu0 0.0
  %v6252 = vand.u32 %v3853, 4294901760
  %v6253 = vsub.f32 %v3853, %v6252
  %6254 = vmatpush1.msra.mxu0 %v6253
  %6255 = vmatprep.subr.mxu0 0.0
  %v6256 = vand.u32 %v3852, 4294901760
  %v6257 = vsub.f32 %v3852, %v6256
  %6258 = vmatpush1.msra.mxu0 %v6257
  %6259 = vmatprep.subr.mxu0 0.0
  %v6260 = vand.u32 %v3851, 4294901760
  %v6261 = vsub.f32 %v3851, %v6260
  %6262 = vmatpush1.msra.mxu0 %v6261
  %6263 = vmatprep.subr.mxu0 0.0
  %v6264 = vand.u32 %v3850, 4294901760
  %v6265 = vsub.f32 %v3850, %v6264
  %6266 = vmatpush1.msra.mxu0 %v6265
  %6267 = vmatprep.subr.mxu0 0.0
  %v6268 = vand.u32 %v3849, 4294901760
  %v6269 = vsub.f32 %v3849, %v6268
  %6270 = vmatpush1.msra.mxu0 %v6269
  %6271 = vmatprep.subr.mxu0 0.0
  %v6272 = vand.u32 %v3848, 4294901760
  %v6273 = vsub.f32 %v3848, %v6272
  %6274 = vmatpush1.msra.mxu0 %v6273
  %6275 = vmatprep.subr.mxu0 0.0
  %v6276 = vand.u32 %v3847, 4294901760
  %v6277 = vsub.f32 %v3847, %v6276
  %6278 = vmatpush1.msra.mxu0 %v6277
  %6279 = vmatprep.subr.mxu0 0.0
  %v6280 = vand.u32 %v3846, 4294901760
  %v6281 = vsub.f32 %v3846, %v6280
  %6282 = vmatpush1.msra.mxu0 %v6281
  %6283 = vmatprep.subr.mxu0 0.0
  %v6284 = vand.u32 %v3845, 4294901760
  %v6285 = vsub.f32 %v3845, %v6284
  %6286 = vmatpush1.msra.mxu0 %v6285
  %6287 = vmatprep.subr.mxu0 0.0
  %v6288 = vand.u32 %v3844, 4294901760
  %v6289 = vsub.f32 %v3844, %v6288
  %6290 = vmatpush1.msra.mxu0 %v6289
  %6291 = vmatprep.subr.mxu0 0.0
  %v6292 = vand.u32 %v3843, 4294901760
  %v6293 = vsub.f32 %v3843, %v6292
  %6294 = vmatpush1.msra.mxu0 %v6293
  %6295 = vmatprep.subr.mxu0 0.0
  %v6296 = vand.u32 %v3842, 4294901760
  %v6297 = vsub.f32 %v3842, %v6296
  %6298 = vmatpush1.msra.mxu0 %v6297
  %6299 = vmatprep.subr.mxu0 0.0
  %v6300 = vand.u32 %v3841, 4294901760
  %v6301 = vsub.f32 %v3841, %v6300
  %6302 = vmatpush1.msra.mxu0 %v6301
  %6303 = vmatprep.subr.mxu0 0.0
  %v6304 = vand.u32 %v3840, 4294901760
  %v6305 = vsub.f32 %v3840, %v6304
  %6306 = vmatpush1.msra.mxu0 %v6305
  %6307 = vmatprep.subr.mxu0 0.0
  %v6308 = vand.u32 %v3839, 4294901760
  %v6309 = vsub.f32 %v3839, %v6308
  %6310 = vmatpush1.msra.mxu0 %v6309
  %6311 = vmatprep.subr.mxu0 0.0
  %v6312 = vand.u32 %v3870, 4294901760
  %v6313 = vsub.f32 %v3870, %v6312
  %6314 = vmatpush2.msra.mxu0 %v6313
  %6315 = vmatprep.subr.mxu0 0.0
  %v6316 = vand.u32 %v3869, 4294901760
  %v6317 = vsub.f32 %v3869, %v6316
  %6318 = vmatpush2.msra.mxu0 %v6317
  %6319 = vmatprep.subr.mxu0 0.0
  %v6320 = vand.u32 %v3868, 4294901760
  %v6321 = vsub.f32 %v3868, %v6320
  %6322 = vmatpush2.msra.mxu0 %v6321
  %6323 = vmatprep.subr.mxu0 0.0
  %v6324 = vand.u32 %v3867, 4294901760
  %v6325 = vsub.f32 %v3867, %v6324
  %6326 = vmatpush2.msra.mxu0 %v6325
  %6327 = vmatprep.subr.mxu0 0.0
  %v6328 = vand.u32 %v3866, 4294901760
  %v6329 = vsub.f32 %v3866, %v6328
  %6330 = vmatpush2.msra.mxu0 %v6329
  %6331 = vmatprep.subr.mxu0 0.0
  %v6332 = vand.u32 %v3865, 4294901760
  %v6333 = vsub.f32 %v3865, %v6332
  %6334 = vmatpush2.msra.mxu0 %v6333
  %6335 = vmatprep.subr.mxu0 0.0
  %v6336 = vand.u32 %v3864, 4294901760
  %v6337 = vsub.f32 %v3864, %v6336
  %6338 = vmatpush2.msra.mxu0 %v6337
  %6339 = vmatprep.subr.mxu0 0.0
  %v6340 = vand.u32 %v3863, 4294901760
  %v6341 = vsub.f32 %v3863, %v6340
  %6342 = vmatpush2.msra.mxu0 %v6341
  %6343 = vmatprep.subr.mxu0 0.0
  %v6344 = vand.u32 %v3862, 4294901760
  %v6345 = vsub.f32 %v3862, %v6344
  %6346 = vmatpush2.msra.mxu0 %v6345
  %6347 = vmatprep.subr.mxu0 0.0
  %v6348 = vand.u32 %v3861, 4294901760
  %v6349 = vsub.f32 %v3861, %v6348
  %6350 = vmatpush2.msra.mxu0 %v6349
  %6351 = vmatprep.subr.mxu0 0.0
  %v6352 = vand.u32 %v3860, 4294901760
  %v6353 = vsub.f32 %v3860, %v6352
  %6354 = vmatpush2.msra.mxu0 %v6353
  %6355 = vmatprep.subr.mxu0 0.0
  %v6356 = vand.u32 %v3859, 4294901760
  %v6357 = vsub.f32 %v3859, %v6356
  %6358 = vmatpush2.msra.mxu0 %v6357
  %6359 = vmatprep.subr.mxu0 0.0
  %v6360 = vand.u32 %v3858, 4294901760
  %v6361 = vsub.f32 %v3858, %v6360
  %6362 = vmatpush2.msra.mxu0 %v6361
  %6363 = vmatprep.subr.mxu0 0.0
  %v6364 = vand.u32 %v3857, 4294901760
  %v6365 = vsub.f32 %v3857, %v6364
  %6366 = vmatpush2.msra.mxu0 %v6365
  %6367 = vmatprep.subr.mxu0 0.0
  %v6368 = vand.u32 %v3856, 4294901760
  %v6369 = vsub.f32 %v3856, %v6368
  %6370 = vmatpush2.msra.mxu0 %v6369
  %6371 = vmatprep.subr.mxu0 0.0
  %v6372 = vand.u32 %v3855, 4294901760
  %v6373 = vsub.f32 %v3855, %v6372
  %6374 = vmatpush2.msra.mxu0 %v6373
  %v6375 = vand.u32 %v214, 4294901760
  %v6376 = vsub.f32 %v214, %v6375
  %6377 = vmatprep.mubr.f32.mxu0 %v6376
  %v6378 = vand.u32 %v213, 4294901760
  %v6379 = vsub.f32 %v213, %v6378
  %6380 = vmatmul.mubr.f32.gmra.mxu0 %v6379
  %v6381 = vpop.f32.mrf.mxu0
  %v6382 = vadd.f32 %v6139, %v6381
  %v6383 = vpop.f32.mrf.mxu0
  %v6384 = vand.u32 %v218, 4294901760
  %v6385 = vsub.f32 %v218, %v6384
  %6386 = vmatprep.mubr.f32.mxu0 %v6385
  %v6387 = vand.u32 %v217, 4294901760
  %v6388 = vsub.f32 %v217, %v6387
  %6389 = vmatmul.mubr.f32.gmra.mxu0 %v6388
  %v6390 = vpop.f32.mrf.mxu0
  %v6391 = vadd.f32 %v6146, %v6390
  %v6392 = vpop.f32.mrf.mxu0
  %v6393 = vand.u32 %v222, 4294901760
  %v6394 = vsub.f32 %v222, %v6393
  %6395 = vmatprep.mubr.f32.mxu0 %v6394
  %v6396 = vand.u32 %v221, 4294901760
  %v6397 = vsub.f32 %v221, %v6396
  %6398 = vmatmul.mubr.f32.gmra.mxu0 %v6397
  %v6399 = vpop.f32.mrf.mxu0
  %v6400 = vadd.f32 %v6153, %v6399
  %v6401 = vpop.f32.mrf.mxu0
  %v6402 = vand.u32 %v226, 4294901760
  %v6403 = vsub.f32 %v226, %v6402
  %6404 = vmatprep.mubr.f32.mxu0 %v6403
  %v6405 = vand.u32 %v225, 4294901760
  %v6406 = vsub.f32 %v225, %v6405
  %6407 = vmatmul.mubr.f32.gmra.mxu0 %v6406
  %v6408 = vpop.f32.mrf.mxu0
  %v6409 = vadd.f32 %v6160, %v6408
  %v6410 = vpop.f32.mrf.mxu0
  %v6411 = vand.u32 %v230, 4294901760
  %v6412 = vsub.f32 %v230, %v6411
  %6413 = vmatprep.mubr.f32.mxu0 %v6412
  %v6414 = vand.u32 %v229, 4294901760
  %v6415 = vsub.f32 %v229, %v6414
  %6416 = vmatmul.mubr.f32.gmra.mxu0 %v6415
  %v6417 = vpop.f32.mrf.mxu0
  %v6418 = vadd.f32 %v6167, %v6417
  %v6419 = vpop.f32.mrf.mxu0
  %v6420 = vand.u32 %v234, 4294901760
  %v6421 = vsub.f32 %v234, %v6420
  %6422 = vmatprep.mubr.f32.mxu0 %v6421
  %v6423 = vand.u32 %v233, 4294901760
  %v6424 = vsub.f32 %v233, %v6423
  %6425 = vmatmul.mubr.f32.gmra.mxu0 %v6424
  %v6426 = vpop.f32.mrf.mxu0
  %v6427 = vadd.f32 %v6174, %v6426
  %v6428 = vpop.f32.mrf.mxu0
  %v6429 = vand.u32 %v238, 4294901760
  %v6430 = vsub.f32 %v238, %v6429
  %6431 = vmatprep.mubr.f32.mxu0 %v6430
  %v6432 = vand.u32 %v237, 4294901760
  %v6433 = vsub.f32 %v237, %v6432
  %6434 = vmatmul.mubr.f32.gmra.mxu0 %v6433
  %v6435 = vpop.f32.mrf.mxu0
  %v6436 = vadd.f32 %v6181, %v6435
  %v6437 = vpop.f32.mrf.mxu0
  %v6438 = vand.u32 %v242, 4294901760
  %v6439 = vsub.f32 %v242, %v6438
  %6440 = vmatprep.mubr.f32.mxu0 %v6439
  %v6441 = vand.u32 %v241, 4294901760
  %v6442 = vsub.f32 %v241, %v6441
  %6443 = vmatmul.mubr.f32.gmra.mxu0 %v6442
  %v6444 = vpop.f32.mrf.mxu0
  %v6445 = vadd.f32 %v6188, %v6444
  %v6446 = vpop.f32.mrf.mxu0
  %v6447 = vand.u32 %v246, 4294901760
  %v6448 = vsub.f32 %v246, %v6447
  %6449 = vmatprep.mubr.f32.mxu0 %v6448
  %v6450 = vand.u32 %v245, 4294901760
  %v6451 = vsub.f32 %v245, %v6450
  %6452 = vmatmul.mubr.f32.gmra.mxu0 %v6451
  %v6453 = vpop.f32.mrf.mxu0
  %v6454 = vadd.f32 %v6195, %v6453
  %v6455 = vpop.f32.mrf.mxu0
  %v6456 = vand.u32 %v250, 4294901760
  %v6457 = vsub.f32 %v250, %v6456
  %6458 = vmatprep.mubr.f32.mxu0 %v6457
  %v6459 = vand.u32 %v249, 4294901760
  %v6460 = vsub.f32 %v249, %v6459
  %6461 = vmatmul.mubr.f32.gmra.mxu0 %v6460
  %v6462 = vpop.f32.mrf.mxu0
  %v6463 = vadd.f32 %v6202, %v6462
  %v6464 = vpop.f32.mrf.mxu0
  %v6465 = vand.u32 %v254, 4294901760
  %v6466 = vsub.f32 %v254, %v6465
  %6467 = vmatprep.mubr.f32.mxu0 %v6466
  %v6468 = vand.u32 %v253, 4294901760
  %v6469 = vsub.f32 %v253, %v6468
  %6470 = vmatmul.mubr.f32.gmra.mxu0 %v6469
  %v6471 = vpop.f32.mrf.mxu0
  %v6472 = vadd.f32 %v6209, %v6471
  %v6473 = vpop.f32.mrf.mxu0
  %v6474 = vand.u32 %v258, 4294901760
  %v6475 = vsub.f32 %v258, %v6474
  %6476 = vmatprep.mubr.f32.mxu0 %v6475
  %v6477 = vand.u32 %v257, 4294901760
  %v6478 = vsub.f32 %v257, %v6477
  %6479 = vmatmul.mubr.f32.gmra.mxu0 %v6478
  %v6480 = vpop.f32.mrf.mxu0
  %v6481 = vadd.f32 %v6216, %v6480
  %v6482 = vpop.f32.mrf.mxu0
  %v6483 = vand.u32 %v262, 4294901760
  %v6484 = vsub.f32 %v262, %v6483
  %6485 = vmatprep.mubr.f32.mxu0 %v6484
  %v6486 = vand.u32 %v261, 4294901760
  %v6487 = vsub.f32 %v261, %v6486
  %6488 = vmatmul.mubr.f32.gmra.mxu0 %v6487
  %v6489 = vpop.f32.mrf.mxu0
  %v6490 = vadd.f32 %v6223, %v6489
  %v6491 = vpop.f32.mrf.mxu0
  %v6492 = vand.u32 %v266, 4294901760
  %v6493 = vsub.f32 %v266, %v6492
  %6494 = vmatprep.mubr.f32.mxu0 %v6493
  %v6495 = vand.u32 %v265, 4294901760
  %v6496 = vsub.f32 %v265, %v6495
  %6497 = vmatmul.mubr.f32.gmra.mxu0 %v6496
  %v6498 = vpop.f32.mrf.mxu0
  %v6499 = vadd.f32 %v6230, %v6498
  %v6500 = vpop.f32.mrf.mxu0
  %v6501 = vand.u32 %v270, 4294901760
  %v6502 = vsub.f32 %v270, %v6501
  %6503 = vmatprep.mubr.f32.mxu0 %v6502
  %v6504 = vand.u32 %v269, 4294901760
  %v6505 = vsub.f32 %v269, %v6504
  %6506 = vmatmul.mubr.f32.gmra.mxu0 %v6505
  %v6507 = vpop.f32.mrf.mxu0
  %v6508 = vadd.f32 %v6237, %v6507
  %v6509 = vpop.f32.mrf.mxu0
  %v6510 = vand.u32 %v274, 4294901760
  %v6511 = vsub.f32 %v274, %v6510
  %6512 = vmatprep.mubr.f32.mxu0 %v6511
  %v6513 = vand.u32 %v273, 4294901760
  %v6514 = vsub.f32 %v273, %v6513
  %6515 = vmatmul.mubr.f32.gmra.mxu0 %v6514
  %v6516 = vpop.f32.mrf.mxu0
  %v6517 = vadd.f32 %v6244, %v6516
  %v6518 = vpop.f32.mrf.mxu0
  %6519 = vdwg.mxu0
  %6520 = vmatprep.subr.mxu0 0.0
  %v6521 = vand.u32 %v3854, 4294901760
  %6522 = vmatpush1.msra.mxu0 %v6521
  %6523 = vmatprep.subr.mxu0 0.0
  %v6524 = vand.u32 %v3853, 4294901760
  %6525 = vmatpush1.msra.mxu0 %v6524
  %6526 = vmatprep.subr.mxu0 0.0
  %v6527 = vand.u32 %v3852, 4294901760
  %6528 = vmatpush1.msra.mxu0 %v6527
  %6529 = vmatprep.subr.mxu0 0.0
  %v6530 = vand.u32 %v3851, 4294901760
  %6531 = vmatpush1.msra.mxu0 %v6530
  %6532 = vmatprep.subr.mxu0 0.0
  %v6533 = vand.u32 %v3850, 4294901760
  %6534 = vmatpush1.msra.mxu0 %v6533
  %6535 = vmatprep.subr.mxu0 0.0
  %v6536 = vand.u32 %v3849, 4294901760
  %6537 = vmatpush1.msra.mxu0 %v6536
  %6538 = vmatprep.subr.mxu0 0.0
  %v6539 = vand.u32 %v3848, 4294901760
  %6540 = vmatpush1.msra.mxu0 %v6539
  %6541 = vmatprep.subr.mxu0 0.0
  %v6542 = vand.u32 %v3847, 4294901760
  %6543 = vmatpush1.msra.mxu0 %v6542
  %6544 = vmatprep.subr.mxu0 0.0
  %v6545 = vand.u32 %v3846, 4294901760
  %6546 = vmatpush1.msra.mxu0 %v6545
  %6547 = vmatprep.subr.mxu0 0.0
  %v6548 = vand.u32 %v3845, 4294901760
  %6549 = vmatpush1.msra.mxu0 %v6548
  %6550 = vmatprep.subr.mxu0 0.0
  %v6551 = vand.u32 %v3844, 4294901760
  %6552 = vmatpush1.msra.mxu0 %v6551
  %6553 = vmatprep.subr.mxu0 0.0
  %v6554 = vand.u32 %v3843, 4294901760
  %6555 = vmatpush1.msra.mxu0 %v6554
  %6556 = vmatprep.subr.mxu0 0.0
  %v6557 = vand.u32 %v3842, 4294901760
  %6558 = vmatpush1.msra.mxu0 %v6557
  %6559 = vmatprep.subr.mxu0 0.0
  %v6560 = vand.u32 %v3841, 4294901760
  %6561 = vmatpush1.msra.mxu0 %v6560
  %6562 = vmatprep.subr.mxu0 0.0
  %v6563 = vand.u32 %v3840, 4294901760
  %6564 = vmatpush1.msra.mxu0 %v6563
  %6565 = vmatprep.subr.mxu0 0.0
  %v6566 = vand.u32 %v3839, 4294901760
  %6567 = vmatpush1.msra.mxu0 %v6566
  %6568 = vmatprep.subr.mxu0 0.0
  %v6569 = vand.u32 %v3870, 4294901760
  %6570 = vmatpush2.msra.mxu0 %v6569
  %6571 = vmatprep.subr.mxu0 0.0
  %v6572 = vand.u32 %v3869, 4294901760
  %6573 = vmatpush2.msra.mxu0 %v6572
  %6574 = vmatprep.subr.mxu0 0.0
  %v6575 = vand.u32 %v3868, 4294901760
  %6576 = vmatpush2.msra.mxu0 %v6575
  %6577 = vmatprep.subr.mxu0 0.0
  %v6578 = vand.u32 %v3867, 4294901760
  %6579 = vmatpush2.msra.mxu0 %v6578
  %6580 = vmatprep.subr.mxu0 0.0
  %v6581 = vand.u32 %v3866, 4294901760
  %6582 = vmatpush2.msra.mxu0 %v6581
  %6583 = vmatprep.subr.mxu0 0.0
  %v6584 = vand.u32 %v3865, 4294901760
  %6585 = vmatpush2.msra.mxu0 %v6584
  %6586 = vmatprep.subr.mxu0 0.0
  %v6587 = vand.u32 %v3864, 4294901760
  %6588 = vmatpush2.msra.mxu0 %v6587
  %6589 = vmatprep.subr.mxu0 0.0
  %v6590 = vand.u32 %v3863, 4294901760
  %6591 = vmatpush2.msra.mxu0 %v6590
  %6592 = vmatprep.subr.mxu0 0.0
  %v6593 = vand.u32 %v3862, 4294901760
  %6594 = vmatpush2.msra.mxu0 %v6593
  %6595 = vmatprep.subr.mxu0 0.0
  %v6596 = vand.u32 %v3861, 4294901760
  %6597 = vmatpush2.msra.mxu0 %v6596
  %6598 = vmatprep.subr.mxu0 0.0
  %v6599 = vand.u32 %v3860, 4294901760
  %6600 = vmatpush2.msra.mxu0 %v6599
  %6601 = vmatprep.subr.mxu0 0.0
  %v6602 = vand.u32 %v3859, 4294901760
  %6603 = vmatpush2.msra.mxu0 %v6602
  %6604 = vmatprep.subr.mxu0 0.0
  %v6605 = vand.u32 %v3858, 4294901760
  %6606 = vmatpush2.msra.mxu0 %v6605
  %6607 = vmatprep.subr.mxu0 0.0
  %v6608 = vand.u32 %v3857, 4294901760
  %6609 = vmatpush2.msra.mxu0 %v6608
  %6610 = vmatprep.subr.mxu0 0.0
  %v6611 = vand.u32 %v3856, 4294901760
  %6612 = vmatpush2.msra.mxu0 %v6611
  %6613 = vmatprep.subr.mxu0 0.0
  %v6614 = vand.u32 %v3855, 4294901760
  %6615 = vmatpush2.msra.mxu0 %v6614
  %v6616 = vand.u32 %v214, 4294901760
  %v6617 = vsub.f32 %v214, %v6616
  %v6618 = vand.u32 %v6617, 4294901760
  %6619 = vmatprep.mubr.f32.mxu0 %v6618
  %v6620 = vand.u32 %v213, 4294901760
  %v6621 = vsub.f32 %v213, %v6620
  %v6622 = vand.u32 %v6621, 4294901760
  %6623 = vmatmul.mubr.f32.gmra.mxu0 %v6622
  %v6624 = vpop.f32.mrf.mxu0
  %v6625 = vadd.f32 %v6382, %v6624
  %v6626 = vpop.f32.mrf.mxu0
  %v6627 = vand.u32 %v218, 4294901760
  %v6628 = vsub.f32 %v218, %v6627
  %v6629 = vand.u32 %v6628, 4294901760
  %6630 = vmatprep.mubr.f32.mxu0 %v6629
  %v6631 = vand.u32 %v217, 4294901760
  %v6632 = vsub.f32 %v217, %v6631
  %v6633 = vand.u32 %v6632, 4294901760
  %6634 = vmatmul.mubr.f32.gmra.mxu0 %v6633
  %v6635 = vpop.f32.mrf.mxu0
  %v6636 = vadd.f32 %v6391, %v6635
  %v6637 = vpop.f32.mrf.mxu0
  %v6638 = vand.u32 %v222, 4294901760
  %v6639 = vsub.f32 %v222, %v6638
  %v6640 = vand.u32 %v6639, 4294901760
  %6641 = vmatprep.mubr.f32.mxu0 %v6640
  %v6642 = vand.u32 %v221, 4294901760
  %v6643 = vsub.f32 %v221, %v6642
  %v6644 = vand.u32 %v6643, 4294901760
  %6645 = vmatmul.mubr.f32.gmra.mxu0 %v6644
  %v6646 = vpop.f32.mrf.mxu0
  %v6647 = vadd.f32 %v6400, %v6646
  %v6648 = vpop.f32.mrf.mxu0
  %v6649 = vand.u32 %v226, 4294901760
  %v6650 = vsub.f32 %v226, %v6649
  %v6651 = vand.u32 %v6650, 4294901760
  %6652 = vmatprep.mubr.f32.mxu0 %v6651
  %v6653 = vand.u32 %v225, 4294901760
  %v6654 = vsub.f32 %v225, %v6653
  %v6655 = vand.u32 %v6654, 4294901760
  %6656 = vmatmul.mubr.f32.gmra.mxu0 %v6655
  %v6657 = vpop.f32.mrf.mxu0
  %v6658 = vadd.f32 %v6409, %v6657
  %v6659 = vpop.f32.mrf.mxu0
  %v6660 = vand.u32 %v230, 4294901760
  %v6661 = vsub.f32 %v230, %v6660
  %v6662 = vand.u32 %v6661, 4294901760
  %6663 = vmatprep.mubr.f32.mxu0 %v6662
  %v6664 = vand.u32 %v229, 4294901760
  %v6665 = vsub.f32 %v229, %v6664
  %v6666 = vand.u32 %v6665, 4294901760
  %6667 = vmatmul.mubr.f32.gmra.mxu0 %v6666
  %v6668 = vpop.f32.mrf.mxu0
  %v6669 = vadd.f32 %v6418, %v6668
  %v6670 = vpop.f32.mrf.mxu0
  %v6671 = vand.u32 %v234, 4294901760
  %v6672 = vsub.f32 %v234, %v6671
  %v6673 = vand.u32 %v6672, 4294901760
  %6674 = vmatprep.mubr.f32.mxu0 %v6673
  %v6675 = vand.u32 %v233, 4294901760
  %v6676 = vsub.f32 %v233, %v6675
  %v6677 = vand.u32 %v6676, 4294901760
  %6678 = vmatmul.mubr.f32.gmra.mxu0 %v6677
  %v6679 = vpop.f32.mrf.mxu0
  %v6680 = vadd.f32 %v6427, %v6679
  %v6681 = vpop.f32.mrf.mxu0
  %v6682 = vand.u32 %v238, 4294901760
  %v6683 = vsub.f32 %v238, %v6682
  %v6684 = vand.u32 %v6683, 4294901760
  %6685 = vmatprep.mubr.f32.mxu0 %v6684
  %v6686 = vand.u32 %v237, 4294901760
  %v6687 = vsub.f32 %v237, %v6686
  %v6688 = vand.u32 %v6687, 4294901760
  %6689 = vmatmul.mubr.f32.gmra.mxu0 %v6688
  %v6690 = vpop.f32.mrf.mxu0
  %v6691 = vadd.f32 %v6436, %v6690
  %v6692 = vpop.f32.mrf.mxu0
  %v6693 = vand.u32 %v242, 4294901760
  %v6694 = vsub.f32 %v242, %v6693
  %v6695 = vand.u32 %v6694, 4294901760
  %6696 = vmatprep.mubr.f32.mxu0 %v6695
  %v6697 = vand.u32 %v241, 4294901760
  %v6698 = vsub.f32 %v241, %v6697
  %v6699 = vand.u32 %v6698, 4294901760
  %6700 = vmatmul.mubr.f32.gmra.mxu0 %v6699
  %v6701 = vpop.f32.mrf.mxu0
  %v6702 = vadd.f32 %v6445, %v6701
  %v6703 = vpop.f32.mrf.mxu0
  %v6704 = vand.u32 %v246, 4294901760
  %v6705 = vsub.f32 %v246, %v6704
  %v6706 = vand.u32 %v6705, 4294901760
  %6707 = vmatprep.mubr.f32.mxu0 %v6706
  %v6708 = vand.u32 %v245, 4294901760
  %v6709 = vsub.f32 %v245, %v6708
  %v6710 = vand.u32 %v6709, 4294901760
  %6711 = vmatmul.mubr.f32.gmra.mxu0 %v6710
  %v6712 = vpop.f32.mrf.mxu0
  %v6713 = vadd.f32 %v6454, %v6712
  %v6714 = vpop.f32.mrf.mxu0
  %v6715 = vand.u32 %v250, 4294901760
  %v6716 = vsub.f32 %v250, %v6715
  %v6717 = vand.u32 %v6716, 4294901760
  %6718 = vmatprep.mubr.f32.mxu0 %v6717
  %v6719 = vand.u32 %v249, 4294901760
  %v6720 = vsub.f32 %v249, %v6719
  %v6721 = vand.u32 %v6720, 4294901760
  %6722 = vmatmul.mubr.f32.gmra.mxu0 %v6721
  %v6723 = vpop.f32.mrf.mxu0
  %v6724 = vadd.f32 %v6463, %v6723
  %v6725 = vpop.f32.mrf.mxu0
  %v6726 = vand.u32 %v254, 4294901760
  %v6727 = vsub.f32 %v254, %v6726
  %v6728 = vand.u32 %v6727, 4294901760
  %6729 = vmatprep.mubr.f32.mxu0 %v6728
  %v6730 = vand.u32 %v253, 4294901760
  %v6731 = vsub.f32 %v253, %v6730
  %v6732 = vand.u32 %v6731, 4294901760
  %6733 = vmatmul.mubr.f32.gmra.mxu0 %v6732
  %v6734 = vpop.f32.mrf.mxu0
  %v6735 = vadd.f32 %v6472, %v6734
  %v6736 = vpop.f32.mrf.mxu0
  %v6737 = vand.u32 %v258, 4294901760
  %v6738 = vsub.f32 %v258, %v6737
  %v6739 = vand.u32 %v6738, 4294901760
  %6740 = vmatprep.mubr.f32.mxu0 %v6739
  %v6741 = vand.u32 %v257, 4294901760
  %v6742 = vsub.f32 %v257, %v6741
  %v6743 = vand.u32 %v6742, 4294901760
  %6744 = vmatmul.mubr.f32.gmra.mxu0 %v6743
  %v6745 = vpop.f32.mrf.mxu0
  %v6746 = vadd.f32 %v6481, %v6745
  %v6747 = vpop.f32.mrf.mxu0
  %v6748 = vand.u32 %v262, 4294901760
  %v6749 = vsub.f32 %v262, %v6748
  %v6750 = vand.u32 %v6749, 4294901760
  %6751 = vmatprep.mubr.f32.mxu0 %v6750
  %v6752 = vand.u32 %v261, 4294901760
  %v6753 = vsub.f32 %v261, %v6752
  %v6754 = vand.u32 %v6753, 4294901760
  %6755 = vmatmul.mubr.f32.gmra.mxu0 %v6754
  %v6756 = vpop.f32.mrf.mxu0
  %v6757 = vadd.f32 %v6490, %v6756
  %v6758 = vpop.f32.mrf.mxu0
  %v6759 = vand.u32 %v266, 4294901760
  %v6760 = vsub.f32 %v266, %v6759
  %v6761 = vand.u32 %v6760, 4294901760
  %6762 = vmatprep.mubr.f32.mxu0 %v6761
  %v6763 = vand.u32 %v265, 4294901760
  %v6764 = vsub.f32 %v265, %v6763
  %v6765 = vand.u32 %v6764, 4294901760
  %6766 = vmatmul.mubr.f32.gmra.mxu0 %v6765
  %v6767 = vpop.f32.mrf.mxu0
  %v6768 = vadd.f32 %v6499, %v6767
  %v6769 = vpop.f32.mrf.mxu0
  %v6770 = vand.u32 %v270, 4294901760
  %v6771 = vsub.f32 %v270, %v6770
  %v6772 = vand.u32 %v6771, 4294901760
  %6773 = vmatprep.mubr.f32.mxu0 %v6772
  %v6774 = vand.u32 %v269, 4294901760
  %v6775 = vsub.f32 %v269, %v6774
  %v6776 = vand.u32 %v6775, 4294901760
  %6777 = vmatmul.mubr.f32.gmra.mxu0 %v6776
  %v6778 = vpop.f32.mrf.mxu0
  %v6779 = vadd.f32 %v6508, %v6778
  %v6780 = vpop.f32.mrf.mxu0
  %v6781 = vand.u32 %v274, 4294901760
  %v6782 = vsub.f32 %v274, %v6781
  %v6783 = vand.u32 %v6782, 4294901760
  %6784 = vmatprep.mubr.f32.mxu0 %v6783
  %v6785 = vand.u32 %v273, 4294901760
  %v6786 = vsub.f32 %v273, %v6785
  %v6787 = vand.u32 %v6786, 4294901760
  %6788 = vmatmul.mubr.f32.gmra.mxu0 %v6787
  %v6789 = vpop.f32.mrf.mxu0
  %v6790 = vadd.f32 %v6517, %v6789
  %v6791 = vpop.f32.mrf.mxu0
  %6792 = vdwg.mxu0
  %6793 = vmatprep.subr.mxu0 0.0
  %v6794 = vand.u32 %v3854, 4294901760
  %v6795 = vsub.f32 %v3854, %v6794
  %v6796 = vand.u32 %v6795, 4294901760
  %6797 = vmatpush1.msra.mxu0 %v6796
  %6798 = vmatprep.subr.mxu0 0.0
  %v6799 = vand.u32 %v3853, 4294901760
  %v6800 = vsub.f32 %v3853, %v6799
  %v6801 = vand.u32 %v6800, 4294901760
  %6802 = vmatpush1.msra.mxu0 %v6801
  %6803 = vmatprep.subr.mxu0 0.0
  %v6804 = vand.u32 %v3852, 4294901760
  %v6805 = vsub.f32 %v3852, %v6804
  %v6806 = vand.u32 %v6805, 4294901760
  %6807 = vmatpush1.msra.mxu0 %v6806
  %6808 = vmatprep.subr.mxu0 0.0
  %v6809 = vand.u32 %v3851, 4294901760
  %v6810 = vsub.f32 %v3851, %v6809
  %v6811 = vand.u32 %v6810, 4294901760
  %6812 = vmatpush1.msra.mxu0 %v6811
  %6813 = vmatprep.subr.mxu0 0.0
  %v6814 = vand.u32 %v3850, 4294901760
  %v6815 = vsub.f32 %v3850, %v6814
  %v6816 = vand.u32 %v6815, 4294901760
  %6817 = vmatpush1.msra.mxu0 %v6816
  %6818 = vmatprep.subr.mxu0 0.0
  %v6819 = vand.u32 %v3849, 4294901760
  %v6820 = vsub.f32 %v3849, %v6819
  %v6821 = vand.u32 %v6820, 4294901760
  %6822 = vmatpush1.msra.mxu0 %v6821
  %6823 = vmatprep.subr.mxu0 0.0
  %v6824 = vand.u32 %v3848, 4294901760
  %v6825 = vsub.f32 %v3848, %v6824
  %v6826 = vand.u32 %v6825, 4294901760
  %6827 = vmatpush1.msra.mxu0 %v6826
  %6828 = vmatprep.subr.mxu0 0.0
  %v6829 = vand.u32 %v3847, 4294901760
  %v6830 = vsub.f32 %v3847, %v6829
  %v6831 = vand.u32 %v6830, 4294901760
  %6832 = vmatpush1.msra.mxu0 %v6831
  %6833 = vmatprep.subr.mxu0 0.0
  %v6834 = vand.u32 %v3846, 4294901760
  %v6835 = vsub.f32 %v3846, %v6834
  %v6836 = vand.u32 %v6835, 4294901760
  %6837 = vmatpush1.msra.mxu0 %v6836
  %6838 = vmatprep.subr.mxu0 0.0
  %v6839 = vand.u32 %v3845, 4294901760
  %v6840 = vsub.f32 %v3845, %v6839
  %v6841 = vand.u32 %v6840, 4294901760
  %6842 = vmatpush1.msra.mxu0 %v6841
  %6843 = vmatprep.subr.mxu0 0.0
  %v6844 = vand.u32 %v3844, 4294901760
  %v6845 = vsub.f32 %v3844, %v6844
  %v6846 = vand.u32 %v6845, 4294901760
  %6847 = vmatpush1.msra.mxu0 %v6846
  %6848 = vmatprep.subr.mxu0 0.0
  %v6849 = vand.u32 %v3843, 4294901760
  %v6850 = vsub.f32 %v3843, %v6849
  %v6851 = vand.u32 %v6850, 4294901760
  %6852 = vmatpush1.msra.mxu0 %v6851
  %6853 = vmatprep.subr.mxu0 0.0
  %v6854 = vand.u32 %v3842, 4294901760
  %v6855 = vsub.f32 %v3842, %v6854
  %v6856 = vand.u32 %v6855, 4294901760
  %6857 = vmatpush1.msra.mxu0 %v6856
  %6858 = vmatprep.subr.mxu0 0.0
  %v6859 = vand.u32 %v3841, 4294901760
  %v6860 = vsub.f32 %v3841, %v6859
  %v6861 = vand.u32 %v6860, 4294901760
  %6862 = vmatpush1.msra.mxu0 %v6861
  %6863 = vmatprep.subr.mxu0 0.0
  %v6864 = vand.u32 %v3840, 4294901760
  %v6865 = vsub.f32 %v3840, %v6864
  %v6866 = vand.u32 %v6865, 4294901760
  %6867 = vmatpush1.msra.mxu0 %v6866
  %6868 = vmatprep.subr.mxu0 0.0
  %v6869 = vand.u32 %v3839, 4294901760
  %v6870 = vsub.f32 %v3839, %v6869
  %v6871 = vand.u32 %v6870, 4294901760
  %6872 = vmatpush1.msra.mxu0 %v6871
  %6873 = vmatprep.subr.mxu0 0.0
  %v6874 = vand.u32 %v3870, 4294901760
  %v6875 = vsub.f32 %v3870, %v6874
  %v6876 = vand.u32 %v6875, 4294901760
  %6877 = vmatpush2.msra.mxu0 %v6876
  %6878 = vmatprep.subr.mxu0 0.0
  %v6879 = vand.u32 %v3869, 4294901760
  %v6880 = vsub.f32 %v3869, %v6879
  %v6881 = vand.u32 %v6880, 4294901760
  %6882 = vmatpush2.msra.mxu0 %v6881
  %6883 = vmatprep.subr.mxu0 0.0
  %v6884 = vand.u32 %v3868, 4294901760
  %v6885 = vsub.f32 %v3868, %v6884
  %v6886 = vand.u32 %v6885, 4294901760
  %6887 = vmatpush2.msra.mxu0 %v6886
  %6888 = vmatprep.subr.mxu0 0.0
  %v6889 = vand.u32 %v3867, 4294901760
  %v6890 = vsub.f32 %v3867, %v6889
  %v6891 = vand.u32 %v6890, 4294901760
  %6892 = vmatpush2.msra.mxu0 %v6891
  %6893 = vmatprep.subr.mxu0 0.0
  %v6894 = vand.u32 %v3866, 4294901760
  %v6895 = vsub.f32 %v3866, %v6894
  %v6896 = vand.u32 %v6895, 4294901760
  %6897 = vmatpush2.msra.mxu0 %v6896
  %6898 = vmatprep.subr.mxu0 0.0
  %v6899 = vand.u32 %v3865, 4294901760
  %v6900 = vsub.f32 %v3865, %v6899
  %v6901 = vand.u32 %v6900, 4294901760
  %6902 = vmatpush2.msra.mxu0 %v6901
  %6903 = vmatprep.subr.mxu0 0.0
  %v6904 = vand.u32 %v3864, 4294901760
  %v6905 = vsub.f32 %v3864, %v6904
  %v6906 = vand.u32 %v6905, 4294901760
  %6907 = vmatpush2.msra.mxu0 %v6906
  %6908 = vmatprep.subr.mxu0 0.0
  %v6909 = vand.u32 %v3863, 4294901760
  %v6910 = vsub.f32 %v3863, %v6909
  %v6911 = vand.u32 %v6910, 4294901760
  %6912 = vmatpush2.msra.mxu0 %v6911
  %6913 = vmatprep.subr.mxu0 0.0
  %v6914 = vand.u32 %v3862, 4294901760
  %v6915 = vsub.f32 %v3862, %v6914
  %v6916 = vand.u32 %v6915, 4294901760
  %6917 = vmatpush2.msra.mxu0 %v6916
  %6918 = vmatprep.subr.mxu0 0.0
  %v6919 = vand.u32 %v3861, 4294901760
  %v6920 = vsub.f32 %v3861, %v6919
  %v6921 = vand.u32 %v6920, 4294901760
  %6922 = vmatpush2.msra.mxu0 %v6921
  %6923 = vmatprep.subr.mxu0 0.0
  %v6924 = vand.u32 %v3860, 4294901760
  %v6925 = vsub.f32 %v3860, %v6924
  %v6926 = vand.u32 %v6925, 4294901760
  %6927 = vmatpush2.msra.mxu0 %v6926
  %6928 = vmatprep.subr.mxu0 0.0
  %v6929 = vand.u32 %v3859, 4294901760
  %v6930 = vsub.f32 %v3859, %v6929
  %v6931 = vand.u32 %v6930, 4294901760
  %6932 = vmatpush2.msra.mxu0 %v6931
  %6933 = vmatprep.subr.mxu0 0.0
  %v6934 = vand.u32 %v3858, 4294901760
  %v6935 = vsub.f32 %v3858, %v6934
  %v6936 = vand.u32 %v6935, 4294901760
  %6937 = vmatpush2.msra.mxu0 %v6936
  %6938 = vmatprep.subr.mxu0 0.0
  %v6939 = vand.u32 %v3857, 4294901760
  %v6940 = vsub.f32 %v3857, %v6939
  %v6941 = vand.u32 %v6940, 4294901760
  %6942 = vmatpush2.msra.mxu0 %v6941
  %6943 = vmatprep.subr.mxu0 0.0
  %v6944 = vand.u32 %v3856, 4294901760
  %v6945 = vsub.f32 %v3856, %v6944
  %v6946 = vand.u32 %v6945, 4294901760
  %6947 = vmatpush2.msra.mxu0 %v6946
  %6948 = vmatprep.subr.mxu0 0.0
  %v6949 = vand.u32 %v3855, 4294901760
  %v6950 = vsub.f32 %v3855, %v6949
  %v6951 = vand.u32 %v6950, 4294901760
  %6952 = vmatpush2.msra.mxu0 %v6951
  %v6953 = vand.u32 %v214, 4294901760
  %6954 = vmatprep.mubr.f32.mxu0 %v6953
  %v6955 = vand.u32 %v213, 4294901760
  %6956 = vmatmul.mubr.f32.gmra.mxu0 %v6955
  %v6957 = vpop.f32.mrf.mxu0
  %v6958 = vadd.f32 %v6625, %v6957
  %v6959 = vpop.f32.mrf.mxu0
  %v6960 = vand.u32 %v218, 4294901760
  %6961 = vmatprep.mubr.f32.mxu0 %v6960
  %v6962 = vand.u32 %v217, 4294901760
  %6963 = vmatmul.mubr.f32.gmra.mxu0 %v6962
  %v6964 = vpop.f32.mrf.mxu0
  %v6965 = vadd.f32 %v6636, %v6964
  %v6966 = vpop.f32.mrf.mxu0
  %v6967 = vand.u32 %v222, 4294901760
  %6968 = vmatprep.mubr.f32.mxu0 %v6967
  %v6969 = vand.u32 %v221, 4294901760
  %6970 = vmatmul.mubr.f32.gmra.mxu0 %v6969
  %v6971 = vpop.f32.mrf.mxu0
  %v6972 = vadd.f32 %v6647, %v6971
  %v6973 = vpop.f32.mrf.mxu0
  %v6974 = vand.u32 %v226, 4294901760
  %6975 = vmatprep.mubr.f32.mxu0 %v6974
  %v6976 = vand.u32 %v225, 4294901760
  %6977 = vmatmul.mubr.f32.gmra.mxu0 %v6976
  %v6978 = vpop.f32.mrf.mxu0
  %v6979 = vadd.f32 %v6658, %v6978
  %v6980 = vpop.f32.mrf.mxu0
  %v6981 = vand.u32 %v230, 4294901760
  %6982 = vmatprep.mubr.f32.mxu0 %v6981
  %v6983 = vand.u32 %v229, 4294901760
  %6984 = vmatmul.mubr.f32.gmra.mxu0 %v6983
  %v6985 = vpop.f32.mrf.mxu0
  %v6986 = vadd.f32 %v6669, %v6985
  %v6987 = vpop.f32.mrf.mxu0
  %v6988 = vand.u32 %v234, 4294901760
  %6989 = vmatprep.mubr.f32.mxu0 %v6988
  %v6990 = vand.u32 %v233, 4294901760
  %6991 = vmatmul.mubr.f32.gmra.mxu0 %v6990
  %v6992 = vpop.f32.mrf.mxu0
  %v6993 = vadd.f32 %v6680, %v6992
  %v6994 = vpop.f32.mrf.mxu0
  %v6995 = vand.u32 %v238, 4294901760
  %6996 = vmatprep.mubr.f32.mxu0 %v6995
  %v6997 = vand.u32 %v237, 4294901760
  %6998 = vmatmul.mubr.f32.gmra.mxu0 %v6997
  %v6999 = vpop.f32.mrf.mxu0
  %v7000 = vadd.f32 %v6691, %v6999
  %v7001 = vpop.f32.mrf.mxu0
  %v7002 = vand.u32 %v242, 4294901760
  %7003 = vmatprep.mubr.f32.mxu0 %v7002
  %v7004 = vand.u32 %v241, 4294901760
  %7005 = vmatmul.mubr.f32.gmra.mxu0 %v7004
  %v7006 = vpop.f32.mrf.mxu0
  %v7007 = vadd.f32 %v6702, %v7006
  %v7008 = vpop.f32.mrf.mxu0
  %v7009 = vand.u32 %v246, 4294901760
  %7010 = vmatprep.mubr.f32.mxu0 %v7009
  %v7011 = vand.u32 %v245, 4294901760
  %7012 = vmatmul.mubr.f32.gmra.mxu0 %v7011
  %v7013 = vpop.f32.mrf.mxu0
  %v7014 = vadd.f32 %v6713, %v7013
  %v7015 = vpop.f32.mrf.mxu0
  %v7016 = vand.u32 %v250, 4294901760
  %7017 = vmatprep.mubr.f32.mxu0 %v7016
  %v7018 = vand.u32 %v249, 4294901760
  %7019 = vmatmul.mubr.f32.gmra.mxu0 %v7018
  %v7020 = vpop.f32.mrf.mxu0
  %v7021 = vadd.f32 %v6724, %v7020
  %v7022 = vpop.f32.mrf.mxu0
  %v7023 = vand.u32 %v254, 4294901760
  %7024 = vmatprep.mubr.f32.mxu0 %v7023
  %v7025 = vand.u32 %v253, 4294901760
  %7026 = vmatmul.mubr.f32.gmra.mxu0 %v7025
  %v7027 = vpop.f32.mrf.mxu0
  %v7028 = vadd.f32 %v6735, %v7027
  %v7029 = vpop.f32.mrf.mxu0
  %v7030 = vand.u32 %v258, 4294901760
  %7031 = vmatprep.mubr.f32.mxu0 %v7030
  %v7032 = vand.u32 %v257, 4294901760
  %7033 = vmatmul.mubr.f32.gmra.mxu0 %v7032
  %v7034 = vpop.f32.mrf.mxu0
  %v7035 = vadd.f32 %v6746, %v7034
  %v7036 = vpop.f32.mrf.mxu0
  %v7037 = vand.u32 %v262, 4294901760
  %7038 = vmatprep.mubr.f32.mxu0 %v7037
  %v7039 = vand.u32 %v261, 4294901760
  %7040 = vmatmul.mubr.f32.gmra.mxu0 %v7039
  %v7041 = vpop.f32.mrf.mxu0
  %v7042 = vadd.f32 %v6757, %v7041
  %v7043 = vpop.f32.mrf.mxu0
  %v7044 = vand.u32 %v266, 4294901760
  %7045 = vmatprep.mubr.f32.mxu0 %v7044
  %v7046 = vand.u32 %v265, 4294901760
  %7047 = vmatmul.mubr.f32.gmra.mxu0 %v7046
  %v7048 = vpop.f32.mrf.mxu0
  %v7049 = vadd.f32 %v6768, %v7048
  %v7050 = vpop.f32.mrf.mxu0
  %v7051 = vand.u32 %v270, 4294901760
  %7052 = vmatprep.mubr.f32.mxu0 %v7051
  %v7053 = vand.u32 %v269, 4294901760
  %7054 = vmatmul.mubr.f32.gmra.mxu0 %v7053
  %v7055 = vpop.f32.mrf.mxu0
  %v7056 = vadd.f32 %v6779, %v7055
  %v7057 = vpop.f32.mrf.mxu0
  %v7058 = vand.u32 %v274, 4294901760
  %7059 = vmatprep.mubr.f32.mxu0 %v7058
  %v7060 = vand.u32 %v273, 4294901760
  %7061 = vmatmul.mubr.f32.gmra.mxu0 %v7060
  %v7062 = vpop.f32.mrf.mxu0
  %v7063 = vadd.f32 %v6790, %v7062
  %v7064 = vpop.f32.mrf.mxu0
  %7065 = vdwg.mxu0
  %7066 = vmatprep.subr.mxu0 0.0
  %v7067 = vand.u32 %v3854, 4294901760
  %7068 = vmatpush1.msra.mxu0 %v7067
  %7069 = vmatprep.subr.mxu0 0.0
  %v7070 = vand.u32 %v3853, 4294901760
  %7071 = vmatpush1.msra.mxu0 %v7070
  %7072 = vmatprep.subr.mxu0 0.0
  %v7073 = vand.u32 %v3852, 4294901760
  %7074 = vmatpush1.msra.mxu0 %v7073
  %7075 = vmatprep.subr.mxu0 0.0
  %v7076 = vand.u32 %v3851, 4294901760
  %7077 = vmatpush1.msra.mxu0 %v7076
  %7078 = vmatprep.subr.mxu0 0.0
  %v7079 = vand.u32 %v3850, 4294901760
  %7080 = vmatpush1.msra.mxu0 %v7079
  %7081 = vmatprep.subr.mxu0 0.0
  %v7082 = vand.u32 %v3849, 4294901760
  %7083 = vmatpush1.msra.mxu0 %v7082
  %7084 = vmatprep.subr.mxu0 0.0
  %v7085 = vand.u32 %v3848, 4294901760
  %7086 = vmatpush1.msra.mxu0 %v7085
  %7087 = vmatprep.subr.mxu0 0.0
  %v7088 = vand.u32 %v3847, 4294901760
  %7089 = vmatpush1.msra.mxu0 %v7088
  %7090 = vmatprep.subr.mxu0 0.0
  %v7091 = vand.u32 %v3846, 4294901760
  %7092 = vmatpush1.msra.mxu0 %v7091
  %7093 = vmatprep.subr.mxu0 0.0
  %v7094 = vand.u32 %v3845, 4294901760
  %7095 = vmatpush1.msra.mxu0 %v7094
  %7096 = vmatprep.subr.mxu0 0.0
  %v7097 = vand.u32 %v3844, 4294901760
  %7098 = vmatpush1.msra.mxu0 %v7097
  %7099 = vmatprep.subr.mxu0 0.0
  %v7100 = vand.u32 %v3843, 4294901760
  %7101 = vmatpush1.msra.mxu0 %v7100
  %7102 = vmatprep.subr.mxu0 0.0
  %v7103 = vand.u32 %v3842, 4294901760
  %7104 = vmatpush1.msra.mxu0 %v7103
  %7105 = vmatprep.subr.mxu0 0.0
  %v7106 = vand.u32 %v3841, 4294901760
  %7107 = vmatpush1.msra.mxu0 %v7106
  %7108 = vmatprep.subr.mxu0 0.0
  %v7109 = vand.u32 %v3840, 4294901760
  %7110 = vmatpush1.msra.mxu0 %v7109
  %7111 = vmatprep.subr.mxu0 0.0
  %v7112 = vand.u32 %v3839, 4294901760
  %7113 = vmatpush1.msra.mxu0 %v7112
  %7114 = vmatprep.subr.mxu0 0.0
  %v7115 = vand.u32 %v3870, 4294901760
  %7116 = vmatpush2.msra.mxu0 %v7115
  %7117 = vmatprep.subr.mxu0 0.0
  %v7118 = vand.u32 %v3869, 4294901760
  %7119 = vmatpush2.msra.mxu0 %v7118
  %7120 = vmatprep.subr.mxu0 0.0
  %v7121 = vand.u32 %v3868, 4294901760
  %7122 = vmatpush2.msra.mxu0 %v7121
  %7123 = vmatprep.subr.mxu0 0.0
  %v7124 = vand.u32 %v3867, 4294901760
  %7125 = vmatpush2.msra.mxu0 %v7124
  %7126 = vmatprep.subr.mxu0 0.0
  %v7127 = vand.u32 %v3866, 4294901760
  %7128 = vmatpush2.msra.mxu0 %v7127
  %7129 = vmatprep.subr.mxu0 0.0
  %v7130 = vand.u32 %v3865, 4294901760
  %7131 = vmatpush2.msra.mxu0 %v7130
  %7132 = vmatprep.subr.mxu0 0.0
  %v7133 = vand.u32 %v3864, 4294901760
  %7134 = vmatpush2.msra.mxu0 %v7133
  %7135 = vmatprep.subr.mxu0 0.0
  %v7136 = vand.u32 %v3863, 4294901760
  %7137 = vmatpush2.msra.mxu0 %v7136
  %7138 = vmatprep.subr.mxu0 0.0
  %v7139 = vand.u32 %v3862, 4294901760
  %7140 = vmatpush2.msra.mxu0 %v7139
  %7141 = vmatprep.subr.mxu0 0.0
  %v7142 = vand.u32 %v3861, 4294901760
  %7143 = vmatpush2.msra.mxu0 %v7142
  %7144 = vmatprep.subr.mxu0 0.0
  %v7145 = vand.u32 %v3860, 4294901760
  %7146 = vmatpush2.msra.mxu0 %v7145
  %7147 = vmatprep.subr.mxu0 0.0
  %v7148 = vand.u32 %v3859, 4294901760
  %7149 = vmatpush2.msra.mxu0 %v7148
  %7150 = vmatprep.subr.mxu0 0.0
  %v7151 = vand.u32 %v3858, 4294901760
  %7152 = vmatpush2.msra.mxu0 %v7151
  %7153 = vmatprep.subr.mxu0 0.0
  %v7154 = vand.u32 %v3857, 4294901760
  %7155 = vmatpush2.msra.mxu0 %v7154
  %7156 = vmatprep.subr.mxu0 0.0
  %v7157 = vand.u32 %v3856, 4294901760
  %7158 = vmatpush2.msra.mxu0 %v7157
  %7159 = vmatprep.subr.mxu0 0.0
  %v7160 = vand.u32 %v3855, 4294901760
  %7161 = vmatpush2.msra.mxu0 %v7160
  %v7162 = vand.u32 %v214, 4294901760
  %7163 = vmatprep.mubr.f32.mxu0 %v7162
  %v7164 = vand.u32 %v213, 4294901760
  %7165 = vmatmul.mubr.f32.gmra.mxu0 %v7164
  %v7166 = vpop.f32.mrf.mxu0
  %v7167 = vadd.f32 %v6958, %v7166
  %v7168 = vpop.f32.mrf.mxu0
  %v7169 = vand.u32 %v218, 4294901760
  %7170 = vmatprep.mubr.f32.mxu0 %v7169
  %v7171 = vand.u32 %v217, 4294901760
  %7172 = vmatmul.mubr.f32.gmra.mxu0 %v7171
  %v7173 = vpop.f32.mrf.mxu0
  %v7174 = vadd.f32 %v6965, %v7173
  %v7175 = vpop.f32.mrf.mxu0
  %v7176 = vand.u32 %v222, 4294901760
  %7177 = vmatprep.mubr.f32.mxu0 %v7176
  %v7178 = vand.u32 %v221, 4294901760
  %7179 = vmatmul.mubr.f32.gmra.mxu0 %v7178
  %v7180 = vpop.f32.mrf.mxu0
  %v7181 = vadd.f32 %v6972, %v7180
  %v7182 = vpop.f32.mrf.mxu0
  %v7183 = vand.u32 %v226, 4294901760
  %7184 = vmatprep.mubr.f32.mxu0 %v7183
  %v7185 = vand.u32 %v225, 4294901760
  %7186 = vmatmul.mubr.f32.gmra.mxu0 %v7185
  %v7187 = vpop.f32.mrf.mxu0
  %v7188 = vadd.f32 %v6979, %v7187
  %v7189 = vpop.f32.mrf.mxu0
  %v7190 = vand.u32 %v230, 4294901760
  %7191 = vmatprep.mubr.f32.mxu0 %v7190
  %v7192 = vand.u32 %v229, 4294901760
  %7193 = vmatmul.mubr.f32.gmra.mxu0 %v7192
  %v7194 = vpop.f32.mrf.mxu0
  %v7195 = vadd.f32 %v6986, %v7194
  %v7196 = vpop.f32.mrf.mxu0
  %v7197 = vand.u32 %v234, 4294901760
  %7198 = vmatprep.mubr.f32.mxu0 %v7197
  %v7199 = vand.u32 %v233, 4294901760
  %7200 = vmatmul.mubr.f32.gmra.mxu0 %v7199
  %v7201 = vpop.f32.mrf.mxu0
  %v7202 = vadd.f32 %v6993, %v7201
  %v7203 = vpop.f32.mrf.mxu0
  %v7204 = vand.u32 %v238, 4294901760
  %7205 = vmatprep.mubr.f32.mxu0 %v7204
  %v7206 = vand.u32 %v237, 4294901760
  %7207 = vmatmul.mubr.f32.gmra.mxu0 %v7206
  %v7208 = vpop.f32.mrf.mxu0
  %v7209 = vadd.f32 %v7000, %v7208
  %v7210 = vpop.f32.mrf.mxu0
  %v7211 = vand.u32 %v242, 4294901760
  %7212 = vmatprep.mubr.f32.mxu0 %v7211
  %v7213 = vand.u32 %v241, 4294901760
  %7214 = vmatmul.mubr.f32.gmra.mxu0 %v7213
  %v7215 = vpop.f32.mrf.mxu0
  %v7216 = vadd.f32 %v7007, %v7215
  %v7217 = vpop.f32.mrf.mxu0
  %v7218 = vand.u32 %v246, 4294901760
  %7219 = vmatprep.mubr.f32.mxu0 %v7218
  %v7220 = vand.u32 %v245, 4294901760
  %7221 = vmatmul.mubr.f32.gmra.mxu0 %v7220
  %v7222 = vpop.f32.mrf.mxu0
  %v7223 = vadd.f32 %v7014, %v7222
  %v7224 = vpop.f32.mrf.mxu0
  %v7225 = vand.u32 %v250, 4294901760
  %7226 = vmatprep.mubr.f32.mxu0 %v7225
  %v7227 = vand.u32 %v249, 4294901760
  %7228 = vmatmul.mubr.f32.gmra.mxu0 %v7227
  %v7229 = vpop.f32.mrf.mxu0
  %v7230 = vadd.f32 %v7021, %v7229
  %v7231 = vpop.f32.mrf.mxu0
  %v7232 = vand.u32 %v254, 4294901760
  %7233 = vmatprep.mubr.f32.mxu0 %v7232
  %v7234 = vand.u32 %v253, 4294901760
  %7235 = vmatmul.mubr.f32.gmra.mxu0 %v7234
  %v7236 = vpop.f32.mrf.mxu0
  %v7237 = vadd.f32 %v7028, %v7236
  %v7238 = vpop.f32.mrf.mxu0
  %v7239 = vand.u32 %v258, 4294901760
  %7240 = vmatprep.mubr.f32.mxu0 %v7239
  %v7241 = vand.u32 %v257, 4294901760
  %7242 = vmatmul.mubr.f32.gmra.mxu0 %v7241
  %v7243 = vpop.f32.mrf.mxu0
  %v7244 = vadd.f32 %v7035, %v7243
  %v7245 = vpop.f32.mrf.mxu0
  %v7246 = vand.u32 %v262, 4294901760
  %7247 = vmatprep.mubr.f32.mxu0 %v7246
  %v7248 = vand.u32 %v261, 4294901760
  %7249 = vmatmul.mubr.f32.gmra.mxu0 %v7248
  %v7250 = vpop.f32.mrf.mxu0
  %v7251 = vadd.f32 %v7042, %v7250
  %v7252 = vpop.f32.mrf.mxu0
  %v7253 = vand.u32 %v266, 4294901760
  %7254 = vmatprep.mubr.f32.mxu0 %v7253
  %v7255 = vand.u32 %v265, 4294901760
  %7256 = vmatmul.mubr.f32.gmra.mxu0 %v7255
  %v7257 = vpop.f32.mrf.mxu0
  %v7258 = vadd.f32 %v7049, %v7257
  %v7259 = vpop.f32.mrf.mxu0
  %v7260 = vand.u32 %v270, 4294901760
  %7261 = vmatprep.mubr.f32.mxu0 %v7260
  %v7262 = vand.u32 %v269, 4294901760
  %7263 = vmatmul.mubr.f32.gmra.mxu0 %v7262
  %v7264 = vpop.f32.mrf.mxu0
  %v7265 = vadd.f32 %v7056, %v7264
  %v7266 = vpop.f32.mrf.mxu0
  %v7267 = vand.u32 %v274, 4294901760
  %7268 = vmatprep.mubr.f32.mxu0 %v7267
  %v7269 = vand.u32 %v273, 4294901760
  %7270 = vmatmul.mubr.f32.gmra.mxu0 %v7269
  %v7271 = vpop.f32.mrf.mxu0
  %v7272 = vadd.f32 %v7063, %v7271
  %v7273 = vpop.f32.mrf.mxu0
  %7274 = vdwg.mxu0
  %v7275 = vadd.f32 %v3791, %v7167
  %v7276 = vadd.f32 %v3792, %v7174
  %v7277 = vadd.f32 %v3793, %v7181
  %v7278 = vadd.f32 %v3794, %v7188
  %v7279 = vadd.f32 %v3795, %v7195
  %v7280 = vadd.f32 %v3796, %v7202
  %v7281 = vadd.f32 %v3797, %v7209
  %v7282 = vadd.f32 %v3798, %v7216
  %v7283 = vadd.f32 %v3799, %v7223
  %v7284 = vadd.f32 %v3800, %v7230
  %v7285 = vadd.f32 %v3801, %v7237
  %v7286 = vadd.f32 %v3802, %v7244
  %v7287 = vadd.f32 %v3803, %v7251
  %v7288 = vadd.f32 %v3804, %v7258
  %v7289 = vadd.f32 %v3805, %v7265
  %v7290 = vadd.f32 %v3806, %v7272
  %7291 = vst [vmem:[%s3] sm:$0xff] %v7275
  %7292 = vst [vmem:[%s3 + $0x8] sm:$0xff] %v7276
  %7293 = vst [vmem:[%s3 + $0x10] sm:$0xff] %v7277
  %7294 = vst [vmem:[%s3 + $0x18] sm:$0xff] %v7278
  %7295 = vst [vmem:[%s3 + $0x20] sm:$0xff] %v7279
  %7296 = vst [vmem:[%s3 + $0x28] sm:$0xff] %v7280
  %7297 = vst [vmem:[%s3 + $0x30] sm:$0xff] %v7281
  %7298 = vst [vmem:[%s3 + $0x38] sm:$0xff] %v7282
  %7299 = vst [vmem:[%s3 + $0x40] sm:$0xff] %v7283
  %7300 = vst [vmem:[%s3 + $0x48] sm:$0xff] %v7284
  %7301 = vst [vmem:[%s3 + $0x50] sm:$0xff] %v7285
  %7302 = vst [vmem:[%s3 + $0x58] sm:$0xff] %v7286
  %7303 = vst [vmem:[%s3 + $0x60] sm:$0xff] %v7287
  %7304 = vst [vmem:[%s3 + $0x68] sm:$0xff] %v7288
  %7305 = vst [vmem:[%s3 + $0x70] sm:$0xff] %v7289
  %7306 = vst [vmem:[%s3 + $0x78] sm:$0xff] %v7290
  // Predicated region
  $region14: #{jj_norm_forward.2} parent=0 // pred_check
    _
  $region15: #{jj_norm_forward.2} parent=0 // pred_check_branch
    %7308 = sbr.rel (0) target = $region17
  $region16: #{jj_norm_forward.2} parent=0 // pred_region
    _
  $region17: #{jj_norm_forward.2} parent=0 // pred_fallthru
    _
  // Predicated region
  $region18: #{jj_norm_forward.2} parent=0 // pred_check
    _
  $region19: #{jj_norm_forward.2} parent=0 // pred_check_branch
    %7310 = sbr.rel (0) target = $region21
  $region20: #{jj_norm_forward.2} parent=0 // pred_region
    _
  $region21: #{jj_norm_forward.2} parent=0 // pred_fallthru
    _
  // Predicated region
  $region22: #{jj_norm_forward.2} parent=0 // pred_check
    _
  $region23: #{jj_norm_forward.2} parent=0 // pred_check_branch
    %7312 = sbr.rel (0) target = $region25
  $region24: #{jj_norm_forward.2} parent=0 // pred_region
    _
  $region25: #{jj_norm_forward.2} parent=0 // pred_fallthru
    _
  // Predicated region
  $region26: #{jj_norm_forward.2} parent=0 // pred_check
    _
  $region27: #{jj_norm_forward.2} parent=0 // pred_check_branch
    %7314 = sbr.rel (0) target = $region29
  $region28: #{jj_norm_forward.2} parent=0 // pred_region
    _
  $region29: #{jj_norm_forward.2} parent=0 // pred_fallthru
    _

// kernel: jj_norm_forward.3
$region0: #{jj_norm_forward.3}
  #allocation0 [shape = 'u32[]', space=smem, size = 0x4, offset = 0x4, fixed_abs, tag = 'smem constant byte address 0x4 - core index']
  #allocation1 [shape = 'u32[144,128]{1,0:T(1,128)}', space=vmem, size = 0x12000, scoped, tag = 'internal scratch']
  %s0 = inlined_call_operand.vmem [shape: s32[512,1], index: 0, kind: input, shape index: {}]
  %s1 = inlined_call_operand.vmem [shape: f32[512,1], index: 1, kind: input, shape index: {}]
  %s2 = inlined_call_operand.vmem [shape: f32[512,128], index: 2, kind: input, shape index: {}]
  %s3 = inlined_call_operand.vmem [shape: f32[128,128], index: 3, kind: input, shape index: {}]
  %s4 = inlined_call_operand.vmem [shape: f32[512,128], index: 4, kind: output, shape index: {}]
  %s5 = sld [smem:[#allocation0]]
  $region26: #{jj_norm_forward.3} parent=0
    _
  %s7 = ssub.s32 1, %s5
  %s8 = scalar_select 0, %s7, %s5
  // Predicated region
  $region2: #{jj_norm_forward.3} parent=0 // pred_check
    _
  $region3: #{jj_norm_forward.3} parent=0 // pred_check_branch
    %10 = sbr.rel (0) target = $region5
  $region4: #{jj_norm_forward.3} parent=0 // pred_region
    _
  $region5: #{jj_norm_forward.3} parent=0 // pred_fallthru
    _
  // Predicated region
  $region6: #{jj_norm_forward.3} parent=0 // pred_check
    _
  $region7: #{jj_norm_forward.3} parent=0 // pred_check_branch
    %12 = sbr.rel (0) target = $region9
  $region8: #{jj_norm_forward.3} parent=0 // pred_region
    _
  $region9: #{jj_norm_forward.3} parent=0 // pred_fallthru
    _
  // Predicated region
  $region10: #{jj_norm_forward.3} parent=0 // pred_check
    _
  $region11: #{jj_norm_forward.3} parent=0 // pred_check_branch
    %14 = sbr.rel (0) target = $region13
  $region12: #{jj_norm_forward.3} parent=0 // pred_region
    _
  $region13: #{jj_norm_forward.3} parent=0 // pred_fallthru
    _
  // Predicated region
  $region14: #{jj_norm_forward.3} parent=0 // pred_check
    _
  $region15: #{jj_norm_forward.3} parent=0 // pred_check_branch
    %16 = sbr.rel (0) target = $region17
  $region16: #{jj_norm_forward.3} parent=0 // pred_region
    _
  $region17: #{jj_norm_forward.3} parent=0 // pred_fallthru
    _
  %v17 = vlaneseq
  %v18 = vand.u32 %v17, 127
  %v19 = vld [vmem:[%s0] sm:$0xff]
  %v20 = vld [vmem:[%s0 + $0x8] sm:$0xff]
  %v21 = vld [vmem:[%s0 + $0x10] sm:$0xff]
  %v22 = vld [vmem:[%s0 + $0x18] sm:$0xff]
  %v23 = vld [vmem:[%s0 + $0x20] sm:$0xff]
  %v24 = vld [vmem:[%s0 + $0x28] sm:$0xff]
  %v25 = vld [vmem:[%s0 + $0x30] sm:$0xff]
  %v26 = vld [vmem:[%s0 + $0x38] sm:$0xff]
  %v27 = vld [vmem:[%s0 + $0x40] sm:$0xff]
  %v28 = vld [vmem:[%s0 + $0x48] sm:$0xff]
  %v29 = vld [vmem:[%s0 + $0x50] sm:$0xff]
  %v30 = vld [vmem:[%s0 + $0x58] sm:$0xff]
  %v31 = vld [vmem:[%s0 + $0x60] sm:$0xff]
  %v32 = vld [vmem:[%s0 + $0x68] sm:$0xff]
  %v33 = vld [vmem:[%s0 + $0x70] sm:$0xff]
  %v34 = vld [vmem:[%s0 + $0x78] sm:$0xff]
  %v35 = vld [vmem:[%s0 + $0x80] sm:$0xff]
  %v36 = vld [vmem:[%s0 + $0x88] sm:$0xff]
  %v37 = vld [vmem:[%s0 + $0x90] sm:$0xff]
  %v38 = vld [vmem:[%s0 + $0x98] sm:$0xff]
  %v39 = vld [vmem:[%s0 + $0xa0] sm:$0xff]
  %v40 = vld [vmem:[%s0 + $0xa8] sm:$0xff]
  %v41 = vld [vmem:[%s0 + $0xb0] sm:$0xff]
  %v42 = vld [vmem:[%s0 + $0xb8] sm:$0xff]
  %v43 = vld [vmem:[%s0 + $0xc0] sm:$0xff]
  %v44 = vld [vmem:[%s0 + $0xc8] sm:$0xff]
  %v45 = vld [vmem:[%s0 + $0xd0] sm:$0xff]
  %v46 = vld [vmem:[%s0 + $0xd8] sm:$0xff]
  %v47 = vld [vmem:[%s0 + $0xe0] sm:$0xff]
  %v48 = vld [vmem:[%s0 + $0xe8] sm:$0xff]
  %v49 = vld [vmem:[%s0 + $0xf0] sm:$0xff]
  %v50 = vld [vmem:[%s0 + $0xf8] sm:$0xff]
  %v51 = vld [vmem:[%s0 + $0x100] sm:$0xff]
  %v52 = vld [vmem:[%s0 + $0x108] sm:$0xff]
  %v53 = vld [vmem:[%s0 + $0x110] sm:$0xff]
  %v54 = vld [vmem:[%s0 + $0x118] sm:$0xff]
  %v55 = vld [vmem:[%s0 + $0x120] sm:$0xff]
  %v56 = vld [vmem:[%s0 + $0x128] sm:$0xff]
  %v57 = vld [vmem:[%s0 + $0x130] sm:$0xff]
  %v58 = vld [vmem:[%s0 + $0x138] sm:$0xff]
  %v59 = vld [vmem:[%s0 + $0x140] sm:$0xff]
  %v60 = vld [vmem:[%s0 + $0x148] sm:$0xff]
  %v61 = vld [vmem:[%s0 + $0x150] sm:$0xff]
  %v62 = vld [vmem:[%s0 + $0x158] sm:$0xff]
  %v63 = vld [vmem:[%s0 + $0x160] sm:$0xff]
  %v64 = vld [vmem:[%s0 + $0x168] sm:$0xff]
  %v65 = vld [vmem:[%s0 + $0x170] sm:$0xff]
  %v66 = vld [vmem:[%s0 + $0x178] sm:$0xff]
  %v67 = vld [vmem:[%s0 + $0x180] sm:$0xff]
  %v68 = vld [vmem:[%s0 + $0x188] sm:$0xff]
  %v69 = vld [vmem:[%s0 + $0x190] sm:$0xff]
  %v70 = vld [vmem:[%s0 + $0x198] sm:$0xff]
  %v71 = vld [vmem:[%s0 + $0x1a0] sm:$0xff]
  %v72 = vld [vmem:[%s0 + $0x1a8] sm:$0xff]
  %v73 = vld [vmem:[%s0 + $0x1b0] sm:$0xff]
  %v74 = vld [vmem:[%s0 + $0x1b8] sm:$0xff]
  %v75 = vld [vmem:[%s0 + $0x1c0] sm:$0xff]
  %v76 = vld [vmem:[%s0 + $0x1c8] sm:$0xff]
  %v77 = vld [vmem:[%s0 + $0x1d0] sm:$0xff]
  %v78 = vld [vmem:[%s0 + $0x1d8] sm:$0xff]
  %v79 = vld [vmem:[%s0 + $0x1e0] sm:$0xff]
  %v80 = vld [vmem:[%s0 + $0x1e8] sm:$0xff]
  %v81 = vld [vmem:[%s0 + $0x1f0] sm:$0xff]
  %v82 = vld [vmem:[%s0 + $0x1f8] sm:$0xff]
  %83 = vset.pattern.permute.xlu0 0
  %84 = vperm.xlu0 %83, %v19
  %v85 = vpop.permute.xlu0 %84
  %86 = vset.pattern.permute.xlu0 0
  %87 = vperm.xlu0 %86, %v20
  %v88 = vpop.permute.xlu0 %87
  %89 = vset.pattern.permute.xlu0 0
  %90 = vperm.xlu0 %89, %v21
  %v91 = vpop.permute.xlu0 %90
  %92 = vset.pattern.permute.xlu0 0
  %93 = vperm.xlu0 %92, %v22
  %v94 = vpop.permute.xlu0 %93
  %95 = vset.pattern.permute.xlu0 0
  %96 = vperm.xlu0 %95, %v23
  %v97 = vpop.permute.xlu0 %96
  %98 = vset.pattern.permute.xlu0 0
  %99 = vperm.xlu0 %98, %v24
  %v100 = vpop.permute.xlu0 %99
  %101 = vset.pattern.permute.xlu0 0
  %102 = vperm.xlu0 %101, %v25
  %v103 = vpop.permute.xlu0 %102
  %104 = vset.pattern.permute.xlu0 0
  %105 = vperm.xlu0 %104, %v26
  %v106 = vpop.permute.xlu0 %105
  %107 = vset.pattern.permute.xlu0 0
  %108 = vperm.xlu0 %107, %v27
  %v109 = vpop.permute.xlu0 %108
  %110 = vset.pattern.permute.xlu0 0
  %111 = vperm.xlu0 %110, %v28
  %v112 = vpop.permute.xlu0 %111
  %113 = vset.pattern.permute.xlu0 0
  %114 = vperm.xlu0 %113, %v29
  %v115 = vpop.permute.xlu0 %114
  %116 = vset.pattern.permute.xlu0 0
  %117 = vperm.xlu0 %116, %v30
  %v118 = vpop.permute.xlu0 %117
  %119 = vset.pattern.permute.xlu0 0
  %120 = vperm.xlu0 %119, %v31
  %v121 = vpop.permute.xlu0 %120
  %122 = vset.pattern.permute.xlu0 0
  %123 = vperm.xlu0 %122, %v32
  %v124 = vpop.permute.xlu0 %123
  %125 = vset.pattern.permute.xlu0 0
  %126 = vperm.xlu0 %125, %v33
  %v127 = vpop.permute.xlu0 %126
  %128 = vset.pattern.permute.xlu0 0
  %129 = vperm.xlu0 %128, %v34
  %v130 = vpop.permute.xlu0 %129
  %131 = vset.pattern.permute.xlu0 0
  %132 = vperm.xlu0 %131, %v35
  %v133 = vpop.permute.xlu0 %132
  %134 = vset.pattern.permute.xlu0 0
  %135 = vperm.xlu0 %134, %v36
  %v136 = vpop.permute.xlu0 %135
  %137 = vset.pattern.permute.xlu0 0
  %138 = vperm.xlu0 %137, %v37
  %v139 = vpop.permute.xlu0 %138
  %140 = vset.pattern.permute.xlu0 0
  %141 = vperm.xlu0 %140, %v38
  %v142 = vpop.permute.xlu0 %141
  %143 = vset.pattern.permute.xlu0 0
  %144 = vperm.xlu0 %143, %v39
  %v145 = vpop.permute.xlu0 %144
  %146 = vset.pattern.permute.xlu0 0
  %147 = vperm.xlu0 %146, %v40
  %v148 = vpop.permute.xlu0 %147
  %149 = vset.pattern.permute.xlu0 0
  %150 = vperm.xlu0 %149, %v41
  %v151 = vpop.permute.xlu0 %150
  %152 = vset.pattern.permute.xlu0 0
  %153 = vperm.xlu0 %152, %v42
  %v154 = vpop.permute.xlu0 %153
  %155 = vset.pattern.permute.xlu0 0
  %156 = vperm.xlu0 %155, %v43
  %v157 = vpop.permute.xlu0 %156
  %158 = vset.pattern.permute.xlu0 0
  %159 = vperm.xlu0 %158, %v44
  %v160 = vpop.permute.xlu0 %159
  %161 = vset.pattern.permute.xlu0 0
  %162 = vperm.xlu0 %161, %v45
  %v163 = vpop.permute.xlu0 %162
  %164 = vset.pattern.permute.xlu0 0
  %165 = vperm.xlu0 %164, %v46
  %v166 = vpop.permute.xlu0 %165
  %167 = vset.pattern.permute.xlu0 0
  %168 = vperm.xlu0 %167, %v47
  %v169 = vpop.permute.xlu0 %168
  %170 = vset.pattern.permute.xlu0 0
  %171 = vperm.xlu0 %170, %v48
  %v172 = vpop.permute.xlu0 %171
  %173 = vset.pattern.permute.xlu0 0
  %174 = vperm.xlu0 %173, %v49
  %v175 = vpop.permute.xlu0 %174
  %176 = vset.pattern.permute.xlu0 0
  %177 = vperm.xlu0 %176, %v50
  %v178 = vpop.permute.xlu0 %177
  %179 = vset.pattern.permute.xlu0 0
  %180 = vperm.xlu0 %179, %v51
  %v181 = vpop.permute.xlu0 %180
  %182 = vset.pattern.permute.xlu0 0
  %183 = vperm.xlu0 %182, %v52
  %v184 = vpop.permute.xlu0 %183
  %185 = vset.pattern.permute.xlu0 0
  %186 = vperm.xlu0 %185, %v53
  %v187 = vpop.permute.xlu0 %186
  %188 = vset.pattern.permute.xlu0 0
  %189 = vperm.xlu0 %188, %v54
  %v190 = vpop.permute.xlu0 %189
  %191 = vset.pattern.permute.xlu0 0
  %192 = vperm.xlu0 %191, %v55
  %v193 = vpop.permute.xlu0 %192
  %194 = vset.pattern.permute.xlu0 0
  %195 = vperm.xlu0 %194, %v56
  %v196 = vpop.permute.xlu0 %195
  %197 = vset.pattern.permute.xlu0 0
  %198 = vperm.xlu0 %197, %v57
  %v199 = vpop.permute.xlu0 %198
  %200 = vset.pattern.permute.xlu0 0
  %201 = vperm.xlu0 %200, %v58
  %v202 = vpop.permute.xlu0 %201
  %203 = vset.pattern.permute.xlu0 0
  %204 = vperm.xlu0 %203, %v59
  %v205 = vpop.permute.xlu0 %204
  %206 = vset.pattern.permute.xlu0 0
  %207 = vperm.xlu0 %206, %v60
  %v208 = vpop.permute.xlu0 %207
  %209 = vset.pattern.permute.xlu0 0
  %210 = vperm.xlu0 %209, %v61
  %v211 = vpop.permute.xlu0 %210
  %212 = vset.pattern.permute.xlu0 0
  %213 = vperm.xlu0 %212, %v62
  %v214 = vpop.permute.xlu0 %213
  %215 = vset.pattern.permute.xlu0 0
  %216 = vperm.xlu0 %215, %v63
  %v217 = vpop.permute.xlu0 %216
  %218 = vset.pattern.permute.xlu0 0
  %219 = vperm.xlu0 %218, %v64
  %v220 = vpop.permute.xlu0 %219
  %221 = vset.pattern.permute.xlu0 0
  %222 = vperm.xlu0 %221, %v65
  %v223 = vpop.permute.xlu0 %222
  %224 = vset.pattern.permute.xlu0 0
  %225 = vperm.xlu0 %224, %v66
  %v226 = vpop.permute.xlu0 %225
  %227 = vset.pattern.permute.xlu0 0
  %228 = vperm.xlu0 %227, %v67
  %v229 = vpop.permute.xlu0 %228
  %230 = vset.pattern.permute.xlu0 0
  %231 = vperm.xlu0 %230, %v68
  %v232 = vpop.permute.xlu0 %231
  %233 = vset.pattern.permute.xlu0 0
  %234 = vperm.xlu0 %233, %v69
  %v235 = vpop.permute.xlu0 %234
  %236 = vset.pattern.permute.xlu0 0
  %237 = vperm.xlu0 %236, %v70
  %v238 = vpop.permute.xlu0 %237
  %239 = vset.pattern.permute.xlu0 0
  %240 = vperm.xlu0 %239, %v71
  %v241 = vpop.permute.xlu0 %240
  %242 = vset.pattern.permute.xlu0 0
  %243 = vperm.xlu0 %242, %v72
  %v244 = vpop.permute.xlu0 %243
  %245 = vset.pattern.permute.xlu0 0
  %246 = vperm.xlu0 %245, %v73
  %v247 = vpop.permute.xlu0 %246
  %248 = vset.pattern.permute.xlu0 0
  %249 = vperm.xlu0 %248, %v74
  %v250 = vpop.permute.xlu0 %249
  %251 = vset.pattern.permute.xlu0 0
  %252 = vperm.xlu0 %251, %v75
  %v253 = vpop.permute.xlu0 %252
  %254 = vset.pattern.permute.xlu0 0
  %255 = vperm.xlu0 %254, %v76
  %v256 = vpop.permute.xlu0 %255
  %257 = vset.pattern.permute.xlu0 0
  %258 = vperm.xlu0 %257, %v77
  %v259 = vpop.permute.xlu0 %258
  %260 = vset.pattern.permute.xlu0 0
  %261 = vperm.xlu0 %260, %v78
  %v262 = vpop.permute.xlu0 %261
  %263 = vset.pattern.permute.xlu0 0
  %264 = vperm.xlu0 %263, %v79
  %v265 = vpop.permute.xlu0 %264
  %266 = vset.pattern.permute.xlu0 0
  %267 = vperm.xlu0 %266, %v80
  %v268 = vpop.permute.xlu0 %267
  %269 = vset.pattern.permute.xlu0 0
  %270 = vperm.xlu0 %269, %v81
  %v271 = vpop.permute.xlu0 %270
  %272 = vset.pattern.permute.xlu0 0
  %273 = vperm.xlu0 %272, %v82
  %v274 = vpop.permute.xlu0 %273
  %vm275 = vcmp.eq.s32.totalorder %v18, %v85
  %vm276 = vcmp.eq.s32.totalorder %v18, %v88
  %vm277 = vcmp.eq.s32.totalorder %v18, %v91
  %vm278 = vcmp.eq.s32.totalorder %v18, %v94
  %vm279 = vcmp.eq.s32.totalorder %v18, %v97
  %vm280 = vcmp.eq.s32.totalorder %v18, %v100
  %vm281 = vcmp.eq.s32.totalorder %v18, %v103
  %vm282 = vcmp.eq.s32.totalorder %v18, %v106
  %vm283 = vcmp.eq.s32.totalorder %v18, %v109
  %vm284 = vcmp.eq.s32.totalorder %v18, %v112
  %vm285 = vcmp.eq.s32.totalorder %v18, %v115
  %vm286 = vcmp.eq.s32.totalorder %v18, %v118
  %vm287 = vcmp.eq.s32.totalorder %v18, %v121
  %vm288 = vcmp.eq.s32.totalorder %v18, %v124
  %vm289 = vcmp.eq.s32.totalorder %v18, %v127
  %vm290 = vcmp.eq.s32.totalorder %v18, %v130
  %vm291 = vcmp.eq.s32.totalorder %v18, %v133
  %vm292 = vcmp.eq.s32.totalorder %v18, %v136
  %vm293 = vcmp.eq.s32.totalorder %v18, %v139
  %vm294 = vcmp.eq.s32.totalorder %v18, %v142
  %vm295 = vcmp.eq.s32.totalorder %v18, %v145
  %vm296 = vcmp.eq.s32.totalorder %v18, %v148
  %vm297 = vcmp.eq.s32.totalorder %v18, %v151
  %vm298 = vcmp.eq.s32.totalorder %v18, %v154
  %vm299 = vcmp.eq.s32.totalorder %v18, %v157
  %vm300 = vcmp.eq.s32.totalorder %v18, %v160
  %vm301 = vcmp.eq.s32.totalorder %v18, %v163
  %vm302 = vcmp.eq.s32.totalorder %v18, %v166
  %vm303 = vcmp.eq.s32.totalorder %v18, %v169
  %vm304 = vcmp.eq.s32.totalorder %v18, %v172
  %vm305 = vcmp.eq.s32.totalorder %v18, %v175
  %vm306 = vcmp.eq.s32.totalorder %v18, %v178
  %vm307 = vcmp.eq.s32.totalorder %v18, %v181
  %vm308 = vcmp.eq.s32.totalorder %v18, %v184
  %vm309 = vcmp.eq.s32.totalorder %v18, %v187
  %vm310 = vcmp.eq.s32.totalorder %v18, %v190
  %vm311 = vcmp.eq.s32.totalorder %v18, %v193
  %vm312 = vcmp.eq.s32.totalorder %v18, %v196
  %vm313 = vcmp.eq.s32.totalorder %v18, %v199
  %vm314 = vcmp.eq.s32.totalorder %v18, %v202
  %vm315 = vcmp.eq.s32.totalorder %v18, %v205
  %vm316 = vcmp.eq.s32.totalorder %v18, %v208
  %vm317 = vcmp.eq.s32.totalorder %v18, %v211
  %vm318 = vcmp.eq.s32.totalorder %v18, %v214
  %vm319 = vcmp.eq.s32.totalorder %v18, %v217
  %vm320 = vcmp.eq.s32.totalorder %v18, %v220
  %vm321 = vcmp.eq.s32.totalorder %v18, %v223
  %vm322 = vcmp.eq.s32.totalorder %v18, %v226
  %vm323 = vcmp.eq.s32.totalorder %v18, %v229
  %vm324 = vcmp.eq.s32.totalorder %v18, %v232
  %vm325 = vcmp.eq.s32.totalorder %v18, %v235
  %vm326 = vcmp.eq.s32.totalorder %v18, %v238
  %vm327 = vcmp.eq.s32.totalorder %v18, %v241
  %vm328 = vcmp.eq.s32.totalorder %v18, %v244
  %vm329 = vcmp.eq.s32.totalorder %v18, %v247
  %vm330 = vcmp.eq.s32.totalorder %v18, %v250
  %vm331 = vcmp.eq.s32.totalorder %v18, %v253
  %vm332 = vcmp.eq.s32.totalorder %v18, %v256
  %vm333 = vcmp.eq.s32.totalorder %v18, %v259
  %vm334 = vcmp.eq.s32.totalorder %v18, %v262
  %vm335 = vcmp.eq.s32.totalorder %v18, %v265
  %vm336 = vcmp.eq.s32.totalorder %v18, %v268
  %vm337 = vcmp.eq.s32.totalorder %v18, %v271
  %vm338 = vcmp.eq.s32.totalorder %v18, %v274
  %v339 = vsel %vm275, 1, 0
  %v340 = vsel %vm276, 1, 0
  %v341 = vsel %vm277, 1, 0
  %v342 = vsel %vm278, 1, 0
  %v343 = vsel %vm279, 1, 0
  %v344 = vsel %vm280, 1, 0
  %v345 = vsel %vm281, 1, 0
  %v346 = vsel %vm282, 1, 0
  %v347 = vsel %vm283, 1, 0
  %v348 = vsel %vm284, 1, 0
  %v349 = vsel %vm285, 1, 0
  %v350 = vsel %vm286, 1, 0
  %v351 = vsel %vm287, 1, 0
  %v352 = vsel %vm288, 1, 0
  %v353 = vsel %vm289, 1, 0
  %v354 = vsel %vm290, 1, 0
  %v355 = vsel %vm291, 1, 0
  %v356 = vsel %vm292, 1, 0
  %v357 = vsel %vm293, 1, 0
  %v358 = vsel %vm294, 1, 0
  %v359 = vsel %vm295, 1, 0
  %v360 = vsel %vm296, 1, 0
  %v361 = vsel %vm297, 1, 0
  %v362 = vsel %vm298, 1, 0
  %v363 = vsel %vm299, 1, 0
  %v364 = vsel %vm300, 1, 0
  %v365 = vsel %vm301, 1, 0
  %v366 = vsel %vm302, 1, 0
  %v367 = vsel %vm303, 1, 0
  %v368 = vsel %vm304, 1, 0
  %v369 = vsel %vm305, 1, 0
  %v370 = vsel %vm306, 1, 0
  %v371 = vsel %vm307, 1, 0
  %v372 = vsel %vm308, 1, 0
  %v373 = vsel %vm309, 1, 0
  %v374 = vsel %vm310, 1, 0
  %v375 = vsel %vm311, 1, 0
  %v376 = vsel %vm312, 1, 0
  %v377 = vsel %vm313, 1, 0
  %v378 = vsel %vm314, 1, 0
  %v379 = vsel %vm315, 1, 0
  %v380 = vsel %vm316, 1, 0
  %v381 = vsel %vm317, 1, 0
  %v382 = vsel %vm318, 1, 0
  %v383 = vsel %vm319, 1, 0
  %v384 = vsel %vm320, 1, 0
  %v385 = vsel %vm321, 1, 0
  %v386 = vsel %vm322, 1, 0
  %v387 = vsel %vm323, 1, 0
  %v388 = vsel %vm324, 1, 0
  %v389 = vsel %vm325, 1, 0
  %v390 = vsel %vm326, 1, 0
  %v391 = vsel %vm327, 1, 0
  %v392 = vsel %vm328, 1, 0
  %v393 = vsel %vm329, 1, 0
  %v394 = vsel %vm330, 1, 0
  %v395 = vsel %vm331, 1, 0
  %v396 = vsel %vm332, 1, 0
  %v397 = vsel %vm333, 1, 0
  %v398 = vsel %vm334, 1, 0
  %v399 = vsel %vm335, 1, 0
  %v400 = vsel %vm336, 1, 0
  %v401 = vsel %vm337, 1, 0
  %v402 = vsel %vm338, 1, 0
  %v403 = vcvt.s32.f32 %v339
  %v404 = vcvt.s32.f32 %v340
  %v405 = vcvt.s32.f32 %v341
  %v406 = vcvt.s32.f32 %v342
  %v407 = vcvt.s32.f32 %v343
  %v408 = vcvt.s32.f32 %v344
  %v409 = vcvt.s32.f32 %v345
  %v410 = vcvt.s32.f32 %v346
  %v411 = vcvt.s32.f32 %v347
  %v412 = vcvt.s32.f32 %v348
  %v413 = vcvt.s32.f32 %v349
  %v414 = vcvt.s32.f32 %v350
  %v415 = vcvt.s32.f32 %v351
  %v416 = vcvt.s32.f32 %v352
  %v417 = vcvt.s32.f32 %v353
  %v418 = vcvt.s32.f32 %v354
  %v419 = vcvt.s32.f32 %v355
  %v420 = vcvt.s32.f32 %v356
  %v421 = vcvt.s32.f32 %v357
  %v422 = vcvt.s32.f32 %v358
  %v423 = vcvt.s32.f32 %v359
  %v424 = vcvt.s32.f32 %v360
  %v425 = vcvt.s32.f32 %v361
  %v426 = vcvt.s32.f32 %v362
  %v427 = vcvt.s32.f32 %v363
  %v428 = vcvt.s32.f32 %v364
  %v429 = vcvt.s32.f32 %v365
  %v430 = vcvt.s32.f32 %v366
  %v431 = vcvt.s32.f32 %v367
  %v432 = vcvt.s32.f32 %v368
  %v433 = vcvt.s32.f32 %v369
  %v434 = vcvt.s32.f32 %v370
  %v435 = vcvt.s32.f32 %v371
  %v436 = vcvt.s32.f32 %v372
  %v437 = vcvt.s32.f32 %v373
  %v438 = vcvt.s32.f32 %v374
  %v439 = vcvt.s32.f32 %v375
  %v440 = vcvt.s32.f32 %v376
  %v441 = vcvt.s32.f32 %v377
  %v442 = vcvt.s32.f32 %v378
  %v443 = vcvt.s32.f32 %v379
  %v444 = vcvt.s32.f32 %v380
  %v445 = vcvt.s32.f32 %v381
  %v446 = vcvt.s32.f32 %v382
  %v447 = vcvt.s32.f32 %v383
  %v448 = vcvt.s32.f32 %v384
  %v449 = vcvt.s32.f32 %v385
  %v450 = vcvt.s32.f32 %v386
  %v451 = vcvt.s32.f32 %v387
  %v452 = vcvt.s32.f32 %v388
  %v453 = vcvt.s32.f32 %v389
  %v454 = vcvt.s32.f32 %v390
  %v455 = vcvt.s32.f32 %v391
  %v456 = vcvt.s32.f32 %v392
  %v457 = vcvt.s32.f32 %v393
  %v458 = vcvt.s32.f32 %v394
  %v459 = vcvt.s32.f32 %v395
  %v460 = vcvt.s32.f32 %v396
  %v461 = vcvt.s32.f32 %v397
  %v462 = vcvt.s32.f32 %v398
  %v463 = vcvt.s32.f32 %v399
  %v464 = vcvt.s32.f32 %v400
  %v465 = vcvt.s32.f32 %v401
  %v466 = vcvt.s32.f32 %v402
  %v467 = vld [vmem:[%s3] sm:$0xff]
  %v468 = vld [vmem:[%s3 + $0x8] sm:$0xff]
  %v469 = vld [vmem:[%s3 + $0x10] sm:$0xff]
  %v470 = vld [vmem:[%s3 + $0x18] sm:$0xff]
  %v471 = vld [vmem:[%s3 + $0x20] sm:$0xff]
  %v472 = vld [vmem:[%s3 + $0x28] sm:$0xff]
  %v473 = vld [vmem:[%s3 + $0x30] sm:$0xff]
  %v474 = vld [vmem:[%s3 + $0x38] sm:$0xff]
  %v475 = vld [vmem:[%s3 + $0x40] sm:$0xff]
  %v476 = vld [vmem:[%s3 + $0x48] sm:$0xff]
  %v477 = vld [vmem:[%s3 + $0x50] sm:$0xff]
  %v478 = vld [vmem:[%s3 + $0x58] sm:$0xff]
  %v479 = vld [vmem:[%s3 + $0x60] sm:$0xff]
  %v480 = vld [vmem:[%s3 + $0x68] sm:$0xff]
  %v481 = vld [vmem:[%s3 + $0x70] sm:$0xff]
  %v482 = vld [vmem:[%s3 + $0x78] sm:$0xff]
  %483 = vmatprep.subr.mxu0 0.0
  %v484 = vand.u32 %v482, 4294901760
  %485 = vmatpush1.msra.mxu0 %v484
  %486 = vmatprep.subr.mxu0 0.0
  %v487 = vand.u32 %v481, 4294901760
  %488 = vmatpush1.msra.mxu0 %v487
  %489 = vmatprep.subr.mxu0 0.0
  %v490 = vand.u32 %v480, 4294901760
  %491 = vmatpush1.msra.mxu0 %v490
  %492 = vmatprep.subr.mxu0 0.0
  %v493 = vand.u32 %v479, 4294901760
  %494 = vmatpush1.msra.mxu0 %v493
  %495 = vmatprep.subr.mxu0 0.0
  %v496 = vand.u32 %v478, 4294901760
  %497 = vmatpush1.msra.mxu0 %v496
  %498 = vmatprep.subr.mxu0 0.0
  %v499 = vand.u32 %v477, 4294901760
  %500 = vmatpush1.msra.mxu0 %v499
  %501 = vmatprep.subr.mxu0 0.0
  %v502 = vand.u32 %v476, 4294901760
  %503 = vmatpush1.msra.mxu0 %v502
  %504 = vmatprep.subr.mxu0 0.0
  %v505 = vand.u32 %v475, 4294901760
  %506 = vmatpush1.msra.mxu0 %v505
  %507 = vmatprep.subr.mxu0 0.0
  %v508 = vand.u32 %v474, 4294901760
  %509 = vmatpush1.msra.mxu0 %v508
  %510 = vmatprep.subr.mxu0 0.0
  %v511 = vand.u32 %v473, 4294901760
  %512 = vmatpush1.msra.mxu0 %v511
  %513 = vmatprep.subr.mxu0 0.0
  %v514 = vand.u32 %v472, 4294901760
  %515 = vmatpush1.msra.mxu0 %v514
  %516 = vmatprep.subr.mxu0 0.0
  %v517 = vand.u32 %v471, 4294901760
  %518 = vmatpush1.msra.mxu0 %v517
  %519 = vmatprep.subr.mxu0 0.0
  %v520 = vand.u32 %v470, 4294901760
  %521 = vmatpush1.msra.mxu0 %v520
  %522 = vmatprep.subr.mxu0 0.0
  %v523 = vand.u32 %v469, 4294901760
  %524 = vmatpush1.msra.mxu0 %v523
  %525 = vmatprep.subr.mxu0 0.0
  %v526 = vand.u32 %v468, 4294901760
  %527 = vmatpush1.msra.mxu0 %v526
  %528 = vmatprep.subr.mxu0 0.0
  %v529 = vand.u32 %v467, 4294901760
  %530 = vmatpush1.msra.mxu0 %v529
  %531 = vmatprep.subr.mxu0 0.0
  %532 = vmatpush2.msra.mxu0 0.0
  %533 = vmatprep.subr.mxu0 0.0
  %534 = vmatpush2.msra.mxu0 0.0
  %535 = vmatprep.subr.mxu0 0.0
  %536 = vmatpush2.msra.mxu0 0.0
  %537 = vmatprep.subr.mxu0 0.0
  %538 = vmatpush2.msra.mxu0 0.0
  %539 = vmatprep.subr.mxu0 0.0
  %540 = vmatpush2.msra.mxu0 0.0
  %541 = vmatprep.subr.mxu0 0.0
  %542 = vmatpush2.msra.mxu0 0.0
  %543 = vmatprep.subr.mxu0 0.0
  %544 = vmatpush2.msra.mxu0 0.0
  %545 = vmatprep.subr.mxu0 0.0
  %546 = vmatpush2.msra.mxu0 0.0
  %547 = vmatprep.subr.mxu0 0.0
  %548 = vmatpush2.msra.mxu0 0.0
  %549 = vmatprep.subr.mxu0 0.0
  %550 = vmatpush2.msra.mxu0 0.0
  %551 = vmatprep.subr.mxu0 0.0
  %552 = vmatpush2.msra.mxu0 0.0
  %553 = vmatprep.subr.mxu0 0.0
  %554 = vmatpush2.msra.mxu0 0.0
  %555 = vmatprep.subr.mxu0 0.0
  %556 = vmatpush2.msra.mxu0 0.0
  %557 = vmatprep.subr.mxu0 0.0
  %558 = vmatpush2.msra.mxu0 0.0
  %559 = vmatprep.subr.mxu0 0.0
  %560 = vmatpush2.msra.mxu0 0.0
  %561 = vmatprep.subr.mxu0 0.0
  %562 = vmatpush2.msra.mxu0 0.0
  %563 = vmatprep.mubr.f32.mxu0 0.0
  %v564 = vand.u32 %v403, 4294901760
  %v565 = vsub.f32 %v403, %v564
  %v566 = vand.u32 %v565, 4294901760
  %v567 = vsub.f32 %v565, %v566
  %v568 = vand.u32 %v567, 4294901760
  %569 = vmatmul.mubr.f32.gmra.mxu0 %v568
  %v570 = vpop.f32.mrf.mxu0
  %v571 = vadd.f32 0.0, %v570
  %v572 = vpop.f32.mrf.mxu0
  %573 = vmatprep.mubr.f32.mxu0 0.0
  %v574 = vand.u32 %v404, 4294901760
  %v575 = vsub.f32 %v404, %v574
  %v576 = vand.u32 %v575, 4294901760
  %v577 = vsub.f32 %v575, %v576
  %v578 = vand.u32 %v577, 4294901760
  %579 = vmatmul.mubr.f32.gmra.mxu0 %v578
  %v580 = vpop.f32.mrf.mxu0
  %v581 = vadd.f32 0.0, %v580
  %v582 = vpop.f32.mrf.mxu0
  %583 = vmatprep.mubr.f32.mxu0 0.0
  %v584 = vand.u32 %v405, 4294901760
  %v585 = vsub.f32 %v405, %v584
  %v586 = vand.u32 %v585, 4294901760
  %v587 = vsub.f32 %v585, %v586
  %v588 = vand.u32 %v587, 4294901760
  %589 = vmatmul.mubr.f32.gmra.mxu0 %v588
  %v590 = vpop.f32.mrf.mxu0
  %v591 = vadd.f32 0.0, %v590
  %v592 = vpop.f32.mrf.mxu0
  %593 = vmatprep.mubr.f32.mxu0 0.0
  %v594 = vand.u32 %v406, 4294901760
  %v595 = vsub.f32 %v406, %v594
  %v596 = vand.u32 %v595, 4294901760
  %v597 = vsub.f32 %v595, %v596
  %v598 = vand.u32 %v597, 4294901760
  %599 = vmatmul.mubr.f32.gmra.mxu0 %v598
  %v600 = vpop.f32.mrf.mxu0
  %v601 = vadd.f32 0.0, %v600
  %v602 = vpop.f32.mrf.mxu0
  %603 = vmatprep.mubr.f32.mxu0 0.0
  %v604 = vand.u32 %v407, 4294901760
  %v605 = vsub.f32 %v407, %v604
  %v606 = vand.u32 %v605, 4294901760
  %v607 = vsub.f32 %v605, %v606
  %v608 = vand.u32 %v607, 4294901760
  %609 = vmatmul.mubr.f32.gmra.mxu0 %v608
  %v610 = vpop.f32.mrf.mxu0
  %v611 = vadd.f32 0.0, %v610
  %v612 = vpop.f32.mrf.mxu0
  %613 = vmatprep.mubr.f32.mxu0 0.0
  %v614 = vand.u32 %v408, 4294901760
  %v615 = vsub.f32 %v408, %v614
  %v616 = vand.u32 %v615, 4294901760
  %v617 = vsub.f32 %v615, %v616
  %v618 = vand.u32 %v617, 4294901760
  %619 = vmatmul.mubr.f32.gmra.mxu0 %v618
  %v620 = vpop.f32.mrf.mxu0
  %v621 = vadd.f32 0.0, %v620
  %v622 = vpop.f32.mrf.mxu0
  %623 = vmatprep.mubr.f32.mxu0 0.0
  %v624 = vand.u32 %v409, 4294901760
  %v625 = vsub.f32 %v409, %v624
  %v626 = vand.u32 %v625, 4294901760
  %v627 = vsub.f32 %v625, %v626
  %v628 = vand.u32 %v627, 4294901760
  %629 = vmatmul.mubr.f32.gmra.mxu0 %v628
  %v630 = vpop.f32.mrf.mxu0
  %v631 = vadd.f32 0.0, %v630
  %v632 = vpop.f32.mrf.mxu0
  %633 = vmatprep.mubr.f32.mxu0 0.0
  %v634 = vand.u32 %v410, 4294901760
  %v635 = vsub.f32 %v410, %v634
  %v636 = vand.u32 %v635, 4294901760
  %v637 = vsub.f32 %v635, %v636
  %v638 = vand.u32 %v637, 4294901760
  %639 = vmatmul.mubr.f32.gmra.mxu0 %v638
  %v640 = vpop.f32.mrf.mxu0
  %v641 = vadd.f32 0.0, %v640
  %v642 = vpop.f32.mrf.mxu0
  %643 = vmatprep.mubr.f32.mxu0 0.0
  %v644 = vand.u32 %v411, 4294901760
  %v645 = vsub.f32 %v411, %v644
  %v646 = vand.u32 %v645, 4294901760
  %v647 = vsub.f32 %v645, %v646
  %v648 = vand.u32 %v647, 4294901760
  %649 = vmatmul.mubr.f32.gmra.mxu0 %v648
  %v650 = vpop.f32.mrf.mxu0
  %v651 = vadd.f32 0.0, %v650
  %v652 = vpop.f32.mrf.mxu0
  %653 = vmatprep.mubr.f32.mxu0 0.0
  %v654 = vand.u32 %v412, 4294901760
  %v655 = vsub.f32 %v412, %v654
  %v656 = vand.u32 %v655, 4294901760
  %v657 = vsub.f32 %v655, %v656
  %v658 = vand.u32 %v657, 4294901760
  %659 = vmatmul.mubr.f32.gmra.mxu0 %v658
  %v660 = vpop.f32.mrf.mxu0
  %v661 = vadd.f32 0.0, %v660
  %v662 = vpop.f32.mrf.mxu0
  %663 = vmatprep.mubr.f32.mxu0 0.0
  %v664 = vand.u32 %v413, 4294901760
  %v665 = vsub.f32 %v413, %v664
  %v666 = vand.u32 %v665, 4294901760
  %v667 = vsub.f32 %v665, %v666
  %v668 = vand.u32 %v667, 4294901760
  %669 = vmatmul.mubr.f32.gmra.mxu0 %v668
  %v670 = vpop.f32.mrf.mxu0
  %v671 = vadd.f32 0.0, %v670
  %v672 = vpop.f32.mrf.mxu0
  %673 = vmatprep.mubr.f32.mxu0 0.0
  %v674 = vand.u32 %v414, 4294901760
  %v675 = vsub.f32 %v414, %v674
  %v676 = vand.u32 %v675, 4294901760
  %v677 = vsub.f32 %v675, %v676
  %v678 = vand.u32 %v677, 4294901760
  %679 = vmatmul.mubr.f32.gmra.mxu0 %v678
  %v680 = vpop.f32.mrf.mxu0
  %v681 = vadd.f32 0.0, %v680
  %v682 = vpop.f32.mrf.mxu0
  %683 = vmatprep.mubr.f32.mxu0 0.0
  %v684 = vand.u32 %v415, 4294901760
  %v685 = vsub.f32 %v415, %v684
  %v686 = vand.u32 %v685, 4294901760
  %v687 = vsub.f32 %v685, %v686
  %v688 = vand.u32 %v687, 4294901760
  %689 = vmatmul.mubr.f32.gmra.mxu0 %v688
  %v690 = vpop.f32.mrf.mxu0
  %v691 = vadd.f32 0.0, %v690
  %v692 = vpop.f32.mrf.mxu0
  %693 = vmatprep.mubr.f32.mxu0 0.0
  %v694 = vand.u32 %v416, 4294901760
  %v695 = vsub.f32 %v416, %v694
  %v696 = vand.u32 %v695, 4294901760
  %v697 = vsub.f32 %v695, %v696
  %v698 = vand.u32 %v697, 4294901760
  %699 = vmatmul.mubr.f32.gmra.mxu0 %v698
  %v700 = vpop.f32.mrf.mxu0
  %v701 = vadd.f32 0.0, %v700
  %v702 = vpop.f32.mrf.mxu0
  %703 = vmatprep.mubr.f32.mxu0 0.0
  %v704 = vand.u32 %v417, 4294901760
  %v705 = vsub.f32 %v417, %v704
  %v706 = vand.u32 %v705, 4294901760
  %v707 = vsub.f32 %v705, %v706
  %v708 = vand.u32 %v707, 4294901760
  %709 = vmatmul.mubr.f32.gmra.mxu0 %v708
  %v710 = vpop.f32.mrf.mxu0
  %v711 = vadd.f32 0.0, %v710
  %v712 = vpop.f32.mrf.mxu0
  %713 = vmatprep.mubr.f32.mxu0 0.0
  %v714 = vand.u32 %v418, 4294901760
  %v715 = vsub.f32 %v418, %v714
  %v716 = vand.u32 %v715, 4294901760
  %v717 = vsub.f32 %v715, %v716
  %v718 = vand.u32 %v717, 4294901760
  %719 = vmatmul.mubr.f32.gmra.mxu0 %v718
  %v720 = vpop.f32.mrf.mxu0
  %v721 = vadd.f32 0.0, %v720
  %v722 = vpop.f32.mrf.mxu0
  %723 = vmatprep.mubr.f32.mxu0 0.0
  %v724 = vand.u32 %v419, 4294901760
  %v725 = vsub.f32 %v419, %v724
  %v726 = vand.u32 %v725, 4294901760
  %v727 = vsub.f32 %v725, %v726
  %v728 = vand.u32 %v727, 4294901760
  %729 = vmatmul.mubr.f32.gmra.mxu0 %v728
  %v730 = vpop.f32.mrf.mxu0
  %v731 = vadd.f32 0.0, %v730
  %v732 = vpop.f32.mrf.mxu0
  %733 = vmatprep.mubr.f32.mxu0 0.0
  %v734 = vand.u32 %v420, 4294901760
  %v735 = vsub.f32 %v420, %v734
  %v736 = vand.u32 %v735, 4294901760
  %v737 = vsub.f32 %v735, %v736
  %v738 = vand.u32 %v737, 4294901760
  %739 = vmatmul.mubr.f32.gmra.mxu0 %v738
  %v740 = vpop.f32.mrf.mxu0
  %v741 = vadd.f32 0.0, %v740
  %v742 = vpop.f32.mrf.mxu0
  %743 = vmatprep.mubr.f32.mxu0 0.0
  %v744 = vand.u32 %v421, 4294901760
  %v745 = vsub.f32 %v421, %v744
  %v746 = vand.u32 %v745, 4294901760
  %v747 = vsub.f32 %v745, %v746
  %v748 = vand.u32 %v747, 4294901760
  %749 = vmatmul.mubr.f32.gmra.mxu0 %v748
  %v750 = vpop.f32.mrf.mxu0
  %v751 = vadd.f32 0.0, %v750
  %v752 = vpop.f32.mrf.mxu0
  %753 = vmatprep.mubr.f32.mxu0 0.0
  %v754 = vand.u32 %v422, 4294901760
  %v755 = vsub.f32 %v422, %v754
  %v756 = vand.u32 %v755, 4294901760
  %v757 = vsub.f32 %v755, %v756
  %v758 = vand.u32 %v757, 4294901760
  %759 = vmatmul.mubr.f32.gmra.mxu0 %v758
  %v760 = vpop.f32.mrf.mxu0
  %v761 = vadd.f32 0.0, %v760
  %v762 = vpop.f32.mrf.mxu0
  %763 = vmatprep.mubr.f32.mxu0 0.0
  %v764 = vand.u32 %v423, 4294901760
  %v765 = vsub.f32 %v423, %v764
  %v766 = vand.u32 %v765, 4294901760
  %v767 = vsub.f32 %v765, %v766
  %v768 = vand.u32 %v767, 4294901760
  %769 = vmatmul.mubr.f32.gmra.mxu0 %v768
  %v770 = vpop.f32.mrf.mxu0
  %v771 = vadd.f32 0.0, %v770
  %v772 = vpop.f32.mrf.mxu0
  %773 = vmatprep.mubr.f32.mxu0 0.0
  %v774 = vand.u32 %v424, 4294901760
  %v775 = vsub.f32 %v424, %v774
  %v776 = vand.u32 %v775, 4294901760
  %v777 = vsub.f32 %v775, %v776
  %v778 = vand.u32 %v777, 4294901760
  %779 = vmatmul.mubr.f32.gmra.mxu0 %v778
  %v780 = vpop.f32.mrf.mxu0
  %v781 = vadd.f32 0.0, %v780
  %v782 = vpop.f32.mrf.mxu0
  %783 = vmatprep.mubr.f32.mxu0 0.0
  %v784 = vand.u32 %v425, 4294901760
  %v785 = vsub.f32 %v425, %v784
  %v786 = vand.u32 %v785, 4294901760
  %v787 = vsub.f32 %v785, %v786
  %v788 = vand.u32 %v787, 4294901760
  %789 = vmatmul.mubr.f32.gmra.mxu0 %v788
  %v790 = vpop.f32.mrf.mxu0
  %v791 = vadd.f32 0.0, %v790
  %v792 = vpop.f32.mrf.mxu0
  %793 = vmatprep.mubr.f32.mxu0 0.0
  %v794 = vand.u32 %v426, 4294901760
  %v795 = vsub.f32 %v426, %v794
  %v796 = vand.u32 %v795, 4294901760
  %v797 = vsub.f32 %v795, %v796
  %v798 = vand.u32 %v797, 4294901760
  %799 = vmatmul.mubr.f32.gmra.mxu0 %v798
  %v800 = vpop.f32.mrf.mxu0
  %v801 = vadd.f32 0.0, %v800
  %v802 = vpop.f32.mrf.mxu0
  %803 = vmatprep.mubr.f32.mxu0 0.0
  %v804 = vand.u32 %v427, 4294901760
  %v805 = vsub.f32 %v427, %v804
  %v806 = vand.u32 %v805, 4294901760
  %v807 = vsub.f32 %v805, %v806
  %v808 = vand.u32 %v807, 4294901760
  %809 = vmatmul.mubr.f32.gmra.mxu0 %v808
  %v810 = vpop.f32.mrf.mxu0
  %v811 = vadd.f32 0.0, %v810
  %v812 = vpop.f32.mrf.mxu0
  %813 = vmatprep.mubr.f32.mxu0 0.0
  %v814 = vand.u32 %v428, 4294901760
  %v815 = vsub.f32 %v428, %v814
  %v816 = vand.u32 %v815, 4294901760
  %v817 = vsub.f32 %v815, %v816
  %v818 = vand.u32 %v817, 4294901760
  %819 = vmatmul.mubr.f32.gmra.mxu0 %v818
  %v820 = vpop.f32.mrf.mxu0
  %v821 = vadd.f32 0.0, %v820
  %v822 = vpop.f32.mrf.mxu0
  %823 = vmatprep.mubr.f32.mxu0 0.0
  %v824 = vand.u32 %v429, 4294901760
  %v825 = vsub.f32 %v429, %v824
  %v826 = vand.u32 %v825, 4294901760
  %v827 = vsub.f32 %v825, %v826
  %v828 = vand.u32 %v827, 4294901760
  %829 = vmatmul.mubr.f32.gmra.mxu0 %v828
  %v830 = vpop.f32.mrf.mxu0
  %v831 = vadd.f32 0.0, %v830
  %v832 = vpop.f32.mrf.mxu0
  %833 = vmatprep.mubr.f32.mxu0 0.0
  %v834 = vand.u32 %v430, 4294901760
  %v835 = vsub.f32 %v430, %v834
  %v836 = vand.u32 %v835, 4294901760
  %v837 = vsub.f32 %v835, %v836
  %v838 = vand.u32 %v837, 4294901760
  %839 = vmatmul.mubr.f32.gmra.mxu0 %v838
  %v840 = vpop.f32.mrf.mxu0
  %v841 = vadd.f32 0.0, %v840
  %v842 = vpop.f32.mrf.mxu0
  %843 = vmatprep.mubr.f32.mxu0 0.0
  %v844 = vand.u32 %v431, 4294901760
  %v845 = vsub.f32 %v431, %v844
  %v846 = vand.u32 %v845, 4294901760
  %v847 = vsub.f32 %v845, %v846
  %v848 = vand.u32 %v847, 4294901760
  %849 = vmatmul.mubr.f32.gmra.mxu0 %v848
  %v850 = vpop.f32.mrf.mxu0
  %v851 = vadd.f32 0.0, %v850
  %v852 = vpop.f32.mrf.mxu0
  %853 = vmatprep.mubr.f32.mxu0 0.0
  %v854 = vand.u32 %v432, 4294901760
  %v855 = vsub.f32 %v432, %v854
  %v856 = vand.u32 %v855, 4294901760
  %v857 = vsub.f32 %v855, %v856
  %v858 = vand.u32 %v857, 4294901760
  %859 = vmatmul.mubr.f32.gmra.mxu0 %v858
  %v860 = vpop.f32.mrf.mxu0
  %v861 = vadd.f32 0.0, %v860
  %v862 = vpop.f32.mrf.mxu0
  %863 = vmatprep.mubr.f32.mxu0 0.0
  %v864 = vand.u32 %v433, 4294901760
  %v865 = vsub.f32 %v433, %v864
  %v866 = vand.u32 %v865, 4294901760
  %v867 = vsub.f32 %v865, %v866
  %v868 = vand.u32 %v867, 4294901760
  %869 = vmatmul.mubr.f32.gmra.mxu0 %v868
  %v870 = vpop.f32.mrf.mxu0
  %v871 = vadd.f32 0.0, %v870
  %v872 = vpop.f32.mrf.mxu0
  %873 = vmatprep.mubr.f32.mxu0 0.0
  %v874 = vand.u32 %v434, 4294901760
  %v875 = vsub.f32 %v434, %v874
  %v876 = vand.u32 %v875, 4294901760
  %v877 = vsub.f32 %v875, %v876
  %v878 = vand.u32 %v877, 4294901760
  %879 = vmatmul.mubr.f32.gmra.mxu0 %v878
  %v880 = vpop.f32.mrf.mxu0
  %v881 = vadd.f32 0.0, %v880
  %v882 = vpop.f32.mrf.mxu0
  %883 = vmatprep.mubr.f32.mxu0 0.0
  %v884 = vand.u32 %v435, 4294901760
  %v885 = vsub.f32 %v435, %v884
  %v886 = vand.u32 %v885, 4294901760
  %v887 = vsub.f32 %v885, %v886
  %v888 = vand.u32 %v887, 4294901760
  %889 = vmatmul.mubr.f32.gmra.mxu0 %v888
  %v890 = vpop.f32.mrf.mxu0
  %v891 = vadd.f32 0.0, %v890
  %v892 = vpop.f32.mrf.mxu0
  %893 = vmatprep.mubr.f32.mxu0 0.0
  %v894 = vand.u32 %v436, 4294901760
  %v895 = vsub.f32 %v436, %v894
  %v896 = vand.u32 %v895, 4294901760
  %v897 = vsub.f32 %v895, %v896
  %v898 = vand.u32 %v897, 4294901760
  %899 = vmatmul.mubr.f32.gmra.mxu0 %v898
  %v900 = vpop.f32.mrf.mxu0
  %v901 = vadd.f32 0.0, %v900
  %v902 = vpop.f32.mrf.mxu0
  %903 = vmatprep.mubr.f32.mxu0 0.0
  %v904 = vand.u32 %v437, 4294901760
  %v905 = vsub.f32 %v437, %v904
  %v906 = vand.u32 %v905, 4294901760
  %v907 = vsub.f32 %v905, %v906
  %v908 = vand.u32 %v907, 4294901760
  %909 = vmatmul.mubr.f32.gmra.mxu0 %v908
  %v910 = vpop.f32.mrf.mxu0
  %v911 = vadd.f32 0.0, %v910
  %v912 = vpop.f32.mrf.mxu0
  %913 = vmatprep.mubr.f32.mxu0 0.0
  %v914 = vand.u32 %v438, 4294901760
  %v915 = vsub.f32 %v438, %v914
  %v916 = vand.u32 %v915, 4294901760
  %v917 = vsub.f32 %v915, %v916
  %v918 = vand.u32 %v917, 4294901760
  %919 = vmatmul.mubr.f32.gmra.mxu0 %v918
  %v920 = vpop.f32.mrf.mxu0
  %v921 = vadd.f32 0.0, %v920
  %v922 = vpop.f32.mrf.mxu0
  %923 = vmatprep.mubr.f32.mxu0 0.0
  %v924 = vand.u32 %v439, 4294901760
  %v925 = vsub.f32 %v439, %v924
  %v926 = vand.u32 %v925, 4294901760
  %v927 = vsub.f32 %v925, %v926
  %v928 = vand.u32 %v927, 4294901760
  %929 = vmatmul.mubr.f32.gmra.mxu0 %v928
  %v930 = vpop.f32.mrf.mxu0
  %v931 = vadd.f32 0.0, %v930
  %v932 = vpop.f32.mrf.mxu0
  %933 = vmatprep.mubr.f32.mxu0 0.0
  %v934 = vand.u32 %v440, 4294901760
  %v935 = vsub.f32 %v440, %v934
  %v936 = vand.u32 %v935, 4294901760
  %v937 = vsub.f32 %v935, %v936
  %v938 = vand.u32 %v937, 4294901760
  %939 = vmatmul.mubr.f32.gmra.mxu0 %v938
  %v940 = vpop.f32.mrf.mxu0
  %v941 = vadd.f32 0.0, %v940
  %v942 = vpop.f32.mrf.mxu0
  %943 = vmatprep.mubr.f32.mxu0 0.0
  %v944 = vand.u32 %v441, 4294901760
  %v945 = vsub.f32 %v441, %v944
  %v946 = vand.u32 %v945, 4294901760
  %v947 = vsub.f32 %v945, %v946
  %v948 = vand.u32 %v947, 4294901760
  %949 = vmatmul.mubr.f32.gmra.mxu0 %v948
  %v950 = vpop.f32.mrf.mxu0
  %v951 = vadd.f32 0.0, %v950
  %v952 = vpop.f32.mrf.mxu0
  %953 = vmatprep.mubr.f32.mxu0 0.0
  %v954 = vand.u32 %v442, 4294901760
  %v955 = vsub.f32 %v442, %v954
  %v956 = vand.u32 %v955, 4294901760
  %v957 = vsub.f32 %v955, %v956
  %v958 = vand.u32 %v957, 4294901760
  %959 = vmatmul.mubr.f32.gmra.mxu0 %v958
  %v960 = vpop.f32.mrf.mxu0
  %v961 = vadd.f32 0.0, %v960
  %v962 = vpop.f32.mrf.mxu0
  %963 = vmatprep.mubr.f32.mxu0 0.0
  %v964 = vand.u32 %v443, 4294901760
  %v965 = vsub.f32 %v443, %v964
  %v966 = vand.u32 %v965, 4294901760
  %v967 = vsub.f32 %v965, %v966
  %v968 = vand.u32 %v967, 4294901760
  %969 = vmatmul.mubr.f32.gmra.mxu0 %v968
  %v970 = vpop.f32.mrf.mxu0
  %v971 = vadd.f32 0.0, %v970
  %v972 = vpop.f32.mrf.mxu0
  %973 = vmatprep.mubr.f32.mxu0 0.0
  %v974 = vand.u32 %v444, 4294901760
  %v975 = vsub.f32 %v444, %v974
  %v976 = vand.u32 %v975, 4294901760
  %v977 = vsub.f32 %v975, %v976
  %v978 = vand.u32 %v977, 4294901760
  %979 = vmatmul.mubr.f32.gmra.mxu0 %v978
  %v980 = vpop.f32.mrf.mxu0
  %v981 = vadd.f32 0.0, %v980
  %v982 = vpop.f32.mrf.mxu0
  %983 = vmatprep.mubr.f32.mxu0 0.0
  %v984 = vand.u32 %v445, 4294901760
  %v985 = vsub.f32 %v445, %v984
  %v986 = vand.u32 %v985, 4294901760
  %v987 = vsub.f32 %v985, %v986
  %v988 = vand.u32 %v987, 4294901760
  %989 = vmatmul.mubr.f32.gmra.mxu0 %v988
  %v990 = vpop.f32.mrf.mxu0
  %v991 = vadd.f32 0.0, %v990
  %v992 = vpop.f32.mrf.mxu0
  %993 = vmatprep.mubr.f32.mxu0 0.0
  %v994 = vand.u32 %v446, 4294901760
  %v995 = vsub.f32 %v446, %v994
  %v996 = vand.u32 %v995, 4294901760
  %v997 = vsub.f32 %v995, %v996
  %v998 = vand.u32 %v997, 4294901760
  %999 = vmatmul.mubr.f32.gmra.mxu0 %v998
  %v1000 = vpop.f32.mrf.mxu0
  %v1001 = vadd.f32 0.0, %v1000
  %v1002 = vpop.f32.mrf.mxu0
  %1003 = vmatprep.mubr.f32.mxu0 0.0
  %v1004 = vand.u32 %v447, 4294901760
  %v1005 = vsub.f32 %v447, %v1004
  %v1006 = vand.u32 %v1005, 4294901760
  %v1007 = vsub.f32 %v1005, %v1006
  %v1008 = vand.u32 %v1007, 4294901760
  %1009 = vmatmul.mubr.f32.gmra.mxu0 %v1008
  %v1010 = vpop.f32.mrf.mxu0
  %v1011 = vadd.f32 0.0, %v1010
  %v1012 = vpop.f32.mrf.mxu0
  %1013 = vmatprep.mubr.f32.mxu0 0.0
  %v1014 = vand.u32 %v448, 4294901760
  %v1015 = vsub.f32 %v448, %v1014
  %v1016 = vand.u32 %v1015, 4294901760
  %v1017 = vsub.f32 %v1015, %v1016
  %v1018 = vand.u32 %v1017, 4294901760
  %1019 = vmatmul.mubr.f32.gmra.mxu0 %v1018
  %v1020 = vpop.f32.mrf.mxu0
  %v1021 = vadd.f32 0.0, %v1020
  %v1022 = vpop.f32.mrf.mxu0
  %1023 = vmatprep.mubr.f32.mxu0 0.0
  %v1024 = vand.u32 %v449, 4294901760
  %v1025 = vsub.f32 %v449, %v1024
  %v1026 = vand.u32 %v1025, 4294901760
  %v1027 = vsub.f32 %v1025, %v1026
  %v1028 = vand.u32 %v1027, 4294901760
  %1029 = vmatmul.mubr.f32.gmra.mxu0 %v1028
  %v1030 = vpop.f32.mrf.mxu0
  %v1031 = vadd.f32 0.0, %v1030
  %v1032 = vpop.f32.mrf.mxu0
  %1033 = vmatprep.mubr.f32.mxu0 0.0
  %v1034 = vand.u32 %v450, 4294901760
  %v1035 = vsub.f32 %v450, %v1034
  %v1036 = vand.u32 %v1035, 4294901760
  %v1037 = vsub.f32 %v1035, %v1036
  %v1038 = vand.u32 %v1037, 4294901760
  %1039 = vmatmul.mubr.f32.gmra.mxu0 %v1038
  %v1040 = vpop.f32.mrf.mxu0
  %v1041 = vadd.f32 0.0, %v1040
  %v1042 = vpop.f32.mrf.mxu0
  %1043 = vmatprep.mubr.f32.mxu0 0.0
  %v1044 = vand.u32 %v451, 4294901760
  %v1045 = vsub.f32 %v451, %v1044
  %v1046 = vand.u32 %v1045, 4294901760
  %v1047 = vsub.f32 %v1045, %v1046
  %v1048 = vand.u32 %v1047, 4294901760
  %1049 = vmatmul.mubr.f32.gmra.mxu0 %v1048
  %v1050 = vpop.f32.mrf.mxu0
  %v1051 = vadd.f32 0.0, %v1050
  %v1052 = vpop.f32.mrf.mxu0
  %1053 = vmatprep.mubr.f32.mxu0 0.0
  %v1054 = vand.u32 %v452, 4294901760
  %v1055 = vsub.f32 %v452, %v1054
  %v1056 = vand.u32 %v1055, 4294901760
  %v1057 = vsub.f32 %v1055, %v1056
  %v1058 = vand.u32 %v1057, 4294901760
  %1059 = vmatmul.mubr.f32.gmra.mxu0 %v1058
  %v1060 = vpop.f32.mrf.mxu0
  %v1061 = vadd.f32 0.0, %v1060
  %v1062 = vpop.f32.mrf.mxu0
  %1063 = vmatprep.mubr.f32.mxu0 0.0
  %v1064 = vand.u32 %v453, 4294901760
  %v1065 = vsub.f32 %v453, %v1064
  %v1066 = vand.u32 %v1065, 4294901760
  %v1067 = vsub.f32 %v1065, %v1066
  %v1068 = vand.u32 %v1067, 4294901760
  %1069 = vmatmul.mubr.f32.gmra.mxu0 %v1068
  %v1070 = vpop.f32.mrf.mxu0
  %v1071 = vadd.f32 0.0, %v1070
  %v1072 = vpop.f32.mrf.mxu0
  %1073 = vmatprep.mubr.f32.mxu0 0.0
  %v1074 = vand.u32 %v454, 4294901760
  %v1075 = vsub.f32 %v454, %v1074
  %v1076 = vand.u32 %v1075, 4294901760
  %v1077 = vsub.f32 %v1075, %v1076
  %v1078 = vand.u32 %v1077, 4294901760
  %1079 = vmatmul.mubr.f32.gmra.mxu0 %v1078
  %v1080 = vpop.f32.mrf.mxu0
  %v1081 = vadd.f32 0.0, %v1080
  %v1082 = vpop.f32.mrf.mxu0
  %1083 = vmatprep.mubr.f32.mxu0 0.0
  %v1084 = vand.u32 %v455, 4294901760
  %v1085 = vsub.f32 %v455, %v1084
  %v1086 = vand.u32 %v1085, 4294901760
  %v1087 = vsub.f32 %v1085, %v1086
  %v1088 = vand.u32 %v1087, 4294901760
  %1089 = vmatmul.mubr.f32.gmra.mxu0 %v1088
  %v1090 = vpop.f32.mrf.mxu0
  %v1091 = vadd.f32 0.0, %v1090
  %v1092 = vpop.f32.mrf.mxu0
  %1093 = vmatprep.mubr.f32.mxu0 0.0
  %v1094 = vand.u32 %v456, 4294901760
  %v1095 = vsub.f32 %v456, %v1094
  %v1096 = vand.u32 %v1095, 4294901760
  %v1097 = vsub.f32 %v1095, %v1096
  %v1098 = vand.u32 %v1097, 4294901760
  %1099 = vmatmul.mubr.f32.gmra.mxu0 %v1098
  %v1100 = vpop.f32.mrf.mxu0
  %v1101 = vadd.f32 0.0, %v1100
  %v1102 = vpop.f32.mrf.mxu0
  %1103 = vmatprep.mubr.f32.mxu0 0.0
  %v1104 = vand.u32 %v457, 4294901760
  %v1105 = vsub.f32 %v457, %v1104
  %v1106 = vand.u32 %v1105, 4294901760
  %v1107 = vsub.f32 %v1105, %v1106
  %v1108 = vand.u32 %v1107, 4294901760
  %1109 = vmatmul.mubr.f32.gmra.mxu0 %v1108
  %v1110 = vpop.f32.mrf.mxu0
  %v1111 = vadd.f32 0.0, %v1110
  %v1112 = vpop.f32.mrf.mxu0
  %1113 = vmatprep.mubr.f32.mxu0 0.0
  %v1114 = vand.u32 %v458, 4294901760
  %v1115 = vsub.f32 %v458, %v1114
  %v1116 = vand.u32 %v1115, 4294901760
  %v1117 = vsub.f32 %v1115, %v1116
  %v1118 = vand.u32 %v1117, 4294901760
  %1119 = vmatmul.mubr.f32.gmra.mxu0 %v1118
  %v1120 = vpop.f32.mrf.mxu0
  %v1121 = vadd.f32 0.0, %v1120
  %v1122 = vpop.f32.mrf.mxu0
  %1123 = vmatprep.mubr.f32.mxu0 0.0
  %v1124 = vand.u32 %v459, 4294901760
  %v1125 = vsub.f32 %v459, %v1124
  %v1126 = vand.u32 %v1125, 4294901760
  %v1127 = vsub.f32 %v1125, %v1126
  %v1128 = vand.u32 %v1127, 4294901760
  %1129 = vmatmul.mubr.f32.gmra.mxu0 %v1128
  %v1130 = vpop.f32.mrf.mxu0
  %v1131 = vadd.f32 0.0, %v1130
  %v1132 = vpop.f32.mrf.mxu0
  %1133 = vmatprep.mubr.f32.mxu0 0.0
  %v1134 = vand.u32 %v460, 4294901760
  %v1135 = vsub.f32 %v460, %v1134
  %v1136 = vand.u32 %v1135, 4294901760
  %v1137 = vsub.f32 %v1135, %v1136
  %v1138 = vand.u32 %v1137, 4294901760
  %1139 = vmatmul.mubr.f32.gmra.mxu0 %v1138
  %v1140 = vpop.f32.mrf.mxu0
  %v1141 = vadd.f32 0.0, %v1140
  %v1142 = vpop.f32.mrf.mxu0
  %1143 = vmatprep.mubr.f32.mxu0 0.0
  %v1144 = vand.u32 %v461, 4294901760
  %v1145 = vsub.f32 %v461, %v1144
  %v1146 = vand.u32 %v1145, 4294901760
  %v1147 = vsub.f32 %v1145, %v1146
  %v1148 = vand.u32 %v1147, 4294901760
  %1149 = vmatmul.mubr.f32.gmra.mxu0 %v1148
  %v1150 = vpop.f32.mrf.mxu0
  %v1151 = vadd.f32 0.0, %v1150
  %v1152 = vpop.f32.mrf.mxu0
  %1153 = vmatprep.mubr.f32.mxu0 0.0
  %v1154 = vand.u32 %v462, 4294901760
  %v1155 = vsub.f32 %v462, %v1154
  %v1156 = vand.u32 %v1155, 4294901760
  %v1157 = vsub.f32 %v1155, %v1156
  %v1158 = vand.u32 %v1157, 4294901760
  %1159 = vmatmul.mubr.f32.gmra.mxu0 %v1158
  %v1160 = vpop.f32.mrf.mxu0
  %v1161 = vadd.f32 0.0, %v1160
  %v1162 = vpop.f32.mrf.mxu0
  %1163 = vmatprep.mubr.f32.mxu0 0.0
  %v1164 = vand.u32 %v463, 4294901760
  %v1165 = vsub.f32 %v463, %v1164
  %v1166 = vand.u32 %v1165, 4294901760
  %v1167 = vsub.f32 %v1165, %v1166
  %v1168 = vand.u32 %v1167, 4294901760
  %1169 = vmatmul.mubr.f32.gmra.mxu0 %v1168
  %v1170 = vpop.f32.mrf.mxu0
  %v1171 = vadd.f32 0.0, %v1170
  %v1172 = vpop.f32.mrf.mxu0
  %1173 = vmatprep.mubr.f32.mxu0 0.0
  %v1174 = vand.u32 %v464, 4294901760
  %v1175 = vsub.f32 %v464, %v1174
  %v1176 = vand.u32 %v1175, 4294901760
  %v1177 = vsub.f32 %v1175, %v1176
  %v1178 = vand.u32 %v1177, 4294901760
  %1179 = vmatmul.mubr.f32.gmra.mxu0 %v1178
  %v1180 = vpop.f32.mrf.mxu0
  %v1181 = vadd.f32 0.0, %v1180
  %v1182 = vpop.f32.mrf.mxu0
  %1183 = vmatprep.mubr.f32.mxu0 0.0
  %v1184 = vand.u32 %v465, 4294901760
  %v1185 = vsub.f32 %v465, %v1184
  %v1186 = vand.u32 %v1185, 4294901760
  %v1187 = vsub.f32 %v1185, %v1186
  %v1188 = vand.u32 %v1187, 4294901760
  %1189 = vmatmul.mubr.f32.gmra.mxu0 %v1188
  %v1190 = vpop.f32.mrf.mxu0
  %v1191 = vadd.f32 0.0, %v1190
  %v1192 = vpop.f32.mrf.mxu0
  %1193 = vmatprep.mubr.f32.mxu0 0.0
  %v1194 = vand.u32 %v466, 4294901760
  %v1195 = vsub.f32 %v466, %v1194
  %v1196 = vand.u32 %v1195, 4294901760
  %v1197 = vsub.f32 %v1195, %v1196
  %v1198 = vand.u32 %v1197, 4294901760
  %1199 = vmatmul.mubr.f32.gmra.mxu0 %v1198
  %v1200 = vpop.f32.mrf.mxu0
  %v1201 = vadd.f32 0.0, %v1200
  %v1202 = vpop.f32.mrf.mxu0
  %1203 = vdwg.mxu0
  %1204 = vmatprep.subr.mxu0 0.0
  %v1205 = vand.u32 %v482, 4294901760
  %v1206 = vsub.f32 %v482, %v1205
  %v1207 = vand.u32 %v1206, 4294901760
  %v1208 = vsub.f32 %v1206, %v1207
  %v1209 = vand.u32 %v1208, 4294901760
  %1210 = vmatpush1.msra.mxu0 %v1209
  %1211 = vmatprep.subr.mxu0 0.0
  %v1212 = vand.u32 %v481, 4294901760
  %v1213 = vsub.f32 %v481, %v1212
  %v1214 = vand.u32 %v1213, 4294901760
  %v1215 = vsub.f32 %v1213, %v1214
  %v1216 = vand.u32 %v1215, 4294901760
  %1217 = vmatpush1.msra.mxu0 %v1216
  %1218 = vmatprep.subr.mxu0 0.0
  %v1219 = vand.u32 %v480, 4294901760
  %v1220 = vsub.f32 %v480, %v1219
  %v1221 = vand.u32 %v1220, 4294901760
  %v1222 = vsub.f32 %v1220, %v1221
  %v1223 = vand.u32 %v1222, 4294901760
  %1224 = vmatpush1.msra.mxu0 %v1223
  %1225 = vmatprep.subr.mxu0 0.0
  %v1226 = vand.u32 %v479, 4294901760
  %v1227 = vsub.f32 %v479, %v1226
  %v1228 = vand.u32 %v1227, 4294901760
  %v1229 = vsub.f32 %v1227, %v1228
  %v1230 = vand.u32 %v1229, 4294901760
  %1231 = vmatpush1.msra.mxu0 %v1230
  %1232 = vmatprep.subr.mxu0 0.0
  %v1233 = vand.u32 %v478, 4294901760
  %v1234 = vsub.f32 %v478, %v1233
  %v1235 = vand.u32 %v1234, 4294901760
  %v1236 = vsub.f32 %v1234, %v1235
  %v1237 = vand.u32 %v1236, 4294901760
  %1238 = vmatpush1.msra.mxu0 %v1237
  %1239 = vmatprep.subr.mxu0 0.0
  %v1240 = vand.u32 %v477, 4294901760
  %v1241 = vsub.f32 %v477, %v1240
  %v1242 = vand.u32 %v1241, 4294901760
  %v1243 = vsub.f32 %v1241, %v1242
  %v1244 = vand.u32 %v1243, 4294901760
  %1245 = vmatpush1.msra.mxu0 %v1244
  %1246 = vmatprep.subr.mxu0 0.0
  %v1247 = vand.u32 %v476, 4294901760
  %v1248 = vsub.f32 %v476, %v1247
  %v1249 = vand.u32 %v1248, 4294901760
  %v1250 = vsub.f32 %v1248, %v1249
  %v1251 = vand.u32 %v1250, 4294901760
  %1252 = vmatpush1.msra.mxu0 %v1251
  %1253 = vmatprep.subr.mxu0 0.0
  %v1254 = vand.u32 %v475, 4294901760
  %v1255 = vsub.f32 %v475, %v1254
  %v1256 = vand.u32 %v1255, 4294901760
  %v1257 = vsub.f32 %v1255, %v1256
  %v1258 = vand.u32 %v1257, 4294901760
  %1259 = vmatpush1.msra.mxu0 %v1258
  %1260 = vmatprep.subr.mxu0 0.0
  %v1261 = vand.u32 %v474, 4294901760
  %v1262 = vsub.f32 %v474, %v1261
  %v1263 = vand.u32 %v1262, 4294901760
  %v1264 = vsub.f32 %v1262, %v1263
  %v1265 = vand.u32 %v1264, 4294901760
  %1266 = vmatpush1.msra.mxu0 %v1265
  %1267 = vmatprep.subr.mxu0 0.0
  %v1268 = vand.u32 %v473, 4294901760
  %v1269 = vsub.f32 %v473, %v1268
  %v1270 = vand.u32 %v1269, 4294901760
  %v1271 = vsub.f32 %v1269, %v1270
  %v1272 = vand.u32 %v1271, 4294901760
  %1273 = vmatpush1.msra.mxu0 %v1272
  %1274 = vmatprep.subr.mxu0 0.0
  %v1275 = vand.u32 %v472, 4294901760
  %v1276 = vsub.f32 %v472, %v1275
  %v1277 = vand.u32 %v1276, 4294901760
  %v1278 = vsub.f32 %v1276, %v1277
  %v1279 = vand.u32 %v1278, 4294901760
  %1280 = vmatpush1.msra.mxu0 %v1279
  %1281 = vmatprep.subr.mxu0 0.0
  %v1282 = vand.u32 %v471, 4294901760
  %v1283 = vsub.f32 %v471, %v1282
  %v1284 = vand.u32 %v1283, 4294901760
  %v1285 = vsub.f32 %v1283, %v1284
  %v1286 = vand.u32 %v1285, 4294901760
  %1287 = vmatpush1.msra.mxu0 %v1286
  %1288 = vmatprep.subr.mxu0 0.0
  %v1289 = vand.u32 %v470, 4294901760
  %v1290 = vsub.f32 %v470, %v1289
  %v1291 = vand.u32 %v1290, 4294901760
  %v1292 = vsub.f32 %v1290, %v1291
  %v1293 = vand.u32 %v1292, 4294901760
  %1294 = vmatpush1.msra.mxu0 %v1293
  %1295 = vmatprep.subr.mxu0 0.0
  %v1296 = vand.u32 %v469, 4294901760
  %v1297 = vsub.f32 %v469, %v1296
  %v1298 = vand.u32 %v1297, 4294901760
  %v1299 = vsub.f32 %v1297, %v1298
  %v1300 = vand.u32 %v1299, 4294901760
  %1301 = vmatpush1.msra.mxu0 %v1300
  %1302 = vmatprep.subr.mxu0 0.0
  %v1303 = vand.u32 %v468, 4294901760
  %v1304 = vsub.f32 %v468, %v1303
  %v1305 = vand.u32 %v1304, 4294901760
  %v1306 = vsub.f32 %v1304, %v1305
  %v1307 = vand.u32 %v1306, 4294901760
  %1308 = vmatpush1.msra.mxu0 %v1307
  %1309 = vmatprep.subr.mxu0 0.0
  %v1310 = vand.u32 %v467, 4294901760
  %v1311 = vsub.f32 %v467, %v1310
  %v1312 = vand.u32 %v1311, 4294901760
  %v1313 = vsub.f32 %v1311, %v1312
  %v1314 = vand.u32 %v1313, 4294901760
  %1315 = vmatpush1.msra.mxu0 %v1314
  %1316 = vmatprep.subr.mxu0 0.0
  %1317 = vmatpush2.msra.mxu0 0.0
  %1318 = vmatprep.subr.mxu0 0.0
  %1319 = vmatpush2.msra.mxu0 0.0
  %1320 = vmatprep.subr.mxu0 0.0
  %1321 = vmatpush2.msra.mxu0 0.0
  %1322 = vmatprep.subr.mxu0 0.0
  %1323 = vmatpush2.msra.mxu0 0.0
  %1324 = vmatprep.subr.mxu0 0.0
  %1325 = vmatpush2.msra.mxu0 0.0
  %1326 = vmatprep.subr.mxu0 0.0
  %1327 = vmatpush2.msra.mxu0 0.0
  %1328 = vmatprep.subr.mxu0 0.0
  %1329 = vmatpush2.msra.mxu0 0.0
  %1330 = vmatprep.subr.mxu0 0.0
  %1331 = vmatpush2.msra.mxu0 0.0
  %1332 = vmatprep.subr.mxu0 0.0
  %1333 = vmatpush2.msra.mxu0 0.0
  %1334 = vmatprep.subr.mxu0 0.0
  %1335 = vmatpush2.msra.mxu0 0.0
  %1336 = vmatprep.subr.mxu0 0.0
  %1337 = vmatpush2.msra.mxu0 0.0
  %1338 = vmatprep.subr.mxu0 0.0
  %1339 = vmatpush2.msra.mxu0 0.0
  %1340 = vmatprep.subr.mxu0 0.0
  %1341 = vmatpush2.msra.mxu0 0.0
  %1342 = vmatprep.subr.mxu0 0.0
  %1343 = vmatpush2.msra.mxu0 0.0
  %1344 = vmatprep.subr.mxu0 0.0
  %1345 = vmatpush2.msra.mxu0 0.0
  %1346 = vmatprep.subr.mxu0 0.0
  %1347 = vmatpush2.msra.mxu0 0.0
  %1348 = vmatprep.mubr.f32.mxu0 0.0
  %v1349 = vand.u32 %v403, 4294901760
  %1350 = vmatmul.mubr.f32.gmra.mxu0 %v1349
  %v1351 = vpop.f32.mrf.mxu0
  %v1352 = vadd.f32 %v571, %v1351
  %v1353 = vpop.f32.mrf.mxu0
  %1354 = vmatprep.mubr.f32.mxu0 0.0
  %v1355 = vand.u32 %v404, 4294901760
  %1356 = vmatmul.mubr.f32.gmra.mxu0 %v1355
  %v1357 = vpop.f32.mrf.mxu0
  %v1358 = vadd.f32 %v581, %v1357
  %v1359 = vpop.f32.mrf.mxu0
  %1360 = vmatprep.mubr.f32.mxu0 0.0
  %v1361 = vand.u32 %v405, 4294901760
  %1362 = vmatmul.mubr.f32.gmra.mxu0 %v1361
  %v1363 = vpop.f32.mrf.mxu0
  %v1364 = vadd.f32 %v591, %v1363
  %v1365 = vpop.f32.mrf.mxu0
  %1366 = vmatprep.mubr.f32.mxu0 0.0
  %v1367 = vand.u32 %v406, 4294901760
  %1368 = vmatmul.mubr.f32.gmra.mxu0 %v1367
  %v1369 = vpop.f32.mrf.mxu0
  %v1370 = vadd.f32 %v601, %v1369
  %v1371 = vpop.f32.mrf.mxu0
  %1372 = vmatprep.mubr.f32.mxu0 0.0
  %v1373 = vand.u32 %v407, 4294901760
  %1374 = vmatmul.mubr.f32.gmra.mxu0 %v1373
  %v1375 = vpop.f32.mrf.mxu0
  %v1376 = vadd.f32 %v611, %v1375
  %v1377 = vpop.f32.mrf.mxu0
  %1378 = vmatprep.mubr.f32.mxu0 0.0
  %v1379 = vand.u32 %v408, 4294901760
  %1380 = vmatmul.mubr.f32.gmra.mxu0 %v1379
  %v1381 = vpop.f32.mrf.mxu0
  %v1382 = vadd.f32 %v621, %v1381
  %v1383 = vpop.f32.mrf.mxu0
  %1384 = vmatprep.mubr.f32.mxu0 0.0
  %v1385 = vand.u32 %v409, 4294901760
  %1386 = vmatmul.mubr.f32.gmra.mxu0 %v1385
  %v1387 = vpop.f32.mrf.mxu0
  %v1388 = vadd.f32 %v631, %v1387
  %v1389 = vpop.f32.mrf.mxu0
  %1390 = vmatprep.mubr.f32.mxu0 0.0
  %v1391 = vand.u32 %v410, 4294901760
  %1392 = vmatmul.mubr.f32.gmra.mxu0 %v1391
  %v1393 = vpop.f32.mrf.mxu0
  %v1394 = vadd.f32 %v641, %v1393
  %v1395 = vpop.f32.mrf.mxu0
  %1396 = vmatprep.mubr.f32.mxu0 0.0
  %v1397 = vand.u32 %v411, 4294901760
  %1398 = vmatmul.mubr.f32.gmra.mxu0 %v1397
  %v1399 = vpop.f32.mrf.mxu0
  %v1400 = vadd.f32 %v651, %v1399
  %v1401 = vpop.f32.mrf.mxu0
  %1402 = vmatprep.mubr.f32.mxu0 0.0
  %v1403 = vand.u32 %v412, 4294901760
  %1404 = vmatmul.mubr.f32.gmra.mxu0 %v1403
  %v1405 = vpop.f32.mrf.mxu0
  %v1406 = vadd.f32 %v661, %v1405
  %v1407 = vpop.f32.mrf.mxu0
  %1408 = vmatprep.mubr.f32.mxu0 0.0
  %v1409 = vand.u32 %v413, 4294901760
  %1410 = vmatmul.mubr.f32.gmra.mxu0 %v1409
  %v1411 = vpop.f32.mrf.mxu0
  %v1412 = vadd.f32 %v671, %v1411
  %v1413 = vpop.f32.mrf.mxu0
  %1414 = vmatprep.mubr.f32.mxu0 0.0
  %v1415 = vand.u32 %v414, 4294901760
  %1416 = vmatmul.mubr.f32.gmra.mxu0 %v1415
  %v1417 = vpop.f32.mrf.mxu0
  %v1418 = vadd.f32 %v681, %v1417
  %v1419 = vpop.f32.mrf.mxu0
  %1420 = vmatprep.mubr.f32.mxu0 0.0
  %v1421 = vand.u32 %v415, 4294901760
  %1422 = vmatmul.mubr.f32.gmra.mxu0 %v1421
  %v1423 = vpop.f32.mrf.mxu0
  %v1424 = vadd.f32 %v691, %v1423
  %v1425 = vpop.f32.mrf.mxu0
  %1426 = vmatprep.mubr.f32.mxu0 0.0
  %v1427 = vand.u32 %v416, 4294901760
  %1428 = vmatmul.mubr.f32.gmra.mxu0 %v1427
  %v1429 = vpop.f32.mrf.mxu0
  %v1430 = vadd.f32 %v701, %v1429
  %v1431 = vpop.f32.mrf.mxu0
  %1432 = vmatprep.mubr.f32.mxu0 0.0
  %v1433 = vand.u32 %v417, 4294901760
  %1434 = vmatmul.mubr.f32.gmra.mxu0 %v1433
  %v1435 = vpop.f32.mrf.mxu0
  %v1436 = vadd.f32 %v711, %v1435
  %v1437 = vpop.f32.mrf.mxu0
  %1438 = vmatprep.mubr.f32.mxu0 0.0
  %v1439 = vand.u32 %v418, 4294901760
  %1440 = vmatmul.mubr.f32.gmra.mxu0 %v1439
  %v1441 = vpop.f32.mrf.mxu0
  %v1442 = vadd.f32 %v721, %v1441
  %v1443 = vpop.f32.mrf.mxu0
  %1444 = vmatprep.mubr.f32.mxu0 0.0
  %v1445 = vand.u32 %v419, 4294901760
  %1446 = vmatmul.mubr.f32.gmra.mxu0 %v1445
  %v1447 = vpop.f32.mrf.mxu0
  %v1448 = vadd.f32 %v731, %v1447
  %v1449 = vpop.f32.mrf.mxu0
  %1450 = vmatprep.mubr.f32.mxu0 0.0
  %v1451 = vand.u32 %v420, 4294901760
  %1452 = vmatmul.mubr.f32.gmra.mxu0 %v1451
  %v1453 = vpop.f32.mrf.mxu0
  %v1454 = vadd.f32 %v741, %v1453
  %v1455 = vpop.f32.mrf.mxu0
  %1456 = vmatprep.mubr.f32.mxu0 0.0
  %v1457 = vand.u32 %v421, 4294901760
  %1458 = vmatmul.mubr.f32.gmra.mxu0 %v1457
  %v1459 = vpop.f32.mrf.mxu0
  %v1460 = vadd.f32 %v751, %v1459
  %v1461 = vpop.f32.mrf.mxu0
  %1462 = vmatprep.mubr.f32.mxu0 0.0
  %v1463 = vand.u32 %v422, 4294901760
  %1464 = vmatmul.mubr.f32.gmra.mxu0 %v1463
  %v1465 = vpop.f32.mrf.mxu0
  %v1466 = vadd.f32 %v761, %v1465
  %v1467 = vpop.f32.mrf.mxu0
  %1468 = vmatprep.mubr.f32.mxu0 0.0
  %v1469 = vand.u32 %v423, 4294901760
  %1470 = vmatmul.mubr.f32.gmra.mxu0 %v1469
  %v1471 = vpop.f32.mrf.mxu0
  %v1472 = vadd.f32 %v771, %v1471
  %v1473 = vpop.f32.mrf.mxu0
  %1474 = vmatprep.mubr.f32.mxu0 0.0
  %v1475 = vand.u32 %v424, 4294901760
  %1476 = vmatmul.mubr.f32.gmra.mxu0 %v1475
  %v1477 = vpop.f32.mrf.mxu0
  %v1478 = vadd.f32 %v781, %v1477
  %v1479 = vpop.f32.mrf.mxu0
  %1480 = vmatprep.mubr.f32.mxu0 0.0
  %v1481 = vand.u32 %v425, 4294901760
  %1482 = vmatmul.mubr.f32.gmra.mxu0 %v1481
  %v1483 = vpop.f32.mrf.mxu0
  %v1484 = vadd.f32 %v791, %v1483
  %v1485 = vpop.f32.mrf.mxu0
  %1486 = vmatprep.mubr.f32.mxu0 0.0
  %v1487 = vand.u32 %v426, 4294901760
  %1488 = vmatmul.mubr.f32.gmra.mxu0 %v1487
  %v1489 = vpop.f32.mrf.mxu0
  %v1490 = vadd.f32 %v801, %v1489
  %v1491 = vpop.f32.mrf.mxu0
  %1492 = vmatprep.mubr.f32.mxu0 0.0
  %v1493 = vand.u32 %v427, 4294901760
  %1494 = vmatmul.mubr.f32.gmra.mxu0 %v1493
  %v1495 = vpop.f32.mrf.mxu0
  %v1496 = vadd.f32 %v811, %v1495
  %v1497 = vpop.f32.mrf.mxu0
  %1498 = vmatprep.mubr.f32.mxu0 0.0
  %v1499 = vand.u32 %v428, 4294901760
  %1500 = vmatmul.mubr.f32.gmra.mxu0 %v1499
  %v1501 = vpop.f32.mrf.mxu0
  %v1502 = vadd.f32 %v821, %v1501
  %v1503 = vpop.f32.mrf.mxu0
  %1504 = vmatprep.mubr.f32.mxu0 0.0
  %v1505 = vand.u32 %v429, 4294901760
  %1506 = vmatmul.mubr.f32.gmra.mxu0 %v1505
  %v1507 = vpop.f32.mrf.mxu0
  %v1508 = vadd.f32 %v831, %v1507
  %v1509 = vpop.f32.mrf.mxu0
  %1510 = vmatprep.mubr.f32.mxu0 0.0
  %v1511 = vand.u32 %v430, 4294901760
  %1512 = vmatmul.mubr.f32.gmra.mxu0 %v1511
  %v1513 = vpop.f32.mrf.mxu0
  %v1514 = vadd.f32 %v841, %v1513
  %v1515 = vpop.f32.mrf.mxu0
  %1516 = vmatprep.mubr.f32.mxu0 0.0
  %v1517 = vand.u32 %v431, 4294901760
  %1518 = vmatmul.mubr.f32.gmra.mxu0 %v1517
  %v1519 = vpop.f32.mrf.mxu0
  %v1520 = vadd.f32 %v851, %v1519
  %v1521 = vpop.f32.mrf.mxu0
  %1522 = vmatprep.mubr.f32.mxu0 0.0
  %v1523 = vand.u32 %v432, 4294901760
  %1524 = vmatmul.mubr.f32.gmra.mxu0 %v1523
  %v1525 = vpop.f32.mrf.mxu0
  %v1526 = vadd.f32 %v861, %v1525
  %v1527 = vpop.f32.mrf.mxu0
  %1528 = vmatprep.mubr.f32.mxu0 0.0
  %v1529 = vand.u32 %v433, 4294901760
  %1530 = vmatmul.mubr.f32.gmra.mxu0 %v1529
  %v1531 = vpop.f32.mrf.mxu0
  %v1532 = vadd.f32 %v871, %v1531
  %v1533 = vpop.f32.mrf.mxu0
  %1534 = vmatprep.mubr.f32.mxu0 0.0
  %v1535 = vand.u32 %v434, 4294901760
  %1536 = vmatmul.mubr.f32.gmra.mxu0 %v1535
  %v1537 = vpop.f32.mrf.mxu0
  %v1538 = vadd.f32 %v881, %v1537
  %v1539 = vpop.f32.mrf.mxu0
  %1540 = vmatprep.mubr.f32.mxu0 0.0
  %v1541 = vand.u32 %v435, 4294901760
  %1542 = vmatmul.mubr.f32.gmra.mxu0 %v1541
  %v1543 = vpop.f32.mrf.mxu0
  %v1544 = vadd.f32 %v891, %v1543
  %v1545 = vpop.f32.mrf.mxu0
  %1546 = vmatprep.mubr.f32.mxu0 0.0
  %v1547 = vand.u32 %v436, 4294901760
  %1548 = vmatmul.mubr.f32.gmra.mxu0 %v1547
  %v1549 = vpop.f32.mrf.mxu0
  %v1550 = vadd.f32 %v901, %v1549
  %v1551 = vpop.f32.mrf.mxu0
  %1552 = vmatprep.mubr.f32.mxu0 0.0
  %v1553 = vand.u32 %v437, 4294901760
  %1554 = vmatmul.mubr.f32.gmra.mxu0 %v1553
  %v1555 = vpop.f32.mrf.mxu0
  %v1556 = vadd.f32 %v911, %v1555
  %v1557 = vpop.f32.mrf.mxu0
  %1558 = vmatprep.mubr.f32.mxu0 0.0
  %v1559 = vand.u32 %v438, 4294901760
  %1560 = vmatmul.mubr.f32.gmra.mxu0 %v1559
  %v1561 = vpop.f32.mrf.mxu0
  %v1562 = vadd.f32 %v921, %v1561
  %v1563 = vpop.f32.mrf.mxu0
  %1564 = vmatprep.mubr.f32.mxu0 0.0
  %v1565 = vand.u32 %v439, 4294901760
  %1566 = vmatmul.mubr.f32.gmra.mxu0 %v1565
  %v1567 = vpop.f32.mrf.mxu0
  %v1568 = vadd.f32 %v931, %v1567
  %v1569 = vpop.f32.mrf.mxu0
  %1570 = vmatprep.mubr.f32.mxu0 0.0
  %v1571 = vand.u32 %v440, 4294901760
  %1572 = vmatmul.mubr.f32.gmra.mxu0 %v1571
  %v1573 = vpop.f32.mrf.mxu0
  %v1574 = vadd.f32 %v941, %v1573
  %v1575 = vpop.f32.mrf.mxu0
  %1576 = vmatprep.mubr.f32.mxu0 0.0
  %v1577 = vand.u32 %v441, 4294901760
  %1578 = vmatmul.mubr.f32.gmra.mxu0 %v1577
  %v1579 = vpop.f32.mrf.mxu0
  %v1580 = vadd.f32 %v951, %v1579
  %v1581 = vpop.f32.mrf.mxu0
  %1582 = vmatprep.mubr.f32.mxu0 0.0
  %v1583 = vand.u32 %v442, 4294901760
  %1584 = vmatmul.mubr.f32.gmra.mxu0 %v1583
  %v1585 = vpop.f32.mrf.mxu0
  %v1586 = vadd.f32 %v961, %v1585
  %v1587 = vpop.f32.mrf.mxu0
  %1588 = vmatprep.mubr.f32.mxu0 0.0
  %v1589 = vand.u32 %v443, 4294901760
  %1590 = vmatmul.mubr.f32.gmra.mxu0 %v1589
  %v1591 = vpop.f32.mrf.mxu0
  %v1592 = vadd.f32 %v971, %v1591
  %v1593 = vpop.f32.mrf.mxu0
  %1594 = vmatprep.mubr.f32.mxu0 0.0
  %v1595 = vand.u32 %v444, 4294901760
  %1596 = vmatmul.mubr.f32.gmra.mxu0 %v1595
  %v1597 = vpop.f32.mrf.mxu0
  %v1598 = vadd.f32 %v981, %v1597
  %v1599 = vpop.f32.mrf.mxu0
  %1600 = vmatprep.mubr.f32.mxu0 0.0
  %v1601 = vand.u32 %v445, 4294901760
  %1602 = vmatmul.mubr.f32.gmra.mxu0 %v1601
  %v1603 = vpop.f32.mrf.mxu0
  %v1604 = vadd.f32 %v991, %v1603
  %v1605 = vpop.f32.mrf.mxu0
  %1606 = vmatprep.mubr.f32.mxu0 0.0
  %v1607 = vand.u32 %v446, 4294901760
  %1608 = vmatmul.mubr.f32.gmra.mxu0 %v1607
  %v1609 = vpop.f32.mrf.mxu0
  %v1610 = vadd.f32 %v1001, %v1609
  %v1611 = vpop.f32.mrf.mxu0
  %1612 = vmatprep.mubr.f32.mxu0 0.0
  %v1613 = vand.u32 %v447, 4294901760
  %1614 = vmatmul.mubr.f32.gmra.mxu0 %v1613
  %v1615 = vpop.f32.mrf.mxu0
  %v1616 = vadd.f32 %v1011, %v1615
  %v1617 = vpop.f32.mrf.mxu0
  %1618 = vmatprep.mubr.f32.mxu0 0.0
  %v1619 = vand.u32 %v448, 4294901760
  %1620 = vmatmul.mubr.f32.gmra.mxu0 %v1619
  %v1621 = vpop.f32.mrf.mxu0
  %v1622 = vadd.f32 %v1021, %v1621
  %v1623 = vpop.f32.mrf.mxu0
  %1624 = vmatprep.mubr.f32.mxu0 0.0
  %v1625 = vand.u32 %v449, 4294901760
  %1626 = vmatmul.mubr.f32.gmra.mxu0 %v1625
  %v1627 = vpop.f32.mrf.mxu0
  %v1628 = vadd.f32 %v1031, %v1627
  %v1629 = vpop.f32.mrf.mxu0
  %1630 = vmatprep.mubr.f32.mxu0 0.0
  %v1631 = vand.u32 %v450, 4294901760
  %1632 = vmatmul.mubr.f32.gmra.mxu0 %v1631
  %v1633 = vpop.f32.mrf.mxu0
  %v1634 = vadd.f32 %v1041, %v1633
  %v1635 = vpop.f32.mrf.mxu0
  %1636 = vmatprep.mubr.f32.mxu0 0.0
  %v1637 = vand.u32 %v451, 4294901760
  %1638 = vmatmul.mubr.f32.gmra.mxu0 %v1637
  %v1639 = vpop.f32.mrf.mxu0
  %v1640 = vadd.f32 %v1051, %v1639
  %v1641 = vpop.f32.mrf.mxu0
  %1642 = vmatprep.mubr.f32.mxu0 0.0
  %v1643 = vand.u32 %v452, 4294901760
  %1644 = vmatmul.mubr.f32.gmra.mxu0 %v1643
  %v1645 = vpop.f32.mrf.mxu0
  %v1646 = vadd.f32 %v1061, %v1645
  %v1647 = vpop.f32.mrf.mxu0
  %1648 = vmatprep.mubr.f32.mxu0 0.0
  %v1649 = vand.u32 %v453, 4294901760
  %1650 = vmatmul.mubr.f32.gmra.mxu0 %v1649
  %v1651 = vpop.f32.mrf.mxu0
  %v1652 = vadd.f32 %v1071, %v1651
  %v1653 = vpop.f32.mrf.mxu0
  %1654 = vmatprep.mubr.f32.mxu0 0.0
  %v1655 = vand.u32 %v454, 4294901760
  %1656 = vmatmul.mubr.f32.gmra.mxu0 %v1655
  %v1657 = vpop.f32.mrf.mxu0
  %v1658 = vadd.f32 %v1081, %v1657
  %v1659 = vpop.f32.mrf.mxu0
  %1660 = vmatprep.mubr.f32.mxu0 0.0
  %v1661 = vand.u32 %v455, 4294901760
  %1662 = vmatmul.mubr.f32.gmra.mxu0 %v1661
  %v1663 = vpop.f32.mrf.mxu0
  %v1664 = vadd.f32 %v1091, %v1663
  %v1665 = vpop.f32.mrf.mxu0
  %1666 = vmatprep.mubr.f32.mxu0 0.0
  %v1667 = vand.u32 %v456, 4294901760
  %1668 = vmatmul.mubr.f32.gmra.mxu0 %v1667
  %v1669 = vpop.f32.mrf.mxu0
  %v1670 = vadd.f32 %v1101, %v1669
  %v1671 = vpop.f32.mrf.mxu0
  %1672 = vmatprep.mubr.f32.mxu0 0.0
  %v1673 = vand.u32 %v457, 4294901760
  %1674 = vmatmul.mubr.f32.gmra.mxu0 %v1673
  %v1675 = vpop.f32.mrf.mxu0
  %v1676 = vadd.f32 %v1111, %v1675
  %v1677 = vpop.f32.mrf.mxu0
  %1678 = vmatprep.mubr.f32.mxu0 0.0
  %v1679 = vand.u32 %v458, 4294901760
  %1680 = vmatmul.mubr.f32.gmra.mxu0 %v1679
  %v1681 = vpop.f32.mrf.mxu0
  %v1682 = vadd.f32 %v1121, %v1681
  %v1683 = vpop.f32.mrf.mxu0
  %1684 = vmatprep.mubr.f32.mxu0 0.0
  %v1685 = vand.u32 %v459, 4294901760
  %1686 = vmatmul.mubr.f32.gmra.mxu0 %v1685
  %v1687 = vpop.f32.mrf.mxu0
  %v1688 = vadd.f32 %v1131, %v1687
  %v1689 = vpop.f32.mrf.mxu0
  %1690 = vmatprep.mubr.f32.mxu0 0.0
  %v1691 = vand.u32 %v460, 4294901760
  %1692 = vmatmul.mubr.f32.gmra.mxu0 %v1691
  %v1693 = vpop.f32.mrf.mxu0
  %v1694 = vadd.f32 %v1141, %v1693
  %v1695 = vpop.f32.mrf.mxu0
  %1696 = vmatprep.mubr.f32.mxu0 0.0
  %v1697 = vand.u32 %v461, 4294901760
  %1698 = vmatmul.mubr.f32.gmra.mxu0 %v1697
  %v1699 = vpop.f32.mrf.mxu0
  %v1700 = vadd.f32 %v1151, %v1699
  %v1701 = vpop.f32.mrf.mxu0
  %1702 = vmatprep.mubr.f32.mxu0 0.0
  %v1703 = vand.u32 %v462, 4294901760
  %1704 = vmatmul.mubr.f32.gmra.mxu0 %v1703
  %v1705 = vpop.f32.mrf.mxu0
  %v1706 = vadd.f32 %v1161, %v1705
  %v1707 = vpop.f32.mrf.mxu0
  %1708 = vmatprep.mubr.f32.mxu0 0.0
  %v1709 = vand.u32 %v463, 4294901760
  %1710 = vmatmul.mubr.f32.gmra.mxu0 %v1709
  %v1711 = vpop.f32.mrf.mxu0
  %v1712 = vadd.f32 %v1171, %v1711
  %v1713 = vpop.f32.mrf.mxu0
  %1714 = vmatprep.mubr.f32.mxu0 0.0
  %v1715 = vand.u32 %v464, 4294901760
  %1716 = vmatmul.mubr.f32.gmra.mxu0 %v1715
  %v1717 = vpop.f32.mrf.mxu0
  %v1718 = vadd.f32 %v1181, %v1717
  %v1719 = vpop.f32.mrf.mxu0
  %1720 = vmatprep.mubr.f32.mxu0 0.0
  %v1721 = vand.u32 %v465, 4294901760
  %1722 = vmatmul.mubr.f32.gmra.mxu0 %v1721
  %v1723 = vpop.f32.mrf.mxu0
  %v1724 = vadd.f32 %v1191, %v1723
  %v1725 = vpop.f32.mrf.mxu0
  %1726 = vmatprep.mubr.f32.mxu0 0.0
  %v1727 = vand.u32 %v466, 4294901760
  %1728 = vmatmul.mubr.f32.gmra.mxu0 %v1727
  %v1729 = vpop.f32.mrf.mxu0
  %v1730 = vadd.f32 %v1201, %v1729
  %v1731 = vpop.f32.mrf.mxu0
  %1732 = vdwg.mxu0
  %1733 = vmatprep.subr.mxu0 0.0
  %v1734 = vand.u32 %v482, 4294901760
  %v1735 = vsub.f32 %v482, %v1734
  %1736 = vmatpush1.msra.mxu0 %v1735
  %1737 = vmatprep.subr.mxu0 0.0
  %v1738 = vand.u32 %v481, 4294901760
  %v1739 = vsub.f32 %v481, %v1738
  %1740 = vmatpush1.msra.mxu0 %v1739
  %1741 = vmatprep.subr.mxu0 0.0
  %v1742 = vand.u32 %v480, 4294901760
  %v1743 = vsub.f32 %v480, %v1742
  %1744 = vmatpush1.msra.mxu0 %v1743
  %1745 = vmatprep.subr.mxu0 0.0
  %v1746 = vand.u32 %v479, 4294901760
  %v1747 = vsub.f32 %v479, %v1746
  %1748 = vmatpush1.msra.mxu0 %v1747
  %1749 = vmatprep.subr.mxu0 0.0
  %v1750 = vand.u32 %v478, 4294901760
  %v1751 = vsub.f32 %v478, %v1750
  %1752 = vmatpush1.msra.mxu0 %v1751
  %1753 = vmatprep.subr.mxu0 0.0
  %v1754 = vand.u32 %v477, 4294901760
  %v1755 = vsub.f32 %v477, %v1754
  %1756 = vmatpush1.msra.mxu0 %v1755
  %1757 = vmatprep.subr.mxu0 0.0
  %v1758 = vand.u32 %v476, 4294901760
  %v1759 = vsub.f32 %v476, %v1758
  %1760 = vmatpush1.msra.mxu0 %v1759
  %1761 = vmatprep.subr.mxu0 0.0
  %v1762 = vand.u32 %v475, 4294901760
  %v1763 = vsub.f32 %v475, %v1762
  %1764 = vmatpush1.msra.mxu0 %v1763
  %1765 = vmatprep.subr.mxu0 0.0
  %v1766 = vand.u32 %v474, 4294901760
  %v1767 = vsub.f32 %v474, %v1766
  %1768 = vmatpush1.msra.mxu0 %v1767
  %1769 = vmatprep.subr.mxu0 0.0
  %v1770 = vand.u32 %v473, 4294901760
  %v1771 = vsub.f32 %v473, %v1770
  %1772 = vmatpush1.msra.mxu0 %v1771
  %1773 = vmatprep.subr.mxu0 0.0
  %v1774 = vand.u32 %v472, 4294901760
  %v1775 = vsub.f32 %v472, %v1774
  %1776 = vmatpush1.msra.mxu0 %v1775
  %1777 = vmatprep.subr.mxu0 0.0
  %v1778 = vand.u32 %v471, 4294901760
  %v1779 = vsub.f32 %v471, %v1778
  %1780 = vmatpush1.msra.mxu0 %v1779
  %1781 = vmatprep.subr.mxu0 0.0
  %v1782 = vand.u32 %v470, 4294901760
  %v1783 = vsub.f32 %v470, %v1782
  %1784 = vmatpush1.msra.mxu0 %v1783
  %1785 = vmatprep.subr.mxu0 0.0
  %v1786 = vand.u32 %v469, 4294901760
  %v1787 = vsub.f32 %v469, %v1786
  %1788 = vmatpush1.msra.mxu0 %v1787
  %1789 = vmatprep.subr.mxu0 0.0
  %v1790 = vand.u32 %v468, 4294901760
  %v1791 = vsub.f32 %v468, %v1790
  %1792 = vmatpush1.msra.mxu0 %v1791
  %1793 = vmatprep.subr.mxu0 0.0
  %v1794 = vand.u32 %v467, 4294901760
  %v1795 = vsub.f32 %v467, %v1794
  %1796 = vmatpush1.msra.mxu0 %v1795
  %1797 = vmatprep.subr.mxu0 0.0
  %1798 = vmatpush2.msra.mxu0 0.0
  %1799 = vmatprep.subr.mxu0 0.0
  %1800 = vmatpush2.msra.mxu0 0.0
  %1801 = vmatprep.subr.mxu0 0.0
  %1802 = vmatpush2.msra.mxu0 0.0
  %1803 = vmatprep.subr.mxu0 0.0
  %1804 = vmatpush2.msra.mxu0 0.0
  %1805 = vmatprep.subr.mxu0 0.0
  %1806 = vmatpush2.msra.mxu0 0.0
  %1807 = vmatprep.subr.mxu0 0.0
  %1808 = vmatpush2.msra.mxu0 0.0
  %1809 = vmatprep.subr.mxu0 0.0
  %1810 = vmatpush2.msra.mxu0 0.0
  %1811 = vmatprep.subr.mxu0 0.0
  %1812 = vmatpush2.msra.mxu0 0.0
  %1813 = vmatprep.subr.mxu0 0.0
  %1814 = vmatpush2.msra.mxu0 0.0
  %1815 = vmatprep.subr.mxu0 0.0
  %1816 = vmatpush2.msra.mxu0 0.0
  %1817 = vmatprep.subr.mxu0 0.0
  %1818 = vmatpush2.msra.mxu0 0.0
  %1819 = vmatprep.subr.mxu0 0.0
  %1820 = vmatpush2.msra.mxu0 0.0
  %1821 = vmatprep.subr.mxu0 0.0
  %1822 = vmatpush2.msra.mxu0 0.0
  %1823 = vmatprep.subr.mxu0 0.0
  %1824 = vmatpush2.msra.mxu0 0.0
  %1825 = vmatprep.subr.mxu0 0.0
  %1826 = vmatpush2.msra.mxu0 0.0
  %1827 = vmatprep.subr.mxu0 0.0
  %1828 = vmatpush2.msra.mxu0 0.0
  %1829 = vmatprep.mubr.f32.mxu0 0.0
  %v1830 = vand.u32 %v403, 4294901760
  %v1831 = vsub.f32 %v403, %v1830
  %1832 = vmatmul.mubr.f32.gmra.mxu0 %v1831
  %v1833 = vpop.f32.mrf.mxu0
  %v1834 = vadd.f32 %v1352, %v1833
  %v1835 = vpop.f32.mrf.mxu0
  %1836 = vmatprep.mubr.f32.mxu0 0.0
  %v1837 = vand.u32 %v404, 4294901760
  %v1838 = vsub.f32 %v404, %v1837
  %1839 = vmatmul.mubr.f32.gmra.mxu0 %v1838
  %v1840 = vpop.f32.mrf.mxu0
  %v1841 = vadd.f32 %v1358, %v1840
  %v1842 = vpop.f32.mrf.mxu0
  %1843 = vmatprep.mubr.f32.mxu0 0.0
  %v1844 = vand.u32 %v405, 4294901760
  %v1845 = vsub.f32 %v405, %v1844
  %1846 = vmatmul.mubr.f32.gmra.mxu0 %v1845
  %v1847 = vpop.f32.mrf.mxu0
  %v1848 = vadd.f32 %v1364, %v1847
  %v1849 = vpop.f32.mrf.mxu0
  %1850 = vmatprep.mubr.f32.mxu0 0.0
  %v1851 = vand.u32 %v406, 4294901760
  %v1852 = vsub.f32 %v406, %v1851
  %1853 = vmatmul.mubr.f32.gmra.mxu0 %v1852
  %v1854 = vpop.f32.mrf.mxu0
  %v1855 = vadd.f32 %v1370, %v1854
  %v1856 = vpop.f32.mrf.mxu0
  %1857 = vmatprep.mubr.f32.mxu0 0.0
  %v1858 = vand.u32 %v407, 4294901760
  %v1859 = vsub.f32 %v407, %v1858
  %1860 = vmatmul.mubr.f32.gmra.mxu0 %v1859
  %v1861 = vpop.f32.mrf.mxu0
  %v1862 = vadd.f32 %v1376, %v1861
  %v1863 = vpop.f32.mrf.mxu0
  %1864 = vmatprep.mubr.f32.mxu0 0.0
  %v1865 = vand.u32 %v408, 4294901760
  %v1866 = vsub.f32 %v408, %v1865
  %1867 = vmatmul.mubr.f32.gmra.mxu0 %v1866
  %v1868 = vpop.f32.mrf.mxu0
  %v1869 = vadd.f32 %v1382, %v1868
  %v1870 = vpop.f32.mrf.mxu0
  %1871 = vmatprep.mubr.f32.mxu0 0.0
  %v1872 = vand.u32 %v409, 4294901760
  %v1873 = vsub.f32 %v409, %v1872
  %1874 = vmatmul.mubr.f32.gmra.mxu0 %v1873
  %v1875 = vpop.f32.mrf.mxu0
  %v1876 = vadd.f32 %v1388, %v1875
  %v1877 = vpop.f32.mrf.mxu0
  %1878 = vmatprep.mubr.f32.mxu0 0.0
  %v1879 = vand.u32 %v410, 4294901760
  %v1880 = vsub.f32 %v410, %v1879
  %1881 = vmatmul.mubr.f32.gmra.mxu0 %v1880
  %v1882 = vpop.f32.mrf.mxu0
  %v1883 = vadd.f32 %v1394, %v1882
  %v1884 = vpop.f32.mrf.mxu0
  %1885 = vmatprep.mubr.f32.mxu0 0.0
  %v1886 = vand.u32 %v411, 4294901760
  %v1887 = vsub.f32 %v411, %v1886
  %1888 = vmatmul.mubr.f32.gmra.mxu0 %v1887
  %v1889 = vpop.f32.mrf.mxu0
  %v1890 = vadd.f32 %v1400, %v1889
  %v1891 = vpop.f32.mrf.mxu0
  %1892 = vmatprep.mubr.f32.mxu0 0.0
  %v1893 = vand.u32 %v412, 4294901760
  %v1894 = vsub.f32 %v412, %v1893
  %1895 = vmatmul.mubr.f32.gmra.mxu0 %v1894
  %v1896 = vpop.f32.mrf.mxu0
  %v1897 = vadd.f32 %v1406, %v1896
  %v1898 = vpop.f32.mrf.mxu0
  %1899 = vmatprep.mubr.f32.mxu0 0.0
  %v1900 = vand.u32 %v413, 4294901760
  %v1901 = vsub.f32 %v413, %v1900
  %1902 = vmatmul.mubr.f32.gmra.mxu0 %v1901
  %v1903 = vpop.f32.mrf.mxu0
  %v1904 = vadd.f32 %v1412, %v1903
  %v1905 = vpop.f32.mrf.mxu0
  %1906 = vmatprep.mubr.f32.mxu0 0.0
  %v1907 = vand.u32 %v414, 4294901760
  %v1908 = vsub.f32 %v414, %v1907
  %1909 = vmatmul.mubr.f32.gmra.mxu0 %v1908
  %v1910 = vpop.f32.mrf.mxu0
  %v1911 = vadd.f32 %v1418, %v1910
  %v1912 = vpop.f32.mrf.mxu0
  %1913 = vmatprep.mubr.f32.mxu0 0.0
  %v1914 = vand.u32 %v415, 4294901760
  %v1915 = vsub.f32 %v415, %v1914
  %1916 = vmatmul.mubr.f32.gmra.mxu0 %v1915
  %v1917 = vpop.f32.mrf.mxu0
  %v1918 = vadd.f32 %v1424, %v1917
  %v1919 = vpop.f32.mrf.mxu0
  %1920 = vmatprep.mubr.f32.mxu0 0.0
  %v1921 = vand.u32 %v416, 4294901760
  %v1922 = vsub.f32 %v416, %v1921
  %1923 = vmatmul.mubr.f32.gmra.mxu0 %v1922
  %v1924 = vpop.f32.mrf.mxu0
  %v1925 = vadd.f32 %v1430, %v1924
  %v1926 = vpop.f32.mrf.mxu0
  %1927 = vmatprep.mubr.f32.mxu0 0.0
  %v1928 = vand.u32 %v417, 4294901760
  %v1929 = vsub.f32 %v417, %v1928
  %1930 = vmatmul.mubr.f32.gmra.mxu0 %v1929
  %v1931 = vpop.f32.mrf.mxu0
  %v1932 = vadd.f32 %v1436, %v1931
  %v1933 = vpop.f32.mrf.mxu0
  %1934 = vmatprep.mubr.f32.mxu0 0.0
  %v1935 = vand.u32 %v418, 4294901760
  %v1936 = vsub.f32 %v418, %v1935
  %1937 = vmatmul.mubr.f32.gmra.mxu0 %v1936
  %v1938 = vpop.f32.mrf.mxu0
  %v1939 = vadd.f32 %v1442, %v1938
  %v1940 = vpop.f32.mrf.mxu0
  %1941 = vmatprep.mubr.f32.mxu0 0.0
  %v1942 = vand.u32 %v419, 4294901760
  %v1943 = vsub.f32 %v419, %v1942
  %1944 = vmatmul.mubr.f32.gmra.mxu0 %v1943
  %v1945 = vpop.f32.mrf.mxu0
  %v1946 = vadd.f32 %v1448, %v1945
  %v1947 = vpop.f32.mrf.mxu0
  %1948 = vmatprep.mubr.f32.mxu0 0.0
  %v1949 = vand.u32 %v420, 4294901760
  %v1950 = vsub.f32 %v420, %v1949
  %1951 = vmatmul.mubr.f32.gmra.mxu0 %v1950
  %v1952 = vpop.f32.mrf.mxu0
  %v1953 = vadd.f32 %v1454, %v1952
  %v1954 = vpop.f32.mrf.mxu0
  %1955 = vmatprep.mubr.f32.mxu0 0.0
  %v1956 = vand.u32 %v421, 4294901760
  %v1957 = vsub.f32 %v421, %v1956
  %1958 = vmatmul.mubr.f32.gmra.mxu0 %v1957
  %v1959 = vpop.f32.mrf.mxu0
  %v1960 = vadd.f32 %v1460, %v1959
  %v1961 = vpop.f32.mrf.mxu0
  %1962 = vmatprep.mubr.f32.mxu0 0.0
  %v1963 = vand.u32 %v422, 4294901760
  %v1964 = vsub.f32 %v422, %v1963
  %1965 = vmatmul.mubr.f32.gmra.mxu0 %v1964
  %v1966 = vpop.f32.mrf.mxu0
  %v1967 = vadd.f32 %v1466, %v1966
  %v1968 = vpop.f32.mrf.mxu0
  %1969 = vmatprep.mubr.f32.mxu0 0.0
  %v1970 = vand.u32 %v423, 4294901760
  %v1971 = vsub.f32 %v423, %v1970
  %1972 = vmatmul.mubr.f32.gmra.mxu0 %v1971
  %v1973 = vpop.f32.mrf.mxu0
  %v1974 = vadd.f32 %v1472, %v1973
  %v1975 = vpop.f32.mrf.mxu0
  %1976 = vmatprep.mubr.f32.mxu0 0.0
  %v1977 = vand.u32 %v424, 4294901760
  %v1978 = vsub.f32 %v424, %v1977
  %1979 = vmatmul.mubr.f32.gmra.mxu0 %v1978
  %v1980 = vpop.f32.mrf.mxu0
  %v1981 = vadd.f32 %v1478, %v1980
  %v1982 = vpop.f32.mrf.mxu0
  %1983 = vmatprep.mubr.f32.mxu0 0.0
  %v1984 = vand.u32 %v425, 4294901760
  %v1985 = vsub.f32 %v425, %v1984
  %1986 = vmatmul.mubr.f32.gmra.mxu0 %v1985
  %v1987 = vpop.f32.mrf.mxu0
  %v1988 = vadd.f32 %v1484, %v1987
  %v1989 = vpop.f32.mrf.mxu0
  %1990 = vmatprep.mubr.f32.mxu0 0.0
  %v1991 = vand.u32 %v426, 4294901760
  %v1992 = vsub.f32 %v426, %v1991
  %1993 = vmatmul.mubr.f32.gmra.mxu0 %v1992
  %v1994 = vpop.f32.mrf.mxu0
  %v1995 = vadd.f32 %v1490, %v1994
  %v1996 = vpop.f32.mrf.mxu0
  %1997 = vmatprep.mubr.f32.mxu0 0.0
  %v1998 = vand.u32 %v427, 4294901760
  %v1999 = vsub.f32 %v427, %v1998
  %2000 = vmatmul.mubr.f32.gmra.mxu0 %v1999
  %v2001 = vpop.f32.mrf.mxu0
  %v2002 = vadd.f32 %v1496, %v2001
  %v2003 = vpop.f32.mrf.mxu0
  %2004 = vmatprep.mubr.f32.mxu0 0.0
  %v2005 = vand.u32 %v428, 4294901760
  %v2006 = vsub.f32 %v428, %v2005
  %2007 = vmatmul.mubr.f32.gmra.mxu0 %v2006
  %v2008 = vpop.f32.mrf.mxu0
  %v2009 = vadd.f32 %v1502, %v2008
  %v2010 = vpop.f32.mrf.mxu0
  %2011 = vmatprep.mubr.f32.mxu0 0.0
  %v2012 = vand.u32 %v429, 4294901760
  %v2013 = vsub.f32 %v429, %v2012
  %2014 = vmatmul.mubr.f32.gmra.mxu0 %v2013
  %v2015 = vpop.f32.mrf.mxu0
  %v2016 = vadd.f32 %v1508, %v2015
  %v2017 = vpop.f32.mrf.mxu0
  %2018 = vmatprep.mubr.f32.mxu0 0.0
  %v2019 = vand.u32 %v430, 4294901760
  %v2020 = vsub.f32 %v430, %v2019
  %2021 = vmatmul.mubr.f32.gmra.mxu0 %v2020
  %v2022 = vpop.f32.mrf.mxu0
  %v2023 = vadd.f32 %v1514, %v2022
  %v2024 = vpop.f32.mrf.mxu0
  %2025 = vmatprep.mubr.f32.mxu0 0.0
  %v2026 = vand.u32 %v431, 4294901760
  %v2027 = vsub.f32 %v431, %v2026
  %2028 = vmatmul.mubr.f32.gmra.mxu0 %v2027
  %v2029 = vpop.f32.mrf.mxu0
  %v2030 = vadd.f32 %v1520, %v2029
  %v2031 = vpop.f32.mrf.mxu0
  %2032 = vmatprep.mubr.f32.mxu0 0.0
  %v2033 = vand.u32 %v432, 4294901760
  %v2034 = vsub.f32 %v432, %v2033
  %2035 = vmatmul.mubr.f32.gmra.mxu0 %v2034
  %v2036 = vpop.f32.mrf.mxu0
  %v2037 = vadd.f32 %v1526, %v2036
  %v2038 = vpop.f32.mrf.mxu0
  %2039 = vmatprep.mubr.f32.mxu0 0.0
  %v2040 = vand.u32 %v433, 4294901760
  %v2041 = vsub.f32 %v433, %v2040
  %2042 = vmatmul.mubr.f32.gmra.mxu0 %v2041
  %v2043 = vpop.f32.mrf.mxu0
  %v2044 = vadd.f32 %v1532, %v2043
  %v2045 = vpop.f32.mrf.mxu0
  %2046 = vmatprep.mubr.f32.mxu0 0.0
  %v2047 = vand.u32 %v434, 4294901760
  %v2048 = vsub.f32 %v434, %v2047
  %2049 = vmatmul.mubr.f32.gmra.mxu0 %v2048
  %v2050 = vpop.f32.mrf.mxu0
  %v2051 = vadd.f32 %v1538, %v2050
  %v2052 = vpop.f32.mrf.mxu0
  %2053 = vmatprep.mubr.f32.mxu0 0.0
  %v2054 = vand.u32 %v435, 4294901760
  %v2055 = vsub.f32 %v435, %v2054
  %2056 = vmatmul.mubr.f32.gmra.mxu0 %v2055
  %v2057 = vpop.f32.mrf.mxu0
  %v2058 = vadd.f32 %v1544, %v2057
  %v2059 = vpop.f32.mrf.mxu0
  %2060 = vmatprep.mubr.f32.mxu0 0.0
  %v2061 = vand.u32 %v436, 4294901760
  %v2062 = vsub.f32 %v436, %v2061
  %2063 = vmatmul.mubr.f32.gmra.mxu0 %v2062
  %v2064 = vpop.f32.mrf.mxu0
  %v2065 = vadd.f32 %v1550, %v2064
  %v2066 = vpop.f32.mrf.mxu0
  %2067 = vmatprep.mubr.f32.mxu0 0.0
  %v2068 = vand.u32 %v437, 4294901760
  %v2069 = vsub.f32 %v437, %v2068
  %2070 = vmatmul.mubr.f32.gmra.mxu0 %v2069
  %v2071 = vpop.f32.mrf.mxu0
  %v2072 = vadd.f32 %v1556, %v2071
  %v2073 = vpop.f32.mrf.mxu0
  %2074 = vmatprep.mubr.f32.mxu0 0.0
  %v2075 = vand.u32 %v438, 4294901760
  %v2076 = vsub.f32 %v438, %v2075
  %2077 = vmatmul.mubr.f32.gmra.mxu0 %v2076
  %v2078 = vpop.f32.mrf.mxu0
  %v2079 = vadd.f32 %v1562, %v2078
  %v2080 = vpop.f32.mrf.mxu0
  %2081 = vmatprep.mubr.f32.mxu0 0.0
  %v2082 = vand.u32 %v439, 4294901760
  %v2083 = vsub.f32 %v439, %v2082
  %2084 = vmatmul.mubr.f32.gmra.mxu0 %v2083
  %v2085 = vpop.f32.mrf.mxu0
  %v2086 = vadd.f32 %v1568, %v2085
  %v2087 = vpop.f32.mrf.mxu0
  %2088 = vmatprep.mubr.f32.mxu0 0.0
  %v2089 = vand.u32 %v440, 4294901760
  %v2090 = vsub.f32 %v440, %v2089
  %2091 = vmatmul.mubr.f32.gmra.mxu0 %v2090
  %v2092 = vpop.f32.mrf.mxu0
  %v2093 = vadd.f32 %v1574, %v2092
  %v2094 = vpop.f32.mrf.mxu0
  %2095 = vmatprep.mubr.f32.mxu0 0.0
  %v2096 = vand.u32 %v441, 4294901760
  %v2097 = vsub.f32 %v441, %v2096
  %2098 = vmatmul.mubr.f32.gmra.mxu0 %v2097
  %v2099 = vpop.f32.mrf.mxu0
  %v2100 = vadd.f32 %v1580, %v2099
  %v2101 = vpop.f32.mrf.mxu0
  %2102 = vmatprep.mubr.f32.mxu0 0.0
  %v2103 = vand.u32 %v442, 4294901760
  %v2104 = vsub.f32 %v442, %v2103
  %2105 = vmatmul.mubr.f32.gmra.mxu0 %v2104
  %v2106 = vpop.f32.mrf.mxu0
  %v2107 = vadd.f32 %v1586, %v2106
  %v2108 = vpop.f32.mrf.mxu0
  %2109 = vmatprep.mubr.f32.mxu0 0.0
  %v2110 = vand.u32 %v443, 4294901760
  %v2111 = vsub.f32 %v443, %v2110
  %2112 = vmatmul.mubr.f32.gmra.mxu0 %v2111
  %v2113 = vpop.f32.mrf.mxu0
  %v2114 = vadd.f32 %v1592, %v2113
  %v2115 = vpop.f32.mrf.mxu0
  %2116 = vmatprep.mubr.f32.mxu0 0.0
  %v2117 = vand.u32 %v444, 4294901760
  %v2118 = vsub.f32 %v444, %v2117
  %2119 = vmatmul.mubr.f32.gmra.mxu0 %v2118
  %v2120 = vpop.f32.mrf.mxu0
  %v2121 = vadd.f32 %v1598, %v2120
  %v2122 = vpop.f32.mrf.mxu0
  %2123 = vmatprep.mubr.f32.mxu0 0.0
  %v2124 = vand.u32 %v445, 4294901760
  %v2125 = vsub.f32 %v445, %v2124
  %2126 = vmatmul.mubr.f32.gmra.mxu0 %v2125
  %v2127 = vpop.f32.mrf.mxu0
  %v2128 = vadd.f32 %v1604, %v2127
  %v2129 = vpop.f32.mrf.mxu0
  %2130 = vmatprep.mubr.f32.mxu0 0.0
  %v2131 = vand.u32 %v446, 4294901760
  %v2132 = vsub.f32 %v446, %v2131
  %2133 = vmatmul.mubr.f32.gmra.mxu0 %v2132
  %v2134 = vpop.f32.mrf.mxu0
  %v2135 = vadd.f32 %v1610, %v2134
  %v2136 = vpop.f32.mrf.mxu0
  %2137 = vmatprep.mubr.f32.mxu0 0.0
  %v2138 = vand.u32 %v447, 4294901760
  %v2139 = vsub.f32 %v447, %v2138
  %2140 = vmatmul.mubr.f32.gmra.mxu0 %v2139
  %v2141 = vpop.f32.mrf.mxu0
  %v2142 = vadd.f32 %v1616, %v2141
  %v2143 = vpop.f32.mrf.mxu0
  %2144 = vmatprep.mubr.f32.mxu0 0.0
  %v2145 = vand.u32 %v448, 4294901760
  %v2146 = vsub.f32 %v448, %v2145
  %2147 = vmatmul.mubr.f32.gmra.mxu0 %v2146
  %v2148 = vpop.f32.mrf.mxu0
  %v2149 = vadd.f32 %v1622, %v2148
  %v2150 = vpop.f32.mrf.mxu0
  %2151 = vmatprep.mubr.f32.mxu0 0.0
  %v2152 = vand.u32 %v449, 4294901760
  %v2153 = vsub.f32 %v449, %v2152
  %2154 = vmatmul.mubr.f32.gmra.mxu0 %v2153
  %v2155 = vpop.f32.mrf.mxu0
  %v2156 = vadd.f32 %v1628, %v2155
  %v2157 = vpop.f32.mrf.mxu0
  %2158 = vmatprep.mubr.f32.mxu0 0.0
  %v2159 = vand.u32 %v450, 4294901760
  %v2160 = vsub.f32 %v450, %v2159
  %2161 = vmatmul.mubr.f32.gmra.mxu0 %v2160
  %v2162 = vpop.f32.mrf.mxu0
  %v2163 = vadd.f32 %v1634, %v2162
  %v2164 = vpop.f32.mrf.mxu0
  %2165 = vmatprep.mubr.f32.mxu0 0.0
  %v2166 = vand.u32 %v451, 4294901760
  %v2167 = vsub.f32 %v451, %v2166
  %2168 = vmatmul.mubr.f32.gmra.mxu0 %v2167
  %v2169 = vpop.f32.mrf.mxu0
  %v2170 = vadd.f32 %v1640, %v2169
  %v2171 = vpop.f32.mrf.mxu0
  %2172 = vmatprep.mubr.f32.mxu0 0.0
  %v2173 = vand.u32 %v452, 4294901760
  %v2174 = vsub.f32 %v452, %v2173
  %2175 = vmatmul.mubr.f32.gmra.mxu0 %v2174
  %v2176 = vpop.f32.mrf.mxu0
  %v2177 = vadd.f32 %v1646, %v2176
  %v2178 = vpop.f32.mrf.mxu0
  %2179 = vmatprep.mubr.f32.mxu0 0.0
  %v2180 = vand.u32 %v453, 4294901760
  %v2181 = vsub.f32 %v453, %v2180
  %2182 = vmatmul.mubr.f32.gmra.mxu0 %v2181
  %v2183 = vpop.f32.mrf.mxu0
  %v2184 = vadd.f32 %v1652, %v2183
  %v2185 = vpop.f32.mrf.mxu0
  %2186 = vmatprep.mubr.f32.mxu0 0.0
  %v2187 = vand.u32 %v454, 4294901760
  %v2188 = vsub.f32 %v454, %v2187
  %2189 = vmatmul.mubr.f32.gmra.mxu0 %v2188
  %v2190 = vpop.f32.mrf.mxu0
  %v2191 = vadd.f32 %v1658, %v2190
  %v2192 = vpop.f32.mrf.mxu0
  %2193 = vmatprep.mubr.f32.mxu0 0.0
  %v2194 = vand.u32 %v455, 4294901760
  %v2195 = vsub.f32 %v455, %v2194
  %2196 = vmatmul.mubr.f32.gmra.mxu0 %v2195
  %v2197 = vpop.f32.mrf.mxu0
  %v2198 = vadd.f32 %v1664, %v2197
  %v2199 = vpop.f32.mrf.mxu0
  %2200 = vmatprep.mubr.f32.mxu0 0.0
  %v2201 = vand.u32 %v456, 4294901760
  %v2202 = vsub.f32 %v456, %v2201
  %2203 = vmatmul.mubr.f32.gmra.mxu0 %v2202
  %v2204 = vpop.f32.mrf.mxu0
  %v2205 = vadd.f32 %v1670, %v2204
  %v2206 = vpop.f32.mrf.mxu0
  %2207 = vmatprep.mubr.f32.mxu0 0.0
  %v2208 = vand.u32 %v457, 4294901760
  %v2209 = vsub.f32 %v457, %v2208
  %2210 = vmatmul.mubr.f32.gmra.mxu0 %v2209
  %v2211 = vpop.f32.mrf.mxu0
  %v2212 = vadd.f32 %v1676, %v2211
  %v2213 = vpop.f32.mrf.mxu0
  %2214 = vmatprep.mubr.f32.mxu0 0.0
  %v2215 = vand.u32 %v458, 4294901760
  %v2216 = vsub.f32 %v458, %v2215
  %2217 = vmatmul.mubr.f32.gmra.mxu0 %v2216
  %v2218 = vpop.f32.mrf.mxu0
  %v2219 = vadd.f32 %v1682, %v2218
  %v2220 = vpop.f32.mrf.mxu0
  %2221 = vmatprep.mubr.f32.mxu0 0.0
  %v2222 = vand.u32 %v459, 4294901760
  %v2223 = vsub.f32 %v459, %v2222
  %2224 = vmatmul.mubr.f32.gmra.mxu0 %v2223
  %v2225 = vpop.f32.mrf.mxu0
  %v2226 = vadd.f32 %v1688, %v2225
  %v2227 = vpop.f32.mrf.mxu0
  %2228 = vmatprep.mubr.f32.mxu0 0.0
  %v2229 = vand.u32 %v460, 4294901760
  %v2230 = vsub.f32 %v460, %v2229
  %2231 = vmatmul.mubr.f32.gmra.mxu0 %v2230
  %v2232 = vpop.f32.mrf.mxu0
  %v2233 = vadd.f32 %v1694, %v2232
  %v2234 = vpop.f32.mrf.mxu0
  %2235 = vmatprep.mubr.f32.mxu0 0.0
  %v2236 = vand.u32 %v461, 4294901760
  %v2237 = vsub.f32 %v461, %v2236
  %2238 = vmatmul.mubr.f32.gmra.mxu0 %v2237
  %v2239 = vpop.f32.mrf.mxu0
  %v2240 = vadd.f32 %v1700, %v2239
  %v2241 = vpop.f32.mrf.mxu0
  %2242 = vmatprep.mubr.f32.mxu0 0.0
  %v2243 = vand.u32 %v462, 4294901760
  %v2244 = vsub.f32 %v462, %v2243
  %2245 = vmatmul.mubr.f32.gmra.mxu0 %v2244
  %v2246 = vpop.f32.mrf.mxu0
  %v2247 = vadd.f32 %v1706, %v2246
  %v2248 = vpop.f32.mrf.mxu0
  %2249 = vmatprep.mubr.f32.mxu0 0.0
  %v2250 = vand.u32 %v463, 4294901760
  %v2251 = vsub.f32 %v463, %v2250
  %2252 = vmatmul.mubr.f32.gmra.mxu0 %v2251
  %v2253 = vpop.f32.mrf.mxu0
  %v2254 = vadd.f32 %v1712, %v2253
  %v2255 = vpop.f32.mrf.mxu0
  %2256 = vmatprep.mubr.f32.mxu0 0.0
  %v2257 = vand.u32 %v464, 4294901760
  %v2258 = vsub.f32 %v464, %v2257
  %2259 = vmatmul.mubr.f32.gmra.mxu0 %v2258
  %v2260 = vpop.f32.mrf.mxu0
  %v2261 = vadd.f32 %v1718, %v2260
  %v2262 = vpop.f32.mrf.mxu0
  %2263 = vmatprep.mubr.f32.mxu0 0.0
  %v2264 = vand.u32 %v465, 4294901760
  %v2265 = vsub.f32 %v465, %v2264
  %2266 = vmatmul.mubr.f32.gmra.mxu0 %v2265
  %v2267 = vpop.f32.mrf.mxu0
  %v2268 = vadd.f32 %v1724, %v2267
  %v2269 = vpop.f32.mrf.mxu0
  %2270 = vmatprep.mubr.f32.mxu0 0.0
  %v2271 = vand.u32 %v466, 4294901760
  %v2272 = vsub.f32 %v466, %v2271
  %2273 = vmatmul.mubr.f32.gmra.mxu0 %v2272
  %v2274 = vpop.f32.mrf.mxu0
  %v2275 = vadd.f32 %v1730, %v2274
  %v2276 = vpop.f32.mrf.mxu0
  %2277 = vdwg.mxu0
  %2278 = vmatprep.subr.mxu0 0.0
  %v2279 = vand.u32 %v482, 4294901760
  %2280 = vmatpush1.msra.mxu0 %v2279
  %2281 = vmatprep.subr.mxu0 0.0
  %v2282 = vand.u32 %v481, 4294901760
  %2283 = vmatpush1.msra.mxu0 %v2282
  %2284 = vmatprep.subr.mxu0 0.0
  %v2285 = vand.u32 %v480, 4294901760
  %2286 = vmatpush1.msra.mxu0 %v2285
  %2287 = vmatprep.subr.mxu0 0.0
  %v2288 = vand.u32 %v479, 4294901760
  %2289 = vmatpush1.msra.mxu0 %v2288
  %2290 = vmatprep.subr.mxu0 0.0
  %v2291 = vand.u32 %v478, 4294901760
  %2292 = vmatpush1.msra.mxu0 %v2291
  %2293 = vmatprep.subr.mxu0 0.0
  %v2294 = vand.u32 %v477, 4294901760
  %2295 = vmatpush1.msra.mxu0 %v2294
  %2296 = vmatprep.subr.mxu0 0.0
  %v2297 = vand.u32 %v476, 4294901760
  %2298 = vmatpush1.msra.mxu0 %v2297
  %2299 = vmatprep.subr.mxu0 0.0
  %v2300 = vand.u32 %v475, 4294901760
  %2301 = vmatpush1.msra.mxu0 %v2300
  %2302 = vmatprep.subr.mxu0 0.0
  %v2303 = vand.u32 %v474, 4294901760
  %2304 = vmatpush1.msra.mxu0 %v2303
  %2305 = vmatprep.subr.mxu0 0.0
  %v2306 = vand.u32 %v473, 4294901760
  %2307 = vmatpush1.msra.mxu0 %v2306
  %2308 = vmatprep.subr.mxu0 0.0
  %v2309 = vand.u32 %v472, 4294901760
  %2310 = vmatpush1.msra.mxu0 %v2309
  %2311 = vmatprep.subr.mxu0 0.0
  %v2312 = vand.u32 %v471, 4294901760
  %2313 = vmatpush1.msra.mxu0 %v2312
  %2314 = vmatprep.subr.mxu0 0.0
  %v2315 = vand.u32 %v470, 4294901760
  %2316 = vmatpush1.msra.mxu0 %v2315
  %2317 = vmatprep.subr.mxu0 0.0
  %v2318 = vand.u32 %v469, 4294901760
  %2319 = vmatpush1.msra.mxu0 %v2318
  %2320 = vmatprep.subr.mxu0 0.0
  %v2321 = vand.u32 %v468, 4294901760
  %2322 = vmatpush1.msra.mxu0 %v2321
  %2323 = vmatprep.subr.mxu0 0.0
  %v2324 = vand.u32 %v467, 4294901760
  %2325 = vmatpush1.msra.mxu0 %v2324
  %2326 = vmatprep.subr.mxu0 0.0
  %2327 = vmatpush2.msra.mxu0 0.0
  %2328 = vmatprep.subr.mxu0 0.0
  %2329 = vmatpush2.msra.mxu0 0.0
  %2330 = vmatprep.subr.mxu0 0.0
  %2331 = vmatpush2.msra.mxu0 0.0
  %2332 = vmatprep.subr.mxu0 0.0
  %2333 = vmatpush2.msra.mxu0 0.0
  %2334 = vmatprep.subr.mxu0 0.0
  %2335 = vmatpush2.msra.mxu0 0.0
  %2336 = vmatprep.subr.mxu0 0.0
  %2337 = vmatpush2.msra.mxu0 0.0
  %2338 = vmatprep.subr.mxu0 0.0
  %2339 = vmatpush2.msra.mxu0 0.0
  %2340 = vmatprep.subr.mxu0 0.0
  %2341 = vmatpush2.msra.mxu0 0.0
  %2342 = vmatprep.subr.mxu0 0.0
  %2343 = vmatpush2.msra.mxu0 0.0
  %2344 = vmatprep.subr.mxu0 0.0
  %2345 = vmatpush2.msra.mxu0 0.0
  %2346 = vmatprep.subr.mxu0 0.0
  %2347 = vmatpush2.msra.mxu0 0.0
  %2348 = vmatprep.subr.mxu0 0.0
  %2349 = vmatpush2.msra.mxu0 0.0
  %2350 = vmatprep.subr.mxu0 0.0
  %2351 = vmatpush2.msra.mxu0 0.0
  %2352 = vmatprep.subr.mxu0 0.0
  %2353 = vmatpush2.msra.mxu0 0.0
  %2354 = vmatprep.subr.mxu0 0.0
  %2355 = vmatpush2.msra.mxu0 0.0
  %2356 = vmatprep.subr.mxu0 0.0
  %2357 = vmatpush2.msra.mxu0 0.0
  %2358 = vmatprep.mubr.f32.mxu0 0.0
  %v2359 = vand.u32 %v403, 4294901760
  %v2360 = vsub.f32 %v403, %v2359
  %v2361 = vand.u32 %v2360, 4294901760
  %2362 = vmatmul.mubr.f32.gmra.mxu0 %v2361
  %v2363 = vpop.f32.mrf.mxu0
  %v2364 = vadd.f32 %v1834, %v2363
  %v2365 = vpop.f32.mrf.mxu0
  %2366 = vmatprep.mubr.f32.mxu0 0.0
  %v2367 = vand.u32 %v404, 4294901760
  %v2368 = vsub.f32 %v404, %v2367
  %v2369 = vand.u32 %v2368, 4294901760
  %2370 = vmatmul.mubr.f32.gmra.mxu0 %v2369
  %v2371 = vpop.f32.mrf.mxu0
  %v2372 = vadd.f32 %v1841, %v2371
  %v2373 = vpop.f32.mrf.mxu0
  %2374 = vmatprep.mubr.f32.mxu0 0.0
  %v2375 = vand.u32 %v405, 4294901760
  %v2376 = vsub.f32 %v405, %v2375
  %v2377 = vand.u32 %v2376, 4294901760
  %2378 = vmatmul.mubr.f32.gmra.mxu0 %v2377
  %v2379 = vpop.f32.mrf.mxu0
  %v2380 = vadd.f32 %v1848, %v2379
  %v2381 = vpop.f32.mrf.mxu0
  %2382 = vmatprep.mubr.f32.mxu0 0.0
  %v2383 = vand.u32 %v406, 4294901760
  %v2384 = vsub.f32 %v406, %v2383
  %v2385 = vand.u32 %v2384, 4294901760
  %2386 = vmatmul.mubr.f32.gmra.mxu0 %v2385
  %v2387 = vpop.f32.mrf.mxu0
  %v2388 = vadd.f32 %v1855, %v2387
  %v2389 = vpop.f32.mrf.mxu0
  %2390 = vmatprep.mubr.f32.mxu0 0.0
  %v2391 = vand.u32 %v407, 4294901760
  %v2392 = vsub.f32 %v407, %v2391
  %v2393 = vand.u32 %v2392, 4294901760
  %2394 = vmatmul.mubr.f32.gmra.mxu0 %v2393
  %v2395 = vpop.f32.mrf.mxu0
  %v2396 = vadd.f32 %v1862, %v2395
  %v2397 = vpop.f32.mrf.mxu0
  %2398 = vmatprep.mubr.f32.mxu0 0.0
  %v2399 = vand.u32 %v408, 4294901760
  %v2400 = vsub.f32 %v408, %v2399
  %v2401 = vand.u32 %v2400, 4294901760
  %2402 = vmatmul.mubr.f32.gmra.mxu0 %v2401
  %v2403 = vpop.f32.mrf.mxu0
  %v2404 = vadd.f32 %v1869, %v2403
  %v2405 = vpop.f32.mrf.mxu0
  %2406 = vmatprep.mubr.f32.mxu0 0.0
  %v2407 = vand.u32 %v409, 4294901760
  %v2408 = vsub.f32 %v409, %v2407
  %v2409 = vand.u32 %v2408, 4294901760
  %2410 = vmatmul.mubr.f32.gmra.mxu0 %v2409
  %v2411 = vpop.f32.mrf.mxu0
  %v2412 = vadd.f32 %v1876, %v2411
  %v2413 = vpop.f32.mrf.mxu0
  %2414 = vmatprep.mubr.f32.mxu0 0.0
  %v2415 = vand.u32 %v410, 4294901760
  %v2416 = vsub.f32 %v410, %v2415
  %v2417 = vand.u32 %v2416, 4294901760
  %2418 = vmatmul.mubr.f32.gmra.mxu0 %v2417
  %v2419 = vpop.f32.mrf.mxu0
  %v2420 = vadd.f32 %v1883, %v2419
  %v2421 = vpop.f32.mrf.mxu0
  %2422 = vmatprep.mubr.f32.mxu0 0.0
  %v2423 = vand.u32 %v411, 4294901760
  %v2424 = vsub.f32 %v411, %v2423
  %v2425 = vand.u32 %v2424, 4294901760
  %2426 = vmatmul.mubr.f32.gmra.mxu0 %v2425
  %v2427 = vpop.f32.mrf.mxu0
  %v2428 = vadd.f32 %v1890, %v2427
  %v2429 = vpop.f32.mrf.mxu0
  %2430 = vmatprep.mubr.f32.mxu0 0.0
  %v2431 = vand.u32 %v412, 4294901760
  %v2432 = vsub.f32 %v412, %v2431
  %v2433 = vand.u32 %v2432, 4294901760
  %2434 = vmatmul.mubr.f32.gmra.mxu0 %v2433
  %v2435 = vpop.f32.mrf.mxu0
  %v2436 = vadd.f32 %v1897, %v2435
  %v2437 = vpop.f32.mrf.mxu0
  %2438 = vmatprep.mubr.f32.mxu0 0.0
  %v2439 = vand.u32 %v413, 4294901760
  %v2440 = vsub.f32 %v413, %v2439
  %v2441 = vand.u32 %v2440, 4294901760
  %2442 = vmatmul.mubr.f32.gmra.mxu0 %v2441
  %v2443 = vpop.f32.mrf.mxu0
  %v2444 = vadd.f32 %v1904, %v2443
  %v2445 = vpop.f32.mrf.mxu0
  %2446 = vmatprep.mubr.f32.mxu0 0.0
  %v2447 = vand.u32 %v414, 4294901760
  %v2448 = vsub.f32 %v414, %v2447
  %v2449 = vand.u32 %v2448, 4294901760
  %2450 = vmatmul.mubr.f32.gmra.mxu0 %v2449
  %v2451 = vpop.f32.mrf.mxu0
  %v2452 = vadd.f32 %v1911, %v2451
  %v2453 = vpop.f32.mrf.mxu0
  %2454 = vmatprep.mubr.f32.mxu0 0.0
  %v2455 = vand.u32 %v415, 4294901760
  %v2456 = vsub.f32 %v415, %v2455
  %v2457 = vand.u32 %v2456, 4294901760
  %2458 = vmatmul.mubr.f32.gmra.mxu0 %v2457
  %v2459 = vpop.f32.mrf.mxu0
  %v2460 = vadd.f32 %v1918, %v2459
  %v2461 = vpop.f32.mrf.mxu0
  %2462 = vmatprep.mubr.f32.mxu0 0.0
  %v2463 = vand.u32 %v416, 4294901760
  %v2464 = vsub.f32 %v416, %v2463
  %v2465 = vand.u32 %v2464, 4294901760
  %2466 = vmatmul.mubr.f32.gmra.mxu0 %v2465
  %v2467 = vpop.f32.mrf.mxu0
  %v2468 = vadd.f32 %v1925, %v2467
  %v2469 = vpop.f32.mrf.mxu0
  %2470 = vmatprep.mubr.f32.mxu0 0.0
  %v2471 = vand.u32 %v417, 4294901760
  %v2472 = vsub.f32 %v417, %v2471
  %v2473 = vand.u32 %v2472, 4294901760
  %2474 = vmatmul.mubr.f32.gmra.mxu0 %v2473
  %v2475 = vpop.f32.mrf.mxu0
  %v2476 = vadd.f32 %v1932, %v2475
  %v2477 = vpop.f32.mrf.mxu0
  %2478 = vmatprep.mubr.f32.mxu0 0.0
  %v2479 = vand.u32 %v418, 4294901760
  %v2480 = vsub.f32 %v418, %v2479
  %v2481 = vand.u32 %v2480, 4294901760
  %2482 = vmatmul.mubr.f32.gmra.mxu0 %v2481
  %v2483 = vpop.f32.mrf.mxu0
  %v2484 = vadd.f32 %v1939, %v2483
  %v2485 = vpop.f32.mrf.mxu0
  %2486 = vmatprep.mubr.f32.mxu0 0.0
  %v2487 = vand.u32 %v419, 4294901760
  %v2488 = vsub.f32 %v419, %v2487
  %v2489 = vand.u32 %v2488, 4294901760
  %2490 = vmatmul.mubr.f32.gmra.mxu0 %v2489
  %v2491 = vpop.f32.mrf.mxu0
  %v2492 = vadd.f32 %v1946, %v2491
  %v2493 = vpop.f32.mrf.mxu0
  %2494 = vmatprep.mubr.f32.mxu0 0.0
  %v2495 = vand.u32 %v420, 4294901760
  %v2496 = vsub.f32 %v420, %v2495
  %v2497 = vand.u32 %v2496, 4294901760
  %2498 = vmatmul.mubr.f32.gmra.mxu0 %v2497
  %v2499 = vpop.f32.mrf.mxu0
  %v2500 = vadd.f32 %v1953, %v2499
  %v2501 = vpop.f32.mrf.mxu0
  %2502 = vmatprep.mubr.f32.mxu0 0.0
  %v2503 = vand.u32 %v421, 4294901760
  %v2504 = vsub.f32 %v421, %v2503
  %v2505 = vand.u32 %v2504, 4294901760
  %2506 = vmatmul.mubr.f32.gmra.mxu0 %v2505
  %v2507 = vpop.f32.mrf.mxu0
  %v2508 = vadd.f32 %v1960, %v2507
  %v2509 = vpop.f32.mrf.mxu0
  %2510 = vmatprep.mubr.f32.mxu0 0.0
  %v2511 = vand.u32 %v422, 4294901760
  %v2512 = vsub.f32 %v422, %v2511
  %v2513 = vand.u32 %v2512, 4294901760
  %2514 = vmatmul.mubr.f32.gmra.mxu0 %v2513
  %v2515 = vpop.f32.mrf.mxu0
  %v2516 = vadd.f32 %v1967, %v2515
  %v2517 = vpop.f32.mrf.mxu0
  %2518 = vmatprep.mubr.f32.mxu0 0.0
  %v2519 = vand.u32 %v423, 4294901760
  %v2520 = vsub.f32 %v423, %v2519
  %v2521 = vand.u32 %v2520, 4294901760
  %2522 = vmatmul.mubr.f32.gmra.mxu0 %v2521
  %v2523 = vpop.f32.mrf.mxu0
  %v2524 = vadd.f32 %v1974, %v2523
  %v2525 = vpop.f32.mrf.mxu0
  %2526 = vmatprep.mubr.f32.mxu0 0.0
  %v2527 = vand.u32 %v424, 4294901760
  %v2528 = vsub.f32 %v424, %v2527
  %v2529 = vand.u32 %v2528, 4294901760
  %2530 = vmatmul.mubr.f32.gmra.mxu0 %v2529
  %v2531 = vpop.f32.mrf.mxu0
  %v2532 = vadd.f32 %v1981, %v2531
  %v2533 = vpop.f32.mrf.mxu0
  %2534 = vmatprep.mubr.f32.mxu0 0.0
  %v2535 = vand.u32 %v425, 4294901760
  %v2536 = vsub.f32 %v425, %v2535
  %v2537 = vand.u32 %v2536, 4294901760
  %2538 = vmatmul.mubr.f32.gmra.mxu0 %v2537
  %v2539 = vpop.f32.mrf.mxu0
  %v2540 = vadd.f32 %v1988, %v2539
  %v2541 = vpop.f32.mrf.mxu0
  %2542 = vmatprep.mubr.f32.mxu0 0.0
  %v2543 = vand.u32 %v426, 4294901760
  %v2544 = vsub.f32 %v426, %v2543
  %v2545 = vand.u32 %v2544, 4294901760
  %2546 = vmatmul.mubr.f32.gmra.mxu0 %v2545
  %v2547 = vpop.f32.mrf.mxu0
  %v2548 = vadd.f32 %v1995, %v2547
  %v2549 = vpop.f32.mrf.mxu0
  %2550 = vmatprep.mubr.f32.mxu0 0.0
  %v2551 = vand.u32 %v427, 4294901760
  %v2552 = vsub.f32 %v427, %v2551
  %v2553 = vand.u32 %v2552, 4294901760
  %2554 = vmatmul.mubr.f32.gmra.mxu0 %v2553
  %v2555 = vpop.f32.mrf.mxu0
  %v2556 = vadd.f32 %v2002, %v2555
  %v2557 = vpop.f32.mrf.mxu0
  %2558 = vmatprep.mubr.f32.mxu0 0.0
  %v2559 = vand.u32 %v428, 4294901760
  %v2560 = vsub.f32 %v428, %v2559
  %v2561 = vand.u32 %v2560, 4294901760
  %2562 = vmatmul.mubr.f32.gmra.mxu0 %v2561
  %v2563 = vpop.f32.mrf.mxu0
  %v2564 = vadd.f32 %v2009, %v2563
  %v2565 = vpop.f32.mrf.mxu0
  %2566 = vmatprep.mubr.f32.mxu0 0.0
  %v2567 = vand.u32 %v429, 4294901760
  %v2568 = vsub.f32 %v429, %v2567
  %v2569 = vand.u32 %v2568, 4294901760
  %2570 = vmatmul.mubr.f32.gmra.mxu0 %v2569
  %v2571 = vpop.f32.mrf.mxu0
  %v2572 = vadd.f32 %v2016, %v2571
  %v2573 = vpop.f32.mrf.mxu0
  %2574 = vmatprep.mubr.f32.mxu0 0.0
  %v2575 = vand.u32 %v430, 4294901760
  %v2576 = vsub.f32 %v430, %v2575
  %v2577 = vand.u32 %v2576, 4294901760
  %2578 = vmatmul.mubr.f32.gmra.mxu0 %v2577
  %v2579 = vpop.f32.mrf.mxu0
  %v2580 = vadd.f32 %v2023, %v2579
  %v2581 = vpop.f32.mrf.mxu0
  %2582 = vmatprep.mubr.f32.mxu0 0.0
  %v2583 = vand.u32 %v431, 4294901760
  %v2584 = vsub.f32 %v431, %v2583
  %v2585 = vand.u32 %v2584, 4294901760
  %2586 = vmatmul.mubr.f32.gmra.mxu0 %v2585
  %v2587 = vpop.f32.mrf.mxu0
  %v2588 = vadd.f32 %v2030, %v2587
  %v2589 = vpop.f32.mrf.mxu0
  %2590 = vmatprep.mubr.f32.mxu0 0.0
  %v2591 = vand.u32 %v432, 4294901760
  %v2592 = vsub.f32 %v432, %v2591
  %v2593 = vand.u32 %v2592, 4294901760
  %2594 = vmatmul.mubr.f32.gmra.mxu0 %v2593
  %v2595 = vpop.f32.mrf.mxu0
  %v2596 = vadd.f32 %v2037, %v2595
  %v2597 = vpop.f32.mrf.mxu0
  %2598 = vmatprep.mubr.f32.mxu0 0.0
  %v2599 = vand.u32 %v433, 4294901760
  %v2600 = vsub.f32 %v433, %v2599
  %v2601 = vand.u32 %v2600, 4294901760
  %2602 = vmatmul.mubr.f32.gmra.mxu0 %v2601
  %v2603 = vpop.f32.mrf.mxu0
  %v2604 = vadd.f32 %v2044, %v2603
  %v2605 = vpop.f32.mrf.mxu0
  %2606 = vmatprep.mubr.f32.mxu0 0.0
  %v2607 = vand.u32 %v434, 4294901760
  %v2608 = vsub.f32 %v434, %v2607
  %v2609 = vand.u32 %v2608, 4294901760
  %2610 = vmatmul.mubr.f32.gmra.mxu0 %v2609
  %v2611 = vpop.f32.mrf.mxu0
  %v2612 = vadd.f32 %v2051, %v2611
  %v2613 = vpop.f32.mrf.mxu0
  %2614 = vmatprep.mubr.f32.mxu0 0.0
  %v2615 = vand.u32 %v435, 4294901760
  %v2616 = vsub.f32 %v435, %v2615
  %v2617 = vand.u32 %v2616, 4294901760
  %2618 = vmatmul.mubr.f32.gmra.mxu0 %v2617
  %v2619 = vpop.f32.mrf.mxu0
  %v2620 = vadd.f32 %v2058, %v2619
  %v2621 = vpop.f32.mrf.mxu0
  %2622 = vmatprep.mubr.f32.mxu0 0.0
  %v2623 = vand.u32 %v436, 4294901760
  %v2624 = vsub.f32 %v436, %v2623
  %v2625 = vand.u32 %v2624, 4294901760
  %2626 = vmatmul.mubr.f32.gmra.mxu0 %v2625
  %v2627 = vpop.f32.mrf.mxu0
  %v2628 = vadd.f32 %v2065, %v2627
  %v2629 = vpop.f32.mrf.mxu0
  %2630 = vmatprep.mubr.f32.mxu0 0.0
  %v2631 = vand.u32 %v437, 4294901760
  %v2632 = vsub.f32 %v437, %v2631
  %v2633 = vand.u32 %v2632, 4294901760
  %2634 = vmatmul.mubr.f32.gmra.mxu0 %v2633
  %v2635 = vpop.f32.mrf.mxu0
  %v2636 = vadd.f32 %v2072, %v2635
  %v2637 = vpop.f32.mrf.mxu0
  %2638 = vmatprep.mubr.f32.mxu0 0.0
  %v2639 = vand.u32 %v438, 4294901760
  %v2640 = vsub.f32 %v438, %v2639
  %v2641 = vand.u32 %v2640, 4294901760
  %2642 = vmatmul.mubr.f32.gmra.mxu0 %v2641
  %v2643 = vpop.f32.mrf.mxu0
  %v2644 = vadd.f32 %v2079, %v2643
  %v2645 = vpop.f32.mrf.mxu0
  %2646 = vmatprep.mubr.f32.mxu0 0.0
  %v2647 = vand.u32 %v439, 4294901760
  %v2648 = vsub.f32 %v439, %v2647
  %v2649 = vand.u32 %v2648, 4294901760
  %2650 = vmatmul.mubr.f32.gmra.mxu0 %v2649
  %v2651 = vpop.f32.mrf.mxu0
  %v2652 = vadd.f32 %v2086, %v2651
  %v2653 = vpop.f32.mrf.mxu0
  %2654 = vmatprep.mubr.f32.mxu0 0.0
  %v2655 = vand.u32 %v440, 4294901760
  %v2656 = vsub.f32 %v440, %v2655
  %v2657 = vand.u32 %v2656, 4294901760
  %2658 = vmatmul.mubr.f32.gmra.mxu0 %v2657
  %v2659 = vpop.f32.mrf.mxu0
  %v2660 = vadd.f32 %v2093, %v2659
  %v2661 = vpop.f32.mrf.mxu0
  %2662 = vmatprep.mubr.f32.mxu0 0.0
  %v2663 = vand.u32 %v441, 4294901760
  %v2664 = vsub.f32 %v441, %v2663
  %v2665 = vand.u32 %v2664, 4294901760
  %2666 = vmatmul.mubr.f32.gmra.mxu0 %v2665
  %v2667 = vpop.f32.mrf.mxu0
  %v2668 = vadd.f32 %v2100, %v2667
  %v2669 = vpop.f32.mrf.mxu0
  %2670 = vmatprep.mubr.f32.mxu0 0.0
  %v2671 = vand.u32 %v442, 4294901760
  %v2672 = vsub.f32 %v442, %v2671
  %v2673 = vand.u32 %v2672, 4294901760
  %2674 = vmatmul.mubr.f32.gmra.mxu0 %v2673
  %v2675 = vpop.f32.mrf.mxu0
  %v2676 = vadd.f32 %v2107, %v2675
  %v2677 = vpop.f32.mrf.mxu0
  %2678 = vmatprep.mubr.f32.mxu0 0.0
  %v2679 = vand.u32 %v443, 4294901760
  %v2680 = vsub.f32 %v443, %v2679
  %v2681 = vand.u32 %v2680, 4294901760
  %2682 = vmatmul.mubr.f32.gmra.mxu0 %v2681
  %v2683 = vpop.f32.mrf.mxu0
  %v2684 = vadd.f32 %v2114, %v2683
  %v2685 = vpop.f32.mrf.mxu0
  %2686 = vmatprep.mubr.f32.mxu0 0.0
  %v2687 = vand.u32 %v444, 4294901760
  %v2688 = vsub.f32 %v444, %v2687
  %v2689 = vand.u32 %v2688, 4294901760
  %2690 = vmatmul.mubr.f32.gmra.mxu0 %v2689
  %v2691 = vpop.f32.mrf.mxu0
  %v2692 = vadd.f32 %v2121, %v2691
  %v2693 = vpop.f32.mrf.mxu0
  %2694 = vmatprep.mubr.f32.mxu0 0.0
  %v2695 = vand.u32 %v445, 4294901760
  %v2696 = vsub.f32 %v445, %v2695
  %v2697 = vand.u32 %v2696, 4294901760
  %2698 = vmatmul.mubr.f32.gmra.mxu0 %v2697
  %v2699 = vpop.f32.mrf.mxu0
  %v2700 = vadd.f32 %v2128, %v2699
  %v2701 = vpop.f32.mrf.mxu0
  %2702 = vmatprep.mubr.f32.mxu0 0.0
  %v2703 = vand.u32 %v446, 4294901760
  %v2704 = vsub.f32 %v446, %v2703
  %v2705 = vand.u32 %v2704, 4294901760
  %2706 = vmatmul.mubr.f32.gmra.mxu0 %v2705
  %v2707 = vpop.f32.mrf.mxu0
  %v2708 = vadd.f32 %v2135, %v2707
  %v2709 = vpop.f32.mrf.mxu0
  %2710 = vmatprep.mubr.f32.mxu0 0.0
  %v2711 = vand.u32 %v447, 4294901760
  %v2712 = vsub.f32 %v447, %v2711
  %v2713 = vand.u32 %v2712, 4294901760
  %2714 = vmatmul.mubr.f32.gmra.mxu0 %v2713
  %v2715 = vpop.f32.mrf.mxu0
  %v2716 = vadd.f32 %v2142, %v2715
  %v2717 = vpop.f32.mrf.mxu0
  %2718 = vmatprep.mubr.f32.mxu0 0.0
  %v2719 = vand.u32 %v448, 4294901760
  %v2720 = vsub.f32 %v448, %v2719
  %v2721 = vand.u32 %v2720, 4294901760
  %2722 = vmatmul.mubr.f32.gmra.mxu0 %v2721
  %v2723 = vpop.f32.mrf.mxu0
  %v2724 = vadd.f32 %v2149, %v2723
  %v2725 = vpop.f32.mrf.mxu0
  %2726 = vmatprep.mubr.f32.mxu0 0.0
  %v2727 = vand.u32 %v449, 4294901760
  %v2728 = vsub.f32 %v449, %v2727
  %v2729 = vand.u32 %v2728, 4294901760
  %2730 = vmatmul.mubr.f32.gmra.mxu0 %v2729
  %v2731 = vpop.f32.mrf.mxu0
  %v2732 = vadd.f32 %v2156, %v2731
  %v2733 = vpop.f32.mrf.mxu0
  %2734 = vmatprep.mubr.f32.mxu0 0.0
  %v2735 = vand.u32 %v450, 4294901760
  %v2736 = vsub.f32 %v450, %v2735
  %v2737 = vand.u32 %v2736, 4294901760
  %2738 = vmatmul.mubr.f32.gmra.mxu0 %v2737
  %v2739 = vpop.f32.mrf.mxu0
  %v2740 = vadd.f32 %v2163, %v2739
  %v2741 = vpop.f32.mrf.mxu0
  %2742 = vmatprep.mubr.f32.mxu0 0.0
  %v2743 = vand.u32 %v451, 4294901760
  %v2744 = vsub.f32 %v451, %v2743
  %v2745 = vand.u32 %v2744, 4294901760
  %2746 = vmatmul.mubr.f32.gmra.mxu0 %v2745
  %v2747 = vpop.f32.mrf.mxu0
  %v2748 = vadd.f32 %v2170, %v2747
  %v2749 = vpop.f32.mrf.mxu0
  %2750 = vmatprep.mubr.f32.mxu0 0.0
  %v2751 = vand.u32 %v452, 4294901760
  %v2752 = vsub.f32 %v452, %v2751
  %v2753 = vand.u32 %v2752, 4294901760
  %2754 = vmatmul.mubr.f32.gmra.mxu0 %v2753
  %v2755 = vpop.f32.mrf.mxu0
  %v2756 = vadd.f32 %v2177, %v2755
  %v2757 = vpop.f32.mrf.mxu0
  %2758 = vmatprep.mubr.f32.mxu0 0.0
  %v2759 = vand.u32 %v453, 4294901760
  %v2760 = vsub.f32 %v453, %v2759
  %v2761 = vand.u32 %v2760, 4294901760
  %2762 = vmatmul.mubr.f32.gmra.mxu0 %v2761
  %v2763 = vpop.f32.mrf.mxu0
  %v2764 = vadd.f32 %v2184, %v2763
  %v2765 = vpop.f32.mrf.mxu0
  %2766 = vmatprep.mubr.f32.mxu0 0.0
  %v2767 = vand.u32 %v454, 4294901760
  %v2768 = vsub.f32 %v454, %v2767
  %v2769 = vand.u32 %v2768, 4294901760
  %2770 = vmatmul.mubr.f32.gmra.mxu0 %v2769
  %v2771 = vpop.f32.mrf.mxu0
  %v2772 = vadd.f32 %v2191, %v2771
  %v2773 = vpop.f32.mrf.mxu0
  %2774 = vmatprep.mubr.f32.mxu0 0.0
  %v2775 = vand.u32 %v455, 4294901760
  %v2776 = vsub.f32 %v455, %v2775
  %v2777 = vand.u32 %v2776, 4294901760
  %2778 = vmatmul.mubr.f32.gmra.mxu0 %v2777
  %v2779 = vpop.f32.mrf.mxu0
  %v2780 = vadd.f32 %v2198, %v2779
  %v2781 = vpop.f32.mrf.mxu0
  %2782 = vmatprep.mubr.f32.mxu0 0.0
  %v2783 = vand.u32 %v456, 4294901760
  %v2784 = vsub.f32 %v456, %v2783
  %v2785 = vand.u32 %v2784, 4294901760
  %2786 = vmatmul.mubr.f32.gmra.mxu0 %v2785
  %v2787 = vpop.f32.mrf.mxu0
  %v2788 = vadd.f32 %v2205, %v2787
  %v2789 = vpop.f32.mrf.mxu0
  %2790 = vmatprep.mubr.f32.mxu0 0.0
  %v2791 = vand.u32 %v457, 4294901760
  %v2792 = vsub.f32 %v457, %v2791
  %v2793 = vand.u32 %v2792, 4294901760
  %2794 = vmatmul.mubr.f32.gmra.mxu0 %v2793
  %v2795 = vpop.f32.mrf.mxu0
  %v2796 = vadd.f32 %v2212, %v2795
  %v2797 = vpop.f32.mrf.mxu0
  %2798 = vmatprep.mubr.f32.mxu0 0.0
  %v2799 = vand.u32 %v458, 4294901760
  %v2800 = vsub.f32 %v458, %v2799
  %v2801 = vand.u32 %v2800, 4294901760
  %2802 = vmatmul.mubr.f32.gmra.mxu0 %v2801
  %v2803 = vpop.f32.mrf.mxu0
  %v2804 = vadd.f32 %v2219, %v2803
  %v2805 = vpop.f32.mrf.mxu0
  %2806 = vmatprep.mubr.f32.mxu0 0.0
  %v2807 = vand.u32 %v459, 4294901760
  %v2808 = vsub.f32 %v459, %v2807
  %v2809 = vand.u32 %v2808, 4294901760
  %2810 = vmatmul.mubr.f32.gmra.mxu0 %v2809
  %v2811 = vpop.f32.mrf.mxu0
  %v2812 = vadd.f32 %v2226, %v2811
  %v2813 = vpop.f32.mrf.mxu0
  %2814 = vmatprep.mubr.f32.mxu0 0.0
  %v2815 = vand.u32 %v460, 4294901760
  %v2816 = vsub.f32 %v460, %v2815
  %v2817 = vand.u32 %v2816, 4294901760
  %2818 = vmatmul.mubr.f32.gmra.mxu0 %v2817
  %v2819 = vpop.f32.mrf.mxu0
  %v2820 = vadd.f32 %v2233, %v2819
  %v2821 = vpop.f32.mrf.mxu0
  %2822 = vmatprep.mubr.f32.mxu0 0.0
  %v2823 = vand.u32 %v461, 4294901760
  %v2824 = vsub.f32 %v461, %v2823
  %v2825 = vand.u32 %v2824, 4294901760
  %2826 = vmatmul.mubr.f32.gmra.mxu0 %v2825
  %v2827 = vpop.f32.mrf.mxu0
  %v2828 = vadd.f32 %v2240, %v2827
  %v2829 = vpop.f32.mrf.mxu0
  %2830 = vmatprep.mubr.f32.mxu0 0.0
  %v2831 = vand.u32 %v462, 4294901760
  %v2832 = vsub.f32 %v462, %v2831
  %v2833 = vand.u32 %v2832, 4294901760
  %2834 = vmatmul.mubr.f32.gmra.mxu0 %v2833
  %v2835 = vpop.f32.mrf.mxu0
  %v2836 = vadd.f32 %v2247, %v2835
  %v2837 = vpop.f32.mrf.mxu0
  %2838 = vmatprep.mubr.f32.mxu0 0.0
  %v2839 = vand.u32 %v463, 4294901760
  %v2840 = vsub.f32 %v463, %v2839
  %v2841 = vand.u32 %v2840, 4294901760
  %2842 = vmatmul.mubr.f32.gmra.mxu0 %v2841
  %v2843 = vpop.f32.mrf.mxu0
  %v2844 = vadd.f32 %v2254, %v2843
  %v2845 = vpop.f32.mrf.mxu0
  %2846 = vmatprep.mubr.f32.mxu0 0.0
  %v2847 = vand.u32 %v464, 4294901760
  %v2848 = vsub.f32 %v464, %v2847
  %v2849 = vand.u32 %v2848, 4294901760
  %2850 = vmatmul.mubr.f32.gmra.mxu0 %v2849
  %v2851 = vpop.f32.mrf.mxu0
  %v2852 = vadd.f32 %v2261, %v2851
  %v2853 = vpop.f32.mrf.mxu0
  %2854 = vmatprep.mubr.f32.mxu0 0.0
  %v2855 = vand.u32 %v465, 4294901760
  %v2856 = vsub.f32 %v465, %v2855
  %v2857 = vand.u32 %v2856, 4294901760
  %2858 = vmatmul.mubr.f32.gmra.mxu0 %v2857
  %v2859 = vpop.f32.mrf.mxu0
  %v2860 = vadd.f32 %v2268, %v2859
  %v2861 = vpop.f32.mrf.mxu0
  %2862 = vmatprep.mubr.f32.mxu0 0.0
  %v2863 = vand.u32 %v466, 4294901760
  %v2864 = vsub.f32 %v466, %v2863
  %v2865 = vand.u32 %v2864, 4294901760
  %2866 = vmatmul.mubr.f32.gmra.mxu0 %v2865
  %v2867 = vpop.f32.mrf.mxu0
  %v2868 = vadd.f32 %v2275, %v2867
  %v2869 = vpop.f32.mrf.mxu0
  %2870 = vdwg.mxu0
  %2871 = vmatprep.subr.mxu0 0.0
  %v2872 = vand.u32 %v482, 4294901760
  %v2873 = vsub.f32 %v482, %v2872
  %v2874 = vand.u32 %v2873, 4294901760
  %2875 = vmatpush1.msra.mxu0 %v2874
  %2876 = vmatprep.subr.mxu0 0.0
  %v2877 = vand.u32 %v481, 4294901760
  %v2878 = vsub.f32 %v481, %v2877
  %v2879 = vand.u32 %v2878, 4294901760
  %2880 = vmatpush1.msra.mxu0 %v2879
  %2881 = vmatprep.subr.mxu0 0.0
  %v2882 = vand.u32 %v480, 4294901760
  %v2883 = vsub.f32 %v480, %v2882
  %v2884 = vand.u32 %v2883, 4294901760
  %2885 = vmatpush1.msra.mxu0 %v2884
  %2886 = vmatprep.subr.mxu0 0.0
  %v2887 = vand.u32 %v479, 4294901760
  %v2888 = vsub.f32 %v479, %v2887
  %v2889 = vand.u32 %v2888, 4294901760
  %2890 = vmatpush1.msra.mxu0 %v2889
  %2891 = vmatprep.subr.mxu0 0.0
  %v2892 = vand.u32 %v478, 4294901760
  %v2893 = vsub.f32 %v478, %v2892
  %v2894 = vand.u32 %v2893, 4294901760
  %2895 = vmatpush1.msra.mxu0 %v2894
  %2896 = vmatprep.subr.mxu0 0.0
  %v2897 = vand.u32 %v477, 4294901760
  %v2898 = vsub.f32 %v477, %v2897
  %v2899 = vand.u32 %v2898, 4294901760
  %2900 = vmatpush1.msra.mxu0 %v2899
  %2901 = vmatprep.subr.mxu0 0.0
  %v2902 = vand.u32 %v476, 4294901760
  %v2903 = vsub.f32 %v476, %v2902
  %v2904 = vand.u32 %v2903, 4294901760
  %2905 = vmatpush1.msra.mxu0 %v2904
  %2906 = vmatprep.subr.mxu0 0.0
  %v2907 = vand.u32 %v475, 4294901760
  %v2908 = vsub.f32 %v475, %v2907
  %v2909 = vand.u32 %v2908, 4294901760
  %2910 = vmatpush1.msra.mxu0 %v2909
  %2911 = vmatprep.subr.mxu0 0.0
  %v2912 = vand.u32 %v474, 4294901760
  %v2913 = vsub.f32 %v474, %v2912
  %v2914 = vand.u32 %v2913, 4294901760
  %2915 = vmatpush1.msra.mxu0 %v2914
  %2916 = vmatprep.subr.mxu0 0.0
  %v2917 = vand.u32 %v473, 4294901760
  %v2918 = vsub.f32 %v473, %v2917
  %v2919 = vand.u32 %v2918, 4294901760
  %2920 = vmatpush1.msra.mxu0 %v2919
  %2921 = vmatprep.subr.mxu0 0.0
  %v2922 = vand.u32 %v472, 4294901760
  %v2923 = vsub.f32 %v472, %v2922
  %v2924 = vand.u32 %v2923, 4294901760
  %2925 = vmatpush1.msra.mxu0 %v2924
  %2926 = vmatprep.subr.mxu0 0.0
  %v2927 = vand.u32 %v471, 4294901760
  %v2928 = vsub.f32 %v471, %v2927
  %v2929 = vand.u32 %v2928, 4294901760
  %2930 = vmatpush1.msra.mxu0 %v2929
  %2931 = vmatprep.subr.mxu0 0.0
  %v2932 = vand.u32 %v470, 4294901760
  %v2933 = vsub.f32 %v470, %v2932
  %v2934 = vand.u32 %v2933, 4294901760
  %2935 = vmatpush1.msra.mxu0 %v2934
  %2936 = vmatprep.subr.mxu0 0.0
  %v2937 = vand.u32 %v469, 4294901760
  %v2938 = vsub.f32 %v469, %v2937
  %v2939 = vand.u32 %v2938, 4294901760
  %2940 = vmatpush1.msra.mxu0 %v2939
  %2941 = vmatprep.subr.mxu0 0.0
  %v2942 = vand.u32 %v468, 4294901760
  %v2943 = vsub.f32 %v468, %v2942
  %v2944 = vand.u32 %v2943, 4294901760
  %2945 = vmatpush1.msra.mxu0 %v2944
  %2946 = vmatprep.subr.mxu0 0.0
  %v2947 = vand.u32 %v467, 4294901760
  %v2948 = vsub.f32 %v467, %v2947
  %v2949 = vand.u32 %v2948, 4294901760
  %2950 = vmatpush1.msra.mxu0 %v2949
  %2951 = vmatprep.subr.mxu0 0.0
  %2952 = vmatpush2.msra.mxu0 0.0
  %2953 = vmatprep.subr.mxu0 0.0
  %2954 = vmatpush2.msra.mxu0 0.0
  %2955 = vmatprep.subr.mxu0 0.0
  %2956 = vmatpush2.msra.mxu0 0.0
  %2957 = vmatprep.subr.mxu0 0.0
  %2958 = vmatpush2.msra.mxu0 0.0
  %2959 = vmatprep.subr.mxu0 0.0
  %2960 = vmatpush2.msra.mxu0 0.0
  %2961 = vmatprep.subr.mxu0 0.0
  %2962 = vmatpush2.msra.mxu0 0.0
  %2963 = vmatprep.subr.mxu0 0.0
  %2964 = vmatpush2.msra.mxu0 0.0
  %2965 = vmatprep.subr.mxu0 0.0
  %2966 = vmatpush2.msra.mxu0 0.0
  %2967 = vmatprep.subr.mxu0 0.0
  %2968 = vmatpush2.msra.mxu0 0.0
  %2969 = vmatprep.subr.mxu0 0.0
  %2970 = vmatpush2.msra.mxu0 0.0
  %2971 = vmatprep.subr.mxu0 0.0
  %2972 = vmatpush2.msra.mxu0 0.0
  %2973 = vmatprep.subr.mxu0 0.0
  %2974 = vmatpush2.msra.mxu0 0.0
  %2975 = vmatprep.subr.mxu0 0.0
  %2976 = vmatpush2.msra.mxu0 0.0
  %2977 = vmatprep.subr.mxu0 0.0
  %2978 = vmatpush2.msra.mxu0 0.0
  %2979 = vmatprep.subr.mxu0 0.0
  %2980 = vmatpush2.msra.mxu0 0.0
  %2981 = vmatprep.subr.mxu0 0.0
  %2982 = vmatpush2.msra.mxu0 0.0
  %2983 = vmatprep.mubr.f32.mxu0 0.0
  %v2984 = vand.u32 %v403, 4294901760
  %2985 = vmatmul.mubr.f32.gmra.mxu0 %v2984
  %v2986 = vpop.f32.mrf.mxu0
  %v2987 = vadd.f32 %v2364, %v2986
  %v2988 = vpop.f32.mrf.mxu0
  %2989 = vmatprep.mubr.f32.mxu0 0.0
  %v2990 = vand.u32 %v404, 4294901760
  %2991 = vmatmul.mubr.f32.gmra.mxu0 %v2990
  %v2992 = vpop.f32.mrf.mxu0
  %v2993 = vadd.f32 %v2372, %v2992
  %v2994 = vpop.f32.mrf.mxu0
  %2995 = vmatprep.mubr.f32.mxu0 0.0
  %v2996 = vand.u32 %v405, 4294901760
  %2997 = vmatmul.mubr.f32.gmra.mxu0 %v2996
  %v2998 = vpop.f32.mrf.mxu0
  %v2999 = vadd.f32 %v2380, %v2998
  %v3000 = vpop.f32.mrf.mxu0
  %3001 = vmatprep.mubr.f32.mxu0 0.0
  %v3002 = vand.u32 %v406, 4294901760
  %3003 = vmatmul.mubr.f32.gmra.mxu0 %v3002
  %v3004 = vpop.f32.mrf.mxu0
  %v3005 = vadd.f32 %v2388, %v3004
  %v3006 = vpop.f32.mrf.mxu0
  %3007 = vmatprep.mubr.f32.mxu0 0.0
  %v3008 = vand.u32 %v407, 4294901760
  %3009 = vmatmul.mubr.f32.gmra.mxu0 %v3008
  %v3010 = vpop.f32.mrf.mxu0
  %v3011 = vadd.f32 %v2396, %v3010
  %v3012 = vpop.f32.mrf.mxu0
  %3013 = vmatprep.mubr.f32.mxu0 0.0
  %v3014 = vand.u32 %v408, 4294901760
  %3015 = vmatmul.mubr.f32.gmra.mxu0 %v3014
  %v3016 = vpop.f32.mrf.mxu0
  %v3017 = vadd.f32 %v2404, %v3016
  %v3018 = vpop.f32.mrf.mxu0
  %3019 = vmatprep.mubr.f32.mxu0 0.0
  %v3020 = vand.u32 %v409, 4294901760
  %3021 = vmatmul.mubr.f32.gmra.mxu0 %v3020
  %v3022 = vpop.f32.mrf.mxu0
  %v3023 = vadd.f32 %v2412, %v3022
  %v3024 = vpop.f32.mrf.mxu0
  %3025 = vmatprep.mubr.f32.mxu0 0.0
  %v3026 = vand.u32 %v410, 4294901760
  %3027 = vmatmul.mubr.f32.gmra.mxu0 %v3026
  %v3028 = vpop.f32.mrf.mxu0
  %v3029 = vadd.f32 %v2420, %v3028
  %v3030 = vpop.f32.mrf.mxu0
  %3031 = vmatprep.mubr.f32.mxu0 0.0
  %v3032 = vand.u32 %v411, 4294901760
  %3033 = vmatmul.mubr.f32.gmra.mxu0 %v3032
  %v3034 = vpop.f32.mrf.mxu0
  %v3035 = vadd.f32 %v2428, %v3034
  %v3036 = vpop.f32.mrf.mxu0
  %3037 = vmatprep.mubr.f32.mxu0 0.0
  %v3038 = vand.u32 %v412, 4294901760
  %3039 = vmatmul.mubr.f32.gmra.mxu0 %v3038
  %v3040 = vpop.f32.mrf.mxu0
  %v3041 = vadd.f32 %v2436, %v3040
  %v3042 = vpop.f32.mrf.mxu0
  %3043 = vmatprep.mubr.f32.mxu0 0.0
  %v3044 = vand.u32 %v413, 4294901760
  %3045 = vmatmul.mubr.f32.gmra.mxu0 %v3044
  %v3046 = vpop.f32.mrf.mxu0
  %v3047 = vadd.f32 %v2444, %v3046
  %v3048 = vpop.f32.mrf.mxu0
  %3049 = vmatprep.mubr.f32.mxu0 0.0
  %v3050 = vand.u32 %v414, 4294901760
  %3051 = vmatmul.mubr.f32.gmra.mxu0 %v3050
  %v3052 = vpop.f32.mrf.mxu0
  %v3053 = vadd.f32 %v2452, %v3052
  %v3054 = vpop.f32.mrf.mxu0
  %3055 = vmatprep.mubr.f32.mxu0 0.0
  %v3056 = vand.u32 %v415, 4294901760
  %3057 = vmatmul.mubr.f32.gmra.mxu0 %v3056
  %v3058 = vpop.f32.mrf.mxu0
  %v3059 = vadd.f32 %v2460, %v3058
  %v3060 = vpop.f32.mrf.mxu0
  %3061 = vmatprep.mubr.f32.mxu0 0.0
  %v3062 = vand.u32 %v416, 4294901760
  %3063 = vmatmul.mubr.f32.gmra.mxu0 %v3062
  %v3064 = vpop.f32.mrf.mxu0
  %v3065 = vadd.f32 %v2468, %v3064
  %v3066 = vpop.f32.mrf.mxu0
  %3067 = vmatprep.mubr.f32.mxu0 0.0
  %v3068 = vand.u32 %v417, 4294901760
  %3069 = vmatmul.mubr.f32.gmra.mxu0 %v3068
  %v3070 = vpop.f32.mrf.mxu0
  %v3071 = vadd.f32 %v2476, %v3070
  %v3072 = vpop.f32.mrf.mxu0
  %3073 = vmatprep.mubr.f32.mxu0 0.0
  %v3074 = vand.u32 %v418, 4294901760
  %3075 = vmatmul.mubr.f32.gmra.mxu0 %v3074
  %v3076 = vpop.f32.mrf.mxu0
  %v3077 = vadd.f32 %v2484, %v3076
  %v3078 = vpop.f32.mrf.mxu0
  %3079 = vmatprep.mubr.f32.mxu0 0.0
  %v3080 = vand.u32 %v419, 4294901760
  %3081 = vmatmul.mubr.f32.gmra.mxu0 %v3080
  %v3082 = vpop.f32.mrf.mxu0
  %v3083 = vadd.f32 %v2492, %v3082
  %v3084 = vpop.f32.mrf.mxu0
  %3085 = vmatprep.mubr.f32.mxu0 0.0
  %v3086 = vand.u32 %v420, 4294901760
  %3087 = vmatmul.mubr.f32.gmra.mxu0 %v3086
  %v3088 = vpop.f32.mrf.mxu0
  %v3089 = vadd.f32 %v2500, %v3088
  %v3090 = vpop.f32.mrf.mxu0
  %3091 = vmatprep.mubr.f32.mxu0 0.0
  %v3092 = vand.u32 %v421, 4294901760
  %3093 = vmatmul.mubr.f32.gmra.mxu0 %v3092
  %v3094 = vpop.f32.mrf.mxu0
  %v3095 = vadd.f32 %v2508, %v3094
  %v3096 = vpop.f32.mrf.mxu0
  %3097 = vmatprep.mubr.f32.mxu0 0.0
  %v3098 = vand.u32 %v422, 4294901760
  %3099 = vmatmul.mubr.f32.gmra.mxu0 %v3098
  %v3100 = vpop.f32.mrf.mxu0
  %v3101 = vadd.f32 %v2516, %v3100
  %v3102 = vpop.f32.mrf.mxu0
  %3103 = vmatprep.mubr.f32.mxu0 0.0
  %v3104 = vand.u32 %v423, 4294901760
  %3105 = vmatmul.mubr.f32.gmra.mxu0 %v3104
  %v3106 = vpop.f32.mrf.mxu0
  %v3107 = vadd.f32 %v2524, %v3106
  %v3108 = vpop.f32.mrf.mxu0
  %3109 = vmatprep.mubr.f32.mxu0 0.0
  %v3110 = vand.u32 %v424, 4294901760
  %3111 = vmatmul.mubr.f32.gmra.mxu0 %v3110
  %v3112 = vpop.f32.mrf.mxu0
  %v3113 = vadd.f32 %v2532, %v3112
  %v3114 = vpop.f32.mrf.mxu0
  %3115 = vmatprep.mubr.f32.mxu0 0.0
  %v3116 = vand.u32 %v425, 4294901760
  %3117 = vmatmul.mubr.f32.gmra.mxu0 %v3116
  %v3118 = vpop.f32.mrf.mxu0
  %v3119 = vadd.f32 %v2540, %v3118
  %v3120 = vpop.f32.mrf.mxu0
  %3121 = vmatprep.mubr.f32.mxu0 0.0
  %v3122 = vand.u32 %v426, 4294901760
  %3123 = vmatmul.mubr.f32.gmra.mxu0 %v3122
  %v3124 = vpop.f32.mrf.mxu0
  %v3125 = vadd.f32 %v2548, %v3124
  %v3126 = vpop.f32.mrf.mxu0
  %3127 = vmatprep.mubr.f32.mxu0 0.0
  %v3128 = vand.u32 %v427, 4294901760
  %3129 = vmatmul.mubr.f32.gmra.mxu0 %v3128
  %v3130 = vpop.f32.mrf.mxu0
  %v3131 = vadd.f32 %v2556, %v3130
  %v3132 = vpop.f32.mrf.mxu0
  %3133 = vmatprep.mubr.f32.mxu0 0.0
  %v3134 = vand.u32 %v428, 4294901760
  %3135 = vmatmul.mubr.f32.gmra.mxu0 %v3134
  %v3136 = vpop.f32.mrf.mxu0
  %v3137 = vadd.f32 %v2564, %v3136
  %v3138 = vpop.f32.mrf.mxu0
  %3139 = vmatprep.mubr.f32.mxu0 0.0
  %v3140 = vand.u32 %v429, 4294901760
  %3141 = vmatmul.mubr.f32.gmra.mxu0 %v3140
  %v3142 = vpop.f32.mrf.mxu0
  %v3143 = vadd.f32 %v2572, %v3142
  %v3144 = vpop.f32.mrf.mxu0
  %3145 = vmatprep.mubr.f32.mxu0 0.0
  %v3146 = vand.u32 %v430, 4294901760
  %3147 = vmatmul.mubr.f32.gmra.mxu0 %v3146
  %v3148 = vpop.f32.mrf.mxu0
  %v3149 = vadd.f32 %v2580, %v3148
  %v3150 = vpop.f32.mrf.mxu0
  %3151 = vmatprep.mubr.f32.mxu0 0.0
  %v3152 = vand.u32 %v431, 4294901760
  %3153 = vmatmul.mubr.f32.gmra.mxu0 %v3152
  %v3154 = vpop.f32.mrf.mxu0
  %v3155 = vadd.f32 %v2588, %v3154
  %v3156 = vpop.f32.mrf.mxu0
  %3157 = vmatprep.mubr.f32.mxu0 0.0
  %v3158 = vand.u32 %v432, 4294901760
  %3159 = vmatmul.mubr.f32.gmra.mxu0 %v3158
  %v3160 = vpop.f32.mrf.mxu0
  %v3161 = vadd.f32 %v2596, %v3160
  %v3162 = vpop.f32.mrf.mxu0
  %3163 = vmatprep.mubr.f32.mxu0 0.0
  %v3164 = vand.u32 %v433, 4294901760
  %3165 = vmatmul.mubr.f32.gmra.mxu0 %v3164
  %v3166 = vpop.f32.mrf.mxu0
  %v3167 = vadd.f32 %v2604, %v3166
  %v3168 = vpop.f32.mrf.mxu0
  %3169 = vmatprep.mubr.f32.mxu0 0.0
  %v3170 = vand.u32 %v434, 4294901760
  %3171 = vmatmul.mubr.f32.gmra.mxu0 %v3170
  %v3172 = vpop.f32.mrf.mxu0
  %v3173 = vadd.f32 %v2612, %v3172
  %v3174 = vpop.f32.mrf.mxu0
  %3175 = vmatprep.mubr.f32.mxu0 0.0
  %v3176 = vand.u32 %v435, 4294901760
  %3177 = vmatmul.mubr.f32.gmra.mxu0 %v3176
  %v3178 = vpop.f32.mrf.mxu0
  %v3179 = vadd.f32 %v2620, %v3178
  %v3180 = vpop.f32.mrf.mxu0
  %3181 = vmatprep.mubr.f32.mxu0 0.0
  %v3182 = vand.u32 %v436, 4294901760
  %3183 = vmatmul.mubr.f32.gmra.mxu0 %v3182
  %v3184 = vpop.f32.mrf.mxu0
  %v3185 = vadd.f32 %v2628, %v3184
  %v3186 = vpop.f32.mrf.mxu0
  %3187 = vmatprep.mubr.f32.mxu0 0.0
  %v3188 = vand.u32 %v437, 4294901760
  %3189 = vmatmul.mubr.f32.gmra.mxu0 %v3188
  %v3190 = vpop.f32.mrf.mxu0
  %v3191 = vadd.f32 %v2636, %v3190
  %v3192 = vpop.f32.mrf.mxu0
  %3193 = vmatprep.mubr.f32.mxu0 0.0
  %v3194 = vand.u32 %v438, 4294901760
  %3195 = vmatmul.mubr.f32.gmra.mxu0 %v3194
  %v3196 = vpop.f32.mrf.mxu0
  %v3197 = vadd.f32 %v2644, %v3196
  %v3198 = vpop.f32.mrf.mxu0
  %3199 = vmatprep.mubr.f32.mxu0 0.0
  %v3200 = vand.u32 %v439, 4294901760
  %3201 = vmatmul.mubr.f32.gmra.mxu0 %v3200
  %v3202 = vpop.f32.mrf.mxu0
  %v3203 = vadd.f32 %v2652, %v3202
  %v3204 = vpop.f32.mrf.mxu0
  %3205 = vmatprep.mubr.f32.mxu0 0.0
  %v3206 = vand.u32 %v440, 4294901760
  %3207 = vmatmul.mubr.f32.gmra.mxu0 %v3206
  %v3208 = vpop.f32.mrf.mxu0
  %v3209 = vadd.f32 %v2660, %v3208
  %v3210 = vpop.f32.mrf.mxu0
  %3211 = vmatprep.mubr.f32.mxu0 0.0
  %v3212 = vand.u32 %v441, 4294901760
  %3213 = vmatmul.mubr.f32.gmra.mxu0 %v3212
  %v3214 = vpop.f32.mrf.mxu0
  %v3215 = vadd.f32 %v2668, %v3214
  %v3216 = vpop.f32.mrf.mxu0
  %3217 = vmatprep.mubr.f32.mxu0 0.0
  %v3218 = vand.u32 %v442, 4294901760
  %3219 = vmatmul.mubr.f32.gmra.mxu0 %v3218
  %v3220 = vpop.f32.mrf.mxu0
  %v3221 = vadd.f32 %v2676, %v3220
  %v3222 = vpop.f32.mrf.mxu0
  %3223 = vmatprep.mubr.f32.mxu0 0.0
  %v3224 = vand.u32 %v443, 4294901760
  %3225 = vmatmul.mubr.f32.gmra.mxu0 %v3224
  %v3226 = vpop.f32.mrf.mxu0
  %v3227 = vadd.f32 %v2684, %v3226
  %v3228 = vpop.f32.mrf.mxu0
  %3229 = vmatprep.mubr.f32.mxu0 0.0
  %v3230 = vand.u32 %v444, 4294901760
  %3231 = vmatmul.mubr.f32.gmra.mxu0 %v3230
  %v3232 = vpop.f32.mrf.mxu0
  %v3233 = vadd.f32 %v2692, %v3232
  %v3234 = vpop.f32.mrf.mxu0
  %3235 = vmatprep.mubr.f32.mxu0 0.0
  %v3236 = vand.u32 %v445, 4294901760
  %3237 = vmatmul.mubr.f32.gmra.mxu0 %v3236
  %v3238 = vpop.f32.mrf.mxu0
  %v3239 = vadd.f32 %v2700, %v3238
  %v3240 = vpop.f32.mrf.mxu0
  %3241 = vmatprep.mubr.f32.mxu0 0.0
  %v3242 = vand.u32 %v446, 4294901760
  %3243 = vmatmul.mubr.f32.gmra.mxu0 %v3242
  %v3244 = vpop.f32.mrf.mxu0
  %v3245 = vadd.f32 %v2708, %v3244
  %v3246 = vpop.f32.mrf.mxu0
  %3247 = vmatprep.mubr.f32.mxu0 0.0
  %v3248 = vand.u32 %v447, 4294901760
  %3249 = vmatmul.mubr.f32.gmra.mxu0 %v3248
  %v3250 = vpop.f32.mrf.mxu0
  %v3251 = vadd.f32 %v2716, %v3250
  %v3252 = vpop.f32.mrf.mxu0
  %3253 = vmatprep.mubr.f32.mxu0 0.0
  %v3254 = vand.u32 %v448, 4294901760
  %3255 = vmatmul.mubr.f32.gmra.mxu0 %v3254
  %v3256 = vpop.f32.mrf.mxu0
  %v3257 = vadd.f32 %v2724, %v3256
  %v3258 = vpop.f32.mrf.mxu0
  %3259 = vmatprep.mubr.f32.mxu0 0.0
  %v3260 = vand.u32 %v449, 4294901760
  %3261 = vmatmul.mubr.f32.gmra.mxu0 %v3260
  %v3262 = vpop.f32.mrf.mxu0
  %v3263 = vadd.f32 %v2732, %v3262
  %v3264 = vpop.f32.mrf.mxu0
  %3265 = vmatprep.mubr.f32.mxu0 0.0
  %v3266 = vand.u32 %v450, 4294901760
  %3267 = vmatmul.mubr.f32.gmra.mxu0 %v3266
  %v3268 = vpop.f32.mrf.mxu0
  %v3269 = vadd.f32 %v2740, %v3268
  %v3270 = vpop.f32.mrf.mxu0
  %3271 = vmatprep.mubr.f32.mxu0 0.0
  %v3272 = vand.u32 %v451, 4294901760
  %3273 = vmatmul.mubr.f32.gmra.mxu0 %v3272
  %v3274 = vpop.f32.mrf.mxu0
  %v3275 = vadd.f32 %v2748, %v3274
  %v3276 = vpop.f32.mrf.mxu0
  %3277 = vmatprep.mubr.f32.mxu0 0.0
  %v3278 = vand.u32 %v452, 4294901760
  %3279 = vmatmul.mubr.f32.gmra.mxu0 %v3278
  %v3280 = vpop.f32.mrf.mxu0
  %v3281 = vadd.f32 %v2756, %v3280
  %v3282 = vpop.f32.mrf.mxu0
  %3283 = vmatprep.mubr.f32.mxu0 0.0
  %v3284 = vand.u32 %v453, 4294901760
  %3285 = vmatmul.mubr.f32.gmra.mxu0 %v3284
  %v3286 = vpop.f32.mrf.mxu0
  %v3287 = vadd.f32 %v2764, %v3286
  %v3288 = vpop.f32.mrf.mxu0
  %3289 = vmatprep.mubr.f32.mxu0 0.0
  %v3290 = vand.u32 %v454, 4294901760
  %3291 = vmatmul.mubr.f32.gmra.mxu0 %v3290
  %v3292 = vpop.f32.mrf.mxu0
  %v3293 = vadd.f32 %v2772, %v3292
  %v3294 = vpop.f32.mrf.mxu0
  %3295 = vmatprep.mubr.f32.mxu0 0.0
  %v3296 = vand.u32 %v455, 4294901760
  %3297 = vmatmul.mubr.f32.gmra.mxu0 %v3296
  %v3298 = vpop.f32.mrf.mxu0
  %v3299 = vadd.f32 %v2780, %v3298
  %v3300 = vpop.f32.mrf.mxu0
  %3301 = vmatprep.mubr.f32.mxu0 0.0
  %v3302 = vand.u32 %v456, 4294901760
  %3303 = vmatmul.mubr.f32.gmra.mxu0 %v3302
  %v3304 = vpop.f32.mrf.mxu0
  %v3305 = vadd.f32 %v2788, %v3304
  %v3306 = vpop.f32.mrf.mxu0
  %3307 = vmatprep.mubr.f32.mxu0 0.0
  %v3308 = vand.u32 %v457, 4294901760
  %3309 = vmatmul.mubr.f32.gmra.mxu0 %v3308
  %v3310 = vpop.f32.mrf.mxu0
  %v3311 = vadd.f32 %v2796, %v3310
  %v3312 = vpop.f32.mrf.mxu0
  %3313 = vmatprep.mubr.f32.mxu0 0.0
  %v3314 = vand.u32 %v458, 4294901760
  %3315 = vmatmul.mubr.f32.gmra.mxu0 %v3314
  %v3316 = vpop.f32.mrf.mxu0
  %v3317 = vadd.f32 %v2804, %v3316
  %v3318 = vpop.f32.mrf.mxu0
  %3319 = vmatprep.mubr.f32.mxu0 0.0
  %v3320 = vand.u32 %v459, 4294901760
  %3321 = vmatmul.mubr.f32.gmra.mxu0 %v3320
  %v3322 = vpop.f32.mrf.mxu0
  %v3323 = vadd.f32 %v2812, %v3322
  %v3324 = vpop.f32.mrf.mxu0
  %3325 = vmatprep.mubr.f32.mxu0 0.0
  %v3326 = vand.u32 %v460, 4294901760
  %3327 = vmatmul.mubr.f32.gmra.mxu0 %v3326
  %v3328 = vpop.f32.mrf.mxu0
  %v3329 = vadd.f32 %v2820, %v3328
  %v3330 = vpop.f32.mrf.mxu0
  %3331 = vmatprep.mubr.f32.mxu0 0.0
  %v3332 = vand.u32 %v461, 4294901760
  %3333 = vmatmul.mubr.f32.gmra.mxu0 %v3332
  %v3334 = vpop.f32.mrf.mxu0
  %v3335 = vadd.f32 %v2828, %v3334
  %v3336 = vpop.f32.mrf.mxu0
  %3337 = vmatprep.mubr.f32.mxu0 0.0
  %v3338 = vand.u32 %v462, 4294901760
  %3339 = vmatmul.mubr.f32.gmra.mxu0 %v3338
  %v3340 = vpop.f32.mrf.mxu0
  %v3341 = vadd.f32 %v2836, %v3340
  %v3342 = vpop.f32.mrf.mxu0
  %3343 = vmatprep.mubr.f32.mxu0 0.0
  %v3344 = vand.u32 %v463, 4294901760
  %3345 = vmatmul.mubr.f32.gmra.mxu0 %v3344
  %v3346 = vpop.f32.mrf.mxu0
  %v3347 = vadd.f32 %v2844, %v3346
  %v3348 = vpop.f32.mrf.mxu0
  %3349 = vmatprep.mubr.f32.mxu0 0.0
  %v3350 = vand.u32 %v464, 4294901760
  %3351 = vmatmul.mubr.f32.gmra.mxu0 %v3350
  %v3352 = vpop.f32.mrf.mxu0
  %v3353 = vadd.f32 %v2852, %v3352
  %v3354 = vpop.f32.mrf.mxu0
  %3355 = vmatprep.mubr.f32.mxu0 0.0
  %v3356 = vand.u32 %v465, 4294901760
  %3357 = vmatmul.mubr.f32.gmra.mxu0 %v3356
  %v3358 = vpop.f32.mrf.mxu0
  %v3359 = vadd.f32 %v2860, %v3358
  %v3360 = vpop.f32.mrf.mxu0
  %3361 = vmatprep.mubr.f32.mxu0 0.0
  %v3362 = vand.u32 %v466, 4294901760
  %3363 = vmatmul.mubr.f32.gmra.mxu0 %v3362
  %v3364 = vpop.f32.mrf.mxu0
  %v3365 = vadd.f32 %v2868, %v3364
  %v3366 = vpop.f32.mrf.mxu0
  %3367 = vdwg.mxu0
  %3368 = vmatprep.subr.mxu0 0.0
  %v3369 = vand.u32 %v482, 4294901760
  %3370 = vmatpush1.msra.mxu0 %v3369
  %3371 = vmatprep.subr.mxu0 0.0
  %v3372 = vand.u32 %v481, 4294901760
  %3373 = vmatpush1.msra.mxu0 %v3372
  %3374 = vmatprep.subr.mxu0 0.0
  %v3375 = vand.u32 %v480, 4294901760
  %3376 = vmatpush1.msra.mxu0 %v3375
  %3377 = vmatprep.subr.mxu0 0.0
  %v3378 = vand.u32 %v479, 4294901760
  %3379 = vmatpush1.msra.mxu0 %v3378
  %3380 = vmatprep.subr.mxu0 0.0
  %v3381 = vand.u32 %v478, 4294901760
  %3382 = vmatpush1.msra.mxu0 %v3381
  %3383 = vmatprep.subr.mxu0 0.0
  %v3384 = vand.u32 %v477, 4294901760
  %3385 = vmatpush1.msra.mxu0 %v3384
  %3386 = vmatprep.subr.mxu0 0.0
  %v3387 = vand.u32 %v476, 4294901760
  %3388 = vmatpush1.msra.mxu0 %v3387
  %3389 = vmatprep.subr.mxu0 0.0
  %v3390 = vand.u32 %v475, 4294901760
  %3391 = vmatpush1.msra.mxu0 %v3390
  %3392 = vmatprep.subr.mxu0 0.0
  %v3393 = vand.u32 %v474, 4294901760
  %3394 = vmatpush1.msra.mxu0 %v3393
  %3395 = vmatprep.subr.mxu0 0.0
  %v3396 = vand.u32 %v473, 4294901760
  %3397 = vmatpush1.msra.mxu0 %v3396
  %3398 = vmatprep.subr.mxu0 0.0
  %v3399 = vand.u32 %v472, 4294901760
  %3400 = vmatpush1.msra.mxu0 %v3399
  %3401 = vmatprep.subr.mxu0 0.0
  %v3402 = vand.u32 %v471, 4294901760
  %3403 = vmatpush1.msra.mxu0 %v3402
  %3404 = vmatprep.subr.mxu0 0.0
  %v3405 = vand.u32 %v470, 4294901760
  %3406 = vmatpush1.msra.mxu0 %v3405
  %3407 = vmatprep.subr.mxu0 0.0
  %v3408 = vand.u32 %v469, 4294901760
  %3409 = vmatpush1.msra.mxu0 %v3408
  %3410 = vmatprep.subr.mxu0 0.0
  %v3411 = vand.u32 %v468, 4294901760
  %3412 = vmatpush1.msra.mxu0 %v3411
  %3413 = vmatprep.subr.mxu0 0.0
  %v3414 = vand.u32 %v467, 4294901760
  %3415 = vmatpush1.msra.mxu0 %v3414
  %3416 = vmatprep.subr.mxu0 0.0
  %3417 = vmatpush2.msra.mxu0 0.0
  %3418 = vmatprep.subr.mxu0 0.0
  %3419 = vmatpush2.msra.mxu0 0.0
  %3420 = vmatprep.subr.mxu0 0.0
  %3421 = vmatpush2.msra.mxu0 0.0
  %3422 = vmatprep.subr.mxu0 0.0
  %3423 = vmatpush2.msra.mxu0 0.0
  %3424 = vmatprep.subr.mxu0 0.0
  %3425 = vmatpush2.msra.mxu0 0.0
  %3426 = vmatprep.subr.mxu0 0.0
  %3427 = vmatpush2.msra.mxu0 0.0
  %3428 = vmatprep.subr.mxu0 0.0
  %3429 = vmatpush2.msra.mxu0 0.0
  %3430 = vmatprep.subr.mxu0 0.0
  %3431 = vmatpush2.msra.mxu0 0.0
  %3432 = vmatprep.subr.mxu0 0.0
  %3433 = vmatpush2.msra.mxu0 0.0
  %3434 = vmatprep.subr.mxu0 0.0
  %3435 = vmatpush2.msra.mxu0 0.0
  %3436 = vmatprep.subr.mxu0 0.0
  %3437 = vmatpush2.msra.mxu0 0.0
  %3438 = vmatprep.subr.mxu0 0.0
  %3439 = vmatpush2.msra.mxu0 0.0
  %3440 = vmatprep.subr.mxu0 0.0
  %3441 = vmatpush2.msra.mxu0 0.0
  %3442 = vmatprep.subr.mxu0 0.0
  %3443 = vmatpush2.msra.mxu0 0.0
  %3444 = vmatprep.subr.mxu0 0.0
  %3445 = vmatpush2.msra.mxu0 0.0
  %3446 = vmatprep.subr.mxu0 0.0
  %3447 = vmatpush2.msra.mxu0 0.0
  %3448 = vmatprep.mubr.f32.mxu0 0.0
  %v3449 = vand.u32 %v403, 4294901760
  %3450 = vmatmul.mubr.f32.gmra.mxu0 %v3449
  %v3451 = vpop.f32.mrf.mxu0
  %v3452 = vadd.f32 %v2987, %v3451
  %v3453 = vpop.f32.mrf.mxu0
  %3454 = vmatprep.mubr.f32.mxu0 0.0
  %v3455 = vand.u32 %v404, 4294901760
  %3456 = vmatmul.mubr.f32.gmra.mxu0 %v3455
  %v3457 = vpop.f32.mrf.mxu0
  %v3458 = vadd.f32 %v2993, %v3457
  %v3459 = vpop.f32.mrf.mxu0
  %3460 = vmatprep.mubr.f32.mxu0 0.0
  %v3461 = vand.u32 %v405, 4294901760
  %3462 = vmatmul.mubr.f32.gmra.mxu0 %v3461
  %v3463 = vpop.f32.mrf.mxu0
  %v3464 = vadd.f32 %v2999, %v3463
  %v3465 = vpop.f32.mrf.mxu0
  %3466 = vmatprep.mubr.f32.mxu0 0.0
  %v3467 = vand.u32 %v406, 4294901760
  %3468 = vmatmul.mubr.f32.gmra.mxu0 %v3467
  %v3469 = vpop.f32.mrf.mxu0
  %v3470 = vadd.f32 %v3005, %v3469
  %v3471 = vpop.f32.mrf.mxu0
  %3472 = vmatprep.mubr.f32.mxu0 0.0
  %v3473 = vand.u32 %v407, 4294901760
  %3474 = vmatmul.mubr.f32.gmra.mxu0 %v3473
  %v3475 = vpop.f32.mrf.mxu0
  %v3476 = vadd.f32 %v3011, %v3475
  %v3477 = vpop.f32.mrf.mxu0
  %3478 = vmatprep.mubr.f32.mxu0 0.0
  %v3479 = vand.u32 %v408, 4294901760
  %3480 = vmatmul.mubr.f32.gmra.mxu0 %v3479
  %v3481 = vpop.f32.mrf.mxu0
  %v3482 = vadd.f32 %v3017, %v3481
  %v3483 = vpop.f32.mrf.mxu0
  %3484 = vmatprep.mubr.f32.mxu0 0.0
  %v3485 = vand.u32 %v409, 4294901760
  %3486 = vmatmul.mubr.f32.gmra.mxu0 %v3485
  %v3487 = vpop.f32.mrf.mxu0
  %v3488 = vadd.f32 %v3023, %v3487
  %v3489 = vpop.f32.mrf.mxu0
  %3490 = vmatprep.mubr.f32.mxu0 0.0
  %v3491 = vand.u32 %v410, 4294901760
  %3492 = vmatmul.mubr.f32.gmra.mxu0 %v3491
  %v3493 = vpop.f32.mrf.mxu0
  %v3494 = vadd.f32 %v3029, %v3493
  %v3495 = vpop.f32.mrf.mxu0
  %3496 = vmatprep.mubr.f32.mxu0 0.0
  %v3497 = vand.u32 %v411, 4294901760
  %3498 = vmatmul.mubr.f32.gmra.mxu0 %v3497
  %v3499 = vpop.f32.mrf.mxu0
  %v3500 = vadd.f32 %v3035, %v3499
  %v3501 = vpop.f32.mrf.mxu0
  %3502 = vmatprep.mubr.f32.mxu0 0.0
  %v3503 = vand.u32 %v412, 4294901760
  %3504 = vmatmul.mubr.f32.gmra.mxu0 %v3503
  %v3505 = vpop.f32.mrf.mxu0
  %v3506 = vadd.f32 %v3041, %v3505
  %v3507 = vpop.f32.mrf.mxu0
  %3508 = vmatprep.mubr.f32.mxu0 0.0
  %v3509 = vand.u32 %v413, 4294901760
  %3510 = vmatmul.mubr.f32.gmra.mxu0 %v3509
  %v3511 = vpop.f32.mrf.mxu0
  %v3512 = vadd.f32 %v3047, %v3511
  %v3513 = vpop.f32.mrf.mxu0
  %3514 = vmatprep.mubr.f32.mxu0 0.0
  %v3515 = vand.u32 %v414, 4294901760
  %3516 = vmatmul.mubr.f32.gmra.mxu0 %v3515
  %v3517 = vpop.f32.mrf.mxu0
  %v3518 = vadd.f32 %v3053, %v3517
  %v3519 = vpop.f32.mrf.mxu0
  %3520 = vmatprep.mubr.f32.mxu0 0.0
  %v3521 = vand.u32 %v415, 4294901760
  %3522 = vmatmul.mubr.f32.gmra.mxu0 %v3521
  %v3523 = vpop.f32.mrf.mxu0
  %v3524 = vadd.f32 %v3059, %v3523
  %v3525 = vpop.f32.mrf.mxu0
  %3526 = vmatprep.mubr.f32.mxu0 0.0
  %v3527 = vand.u32 %v416, 4294901760
  %3528 = vmatmul.mubr.f32.gmra.mxu0 %v3527
  %v3529 = vpop.f32.mrf.mxu0
  %v3530 = vadd.f32 %v3065, %v3529
  %v3531 = vpop.f32.mrf.mxu0
  %3532 = vmatprep.mubr.f32.mxu0 0.0
  %v3533 = vand.u32 %v417, 4294901760
  %3534 = vmatmul.mubr.f32.gmra.mxu0 %v3533
  %v3535 = vpop.f32.mrf.mxu0
  %v3536 = vadd.f32 %v3071, %v3535
  %v3537 = vpop.f32.mrf.mxu0
  %3538 = vmatprep.mubr.f32.mxu0 0.0
  %v3539 = vand.u32 %v418, 4294901760
  %3540 = vmatmul.mubr.f32.gmra.mxu0 %v3539
  %v3541 = vpop.f32.mrf.mxu0
  %v3542 = vadd.f32 %v3077, %v3541
  %v3543 = vpop.f32.mrf.mxu0
  %3544 = vmatprep.mubr.f32.mxu0 0.0
  %v3545 = vand.u32 %v419, 4294901760
  %3546 = vmatmul.mubr.f32.gmra.mxu0 %v3545
  %v3547 = vpop.f32.mrf.mxu0
  %v3548 = vadd.f32 %v3083, %v3547
  %v3549 = vpop.f32.mrf.mxu0
  %3550 = vmatprep.mubr.f32.mxu0 0.0
  %v3551 = vand.u32 %v420, 4294901760
  %3552 = vmatmul.mubr.f32.gmra.mxu0 %v3551
  %v3553 = vpop.f32.mrf.mxu0
  %v3554 = vadd.f32 %v3089, %v3553
  %v3555 = vpop.f32.mrf.mxu0
  %3556 = vmatprep.mubr.f32.mxu0 0.0
  %v3557 = vand.u32 %v421, 4294901760
  %3558 = vmatmul.mubr.f32.gmra.mxu0 %v3557
  %v3559 = vpop.f32.mrf.mxu0
  %v3560 = vadd.f32 %v3095, %v3559
  %v3561 = vpop.f32.mrf.mxu0
  %3562 = vmatprep.mubr.f32.mxu0 0.0
  %v3563 = vand.u32 %v422, 4294901760
  %3564 = vmatmul.mubr.f32.gmra.mxu0 %v3563
  %v3565 = vpop.f32.mrf.mxu0
  %v3566 = vadd.f32 %v3101, %v3565
  %v3567 = vpop.f32.mrf.mxu0
  %3568 = vmatprep.mubr.f32.mxu0 0.0
  %v3569 = vand.u32 %v423, 4294901760
  %3570 = vmatmul.mubr.f32.gmra.mxu0 %v3569
  %v3571 = vpop.f32.mrf.mxu0
  %v3572 = vadd.f32 %v3107, %v3571
  %v3573 = vpop.f32.mrf.mxu0
  %3574 = vmatprep.mubr.f32.mxu0 0.0
  %v3575 = vand.u32 %v424, 4294901760
  %3576 = vmatmul.mubr.f32.gmra.mxu0 %v3575
  %v3577 = vpop.f32.mrf.mxu0
  %v3578 = vadd.f32 %v3113, %v3577
  %v3579 = vpop.f32.mrf.mxu0
  %3580 = vmatprep.mubr.f32.mxu0 0.0
  %v3581 = vand.u32 %v425, 4294901760
  %3582 = vmatmul.mubr.f32.gmra.mxu0 %v3581
  %v3583 = vpop.f32.mrf.mxu0
  %v3584 = vadd.f32 %v3119, %v3583
  %v3585 = vpop.f32.mrf.mxu0
  %3586 = vmatprep.mubr.f32.mxu0 0.0
  %v3587 = vand.u32 %v426, 4294901760
  %3588 = vmatmul.mubr.f32.gmra.mxu0 %v3587
  %v3589 = vpop.f32.mrf.mxu0
  %v3590 = vadd.f32 %v3125, %v3589
  %v3591 = vpop.f32.mrf.mxu0
  %3592 = vmatprep.mubr.f32.mxu0 0.0
  %v3593 = vand.u32 %v427, 4294901760
  %3594 = vmatmul.mubr.f32.gmra.mxu0 %v3593
  %v3595 = vpop.f32.mrf.mxu0
  %v3596 = vadd.f32 %v3131, %v3595
  %v3597 = vpop.f32.mrf.mxu0
  %3598 = vmatprep.mubr.f32.mxu0 0.0
  %v3599 = vand.u32 %v428, 4294901760
  %3600 = vmatmul.mubr.f32.gmra.mxu0 %v3599
  %v3601 = vpop.f32.mrf.mxu0
  %v3602 = vadd.f32 %v3137, %v3601
  %v3603 = vpop.f32.mrf.mxu0
  %3604 = vmatprep.mubr.f32.mxu0 0.0
  %v3605 = vand.u32 %v429, 4294901760
  %3606 = vmatmul.mubr.f32.gmra.mxu0 %v3605
  %v3607 = vpop.f32.mrf.mxu0
  %v3608 = vadd.f32 %v3143, %v3607
  %v3609 = vpop.f32.mrf.mxu0
  %3610 = vmatprep.mubr.f32.mxu0 0.0
  %v3611 = vand.u32 %v430, 4294901760
  %3612 = vmatmul.mubr.f32.gmra.mxu0 %v3611
  %v3613 = vpop.f32.mrf.mxu0
  %v3614 = vadd.f32 %v3149, %v3613
  %v3615 = vpop.f32.mrf.mxu0
  %3616 = vmatprep.mubr.f32.mxu0 0.0
  %v3617 = vand.u32 %v431, 4294901760
  %3618 = vmatmul.mubr.f32.gmra.mxu0 %v3617
  %v3619 = vpop.f32.mrf.mxu0
  %v3620 = vadd.f32 %v3155, %v3619
  %v3621 = vpop.f32.mrf.mxu0
  %3622 = vmatprep.mubr.f32.mxu0 0.0
  %v3623 = vand.u32 %v432, 4294901760
  %3624 = vmatmul.mubr.f32.gmra.mxu0 %v3623
  %v3625 = vpop.f32.mrf.mxu0
  %v3626 = vadd.f32 %v3161, %v3625
  %v3627 = vpop.f32.mrf.mxu0
  %3628 = vmatprep.mubr.f32.mxu0 0.0
  %v3629 = vand.u32 %v433, 4294901760
  %3630 = vmatmul.mubr.f32.gmra.mxu0 %v3629
  %v3631 = vpop.f32.mrf.mxu0
  %v3632 = vadd.f32 %v3167, %v3631
  %v3633 = vpop.f32.mrf.mxu0
  %3634 = vmatprep.mubr.f32.mxu0 0.0
  %v3635 = vand.u32 %v434, 4294901760
  %3636 = vmatmul.mubr.f32.gmra.mxu0 %v3635
  %v3637 = vpop.f32.mrf.mxu0
  %v3638 = vadd.f32 %v3173, %v3637
  %v3639 = vpop.f32.mrf.mxu0
  %3640 = vmatprep.mubr.f32.mxu0 0.0
  %v3641 = vand.u32 %v435, 4294901760
  %3642 = vmatmul.mubr.f32.gmra.mxu0 %v3641
  %v3643 = vpop.f32.mrf.mxu0
  %v3644 = vadd.f32 %v3179, %v3643
  %v3645 = vpop.f32.mrf.mxu0
  %3646 = vmatprep.mubr.f32.mxu0 0.0
  %v3647 = vand.u32 %v436, 4294901760
  %3648 = vmatmul.mubr.f32.gmra.mxu0 %v3647
  %v3649 = vpop.f32.mrf.mxu0
  %v3650 = vadd.f32 %v3185, %v3649
  %v3651 = vpop.f32.mrf.mxu0
  %3652 = vmatprep.mubr.f32.mxu0 0.0
  %v3653 = vand.u32 %v437, 4294901760
  %3654 = vmatmul.mubr.f32.gmra.mxu0 %v3653
  %v3655 = vpop.f32.mrf.mxu0
  %v3656 = vadd.f32 %v3191, %v3655
  %v3657 = vpop.f32.mrf.mxu0
  %3658 = vmatprep.mubr.f32.mxu0 0.0
  %v3659 = vand.u32 %v438, 4294901760
  %3660 = vmatmul.mubr.f32.gmra.mxu0 %v3659
  %v3661 = vpop.f32.mrf.mxu0
  %v3662 = vadd.f32 %v3197, %v3661
  %v3663 = vpop.f32.mrf.mxu0
  %3664 = vmatprep.mubr.f32.mxu0 0.0
  %v3665 = vand.u32 %v439, 4294901760
  %3666 = vmatmul.mubr.f32.gmra.mxu0 %v3665
  %v3667 = vpop.f32.mrf.mxu0
  %v3668 = vadd.f32 %v3203, %v3667
  %v3669 = vpop.f32.mrf.mxu0
  %3670 = vmatprep.mubr.f32.mxu0 0.0
  %v3671 = vand.u32 %v440, 4294901760
  %3672 = vmatmul.mubr.f32.gmra.mxu0 %v3671
  %v3673 = vpop.f32.mrf.mxu0
  %v3674 = vadd.f32 %v3209, %v3673
  %v3675 = vpop.f32.mrf.mxu0
  %3676 = vmatprep.mubr.f32.mxu0 0.0
  %v3677 = vand.u32 %v441, 4294901760
  %3678 = vmatmul.mubr.f32.gmra.mxu0 %v3677
  %v3679 = vpop.f32.mrf.mxu0
  %v3680 = vadd.f32 %v3215, %v3679
  %v3681 = vpop.f32.mrf.mxu0
  %3682 = vmatprep.mubr.f32.mxu0 0.0
  %v3683 = vand.u32 %v442, 4294901760
  %3684 = vmatmul.mubr.f32.gmra.mxu0 %v3683
  %v3685 = vpop.f32.mrf.mxu0
  %v3686 = vadd.f32 %v3221, %v3685
  %v3687 = vpop.f32.mrf.mxu0
  %3688 = vmatprep.mubr.f32.mxu0 0.0
  %v3689 = vand.u32 %v443, 4294901760
  %3690 = vmatmul.mubr.f32.gmra.mxu0 %v3689
  %v3691 = vpop.f32.mrf.mxu0
  %v3692 = vadd.f32 %v3227, %v3691
  %v3693 = vpop.f32.mrf.mxu0
  %3694 = vmatprep.mubr.f32.mxu0 0.0
  %v3695 = vand.u32 %v444, 4294901760
  %3696 = vmatmul.mubr.f32.gmra.mxu0 %v3695
  %v3697 = vpop.f32.mrf.mxu0
  %v3698 = vadd.f32 %v3233, %v3697
  %v3699 = vpop.f32.mrf.mxu0
  %3700 = vmatprep.mubr.f32.mxu0 0.0
  %v3701 = vand.u32 %v445, 4294901760
  %3702 = vmatmul.mubr.f32.gmra.mxu0 %v3701
  %v3703 = vpop.f32.mrf.mxu0
  %v3704 = vadd.f32 %v3239, %v3703
  %v3705 = vpop.f32.mrf.mxu0
  %3706 = vmatprep.mubr.f32.mxu0 0.0
  %v3707 = vand.u32 %v446, 4294901760
  %3708 = vmatmul.mubr.f32.gmra.mxu0 %v3707
  %v3709 = vpop.f32.mrf.mxu0
  %v3710 = vadd.f32 %v3245, %v3709
  %v3711 = vpop.f32.mrf.mxu0
  %3712 = vmatprep.mubr.f32.mxu0 0.0
  %v3713 = vand.u32 %v447, 4294901760
  %3714 = vmatmul.mubr.f32.gmra.mxu0 %v3713
  %v3715 = vpop.f32.mrf.mxu0
  %v3716 = vadd.f32 %v3251, %v3715
  %v3717 = vpop.f32.mrf.mxu0
  %3718 = vmatprep.mubr.f32.mxu0 0.0
  %v3719 = vand.u32 %v448, 4294901760
  %3720 = vmatmul.mubr.f32.gmra.mxu0 %v3719
  %v3721 = vpop.f32.mrf.mxu0
  %v3722 = vadd.f32 %v3257, %v3721
  %v3723 = vpop.f32.mrf.mxu0
  %3724 = vmatprep.mubr.f32.mxu0 0.0
  %v3725 = vand.u32 %v449, 4294901760
  %3726 = vmatmul.mubr.f32.gmra.mxu0 %v3725
  %v3727 = vpop.f32.mrf.mxu0
  %v3728 = vadd.f32 %v3263, %v3727
  %v3729 = vpop.f32.mrf.mxu0
  %3730 = vmatprep.mubr.f32.mxu0 0.0
  %v3731 = vand.u32 %v450, 4294901760
  %3732 = vmatmul.mubr.f32.gmra.mxu0 %v3731
  %v3733 = vpop.f32.mrf.mxu0
  %v3734 = vadd.f32 %v3269, %v3733
  %v3735 = vpop.f32.mrf.mxu0
  %3736 = vmatprep.mubr.f32.mxu0 0.0
  %v3737 = vand.u32 %v451, 4294901760
  %3738 = vmatmul.mubr.f32.gmra.mxu0 %v3737
  %v3739 = vpop.f32.mrf.mxu0
  %v3740 = vadd.f32 %v3275, %v3739
  %v3741 = vpop.f32.mrf.mxu0
  %3742 = vmatprep.mubr.f32.mxu0 0.0
  %v3743 = vand.u32 %v452, 4294901760
  %3744 = vmatmul.mubr.f32.gmra.mxu0 %v3743
  %v3745 = vpop.f32.mrf.mxu0
  %v3746 = vadd.f32 %v3281, %v3745
  %v3747 = vpop.f32.mrf.mxu0
  %3748 = vmatprep.mubr.f32.mxu0 0.0
  %v3749 = vand.u32 %v453, 4294901760
  %3750 = vmatmul.mubr.f32.gmra.mxu0 %v3749
  %v3751 = vpop.f32.mrf.mxu0
  %v3752 = vadd.f32 %v3287, %v3751
  %v3753 = vpop.f32.mrf.mxu0
  %3754 = vmatprep.mubr.f32.mxu0 0.0
  %v3755 = vand.u32 %v454, 4294901760
  %3756 = vmatmul.mubr.f32.gmra.mxu0 %v3755
  %v3757 = vpop.f32.mrf.mxu0
  %v3758 = vadd.f32 %v3293, %v3757
  %v3759 = vpop.f32.mrf.mxu0
  %3760 = vmatprep.mubr.f32.mxu0 0.0
  %v3761 = vand.u32 %v455, 4294901760
  %3762 = vmatmul.mubr.f32.gmra.mxu0 %v3761
  %v3763 = vpop.f32.mrf.mxu0
  %v3764 = vadd.f32 %v3299, %v3763
  %v3765 = vpop.f32.mrf.mxu0
  %3766 = vmatprep.mubr.f32.mxu0 0.0
  %v3767 = vand.u32 %v456, 4294901760
  %3768 = vmatmul.mubr.f32.gmra.mxu0 %v3767
  %v3769 = vpop.f32.mrf.mxu0
  %v3770 = vadd.f32 %v3305, %v3769
  %v3771 = vpop.f32.mrf.mxu0
  %3772 = vmatprep.mubr.f32.mxu0 0.0
  %v3773 = vand.u32 %v457, 4294901760
  %3774 = vmatmul.mubr.f32.gmra.mxu0 %v3773
  %v3775 = vpop.f32.mrf.mxu0
  %v3776 = vadd.f32 %v3311, %v3775
  %v3777 = vpop.f32.mrf.mxu0
  %3778 = vmatprep.mubr.f32.mxu0 0.0
  %v3779 = vand.u32 %v458, 4294901760
  %3780 = vmatmul.mubr.f32.gmra.mxu0 %v3779
  %v3781 = vpop.f32.mrf.mxu0
  %v3782 = vadd.f32 %v3317, %v3781
  %v3783 = vpop.f32.mrf.mxu0
  %3784 = vmatprep.mubr.f32.mxu0 0.0
  %v3785 = vand.u32 %v459, 4294901760
  %3786 = vmatmul.mubr.f32.gmra.mxu0 %v3785
  %v3787 = vpop.f32.mrf.mxu0
  %v3788 = vadd.f32 %v3323, %v3787
  %v3789 = vpop.f32.mrf.mxu0
  %3790 = vmatprep.mubr.f32.mxu0 0.0
  %v3791 = vand.u32 %v460, 4294901760
  %3792 = vmatmul.mubr.f32.gmra.mxu0 %v3791
  %v3793 = vpop.f32.mrf.mxu0
  %v3794 = vadd.f32 %v3329, %v3793
  %v3795 = vpop.f32.mrf.mxu0
  %3796 = vmatprep.mubr.f32.mxu0 0.0
  %v3797 = vand.u32 %v461, 4294901760
  %3798 = vmatmul.mubr.f32.gmra.mxu0 %v3797
  %v3799 = vpop.f32.mrf.mxu0
  %v3800 = vadd.f32 %v3335, %v3799
  %v3801 = vpop.f32.mrf.mxu0
  %3802 = vmatprep.mubr.f32.mxu0 0.0
  %v3803 = vand.u32 %v462, 4294901760
  %3804 = vmatmul.mubr.f32.gmra.mxu0 %v3803
  %v3805 = vpop.f32.mrf.mxu0
  %v3806 = vadd.f32 %v3341, %v3805
  %v3807 = vpop.f32.mrf.mxu0
  %3808 = vmatprep.mubr.f32.mxu0 0.0
  %v3809 = vand.u32 %v463, 4294901760
  %3810 = vmatmul.mubr.f32.gmra.mxu0 %v3809
  %v3811 = vpop.f32.mrf.mxu0
  %v3812 = vadd.f32 %v3347, %v3811
  %v3813 = vpop.f32.mrf.mxu0
  %3814 = vmatprep.mubr.f32.mxu0 0.0
  %v3815 = vand.u32 %v464, 4294901760
  %3816 = vmatmul.mubr.f32.gmra.mxu0 %v3815
  %v3817 = vpop.f32.mrf.mxu0
  %v3818 = vadd.f32 %v3353, %v3817
  %v3819 = vpop.f32.mrf.mxu0
  %3820 = vmatprep.mubr.f32.mxu0 0.0
  %v3821 = vand.u32 %v465, 4294901760
  %3822 = vmatmul.mubr.f32.gmra.mxu0 %v3821
  %v3823 = vpop.f32.mrf.mxu0
  %v3824 = vadd.f32 %v3359, %v3823
  %v3825 = vpop.f32.mrf.mxu0
  %3826 = vmatprep.mubr.f32.mxu0 0.0
  %v3827 = vand.u32 %v466, 4294901760
  %3828 = vmatmul.mubr.f32.gmra.mxu0 %v3827
  %v3829 = vpop.f32.mrf.mxu0
  %v3830 = vadd.f32 %v3365, %v3829
  %v3831 = vpop.f32.mrf.mxu0
  %3832 = vdwg.mxu0
  %v3833 = vld [vmem:[%s1] sm:$0xff]
  %v3834 = vld [vmem:[%s1 + $0x8] sm:$0xff]
  %v3835 = vld [vmem:[%s1 + $0x10] sm:$0xff]
  %v3836 = vld [vmem:[%s1 + $0x18] sm:$0xff]
  %v3837 = vld [vmem:[%s1 + $0x20] sm:$0xff]
  %v3838 = vld [vmem:[%s1 + $0x28] sm:$0xff]
  %v3839 = vld [vmem:[%s1 + $0x30] sm:$0xff]
  %v3840 = vld [vmem:[%s1 + $0x38] sm:$0xff]
  %v3841 = vld [vmem:[%s1 + $0x40] sm:$0xff]
  %v3842 = vld [vmem:[%s1 + $0x48] sm:$0xff]
  %v3843 = vld [vmem:[%s1 + $0x50] sm:$0xff]
  %v3844 = vld [vmem:[%s1 + $0x58] sm:$0xff]
  %v3845 = vld [vmem:[%s1 + $0x60] sm:$0xff]
  %v3846 = vld [vmem:[%s1 + $0x68] sm:$0xff]
  %v3847 = vld [vmem:[%s1 + $0x70] sm:$0xff]
  %v3848 = vld [vmem:[%s1 + $0x78] sm:$0xff]
  %v3849 = vld [vmem:[%s1 + $0x80] sm:$0xff]
  %v3850 = vld [vmem:[%s1 + $0x88] sm:$0xff]
  %v3851 = vld [vmem:[%s1 + $0x90] sm:$0xff]
  %v3852 = vld [vmem:[%s1 + $0x98] sm:$0xff]
  %v3853 = vld [vmem:[%s1 + $0xa0] sm:$0xff]
  %v3854 = vld [vmem:[%s1 + $0xa8] sm:$0xff]
  %v3855 = vld [vmem:[%s1 + $0xb0] sm:$0xff]
  %v3856 = vld [vmem:[%s1 + $0xb8] sm:$0xff]
  %v3857 = vld [vmem:[%s1 + $0xc0] sm:$0xff]
  %v3858 = vld [vmem:[%s1 + $0xc8] sm:$0xff]
  %v3859 = vld [vmem:[%s1 + $0xd0] sm:$0xff]
  %v3860 = vld [vmem:[%s1 + $0xd8] sm:$0xff]
  %v3861 = vld [vmem:[%s1 + $0xe0] sm:$0xff]
  %v3862 = vld [vmem:[%s1 + $0xe8] sm:$0xff]
  %v3863 = vld [vmem:[%s1 + $0xf0] sm:$0xff]
  %v3864 = vld [vmem:[%s1 + $0xf8] sm:$0xff]
  %v3865 = vld [vmem:[%s1 + $0x100] sm:$0xff]
  %v3866 = vld [vmem:[%s1 + $0x108] sm:$0xff]
  %v3867 = vld [vmem:[%s1 + $0x110] sm:$0xff]
  %v3868 = vld [vmem:[%s1 + $0x118] sm:$0xff]
  %v3869 = vld [vmem:[%s1 + $0x120] sm:$0xff]
  %v3870 = vld [vmem:[%s1 + $0x128] sm:$0xff]
  %v3871 = vld [vmem:[%s1 + $0x130] sm:$0xff]
  %v3872 = vld [vmem:[%s1 + $0x138] sm:$0xff]
  %v3873 = vld [vmem:[%s1 + $0x140] sm:$0xff]
  %v3874 = vld [vmem:[%s1 + $0x148] sm:$0xff]
  %v3875 = vld [vmem:[%s1 + $0x150] sm:$0xff]
  %v3876 = vld [vmem:[%s1 + $0x158] sm:$0xff]
  %v3877 = vld [vmem:[%s1 + $0x160] sm:$0xff]
  %v3878 = vld [vmem:[%s1 + $0x168] sm:$0xff]
  %v3879 = vld [vmem:[%s1 + $0x170] sm:$0xff]
  %v3880 = vld [vmem:[%s1 + $0x178] sm:$0xff]
  %v3881 = vld [vmem:[%s1 + $0x180] sm:$0xff]
  %v3882 = vld [vmem:[%s1 + $0x188] sm:$0xff]
  %v3883 = vld [vmem:[%s1 + $0x190] sm:$0xff]
  %v3884 = vld [vmem:[%s1 + $0x198] sm:$0xff]
  %v3885 = vld [vmem:[%s1 + $0x1a0] sm:$0xff]
  %v3886 = vld [vmem:[%s1 + $0x1a8] sm:$0xff]
  %v3887 = vld [vmem:[%s1 + $0x1b0] sm:$0xff]
  %v3888 = vld [vmem:[%s1 + $0x1b8] sm:$0xff]
  %v3889 = vld [vmem:[%s1 + $0x1c0] sm:$0xff]
  %v3890 = vld [vmem:[%s1 + $0x1c8] sm:$0xff]
  %v3891 = vld [vmem:[%s1 + $0x1d0] sm:$0xff]
  %v3892 = vld [vmem:[%s1 + $0x1d8] sm:$0xff]
  %v3893 = vld [vmem:[%s1 + $0x1e0] sm:$0xff]
  %v3894 = vld [vmem:[%s1 + $0x1e8] sm:$0xff]
  %v3895 = vld [vmem:[%s1 + $0x1f0] sm:$0xff]
  %v3896 = vld [vmem:[%s1 + $0x1f8] sm:$0xff]
  %v3897 = vld [vmem:[%s2] sm:$0xff]
  %v3898 = vld [vmem:[%s2 + $0x8] sm:$0xff]
  %v3899 = vld [vmem:[%s2 + $0x10] sm:$0xff]
  %v3900 = vld [vmem:[%s2 + $0x18] sm:$0xff]
  %v3901 = vld [vmem:[%s2 + $0x20] sm:$0xff]
  %v3902 = vld [vmem:[%s2 + $0x28] sm:$0xff]
  %v3903 = vld [vmem:[%s2 + $0x30] sm:$0xff]
  %v3904 = vld [vmem:[%s2 + $0x38] sm:$0xff]
  %v3905 = vld [vmem:[%s2 + $0x40] sm:$0xff]
  %v3906 = vld [vmem:[%s2 + $0x48] sm:$0xff]
  %v3907 = vld [vmem:[%s2 + $0x50] sm:$0xff]
  %v3908 = vld [vmem:[%s2 + $0x58] sm:$0xff]
  %v3909 = vld [vmem:[%s2 + $0x60] sm:$0xff]
  %v3910 = vld [vmem:[%s2 + $0x68] sm:$0xff]
  %v3911 = vld [vmem:[%s2 + $0x70] sm:$0xff]
  %v3912 = vld [vmem:[%s2 + $0x78] sm:$0xff]
  %v3913 = vld [vmem:[%s2 + $0x80] sm:$0xff]
  %v3914 = vld [vmem:[%s2 + $0x88] sm:$0xff]
  %v3915 = vld [vmem:[%s2 + $0x90] sm:$0xff]
  %v3916 = vld [vmem:[%s2 + $0x98] sm:$0xff]
  %v3917 = vld [vmem:[%s2 + $0xa0] sm:$0xff]
  %v3918 = vld [vmem:[%s2 + $0xa8] sm:$0xff]
  %v3919 = vld [vmem:[%s2 + $0xb0] sm:$0xff]
  %v3920 = vld [vmem:[%s2 + $0xb8] sm:$0xff]
  %v3921 = vld [vmem:[%s2 + $0xc0] sm:$0xff]
  %v3922 = vld [vmem:[%s2 + $0xc8] sm:$0xff]
  %v3923 = vld [vmem:[%s2 + $0xd0] sm:$0xff]
  %v3924 = vld [vmem:[%s2 + $0xd8] sm:$0xff]
  %v3925 = vld [vmem:[%s2 + $0xe0] sm:$0xff]
  %v3926 = vld [vmem:[%s2 + $0xe8] sm:$0xff]
  %v3927 = vld [vmem:[%s2 + $0xf0] sm:$0xff]
  %v3928 = vld [vmem:[%s2 + $0xf8] sm:$0xff]
  %v3929 = vld [vmem:[%s2 + $0x100] sm:$0xff]
  %v3930 = vld [vmem:[%s2 + $0x108] sm:$0xff]
  %v3931 = vld [vmem:[%s2 + $0x110] sm:$0xff]
  %v3932 = vld [vmem:[%s2 + $0x118] sm:$0xff]
  %v3933 = vld [vmem:[%s2 + $0x120] sm:$0xff]
  %v3934 = vld [vmem:[%s2 + $0x128] sm:$0xff]
  %v3935 = vld [vmem:[%s2 + $0x130] sm:$0xff]
  %v3936 = vld [vmem:[%s2 + $0x138] sm:$0xff]
  %v3937 = vld [vmem:[%s2 + $0x140] sm:$0xff]
  %v3938 = vld [vmem:[%s2 + $0x148] sm:$0xff]
  %v3939 = vld [vmem:[%s2 + $0x150] sm:$0xff]
  %v3940 = vld [vmem:[%s2 + $0x158] sm:$0xff]
  %v3941 = vld [vmem:[%s2 + $0x160] sm:$0xff]
  %v3942 = vld [vmem:[%s2 + $0x168] sm:$0xff]
  %v3943 = vld [vmem:[%s2 + $0x170] sm:$0xff]
  %v3944 = vld [vmem:[%s2 + $0x178] sm:$0xff]
  %v3945 = vld [vmem:[%s2 + $0x180] sm:$0xff]
  %v3946 = vld [vmem:[%s2 + $0x188] sm:$0xff]
  %v3947 = vld [vmem:[%s2 + $0x190] sm:$0xff]
  %v3948 = vld [vmem:[%s2 + $0x198] sm:$0xff]
  %v3949 = vld [vmem:[%s2 + $0x1a0] sm:$0xff]
  %v3950 = vld [vmem:[%s2 + $0x1a8] sm:$0xff]
  %v3951 = vld [vmem:[%s2 + $0x1b0] sm:$0xff]
  %v3952 = vld [vmem:[%s2 + $0x1b8] sm:$0xff]
  %v3953 = vld [vmem:[%s2 + $0x1c0] sm:$0xff]
  %v3954 = vld [vmem:[%s2 + $0x1c8] sm:$0xff]
  %v3955 = vld [vmem:[%s2 + $0x1d0] sm:$0xff]
  %v3956 = vld [vmem:[%s2 + $0x1d8] sm:$0xff]
  %v3957 = vld [vmem:[%s2 + $0x1e0] sm:$0xff]
  %v3958 = vld [vmem:[%s2 + $0x1e8] sm:$0xff]
  %v3959 = vld [vmem:[%s2 + $0x1f0] sm:$0xff]
  %v3960 = vld [vmem:[%s2 + $0x1f8] sm:$0xff]
  %3962 = vset.pattern.permute.xlu0 0
  %3963 = vperm.xlu0 %3962, %v3833
  %v3964 = vpop.permute.xlu0 %3963
  %3967 = vset.pattern.permute.xlu0 0
  %3968 = vperm.xlu0 %3967, %v3834
  %v3969 = vpop.permute.xlu0 %3968
  %3972 = vset.pattern.permute.xlu0 0
  %3973 = vperm.xlu0 %3972, %v3835
  %v3974 = vpop.permute.xlu0 %3973
  %3977 = vset.pattern.permute.xlu0 0
  %3978 = vperm.xlu0 %3977, %v3836
  %v3979 = vpop.permute.xlu0 %3978
  %3982 = vset.pattern.permute.xlu0 0
  %3983 = vperm.xlu0 %3982, %v3837
  %v3984 = vpop.permute.xlu0 %3983
  %3987 = vset.pattern.permute.xlu0 0
  %3988 = vperm.xlu0 %3987, %v3838
  %v3989 = vpop.permute.xlu0 %3988
  %3992 = vset.pattern.permute.xlu0 0
  %3993 = vperm.xlu0 %3992, %v3839
  %v3994 = vpop.permute.xlu0 %3993
  %3997 = vset.pattern.permute.xlu0 0
  %3998 = vperm.xlu0 %3997, %v3840
  %v3999 = vpop.permute.xlu0 %3998
  %4002 = vset.pattern.permute.xlu0 0
  %4003 = vperm.xlu0 %4002, %v3841
  %v4004 = vpop.permute.xlu0 %4003
  %4007 = vset.pattern.permute.xlu0 0
  %4008 = vperm.xlu0 %4007, %v3842
  %v4009 = vpop.permute.xlu0 %4008
  %4012 = vset.pattern.permute.xlu0 0
  %4013 = vperm.xlu0 %4012, %v3843
  %v4014 = vpop.permute.xlu0 %4013
  %4017 = vset.pattern.permute.xlu0 0
  %4018 = vperm.xlu0 %4017, %v3844
  %v4019 = vpop.permute.xlu0 %4018
  %4022 = vset.pattern.permute.xlu0 0
  %4023 = vperm.xlu0 %4022, %v3845
  %v4024 = vpop.permute.xlu0 %4023
  %4027 = vset.pattern.permute.xlu0 0
  %4028 = vperm.xlu0 %4027, %v3846
  %v4029 = vpop.permute.xlu0 %4028
  %4032 = vset.pattern.permute.xlu0 0
  %4033 = vperm.xlu0 %4032, %v3847
  %v4034 = vpop.permute.xlu0 %4033
  %4037 = vset.pattern.permute.xlu0 0
  %4038 = vperm.xlu0 %4037, %v3848
  %v4039 = vpop.permute.xlu0 %4038
  %4042 = vset.pattern.permute.xlu0 0
  %4043 = vperm.xlu0 %4042, %v3849
  %v4044 = vpop.permute.xlu0 %4043
  %4047 = vset.pattern.permute.xlu0 0
  %4048 = vperm.xlu0 %4047, %v3850
  %v4049 = vpop.permute.xlu0 %4048
  %4052 = vset.pattern.permute.xlu0 0
  %4053 = vperm.xlu0 %4052, %v3851
  %v4054 = vpop.permute.xlu0 %4053
  %4057 = vset.pattern.permute.xlu0 0
  %4058 = vperm.xlu0 %4057, %v3852
  %v4059 = vpop.permute.xlu0 %4058
  %4062 = vset.pattern.permute.xlu0 0
  %4063 = vperm.xlu0 %4062, %v3853
  %v4064 = vpop.permute.xlu0 %4063
  %4067 = vset.pattern.permute.xlu0 0
  %4068 = vperm.xlu0 %4067, %v3854
  %v4069 = vpop.permute.xlu0 %4068
  %4072 = vset.pattern.permute.xlu0 0
  %4073 = vperm.xlu0 %4072, %v3855
  %v4074 = vpop.permute.xlu0 %4073
  %4077 = vset.pattern.permute.xlu0 0
  %4078 = vperm.xlu0 %4077, %v3856
  %v4079 = vpop.permute.xlu0 %4078
  %4082 = vset.pattern.permute.xlu0 0
  %4083 = vperm.xlu0 %4082, %v3857
  %v4084 = vpop.permute.xlu0 %4083
  %4087 = vset.pattern.permute.xlu0 0
  %4088 = vperm.xlu0 %4087, %v3858
  %v4089 = vpop.permute.xlu0 %4088
  %4092 = vset.pattern.permute.xlu0 0
  %4093 = vperm.xlu0 %4092, %v3859
  %v4094 = vpop.permute.xlu0 %4093
  %4097 = vset.pattern.permute.xlu0 0
  %4098 = vperm.xlu0 %4097, %v3860
  %v4099 = vpop.permute.xlu0 %4098
  %4102 = vset.pattern.permute.xlu0 0
  %4103 = vperm.xlu0 %4102, %v3861
  %v4104 = vpop.permute.xlu0 %4103
  %4107 = vset.pattern.permute.xlu0 0
  %4108 = vperm.xlu0 %4107, %v3862
  %v4109 = vpop.permute.xlu0 %4108
  %4112 = vset.pattern.permute.xlu0 0
  %4113 = vperm.xlu0 %4112, %v3863
  %v4114 = vpop.permute.xlu0 %4113
  %4117 = vset.pattern.permute.xlu0 0
  %4118 = vperm.xlu0 %4117, %v3864
  %v4119 = vpop.permute.xlu0 %4118
  %4122 = vset.pattern.permute.xlu0 0
  %4123 = vperm.xlu0 %4122, %v3865
  %v4124 = vpop.permute.xlu0 %4123
  %4127 = vset.pattern.permute.xlu0 0
  %4128 = vperm.xlu0 %4127, %v3866
  %v4129 = vpop.permute.xlu0 %4128
  %4132 = vset.pattern.permute.xlu0 0
  %4133 = vperm.xlu0 %4132, %v3867
  %v4134 = vpop.permute.xlu0 %4133
  %4137 = vset.pattern.permute.xlu0 0
  %4138 = vperm.xlu0 %4137, %v3868
  %v4139 = vpop.permute.xlu0 %4138
  %4142 = vset.pattern.permute.xlu0 0
  %4143 = vperm.xlu0 %4142, %v3869
  %v4144 = vpop.permute.xlu0 %4143
  %4147 = vset.pattern.permute.xlu0 0
  %4148 = vperm.xlu0 %4147, %v3870
  %v4149 = vpop.permute.xlu0 %4148
  %4152 = vset.pattern.permute.xlu0 0
  %4153 = vperm.xlu0 %4152, %v3871
  %v4154 = vpop.permute.xlu0 %4153
  %4157 = vset.pattern.permute.xlu0 0
  %4158 = vperm.xlu0 %4157, %v3872
  %v4159 = vpop.permute.xlu0 %4158
  %4162 = vset.pattern.permute.xlu0 0
  %4163 = vperm.xlu0 %4162, %v3873
  %v4164 = vpop.permute.xlu0 %4163
  %4167 = vset.pattern.permute.xlu0 0
  %4168 = vperm.xlu0 %4167, %v3874
  %v4169 = vpop.permute.xlu0 %4168
  %4172 = vset.pattern.permute.xlu0 0
  %4173 = vperm.xlu0 %4172, %v3875
  %v4174 = vpop.permute.xlu0 %4173
  %4177 = vset.pattern.permute.xlu0 0
  %4178 = vperm.xlu0 %4177, %v3876
  %v4179 = vpop.permute.xlu0 %4178
  %4182 = vset.pattern.permute.xlu0 0
  %4183 = vperm.xlu0 %4182, %v3877
  %v4184 = vpop.permute.xlu0 %4183
  %4187 = vset.pattern.permute.xlu0 0
  %4188 = vperm.xlu0 %4187, %v3878
  %v4189 = vpop.permute.xlu0 %4188
  %4192 = vset.pattern.permute.xlu0 0
  %4193 = vperm.xlu0 %4192, %v3879
  %v4194 = vpop.permute.xlu0 %4193
  %4197 = vset.pattern.permute.xlu0 0
  %4198 = vperm.xlu0 %4197, %v3880
  %v4199 = vpop.permute.xlu0 %4198
  %4202 = vset.pattern.permute.xlu0 0
  %4203 = vperm.xlu0 %4202, %v3881
  %v4204 = vpop.permute.xlu0 %4203
  %4207 = vset.pattern.permute.xlu0 0
  %4208 = vperm.xlu0 %4207, %v3882
  %v4209 = vpop.permute.xlu0 %4208
  %4212 = vset.pattern.permute.xlu0 0
  %4213 = vperm.xlu0 %4212, %v3883
  %v4214 = vpop.permute.xlu0 %4213
  %4217 = vset.pattern.permute.xlu0 0
  %4218 = vperm.xlu0 %4217, %v3884
  %v4219 = vpop.permute.xlu0 %4218
  %4222 = vset.pattern.permute.xlu0 0
  %4223 = vperm.xlu0 %4222, %v3885
  %v4224 = vpop.permute.xlu0 %4223
  %4227 = vset.pattern.permute.xlu0 0
  %4228 = vperm.xlu0 %4227, %v3886
  %v4229 = vpop.permute.xlu0 %4228
  %4232 = vset.pattern.permute.xlu0 0
  %4233 = vperm.xlu0 %4232, %v3887
  %v4234 = vpop.permute.xlu0 %4233
  %4237 = vset.pattern.permute.xlu0 0
  %4238 = vperm.xlu0 %4237, %v3888
  %v4239 = vpop.permute.xlu0 %4238
  %4242 = vset.pattern.permute.xlu0 0
  %4243 = vperm.xlu0 %4242, %v3889
  %v4244 = vpop.permute.xlu0 %4243
  %4247 = vset.pattern.permute.xlu0 0
  %4248 = vperm.xlu0 %4247, %v3890
  %v4249 = vpop.permute.xlu0 %4248
  %4252 = vset.pattern.permute.xlu0 0
  %4253 = vperm.xlu0 %4252, %v3891
  %v4254 = vpop.permute.xlu0 %4253
  %4257 = vset.pattern.permute.xlu0 0
  %4258 = vperm.xlu0 %4257, %v3892
  %v4259 = vpop.permute.xlu0 %4258
  %4262 = vset.pattern.permute.xlu0 0
  %4263 = vperm.xlu0 %4262, %v3893
  %v4264 = vpop.permute.xlu0 %4263
  %4267 = vset.pattern.permute.xlu0 0
  %4268 = vperm.xlu0 %4267, %v3894
  %v4269 = vpop.permute.xlu0 %4268
  %4272 = vset.pattern.permute.xlu0 0
  %4273 = vperm.xlu0 %4272, %v3895
  %v4274 = vpop.permute.xlu0 %4273
  %4277 = vset.pattern.permute.xlu0 0
  %4278 = vperm.xlu0 %4277, %v3896
  %v4279 = vpop.permute.xlu0 %4278
  %v4281 = vmul.f32 %v3964, %v3897
  %v4282 = vmul.f32 %v3969, %v3898
  %v4283 = vmul.f32 %v3974, %v3899
  %v4284 = vmul.f32 %v3979, %v3900
  %v4285 = vmul.f32 %v3984, %v3901
  %v4286 = vmul.f32 %v3989, %v3902
  %v4287 = vmul.f32 %v3994, %v3903
  %v4288 = vmul.f32 %v3999, %v3904
  %v4289 = vmul.f32 %v4004, %v3905
  %v4290 = vmul.f32 %v4009, %v3906
  %v4291 = vmul.f32 %v4014, %v3907
  %v4292 = vmul.f32 %v4019, %v3908
  %v4293 = vmul.f32 %v4024, %v3909
  %v4294 = vmul.f32 %v4029, %v3910
  %v4295 = vmul.f32 %v4034, %v3911
  %v4296 = vmul.f32 %v4039, %v3912
  %v4297 = vmul.f32 %v4044, %v3913
  %v4298 = vmul.f32 %v4049, %v3914
  %v4299 = vmul.f32 %v4054, %v3915
  %v4300 = vmul.f32 %v4059, %v3916
  %v4301 = vmul.f32 %v4064, %v3917
  %v4302 = vmul.f32 %v4069, %v3918
  %v4303 = vmul.f32 %v4074, %v3919
  %v4304 = vmul.f32 %v4079, %v3920
  %v4305 = vmul.f32 %v4084, %v3921
  %v4306 = vmul.f32 %v4089, %v3922
  %v4307 = vmul.f32 %v4094, %v3923
  %v4308 = vmul.f32 %v4099, %v3924
  %v4309 = vmul.f32 %v4104, %v3925
  %v4310 = vmul.f32 %v4109, %v3926
  %v4311 = vmul.f32 %v4114, %v3927
  %v4312 = vmul.f32 %v4119, %v3928
  %v4313 = vmul.f32 %v4124, %v3929
  %v4314 = vmul.f32 %v4129, %v3930
  %v4315 = vmul.f32 %v4134, %v3931
  %v4316 = vmul.f32 %v4139, %v3932
  %v4317 = vmul.f32 %v4144, %v3933
  %v4318 = vmul.f32 %v4149, %v3934
  %v4319 = vmul.f32 %v4154, %v3935
  %v4320 = vmul.f32 %v4159, %v3936
  %v4321 = vmul.f32 %v4164, %v3937
  %v4322 = vmul.f32 %v4169, %v3938
  %v4323 = vmul.f32 %v4174, %v3939
  %v4324 = vmul.f32 %v4179, %v3940
  %v4325 = vmul.f32 %v4184, %v3941
  %v4326 = vmul.f32 %v4189, %v3942
  %v4327 = vmul.f32 %v4194, %v3943
  %v4328 = vmul.f32 %v4199, %v3944
  %v4329 = vmul.f32 %v4204, %v3945
  %v4330 = vmul.f32 %v4209, %v3946
  %v4331 = vmul.f32 %v4214, %v3947
  %v4332 = vmul.f32 %v4219, %v3948
  %v4333 = vmul.f32 %v4224, %v3949
  %v4334 = vmul.f32 %v4229, %v3950
  %v4335 = vmul.f32 %v4234, %v3951
  %v4336 = vmul.f32 %v4239, %v3952
  %v4337 = vmul.f32 %v4244, %v3953
  %v4338 = vmul.f32 %v4249, %v3954
  %v4339 = vmul.f32 %v4254, %v3955
  %v4340 = vmul.f32 %v4259, %v3956
  %v4341 = vmul.f32 %v4264, %v3957
  %v4342 = vmul.f32 %v4269, %v3958
  %v4343 = vmul.f32 %v4274, %v3959
  %v4344 = vmul.f32 %v4279, %v3960
  %v4345 = vadd.f32 %v4281, %v3452
  %v4346 = vadd.f32 %v4282, %v3458
  %v4347 = vadd.f32 %v4283, %v3464
  %v4348 = vadd.f32 %v4284, %v3470
  %v4349 = vadd.f32 %v4285, %v3476
  %v4350 = vadd.f32 %v4286, %v3482
  %v4351 = vadd.f32 %v4287, %v3488
  %v4352 = vadd.f32 %v4288, %v3494
  %v4353 = vadd.f32 %v4289, %v3500
  %v4354 = vadd.f32 %v4290, %v3506
  %v4355 = vadd.f32 %v4291, %v3512
  %v4356 = vadd.f32 %v4292, %v3518
  %v4357 = vadd.f32 %v4293, %v3524
  %v4358 = vadd.f32 %v4294, %v3530
  %v4359 = vadd.f32 %v4295, %v3536
  %v4360 = vadd.f32 %v4296, %v3542
  %v4361 = vadd.f32 %v4297, %v3548
  %v4362 = vadd.f32 %v4298, %v3554
  %v4363 = vadd.f32 %v4299, %v3560
  %v4364 = vadd.f32 %v4300, %v3566
  %v4365 = vadd.f32 %v4301, %v3572
  %v4366 = vadd.f32 %v4302, %v3578
  %v4367 = vadd.f32 %v4303, %v3584
  %v4368 = vadd.f32 %v4304, %v3590
  %v4369 = vadd.f32 %v4305, %v3596
  %v4370 = vadd.f32 %v4306, %v3602
  %v4371 = vadd.f32 %v4307, %v3608
  %v4372 = vadd.f32 %v4308, %v3614
  %v4373 = vadd.f32 %v4309, %v3620
  %v4374 = vadd.f32 %v4310, %v3626
  %v4375 = vadd.f32 %v4311, %v3632
  %v4376 = vadd.f32 %v4312, %v3638
  %v4377 = vadd.f32 %v4313, %v3644
  %v4378 = vadd.f32 %v4314, %v3650
  %v4379 = vadd.f32 %v4315, %v3656
  %v4380 = vadd.f32 %v4316, %v3662
  %v4381 = vadd.f32 %v4317, %v3668
  %v4382 = vadd.f32 %v4318, %v3674
  %v4383 = vadd.f32 %v4319, %v3680
  %v4384 = vadd.f32 %v4320, %v3686
  %v4385 = vadd.f32 %v4321, %v3692
  %v4386 = vadd.f32 %v4322, %v3698
  %v4387 = vadd.f32 %v4323, %v3704
  %v4388 = vadd.f32 %v4324, %v3710
  %v4389 = vadd.f32 %v4325, %v3716
  %v4390 = vadd.f32 %v4326, %v3722
  %v4391 = vadd.f32 %v4327, %v3728
  %v4392 = vadd.f32 %v4328, %v3734
  %v4393 = vadd.f32 %v4329, %v3740
  %v4394 = vadd.f32 %v4330, %v3746
  %v4395 = vadd.f32 %v4331, %v3752
  %v4396 = vadd.f32 %v4332, %v3758
  %v4397 = vadd.f32 %v4333, %v3764
  %v4398 = vadd.f32 %v4334, %v3770
  %v4399 = vadd.f32 %v4335, %v3776
  %v4400 = vadd.f32 %v4336, %v3782
  %v4401 = vadd.f32 %v4337, %v3788
  %v4402 = vadd.f32 %v4338, %v3794
  %v4403 = vadd.f32 %v4339, %v3800
  %v4404 = vadd.f32 %v4340, %v3806
  %v4405 = vadd.f32 %v4341, %v3812
  %v4406 = vadd.f32 %v4342, %v3818
  %v4407 = vadd.f32 %v4343, %v3824
  %v4408 = vadd.f32 %v4344, %v3830
  %4409 = vst [vmem:[%s4] sm:$0xff] %v4345
  %4410 = vst [vmem:[%s4 + $0x8] sm:$0xff] %v4346
  %4411 = vst [vmem:[%s4 + $0x10] sm:$0xff] %v4347
  %4412 = vst [vmem:[%s4 + $0x18] sm:$0xff] %v4348
  %4413 = vst [vmem:[%s4 + $0x20] sm:$0xff] %v4349
  %4414 = vst [vmem:[%s4 + $0x28] sm:$0xff] %v4350
  %4415 = vst [vmem:[%s4 + $0x30] sm:$0xff] %v4351
  %4416 = vst [vmem:[%s4 + $0x38] sm:$0xff] %v4352
  %4417 = vst [vmem:[%s4 + $0x40] sm:$0xff] %v4353
  %4418 = vst [vmem:[%s4 + $0x48] sm:$0xff] %v4354
  %4419 = vst [vmem:[%s4 + $0x50] sm:$0xff] %v4355
  %4420 = vst [vmem:[%s4 + $0x58] sm:$0xff] %v4356
  %4421 = vst [vmem:[%s4 + $0x60] sm:$0xff] %v4357
  %4422 = vst [vmem:[%s4 + $0x68] sm:$0xff] %v4358
  %4423 = vst [vmem:[%s4 + $0x70] sm:$0xff] %v4359
  %4424 = vst [vmem:[%s4 + $0x78] sm:$0xff] %v4360
  %4425 = vst [vmem:[%s4 + $0x80] sm:$0xff] %v4361
  %4426 = vst [vmem:[%s4 + $0x88] sm:$0xff] %v4362
  %4427 = vst [vmem:[%s4 + $0x90] sm:$0xff] %v4363
  %4428 = vst [vmem:[%s4 + $0x98] sm:$0xff] %v4364
  %4429 = vst [vmem:[%s4 + $0xa0] sm:$0xff] %v4365
  %4430 = vst [vmem:[%s4 + $0xa8] sm:$0xff] %v4366
  %4431 = vst [vmem:[%s4 + $0xb0] sm:$0xff] %v4367
  %4432 = vst [vmem:[%s4 + $0xb8] sm:$0xff] %v4368
  %4433 = vst [vmem:[%s4 + $0xc0] sm:$0xff] %v4369
  %4434 = vst [vmem:[%s4 + $0xc8] sm:$0xff] %v4370
  %4435 = vst [vmem:[%s4 + $0xd0] sm:$0xff] %v4371
  %4436 = vst [vmem:[%s4 + $0xd8] sm:$0xff] %v4372
  %4437 = vst [vmem:[%s4 + $0xe0] sm:$0xff] %v4373
  %4438 = vst [vmem:[%s4 + $0xe8] sm:$0xff] %v4374
  %4439 = vst [vmem:[%s4 + $0xf0] sm:$0xff] %v4375
  %4440 = vst [vmem:[%s4 + $0xf8] sm:$0xff] %v4376
  %4441 = vst [vmem:[%s4 + $0x100] sm:$0xff] %v4377
  %4442 = vst [vmem:[%s4 + $0x108] sm:$0xff] %v4378
  %4443 = vst [vmem:[%s4 + $0x110] sm:$0xff] %v4379
  %4444 = vst [vmem:[%s4 + $0x118] sm:$0xff] %v4380
  %4445 = vst [vmem:[%s4 + $0x120] sm:$0xff] %v4381
  %4446 = vst [vmem:[%s4 + $0x128] sm:$0xff] %v4382
  %4447 = vst [vmem:[%s4 + $0x130] sm:$0xff] %v4383
  %4448 = vst [vmem:[%s4 + $0x138] sm:$0xff] %v4384
  %4449 = vst [vmem:[%s4 + $0x140] sm:$0xff] %v4385
  %4450 = vst [vmem:[%s4 + $0x148] sm:$0xff] %v4386
  %4451 = vst [vmem:[%s4 + $0x150] sm:$0xff] %v4387
  %4452 = vst [vmem:[%s4 + $0x158] sm:$0xff] %v4388
  %4453 = vst [vmem:[%s4 + $0x160] sm:$0xff] %v4389
  %4454 = vst [vmem:[%s4 + $0x168] sm:$0xff] %v4390
  %4455 = vst [vmem:[%s4 + $0x170] sm:$0xff] %v4391
  %4456 = vst [vmem:[%s4 + $0x178] sm:$0xff] %v4392
  %4457 = vst [vmem:[%s4 + $0x180] sm:$0xff] %v4393
  %4458 = vst [vmem:[%s4 + $0x188] sm:$0xff] %v4394
  %4459 = vst [vmem:[%s4 + $0x190] sm:$0xff] %v4395
  %4460 = vst [vmem:[%s4 + $0x198] sm:$0xff] %v4396
  %4461 = vst [vmem:[%s4 + $0x1a0] sm:$0xff] %v4397
  %4462 = vst [vmem:[%s4 + $0x1a8] sm:$0xff] %v4398
  %4463 = vst [vmem:[%s4 + $0x1b0] sm:$0xff] %v4399
  %4464 = vst [vmem:[%s4 + $0x1b8] sm:$0xff] %v4400
  %4465 = vst [vmem:[%s4 + $0x1c0] sm:$0xff] %v4401
  %4466 = vst [vmem:[%s4 + $0x1c8] sm:$0xff] %v4402
  %4467 = vst [vmem:[%s4 + $0x1d0] sm:$0xff] %v4403
  %4468 = vst [vmem:[%s4 + $0x1d8] sm:$0xff] %v4404
  %4469 = vst [vmem:[%s4 + $0x1e0] sm:$0xff] %v4405
  %4470 = vst [vmem:[%s4 + $0x1e8] sm:$0xff] %v4406
  %4471 = vst [vmem:[%s4 + $0x1f0] sm:$0xff] %v4407
  %4472 = vst [vmem:[%s4 + $0x1f8] sm:$0xff] %v4408
  // Predicated region
  $region18: #{jj_norm_forward.3} parent=0 // pred_check
    _
  $region19: #{jj_norm_forward.3} parent=0 // pred_check_branch
    %4474 = sbr.rel (0) target = $region21
  $region20: #{jj_norm_forward.3} parent=0 // pred_region
    _
  $region21: #{jj_norm_forward.3} parent=0 // pred_fallthru
    _
  // Predicated region
  $region22: #{jj_norm_forward.3} parent=0 // pred_check
    _
  $region23: #{jj_norm_forward.3} parent=0 // pred_check_branch
    %4476 = sbr.rel (0) target = $region25
  $region24: #{jj_norm_forward.3} parent=0 // pred_region
    _
  $region25: #{jj_norm_forward.3} parent=0 // pred_fallthru
    _

</llo_original>
